<compile_context>
chip_gen: v5e
topology: v5e:2x2
jax: 0.10.0
libtpu: 0.0.40
codegen_flags: <defaults>
</compile_context>

<pallas_src>
import functools
import numpy as np
import jax
import jax.numpy as jnp
from jax.experimental import pallas as pl
from jax.experimental.pallas import tpu as pltpu  # noqa: F401  (kept for tuning knobs)


_LRELU_GAIN = np.float32(np.sqrt(2.0))


# ----------------------------------------------------------------------------
# In-kernel helpers (operate on VMEM values)
# ----------------------------------------------------------------------------

def _affine(wv, aT, ab, mxu_dtype):
    """style = w @ A^T + b.  A is passed pre-transposed as (w_dim, Cin)."""
    return jnp.dot(wv.astype(mxu_dtype), aT.astype(mxu_dtype),
                   preferred_element_type=jnp.float32) + ab


def _mod_conv(x_pad, style, wmat, w2, noise, bias, *, H, W, Cin, Cout, ksize,
              demod, act, mxu_dtype):
    """Modulated conv over the whole batch as one im2col matmul.

    x_pad : (B, H+2p, W+2p, Cin)  spatially pre-padded (p = ksize//2)
    style : (B, Cin)              per-sample input-channel scale
    wmat  : (ksize*ksize*Cin, Cout) flattened conv weight (tap-major rows)
    w2    : (Cin, Cout)           sum over taps of weight^2 (for demod) or None
    noise : (H, W) already scaled by strength, or None
    bias  : (1, Cout)
    """
    B = x_pad.shape[0]
    xm = x_pad * style[:, None, None, :]                 # modulate activations
    if ksize == 1:
        patches = xm.reshape(B * H * W, Cin)
    else:
        cols = [xm[:, ky:ky + H, kx:kx + W, :]
                for ky in range(ksize) for kx in range(ksize)]
        patches = jnp.concatenate(cols, axis=-1)          # (B, H, W, k*k*Cin)
        patches = patches.reshape(B * H * W, ksize * ksize * Cin)
    acc = jnp.dot(patches.astype(mxu_dtype), wmat.astype(mxu_dtype),
                  preferred_element_type=jnp.float32)      # (B*H*W, Cout)
    y = acc.reshape(B, H, W, Cout)
    if demod:
        # rsqrt(sum_{tap,cin} (w * s)^2) == rsqrt((s*s) @ sum_tap(w^2))
        d = jax.lax.rsqrt(
            jnp.dot(style * style, w2, preferred_element_type=jnp.float32)
            + 1e-8)                                        # (B, Cout)
        y = y * d[:, None, None, :]
    if noise is not None:
        y = y + noise[None, :, :, None]
    y = y + bias[:, None, None, :]                         # (1,1,1,Cout)
    if act:
        y = jnp.where(y >= 0.0, y, 0.2 * y) * _LRELU_GAIN
    return y


# ----------------------------------------------------------------------------
# Pallas kernels
# ----------------------------------------------------------------------------

def _conv_layer_kernel(wv_ref, aT_ref, ab_ref, xp_ref, wmat_ref, w2_ref,
                       noise_ref, b_ref, o_ref, *, H, W, Cin, Cout, ksize,
                       mxu_dtype):
    """Fused: style affine + modulated 3x3 conv + demod + noise + bias + lrelu."""
    style = _affine(wv_ref[...], aT_ref[...], ab_ref[...], mxu_dtype)
    y = _mod_conv(xp_ref[...], style, wmat_ref[...], w2_ref[...],
                  noise_ref[...], b_ref[...],
                  H=H, W=W, Cin=Cin, Cout=Cout, ksize=ksize,
                  demod=True, act=True, mxu_dtype=mxu_dtype)
    o_ref[...] = y.astype(o_ref.dtype)


def _conv_rgb_kernel(wv1_ref, aT1_ref, ab1_ref, xp_ref, wmat1_ref, w21_ref,
                     noise_ref, b1_ref,
                     wv2_ref, aT2_ref, ab2_ref, wmatR_ref, bR_ref,
                     x_out_ref, rgb_ref, *, H, W, C, Crgb, mxu_dtype):
    """Fused: (affine + conv1 3x3 + demod + noise + bias + lrelu)
              followed by (affine + toRGB 1x1, no demod/act/noise)."""
    s1 = _affine(wv1_ref[...], aT1_ref[...], ab1_ref[...], mxu_dtype)
    y = _mod_conv(xp_ref[...], s1, wmat1_ref[...], w21_ref[...],
                  noise_ref[...], b1_ref[...],
                  H=H, W=W, Cin=C, Cout=C, ksize=3,
                  demod=True, act=True, mxu_dtype=mxu_dtype)
    x_out_ref[...] = y.astype(x_out_ref.dtype)

    s2 = _affine(wv2_ref[...], aT2_ref[...], ab2_ref[...], mxu_dtype)
    rgb = _mod_conv(y, s2, wmatR_ref[...], None, None, bR_ref[...],
                    H=H, W=W, Cin=C, Cout=Crgb, ksize=1,
                    demod=False, act=False, mxu_dtype=mxu_dtype)
    rgb_ref[...] = rgb.astype(rgb_ref.dtype)


# ----------------------------------------------------------------------------
# pallas_call wrappers (whole batch per call, no grid — everything fits VMEM)
# TODO(synk): at real StyleGAN sizes (ch up to 512, res up to 1024) this
# "whole padded batch per call" design must switch to H-tiled BlockSpecs with
# a 1-row halo (v7x VMEM is 64 MiB) — not needed at this toy config.
# ----------------------------------------------------------------------------

def conv3x3_layer(x, wv, lp, mxu_dtype=jnp.float32):
    B, H, W, Cin = x.shape
    Cout = lp['wmat'].shape[1]
    xp = jnp.pad(x, ((0, 0), (1, 1), (1, 1), (0, 0)))
    kern = functools.partial(_conv_layer_kernel, H=H, W=W, Cin=Cin, Cout=Cout,
                             ksize=3, mxu_dtype=mxu_dtype)
    return pl.pallas_call(
        kern,
        out_shape=jax.ShapeDtypeStruct((B, H, W, Cout), jnp.float32),
    )(wv, lp['aff_AT'], lp['aff_b'], xp, lp['wmat'], lp['w2'],
      lp['noise_scaled'], lp['bias'])


def conv3x3_rgb_block(x, wv1, wv2, lp1, lpR, mxu_dtype=jnp.float32):
    B, H, W, C = x.shape
    Crgb = lpR['wmat'].shape[1]
    xp = jnp.pad(x, ((0, 0), (1, 1), (1, 1), (0, 0)))
    kern = functools.partial(_conv_rgb_kernel, H=H, W=W, C=C, Crgb=Crgb,
                             mxu_dtype=mxu_dtype)
    x_out, rgb = pl.pallas_call(
        kern,
        out_shape=(jax.ShapeDtypeStruct((B, H, W, C), jnp.float32),
                   jax.ShapeDtypeStruct((B, H, W, Crgb), jnp.float32)),
    )(wv1, lp1['aff_AT'], lp1['aff_b'], xp, lp1['wmat'], lp1['w2'],
      lp1['noise_scaled'], lp1['bias'],
      wv2, lpR['aff_AT'], lpR['aff_b'], lpR['wmat'], lpR['bias'])
    return x_out, rgb


# ----------------------------------------------------------------------------
# Glue
# ----------------------------------------------------------------------------

def upsample2x(x):
    # TODO(synk): StyleGAN2 uses FIR-filtered upfirdn2d upsampling; nearest
    # neighbour is the Pallas-friendly simplification.  Fusing the upsample
    # into the following conv0 kernel is a further possible optimization.
    return jnp.repeat(jnp.repeat(x, 2, axis=1), 2, axis=2)


class StyleGANPallas:
    """Pallas implementation of StyleGAN.gen_w (synthesis forward)."""

    def __init__(self, size=16, w_dim=32, ch=16, img_channels=3,
                 key=jax.random.PRNGKey(0), mxu_dtype=jnp.float32):
        self.size = size
        self.w_dim = w_dim
        self.ch = ch
        self.img_channels = img_channels
        # Set mxu_dtype=jnp.bfloat16 on v6e/v7x for faster MXU matmuls with
        # f32 accumulation; default f32 keeps force_fp32 semantics.
        self.mxu_dtype = mxu_dtype
        self.n_latents = int((np.log2(size) - 1) * 2)
        self.resolutions = [2 ** i for i in range(2, int(np.log2(size)) + 1)]

        def nrm(k, shape, scale):
            return jax.random.normal(k, shape, jnp.float32) * scale

        keys = iter(jax.random.split(key, 256))
        p = {}
        p['const'] = nrm(next(keys), (4, 4, ch), 1.0)

        def make_conv(cin, cout, ksize, res, with_noise):
            w = nrm(next(keys), (ksize * ksize, cin, cout),
                    1.0 / np.sqrt(cin * ksize * ksize))
            d = {
                'wmat': w.reshape(ksize * ksize * cin, cout),   # im2col weight
                'w2': jnp.sum(w * w, axis=0),                   # (cin, cout)
                'bias': jnp.zeros((1, cout), jnp.float32),
                'aff_AT': nrm(next(keys), (w_dim, cin),
                              1.0 / np.sqrt(w_dim)),            # pre-transposed
                'aff_b': jnp.ones((1, cin), jnp.float32),
            }
            if with_noise:
                d['noise_scaled'] = (nrm(next(keys), (res, res), 1.0)
                                     * jnp.float32(0.05))       # randn * strength
            return d

        # b4: conv1 + torgb ; higher blocks: conv0, conv1, torgb
        p['b4_conv1'] = make_conv(ch, ch, 3, 4, True)
        p['b4_torgb'] = make_conv(ch, img_channels, 1, 4, False)
        for res in self.resolutions[1:]:
            p[f'b{res}_conv0'] = make_conv(ch, ch, 3, res, True)
            p[f'b{res}_conv1'] = make_conv(ch, ch, 3, res, True)
            p[f'b{res}_torgb'] = make_conv(ch, img_channels, 1, res, False)
        self.params = p

        self._forward_jit = jax.jit(self._forward)

    def _forward(self, w):
        # gen_w semantics: (B, w_dim) -> (B, 1, w_dim) -> repeat to n_latents
        if w.ndim == 2:
            w = w[:, None, :]
        if w.shape[1] == 1:
            w = jnp.repeat(w, self.n_latents, axis=1)
        assert w.shape[1] == self.n_latents

        B = w.shape[0]
        p = self.params
        x = jnp.broadcast_to(p['const'][None], (B,) + p['const'].shape)

        # block 4x4: conv1 + torgb fused in one pallas_call
        x, rgb = conv3x3_rgb_block(x, w[:, 0], w[:, 1],
                                   p['b4_conv1'], p['b4_torgb'],
                                   self.mxu_dtype)

        w_idx = 1
        for res in self.resolutions[1:]:
            blk = f'b{res}'
            x = upsample2x(x)
            x = conv3x3_layer(x, w[:, w_idx], p[blk + '_conv0'],
                              self.mxu_dtype)
            x, y = conv3x3_rgb_block(x, w[:, w_idx + 1], w[:, w_idx + 2],
                                     p[blk + '_conv1'], p[blk + '_torgb'],
                                     self.mxu_dtype)
            rgb = upsample2x(rgb) + y
            w_idx += 2

        # NHWC -> NCHW to match PyTorch output convention
        return jnp.transpose(rgb, (0, 3, 1, 2))

    def __call__(self, w):
        return self._forward_jit(jnp.asarray(w, jnp.float32))


# TODO(synk): load_generator / torch.load checkpoint loading and the mapping
# network (gen_z, generate_random_w, sample_w) are not exercised by forward()
# and are not implemented; weights are synthetic.

if __name__ == "__main__":
    key = jax.random.PRNGKey(0)
    k_model, k_w = jax.random.split(key)

    size = 16            # small size -> n_latents = (log2(16)-1)*2 = 6
    w_dim = 32
    model = StyleGANPallas(size=size, w_dim=w_dim, ch=16, img_channels=3,
                           key=k_model)

    w = jax.random.normal(k_w, (2, w_dim), jnp.float32)   # (B, w_dim)
    img = model(w)
    img = jax.block_until_ready(img)

    assert img.shape == (2, 3, size, size), img.shape
    assert img.dtype == jnp.float32
    assert bool(jnp.all(jnp.isfinite(img)))
    print("KERNEL_OK")
</pallas_src>

<mosaic_0001>
module attributes {stable_mosaic.version = 11 : i64} {
  func.func @_conv_layer_kernel(%arg0: memref<2x32xf32, #tpu.memory_space<vmem>>, %arg1: memref<32x16xf32, #tpu.memory_space<vmem>>, %arg2: memref<1x16xf32, #tpu.memory_space<vmem>>, %arg3: memref<2x10x10x16xf32, #tpu.memory_space<vmem>>, %arg4: memref<144x16xf32, #tpu.memory_space<vmem>>, %arg5: memref<16x16xf32, #tpu.memory_space<vmem>>, %arg6: memref<8x8xf32, #tpu.memory_space<vmem>>, %arg7: memref<1x16xf32, #tpu.memory_space<vmem>>, %arg8: memref<2x8x8x16xf32, #tpu.memory_space<vmem>>) attributes {dimension_semantics = [], scalar_prefetch = 0 : i64, scratch_operands = 0 : i64, tpu.core_type = #tpu.core_type<tc>} {
    %c0 = arith.constant 0 : index
    %c0_0 = arith.constant 0 : index
    %0 = vector.load %arg0[%c0, %c0_0] : memref<2x32xf32, #tpu.memory_space<vmem>>, vector<2x32xf32>
    %c0_1 = arith.constant 0 : index
    %c0_2 = arith.constant 0 : index
    %1 = vector.load %arg1[%c0_1, %c0_2] : memref<32x16xf32, #tpu.memory_space<vmem>>, vector<32x16xf32>
    %c0_3 = arith.constant 0 : index
    %c0_4 = arith.constant 0 : index
    %2 = vector.load %arg2[%c0_3, %c0_4] : memref<1x16xf32, #tpu.memory_space<vmem>>, vector<1x16xf32>
    %cst = arith.constant dense<0.000000e+00> : vector<2x16xf32>
    %3 = tpu.matmul %0, %1, %cst {dimension_numbers = #tpu.dot_dimension_numbers<[1], [0], [0], [1], [0, 0, 1, 1], [], []>} : vector<2x32xf32>, vector<32x16xf32>, vector<2x16xf32> -> vector<2x16xf32>
    %4 = vector.broadcast %2 : vector<1x16xf32> to vector<2x16xf32>
    %5 = arith.addf %3, %4 : vector<2x16xf32>
    %c0_5 = arith.constant 0 : index
    %c0_6 = arith.constant 0 : index
    %c0_7 = arith.constant 0 : index
    %c0_8 = arith.constant 0 : index
    %6 = vector.load %arg3[%c0_5, %c0_6, %c0_7, %c0_8] : memref<2x10x10x16xf32, #tpu.memory_space<vmem>>, vector<2x10x10x16xf32>
    %c0_9 = arith.constant 0 : index
    %c0_10 = arith.constant 0 : index
    %7 = vector.load %arg4[%c0_9, %c0_10] : memref<144x16xf32, #tpu.memory_space<vmem>>, vector<144x16xf32>
    %c0_11 = arith.constant 0 : index
    %c0_12 = arith.constant 0 : index
    %8 = vector.load %arg5[%c0_11, %c0_12] : memref<16x16xf32, #tpu.memory_space<vmem>>, vector<16x16xf32>
    %c0_13 = arith.constant 0 : index
    %c0_14 = arith.constant 0 : index
    %9 = vector.load %arg6[%c0_13, %c0_14] : memref<8x8xf32, #tpu.memory_space<vmem>>, vector<8x8xf32>
    %c0_15 = arith.constant 0 : index
    %c0_16 = arith.constant 0 : index
    %10 = vector.load %arg7[%c0_15, %c0_16] : memref<1x16xf32, #tpu.memory_space<vmem>>, vector<1x16xf32>
    %11 = vector.shape_cast %5 : vector<2x16xf32> to vector<2x1x1x16xf32>
    %12 = vector.broadcast %11 : vector<2x1x1x16xf32> to vector<2x10x10x16xf32>
    %13 = arith.mulf %6, %12 : vector<2x10x10x16xf32>
    %14 = vector.extract_strided_slice %13 {offsets = [0, 0, 0, 0], sizes = [2, 8, 8, 16], strides = [1, 1, 1, 1]} : vector<2x10x10x16xf32> to vector<2x8x8x16xf32>
    %15 = vector.extract_strided_slice %13 {offsets = [0, 0, 1, 0], sizes = [2, 8, 8, 16], strides = [1, 1, 1, 1]} : vector<2x10x10x16xf32> to vector<2x8x8x16xf32>
    %16 = vector.extract_strided_slice %13 {offsets = [0, 0, 2, 0], sizes = [2, 8, 8, 16], strides = [1, 1, 1, 1]} : vector<2x10x10x16xf32> to vector<2x8x8x16xf32>
    %17 = vector.extract_strided_slice %13 {offsets = [0, 1, 0, 0], sizes = [2, 8, 8, 16], strides = [1, 1, 1, 1]} : vector<2x10x10x16xf32> to vector<2x8x8x16xf32>
    %18 = vector.extract_strided_slice %13 {offsets = [0, 1, 1, 0], sizes = [2, 8, 8, 16], strides = [1, 1, 1, 1]} : vector<2x10x10x16xf32> to vector<2x8x8x16xf32>
    %19 = vector.extract_strided_slice %13 {offsets = [0, 1, 2, 0], sizes = [2, 8, 8, 16], strides = [1, 1, 1, 1]} : vector<2x10x10x16xf32> to vector<2x8x8x16xf32>
    %20 = vector.extract_strided_slice %13 {offsets = [0, 2, 0, 0], sizes = [2, 8, 8, 16], strides = [1, 1, 1, 1]} : vector<2x10x10x16xf32> to vector<2x8x8x16xf32>
    %21 = vector.extract_strided_slice %13 {offsets = [0, 2, 1, 0], sizes = [2, 8, 8, 16], strides = [1, 1, 1, 1]} : vector<2x10x10x16xf32> to vector<2x8x8x16xf32>
    %22 = vector.extract_strided_slice %13 {offsets = [0, 2, 2, 0], sizes = [2, 8, 8, 16], strides = [1, 1, 1, 1]} : vector<2x10x10x16xf32> to vector<2x8x8x16xf32>
    %23 = tpu.concatenate %14, %15, %16, %17, %18, %19, %20, %21, %22 in 3 : vector<2x8x8x16xf32>, vector<2x8x8x16xf32>, vector<2x8x8x16xf32>, vector<2x8x8x16xf32>, vector<2x8x8x16xf32>, vector<2x8x8x16xf32>, vector<2x8x8x16xf32>, vector<2x8x8x16xf32>, vector<2x8x8x16xf32> -> vector<2x8x8x144xf32>
    %24 = vector.shape_cast %23 : vector<2x8x8x144xf32> to vector<128x144xf32>
    %cst_17 = arith.constant dense<0.000000e+00> : vector<128x16xf32>
    %25 = tpu.matmul %24, %7, %cst_17 {dimension_numbers = #tpu.dot_dimension_numbers<[1], [0], [0], [1], [0, 0, 1, 1], [], []>} : vector<128x144xf32>, vector<144x16xf32>, vector<128x16xf32> -> vector<128x16xf32>
    %26 = vector.shape_cast %25 : vector<128x16xf32> to vector<2x8x8x16xf32>
    %27 = arith.mulf %5, %5 : vector<2x16xf32>
    %cst_18 = arith.constant dense<0.000000e+00> : vector<2x16xf32>
    %28 = tpu.matmul %27, %8, %cst_18 {dimension_numbers = #tpu.dot_dimension_numbers<[1], [0], [0], [1], [0, 0, 1, 1], [], []>} : vector<2x16xf32>, vector<16x16xf32>, vector<2x16xf32> -> vector<2x16xf32>
    %cst_19 = arith.constant 9.99999993E-9 : f32
    %29 = vector.broadcast %cst_19 : f32 to vector<2x16xf32>
    %30 = arith.addf %28, %29 : vector<2x16xf32>
    %31 = math.rsqrt %30 : vector<2x16xf32>
    %32 = vector.shape_cast %31 : vector<2x16xf32> to vector<2x1x1x16xf32>
    %33 = vector.broadcast %32 : vector<2x1x1x16xf32> to vector<2x8x8x16xf32>
    %34 = arith.mulf %26, %33 : vector<2x8x8x16xf32>
    %35 = vector.shape_cast %9 : vector<8x8xf32> to vector<1x8x8x1xf32>
    %36 = vector.broadcast %35 : vector<1x8x8x1xf32> to vector<2x8x8x16xf32>
    %37 = arith.addf %34, %36 : vector<2x8x8x16xf32>
    %38 = vector.shape_cast %10 : vector<1x16xf32> to vector<1x1x1x16xf32>
    %39 = vector.broadcast %38 : vector<1x1x1x16xf32> to vector<2x8x8x16xf32>
    %40 = arith.addf %37, %39 : vector<2x8x8x16xf32>
    %cst_20 = arith.constant 0.000000e+00 : f32
    %41 = vector.broadcast %cst_20 : f32 to vector<2x8x8x16xf32>
    %42 = arith.cmpf oge, %40, %41 : vector<2x8x8x16xf32>
    %cst_21 = arith.constant 2.000000e-01 : f32
    %43 = vector.broadcast %cst_21 : f32 to vector<2x8x8x16xf32>
    %44 = arith.mulf %43, %40 : vector<2x8x8x16xf32>
    %45 = arith.select %42, %40, %44 : vector<2x8x8x16xi1>, vector<2x8x8x16xf32>
    %cst_22 = arith.constant 1.41421354 : f32
    %46 = vector.broadcast %cst_22 : f32 to vector<2x8x8x16xf32>
    %47 = arith.mulf %45, %46 : vector<2x8x8x16xf32>
    %c0_23 = arith.constant 0 : index
    %c0_24 = arith.constant 0 : index
    %c0_25 = arith.constant 0 : index
    %c0_26 = arith.constant 0 : index
    %48 = vector.load %arg8[%c0_23, %c0_24, %c0_25, %c0_26] : memref<2x8x8x16xf32, #tpu.memory_space<vmem>>, vector<2x8x8x16xf32>
    tpu.vector_store %arg8[%c0_23, %c0_24, %c0_25, %c0_26], %47 {strides = array<i32>} : memref<2x8x8x16xf32, #tpu.memory_space<vmem>>, vector<2x8x8x16xf32>,
    return
  }
}

module attributes {stable_mosaic.version = 11 : i64} {
  func.func @_conv_rgb_kernel(%arg0: memref<2x32xf32, #tpu.memory_space<vmem>>, %arg1: memref<32x16xf32, #tpu.memory_space<vmem>>, %arg2: memref<1x16xf32, #tpu.memory_space<vmem>>, %arg3: memref<2x6x6x16xf32, #tpu.memory_space<vmem>>, %arg4: memref<144x16xf32, #tpu.memory_space<vmem>>, %arg5: memref<16x16xf32, #tpu.memory_space<vmem>>, %arg6: memref<4x4xf32, #tpu.memory_space<vmem>>, %arg7: memref<1x16xf32, #tpu.memory_space<vmem>>, %arg8: memref<2x32xf32, #tpu.memory_space<vmem>>, %arg9: memref<32x16xf32, #tpu.memory_space<vmem>>, %arg10: memref<1x16xf32, #tpu.memory_space<vmem>>, %arg11: memref<16x3xf32, #tpu.memory_space<vmem>>, %arg12: memref<1x3xf32, #tpu.memory_space<vmem>>, %arg13: memref<2x4x4x16xf32, #tpu.memory_space<vmem>>, %arg14: memref<2x4x4x3xf32, #tpu.memory_space<vmem>>) attributes {dimension_semantics = [], scalar_prefetch = 0 : i64, scratch_operands = 0 : i64, tpu.core_type = #tpu.core_type<tc>} {
    %c0 = arith.constant 0 : index
    %c0_0 = arith.constant 0 : index
    %0 = vector.load %arg0[%c0, %c0_0] : memref<2x32xf32, #tpu.memory_space<vmem>>, vector<2x32xf32>
    %c0_1 = arith.constant 0 : index
    %c0_2 = arith.constant 0 : index
    %1 = vector.load %arg1[%c0_1, %c0_2] : memref<32x16xf32, #tpu.memory_space<vmem>>, vector<32x16xf32>
    %c0_3 = arith.constant 0 : index
    %c0_4 = arith.constant 0 : index
    %2 = vector.load %arg2[%c0_3, %c0_4] : memref<1x16xf32, #tpu.memory_space<vmem>>, vector<1x16xf32>
    %cst = arith.constant dense<0.000000e+00> : vector<2x16xf32>
    %3 = tpu.matmul %0, %1, %cst {dimension_numbers = #tpu.dot_dimension_numbers<[1], [0], [0], [1], [0, 0, 1, 1], [], []>} : vector<2x32xf32>, vector<32x16xf32>, vector<2x16xf32> -> vector<2x16xf32>
    %4 = vector.broadcast %2 : vector<1x16xf32> to vector<2x16xf32>
    %5 = arith.addf %3, %4 : vector<2x16xf32>
    %c0_5 = arith.constant 0 : index
    %c0_6 = arith.constant 0 : index
    %c0_7 = arith.constant 0 : index
    %c0_8 = arith.constant 0 : index
    %6 = vector.load %arg3[%c0_5, %c0_6, %c0_7, %c0_8] : memref<2x6x6x16xf32, #tpu.memory_space<vmem>>, vector<2x6x6x16xf32>
    %c0_9 = arith.constant 0 : index
    %c0_10 = arith.constant 0 : index
    %7 = vector.load %arg4[%c0_9, %c0_10] : memref<144x16xf32, #tpu.memory_space<vmem>>, vector<144x16xf32>
    %c0_11 = arith.constant 0 : index
    %c0_12 = arith.constant 0 : index
    %8 = vector.load %arg5[%c0_11, %c0_12] : memref<16x16xf32, #tpu.memory_space<vmem>>, vector<16x16xf32>
    %c0_13 = arith.constant 0 : index
    %c0_14 = arith.constant 0 : index
    %9 = vector.load %arg6[%c0_13, %c0_14] : memref<4x4xf32, #tpu.memory_space<vmem>>, vector<4x4xf32>
    %c0_15 = arith.constant 0 : index
    %c0_16 = arith.constant 0 : index
    %10 = vector.load %arg7[%c0_15, %c0_16] : memref<1x16xf32, #tpu.memory_space<vmem>>, vector<1x16xf32>
    %11 = vector.shape_cast %5 : vector<2x16xf32> to vector<2x1x1x16xf32>
    %12 = vector.broadcast %11 : vector<2x1x1x16xf32> to vector<2x6x6x16xf32>
    %13 = arith.mulf %6, %12 : vector<2x6x6x16xf32>
    %14 = vector.extract_strided_slice %13 {offsets = [0, 0, 0, 0], sizes = [2, 4, 4, 16], strides = [1, 1, 1, 1]} : vector<2x6x6x16xf32> to vector<2x4x4x16xf32>
    %15 = vector.extract_strided_slice %13 {offsets = [0, 0, 1, 0], sizes = [2, 4, 4, 16], strides = [1, 1, 1, 1]} : vector<2x6x6x16xf32> to vector<2x4x4x16xf32>
    %16 = vector.extract_strided_slice %13 {offsets = [0, 0, 2, 0], sizes = [2, 4, 4, 16], strides = [1, 1, 1, 1]} : vector<2x6x6x16xf32> to vector<2x4x4x16xf32>
    %17 = vector.extract_strided_slice %13 {offsets = [0, 1, 0, 0], sizes = [2, 4, 4, 16], strides = [1, 1, 1, 1]} : vector<2x6x6x16xf32> to vector<2x4x4x16xf32>
    %18 = vector.extract_strided_slice %13 {offsets = [0, 1, 1, 0], sizes = [2, 4, 4, 16], strides = [1, 1, 1, 1]} : vector<2x6x6x16xf32> to vector<2x4x4x16xf32>
    %19 = vector.extract_strided_slice %13 {offsets = [0, 1, 2, 0], sizes = [2, 4, 4, 16], strides = [1, 1, 1, 1]} : vector<2x6x6x16xf32> to vector<2x4x4x16xf32>
    %20 = vector.extract_strided_slice %13 {offsets = [0, 2, 0, 0], sizes = [2, 4, 4, 16], strides = [1, 1, 1, 1]} : vector<2x6x6x16xf32> to vector<2x4x4x16xf32>
    %21 = vector.extract_strided_slice %13 {offsets = [0, 2, 1, 0], sizes = [2, 4, 4, 16], strides = [1, 1, 1, 1]} : vector<2x6x6x16xf32> to vector<2x4x4x16xf32>
    %22 = vector.extract_strided_slice %13 {offsets = [0, 2, 2, 0], sizes = [2, 4, 4, 16], strides = [1, 1, 1, 1]} : vector<2x6x6x16xf32> to vector<2x4x4x16xf32>
    %23 = tpu.concatenate %14, %15, %16, %17, %18, %19, %20, %21, %22 in 3 : vector<2x4x4x16xf32>, vector<2x4x4x16xf32>, vector<2x4x4x16xf32>, vector<2x4x4x16xf32>, vector<2x4x4x16xf32>, vector<2x4x4x16xf32>, vector<2x4x4x16xf32>, vector<2x4x4x16xf32>, vector<2x4x4x16xf32> -> vector<2x4x4x144xf32>
    %24 = vector.shape_cast %23 : vector<2x4x4x144xf32> to vector<32x144xf32>
    %cst_17 = arith.constant dense<0.000000e+00> : vector<32x16xf32>
    %25 = tpu.matmul %24, %7, %cst_17 {dimension_numbers = #tpu.dot_dimension_numbers<[1], [0], [0], [1], [0, 0, 1, 1], [], []>} : vector<32x144xf32>, vector<144x16xf32>, vector<32x16xf32> -> vector<32x16xf32>
    %26 = vector.shape_cast %25 : vector<32x16xf32> to vector<2x4x4x16xf32>
    %27 = arith.mulf %5, %5 : vector<2x16xf32>
    %cst_18 = arith.constant dense<0.000000e+00> : vector<2x16xf32>
    %28 = tpu.matmul %27, %8, %cst_18 {dimension_numbers = #tpu.dot_dimension_numbers<[1], [0], [0], [1], [0, 0, 1, 1], [], []>} : vector<2x16xf32>, vector<16x16xf32>, vector<2x16xf32> -> vector<2x16xf32>
    %cst_19 = arith.constant 9.99999993E-9 : f32
    %29 = vector.broadcast %cst_19 : f32 to vector<2x16xf32>
    %30 = arith.addf %28, %29 : vector<2x16xf32>
    %31 = math.rsqrt %30 : vector<2x16xf32>
    %32 = vector.shape_cast %31 : vector<2x16xf32> to vector<2x1x1x16xf32>
    %33 = vector.broadcast %32 : vector<2x1x1x16xf32> to vector<2x4x4x16xf32>
    %34 = arith.mulf %26, %33 : vector<2x4x4x16xf32>
    %35 = vector.shape_cast %9 : vector<4x4xf32> to vector<1x4x4x1xf32>
    %36 = vector.broadcast %35 : vector<1x4x4x1xf32> to vector<2x4x4x16xf32>
    %37 = arith.addf %34, %36 : vector<2x4x4x16xf32>
    %38 = vector.shape_cast %10 : vector<1x16xf32> to vector<1x1x1x16xf32>
    %39 = vector.broadcast %38 : vector<1x1x1x16xf32> to vector<2x4x4x16xf32>
    %40 = arith.addf %37, %39 : vector<2x4x4x16xf32>
    %cst_20 = arith.constant 0.000000e+00 : f32
    %41 = vector.broadcast %cst_20 : f32 to vector<2x4x4x16xf32>
    %42 = arith.cmpf oge, %40, %41 : vector<2x4x4x16xf32>
    %cst_21 = arith.constant 2.000000e-01 : f32
    %43 = vector.broadcast %cst_21 : f32 to vector<2x4x4x16xf32>
    %44 = arith.mulf %43, %40 : vector<2x4x4x16xf32>
    %45 = arith.select %42, %40, %44 : vector<2x4x4x16xi1>, vector<2x4x4x16xf32>
    %cst_22 = arith.constant 1.41421354 : f32
    %46 = vector.broadcast %cst_22 : f32 to vector<2x4x4x16xf32>
    %47 = arith.mulf %45, %46 : vector<2x4x4x16xf32>
    %c0_23 = arith.constant 0 : index
    %c0_24 = arith.constant 0 : index
    %c0_25 = arith.constant 0 : index
    %c0_26 = arith.constant 0 : index
    %48 = vector.load %arg13[%c0_23, %c0_24, %c0_25, %c0_26] : memref<2x4x4x16xf32, #tpu.memory_space<vmem>>, vector<2x4x4x16xf32>
    tpu.vector_store %arg13[%c0_23, %c0_24, %c0_25, %c0_26], %47 {strides = array<i32>} : memref<2x4x4x16xf32, #tpu.memory_space<vmem>>, vector<2x4x4x16xf32>,
    %c0_27 = arith.constant 0 : index
    %c0_28 = arith.constant 0 : index
    %49 = vector.load %arg8[%c0_27, %c0_28] : memref<2x32xf32, #tpu.memory_space<vmem>>, vector<2x32xf32>
    %c0_29 = arith.constant 0 : index
    %c0_30 = arith.constant 0 : index
    %50 = vector.load %arg9[%c0_29, %c0_30] : memref<32x16xf32, #tpu.memory_space<vmem>>, vector<32x16xf32>
    %c0_31 = arith.constant 0 : index
    %c0_32 = arith.constant 0 : index
    %51 = vector.load %arg10[%c0_31, %c0_32] : memref<1x16xf32, #tpu.memory_space<vmem>>, vector<1x16xf32>
    %cst_33 = arith.constant dense<0.000000e+00> : vector<2x16xf32>
    %52 = tpu.matmul %49, %50, %cst_33 {dimension_numbers = #tpu.dot_dimension_numbers<[1], [0], [0], [1], [0, 0, 1, 1], [], []>} : vector<2x32xf32>, vector<32x16xf32>, vector<2x16xf32> -> vector<2x16xf32>
    %53 = vector.broadcast %51 : vector<1x16xf32> to vector<2x16xf32>
    %54 = arith.addf %52, %53 : vector<2x16xf32>
    %c0_34 = arith.constant 0 : index
    %c0_35 = arith.constant 0 : index
    %55 = vector.load %arg11[%c0_34, %c0_35] : memref<16x3xf32, #tpu.memory_space<vmem>>, vector<16x3xf32>
    %c0_36 = arith.constant 0 : index
    %c0_37 = arith.constant 0 : index
    %56 = vector.load %arg12[%c0_36, %c0_37] : memref<1x3xf32, #tpu.memory_space<vmem>>, vector<1x3xf32>
    %57 = vector.shape_cast %54 : vector<2x16xf32> to vector<2x1x1x16xf32>
    %58 = vector.broadcast %57 : vector<2x1x1x16xf32> to vector<2x4x4x16xf32>
    %59 = arith.mulf %47, %58 : vector<2x4x4x16xf32>
    %60 = vector.shape_cast %59 : vector<2x4x4x16xf32> to vector<32x16xf32>
    %cst_38 = arith.constant dense<0.000000e+00> : vector<32x3xf32>
    %61 = tpu.matmul %60, %55, %cst_38 {dimension_numbers = #tpu.dot_dimension_numbers<[1], [0], [0], [1], [0, 0, 1, 1], [], []>} : vector<32x16xf32>, vector<16x3xf32>, vector<32x3xf32> -> vector<32x3xf32>
    %62 = vector.shape_cast %61 : vector<32x3xf32> to vector<2x4x4x3xf32>
    %63 = vector.shape_cast %56 : vector<1x3xf32> to vector<1x1x1x3xf32>
    %64 = vector.broadcast %63 : vector<1x1x1x3xf32> to vector<2x4x4x3xf32>
    %65 = arith.addf %62, %64 : vector<2x4x4x3xf32>
    %c0_39 = arith.constant 0 : index
    %c0_40 = arith.constant 0 : index
    %c0_41 = arith.constant 0 : index
    %c0_42 = arith.constant 0 : index
    %66 = vector.load %arg14[%c0_39, %c0_40, %c0_41, %c0_42] : memref<2x4x4x3xf32, #tpu.memory_space<vmem>>, vector<2x4x4x3xf32>
    tpu.vector_store %arg14[%c0_39, %c0_40, %c0_41, %c0_42], %65 {strides = array<i32>} : memref<2x4x4x3xf32, #tpu.memory_space<vmem>>, vector<2x4x4x3xf32>,
    return
  }
}

module attributes {stable_mosaic.version = 11 : i64} {
  func.func @_conv_rgb_kernel(%arg0: memref<2x32xf32, #tpu.memory_space<vmem>>, %arg1: memref<32x16xf32, #tpu.memory_space<vmem>>, %arg2: memref<1x16xf32, #tpu.memory_space<vmem>>, %arg3: memref<2x10x10x16xf32, #tpu.memory_space<vmem>>, %arg4: memref<144x16xf32, #tpu.memory_space<vmem>>, %arg5: memref<16x16xf32, #tpu.memory_space<vmem>>, %arg6: memref<8x8xf32, #tpu.memory_space<vmem>>, %arg7: memref<1x16xf32, #tpu.memory_space<vmem>>, %arg8: memref<2x32xf32, #tpu.memory_space<vmem>>, %arg9: memref<32x16xf32, #tpu.memory_space<vmem>>, %arg10: memref<1x16xf32, #tpu.memory_space<vmem>>, %arg11: memref<16x3xf32, #tpu.memory_space<vmem>>, %arg12: memref<1x3xf32, #tpu.memory_space<vmem>>, %arg13: memref<2x8x8x16xf32, #tpu.memory_space<vmem>>, %arg14: memref<2x8x8x3xf32, #tpu.memory_space<vmem>>) attributes {dimension_semantics = [], scalar_prefetch = 0 : i64, scratch_operands = 0 : i64, tpu.core_type = #tpu.core_type<tc>} {
    %c0 = arith.constant 0 : index
    %c0_0 = arith.constant 0 : index
    %0 = vector.load %arg0[%c0, %c0_0] : memref<2x32xf32, #tpu.memory_space<vmem>>, vector<2x32xf32>
    %c0_1 = arith.constant 0 : index
    %c0_2 = arith.constant 0 : index
    %1 = vector.load %arg1[%c0_1, %c0_2] : memref<32x16xf32, #tpu.memory_space<vmem>>, vector<32x16xf32>
    %c0_3 = arith.constant 0 : index
    %c0_4 = arith.constant 0 : index
    %2 = vector.load %arg2[%c0_3, %c0_4] : memref<1x16xf32, #tpu.memory_space<vmem>>, vector<1x16xf32>
    %cst = arith.constant dense<0.000000e+00> : vector<2x16xf32>
    %3 = tpu.matmul %0, %1, %cst {dimension_numbers = #tpu.dot_dimension_numbers<[1], [0], [0], [1], [0, 0, 1, 1], [], []>} : vector<2x32xf32>, vector<32x16xf32>, vector<2x16xf32> -> vector<2x16xf32>
    %4 = vector.broadcast %2 : vector<1x16xf32> to vector<2x16xf32>
    %5 = arith.addf %3, %4 : vector<2x16xf32>
    %c0_5 = arith.constant 0 : index
    %c0_6 = arith.constant 0 : index
    %c0_7 = arith.constant 0 : index
    %c0_8 = arith.constant 0 : index
    %6 = vector.load %arg3[%c0_5, %c0_6, %c0_7, %c0_8] : memref<2x10x10x16xf32, #tpu.memory_space<vmem>>, vector<2x10x10x16xf32>
    %c0_9 = arith.constant 0 : index
    %c0_10 = arith.constant 0 : index
    %7 = vector.load %arg4[%c0_9, %c0_10] : memref<144x16xf32, #tpu.memory_space<vmem>>, vector<144x16xf32>
    %c0_11 = arith.constant 0 : index
    %c0_12 = arith.constant 0 : index
    %8 = vector.load %arg5[%c0_11, %c0_12] : memref<16x16xf32, #tpu.memory_space<vmem>>, vector<16x16xf32>
    %c0_13 = arith.constant 0 : index
    %c0_14 = arith.constant 0 : index
    %9 = vector.load %arg6[%c0_13, %c0_14] : memref<8x8xf32, #tpu.memory_space<vmem>>, vector<8x8xf32>
    %c0_15 = arith.constant 0 : index
    %c0_16 = arith.constant 0 : index
    %10 = vector.load %arg7[%c0_15, %c0_16] : memref<1x16xf32, #tpu.memory_space<vmem>>, vector<1x16xf32>
    %11 = vector.shape_cast %5 : vector<2x16xf32> to vector<2x1x1x16xf32>
    %12 = vector.broadcast %11 : vector<2x1x1x16xf32> to vector<2x10x10x16xf32>
    %13 = arith.mulf %6, %12 : vector<2x10x10x16xf32>
    %14 = vector.extract_strided_slice %13 {offsets = [0, 0, 0, 0], sizes = [2, 8, 8, 16], strides = [1, 1, 1, 1]} : vector<2x10x10x16xf32> to vector<2x8x8x16xf32>
    %15 = vector.extract_strided_slice %13 {offsets = [0, 0, 1, 0], sizes = [2, 8, 8, 16], strides = [1, 1, 1, 1]} : vector<2x10x10x16xf32> to vector<2x8x8x16xf32>
    %16 = vector.extract_strided_slice %13 {offsets = [0, 0, 2, 0], sizes = [2, 8, 8, 16], strides = [1, 1, 1, 1]} : vector<2x10x10x16xf32> to vector<2x8x8x16xf32>
    %17 = vector.extract_strided_slice %13 {offsets = [0, 1, 0, 0], sizes = [2, 8, 8, 16], strides = [1, 1, 1, 1]} : vector<2x10x10x16xf32> to vector<2x8x8x16xf32>
    %18 = vector.extract_strided_slice %13 {offsets = [0, 1, 1, 0], sizes = [2, 8, 8, 16], strides = [1, 1, 1, 1]} : vector<2x10x10x16xf32> to vector<2x8x8x16xf32>
    %19 = vector.extract_strided_slice %13 {offsets = [0, 1, 2, 0], sizes = [2, 8, 8, 16], strides = [1, 1, 1, 1]} : vector<2x10x10x16xf32> to vector<2x8x8x16xf32>
    %20 = vector.extract_strided_slice %13 {offsets = [0, 2, 0, 0], sizes = [2, 8, 8, 16], strides = [1, 1, 1, 1]} : vector<2x10x10x16xf32> to vector<2x8x8x16xf32>
    %21 = vector.extract_strided_slice %13 {offsets = [0, 2, 1, 0], sizes = [2, 8, 8, 16], strides = [1, 1, 1, 1]} : vector<2x10x10x16xf32> to vector<2x8x8x16xf32>
    %22 = vector.extract_strided_slice %13 {offsets = [0, 2, 2, 0], sizes = [2, 8, 8, 16], strides = [1, 1, 1, 1]} : vector<2x10x10x16xf32> to vector<2x8x8x16xf32>
    %23 = tpu.concatenate %14, %15, %16, %17, %18, %19, %20, %21, %22 in 3 : vector<2x8x8x16xf32>, vector<2x8x8x16xf32>, vector<2x8x8x16xf32>, vector<2x8x8x16xf32>, vector<2x8x8x16xf32>, vector<2x8x8x16xf32>, vector<2x8x8x16xf32>, vector<2x8x8x16xf32>, vector<2x8x8x16xf32> -> vector<2x8x8x144xf32>
    %24 = vector.shape_cast %23 : vector<2x8x8x144xf32> to vector<128x144xf32>
    %cst_17 = arith.constant dense<0.000000e+00> : vector<128x16xf32>
    %25 = tpu.matmul %24, %7, %cst_17 {dimension_numbers = #tpu.dot_dimension_numbers<[1], [0], [0], [1], [0, 0, 1, 1], [], []>} : vector<128x144xf32>, vector<144x16xf32>, vector<128x16xf32> -> vector<128x16xf32>
    %26 = vector.shape_cast %25 : vector<128x16xf32> to vector<2x8x8x16xf32>
    %27 = arith.mulf %5, %5 : vector<2x16xf32>
    %cst_18 = arith.constant dense<0.000000e+00> : vector<2x16xf32>
    %28 = tpu.matmul %27, %8, %cst_18 {dimension_numbers = #tpu.dot_dimension_numbers<[1], [0], [0], [1], [0, 0, 1, 1], [], []>} : vector<2x16xf32>, vector<16x16xf32>, vector<2x16xf32> -> vector<2x16xf32>
    %cst_19 = arith.constant 9.99999993E-9 : f32
    %29 = vector.broadcast %cst_19 : f32 to vector<2x16xf32>
    %30 = arith.addf %28, %29 : vector<2x16xf32>
    %31 = math.rsqrt %30 : vector<2x16xf32>
    %32 = vector.shape_cast %31 : vector<2x16xf32> to vector<2x1x1x16xf32>
    %33 = vector.broadcast %32 : vector<2x1x1x16xf32> to vector<2x8x8x16xf32>
    %34 = arith.mulf %26, %33 : vector<2x8x8x16xf32>
    %35 = vector.shape_cast %9 : vector<8x8xf32> to vector<1x8x8x1xf32>
    %36 = vector.broadcast %35 : vector<1x8x8x1xf32> to vector<2x8x8x16xf32>
    %37 = arith.addf %34, %36 : vector<2x8x8x16xf32>
    %38 = vector.shape_cast %10 : vector<1x16xf32> to vector<1x1x1x16xf32>
    %39 = vector.broadcast %38 : vector<1x1x1x16xf32> to vector<2x8x8x16xf32>
    %40 = arith.addf %37, %39 : vector<2x8x8x16xf32>
    %cst_20 = arith.constant 0.000000e+00 : f32
    %41 = vector.broadcast %cst_20 : f32 to vector<2x8x8x16xf32>
    %42 = arith.cmpf oge, %40, %41 : vector<2x8x8x16xf32>
    %cst_21 = arith.constant 2.000000e-01 : f32
    %43 = vector.broadcast %cst_21 : f32 to vector<2x8x8x16xf32>
    %44 = arith.mulf %43, %40 : vector<2x8x8x16xf32>
    %45 = arith.select %42, %40, %44 : vector<2x8x8x16xi1>, vector<2x8x8x16xf32>
    %cst_22 = arith.constant 1.41421354 : f32
    %46 = vector.broadcast %cst_22 : f32 to vector<2x8x8x16xf32>
    %47 = arith.mulf %45, %46 : vector<2x8x8x16xf32>
    %c0_23 = arith.constant 0 : index
    %c0_24 = arith.constant 0 : index
    %c0_25 = arith.constant 0 : index
    %c0_26 = arith.constant 0 : index
    %48 = vector.load %arg13[%c0_23, %c0_24, %c0_25, %c0_26] : memref<2x8x8x16xf32, #tpu.memory_space<vmem>>, vector<2x8x8x16xf32>
    tpu.vector_store %arg13[%c0_23, %c0_24, %c0_25, %c0_26], %47 {strides = array<i32>} : memref<2x8x8x16xf32, #tpu.memory_space<vmem>>, vector<2x8x8x16xf32>,
    %c0_27 = arith.constant 0 : index
    %c0_28 = arith.constant 0 : index
    %49 = vector.load %arg8[%c0_27, %c0_28] : memref<2x32xf32, #tpu.memory_space<vmem>>, vector<2x32xf32>
    %c0_29 = arith.constant 0 : index
    %c0_30 = arith.constant 0 : index
    %50 = vector.load %arg9[%c0_29, %c0_30] : memref<32x16xf32, #tpu.memory_space<vmem>>, vector<32x16xf32>
    %c0_31 = arith.constant 0 : index
    %c0_32 = arith.constant 0 : index
    %51 = vector.load %arg10[%c0_31, %c0_32] : memref<1x16xf32, #tpu.memory_space<vmem>>, vector<1x16xf32>
    %cst_33 = arith.constant dense<0.000000e+00> : vector<2x16xf32>
    %52 = tpu.matmul %49, %50, %cst_33 {dimension_numbers = #tpu.dot_dimension_numbers<[1], [0], [0], [1], [0, 0, 1, 1], [], []>} : vector<2x32xf32>, vector<32x16xf32>, vector<2x16xf32> -> vector<2x16xf32>
    %53 = vector.broadcast %51 : vector<1x16xf32> to vector<2x16xf32>
    %54 = arith.addf %52, %53 : vector<2x16xf32>
    %c0_34 = arith.constant 0 : index
    %c0_35 = arith.constant 0 : index
    %55 = vector.load %arg11[%c0_34, %c0_35] : memref<16x3xf32, #tpu.memory_space<vmem>>, vector<16x3xf32>
    %c0_36 = arith.constant 0 : index
    %c0_37 = arith.constant 0 : index
    %56 = vector.load %arg12[%c0_36, %c0_37] : memref<1x3xf32, #tpu.memory_space<vmem>>, vector<1x3xf32>
    %57 = vector.shape_cast %54 : vector<2x16xf32> to vector<2x1x1x16xf32>
    %58 = vector.broadcast %57 : vector<2x1x1x16xf32> to vector<2x8x8x16xf32>
    %59 = arith.mulf %47, %58 : vector<2x8x8x16xf32>
    %60 = vector.shape_cast %59 : vector<2x8x8x16xf32> to vector<128x16xf32>
    %cst_38 = arith.constant dense<0.000000e+00> : vector<128x3xf32>
    %61 = tpu.matmul %60, %55, %cst_38 {dimension_numbers = #tpu.dot_dimension_numbers<[1], [0], [0], [1], [0, 0, 1, 1], [], []>} : vector<128x16xf32>, vector<16x3xf32>, vector<128x3xf32> -> vector<128x3xf32>
    %62 = vector.shape_cast %61 : vector<128x3xf32> to vector<2x8x8x3xf32>
    %63 = vector.shape_cast %56 : vector<1x3xf32> to vector<1x1x1x3xf32>
    %64 = vector.broadcast %63 : vector<1x1x1x3xf32> to vector<2x8x8x3xf32>
    %65 = arith.addf %62, %64 : vector<2x8x8x3xf32>
    %c0_39 = arith.constant 0 : index
    %c0_40 = arith.constant 0 : index
    %c0_41 = arith.constant 0 : index
    %c0_42 = arith.constant 0 : index
    %66 = vector.load %arg14[%c0_39, %c0_40, %c0_41, %c0_42] : memref<2x8x8x3xf32, #tpu.memory_space<vmem>>, vector<2x8x8x3xf32>
    tpu.vector_store %arg14[%c0_39, %c0_40, %c0_41, %c0_42], %65 {strides = array<i32>} : memref<2x8x8x3xf32, #tpu.memory_space<vmem>>, vector<2x8x8x3xf32>,
    return
  }
}

module attributes {stable_mosaic.version = 11 : i64} {
  func.func @_conv_rgb_kernel(%arg0: memref<2x32xf32, #tpu.memory_space<vmem>>, %arg1: memref<32x16xf32, #tpu.memory_space<vmem>>, %arg2: memref<1x16xf32, #tpu.memory_space<vmem>>, %arg3: memref<2x18x18x16xf32, #tpu.memory_space<vmem>>, %arg4: memref<144x16xf32, #tpu.memory_space<vmem>>, %arg5: memref<16x16xf32, #tpu.memory_space<vmem>>, %arg6: memref<16x16xf32, #tpu.memory_space<vmem>>, %arg7: memref<1x16xf32, #tpu.memory_space<vmem>>, %arg8: memref<2x32xf32, #tpu.memory_space<vmem>>, %arg9: memref<32x16xf32, #tpu.memory_space<vmem>>, %arg10: memref<1x16xf32, #tpu.memory_space<vmem>>, %arg11: memref<16x3xf32, #tpu.memory_space<vmem>>, %arg12: memref<1x3xf32, #tpu.memory_space<vmem>>, %arg13: memref<2x16x16x16xf32, #tpu.memory_space<vmem>>, %arg14: memref<2x16x16x3xf32, #tpu.memory_space<vmem>>) attributes {dimension_semantics = [], scalar_prefetch = 0 : i64, scratch_operands = 0 : i64, tpu.core_type = #tpu.core_type<tc>} {
    %c0 = arith.constant 0 : index
    %c0_0 = arith.constant 0 : index
    %0 = vector.load %arg0[%c0, %c0_0] : memref<2x32xf32, #tpu.memory_space<vmem>>, vector<2x32xf32>
    %c0_1 = arith.constant 0 : index
    %c0_2 = arith.constant 0 : index
    %1 = vector.load %arg1[%c0_1, %c0_2] : memref<32x16xf32, #tpu.memory_space<vmem>>, vector<32x16xf32>
    %c0_3 = arith.constant 0 : index
    %c0_4 = arith.constant 0 : index
    %2 = vector.load %arg2[%c0_3, %c0_4] : memref<1x16xf32, #tpu.memory_space<vmem>>, vector<1x16xf32>
    %cst = arith.constant dense<0.000000e+00> : vector<2x16xf32>
    %3 = tpu.matmul %0, %1, %cst {dimension_numbers = #tpu.dot_dimension_numbers<[1], [0], [0], [1], [0, 0, 1, 1], [], []>} : vector<2x32xf32>, vector<32x16xf32>, vector<2x16xf32> -> vector<2x16xf32>
    %4 = vector.broadcast %2 : vector<1x16xf32> to vector<2x16xf32>
    %5 = arith.addf %3, %4 : vector<2x16xf32>
    %c0_5 = arith.constant 0 : index
    %c0_6 = arith.constant 0 : index
    %c0_7 = arith.constant 0 : index
    %c0_8 = arith.constant 0 : index
    %6 = vector.load %arg3[%c0_5, %c0_6, %c0_7, %c0_8] : memref<2x18x18x16xf32, #tpu.memory_space<vmem>>, vector<2x18x18x16xf32>
    %c0_9 = arith.constant 0 : index
    %c0_10 = arith.constant 0 : index
    %7 = vector.load %arg4[%c0_9, %c0_10] : memref<144x16xf32, #tpu.memory_space<vmem>>, vector<144x16xf32>
    %c0_11 = arith.constant 0 : index
    %c0_12 = arith.constant 0 : index
    %8 = vector.load %arg5[%c0_11, %c0_12] : memref<16x16xf32, #tpu.memory_space<vmem>>, vector<16x16xf32>
    %c0_13 = arith.constant 0 : index
    %c0_14 = arith.constant 0 : index
    %9 = vector.load %arg6[%c0_13, %c0_14] : memref<16x16xf32, #tpu.memory_space<vmem>>, vector<16x16xf32>
    %c0_15 = arith.constant 0 : index
    %c0_16 = arith.constant 0 : index
    %10 = vector.load %arg7[%c0_15, %c0_16] : memref<1x16xf32, #tpu.memory_space<vmem>>, vector<1x16xf32>
    %11 = vector.shape_cast %5 : vector<2x16xf32> to vector<2x1x1x16xf32>
    %12 = vector.broadcast %11 : vector<2x1x1x16xf32> to vector<2x18x18x16xf32>
    %13 = arith.mulf %6, %12 : vector<2x18x18x16xf32>
    %14 = vector.extract_strided_slice %13 {offsets = [0, 0, 0, 0], sizes = [2, 16, 16, 16], strides = [1, 1, 1, 1]} : vector<2x18x18x16xf32> to vector<2x16x16x16xf32>
    %15 = vector.extract_strided_slice %13 {offsets = [0, 0, 1, 0], sizes = [2, 16, 16, 16], strides = [1, 1, 1, 1]} : vector<2x18x18x16xf32> to vector<2x16x16x16xf32>
    %16 = vector.extract_strided_slice %13 {offsets = [0, 0, 2, 0], sizes = [2, 16, 16, 16], strides = [1, 1, 1, 1]} : vector<2x18x18x16xf32> to vector<2x16x16x16xf32>
    %17 = vector.extract_strided_slice %13 {offsets = [0, 1, 0, 0], sizes = [2, 16, 16, 16], strides = [1, 1, 1, 1]} : vector<2x18x18x16xf32> to vector<2x16x16x16xf32>
    %18 = vector.extract_strided_slice %13 {offsets = [0, 1, 1, 0], sizes = [2, 16, 16, 16], strides = [1, 1, 1, 1]} : vector<2x18x18x16xf32> to vector<2x16x16x16xf32>
    %19 = vector.extract_strided_slice %13 {offsets = [0, 1, 2, 0], sizes = [2, 16, 16, 16], strides = [1, 1, 1, 1]} : vector<2x18x18x16xf32> to vector<2x16x16x16xf32>
    %20 = vector.extract_strided_slice %13 {offsets = [0, 2, 0, 0], sizes = [2, 16, 16, 16], strides = [1, 1, 1, 1]} : vector<2x18x18x16xf32> to vector<2x16x16x16xf32>
    %21 = vector.extract_strided_slice %13 {offsets = [0, 2, 1, 0], sizes = [2, 16, 16, 16], strides = [1, 1, 1, 1]} : vector<2x18x18x16xf32> to vector<2x16x16x16xf32>
    %22 = vector.extract_strided_slice %13 {offsets = [0, 2, 2, 0], sizes = [2, 16, 16, 16], strides = [1, 1, 1, 1]} : vector<2x18x18x16xf32> to vector<2x16x16x16xf32>
    %23 = tpu.concatenate %14, %15, %16, %17, %18, %19, %20, %21, %22 in 3 : vector<2x16x16x16xf32>, vector<2x16x16x16xf32>, vector<2x16x16x16xf32>, vector<2x16x16x16xf32>, vector<2x16x16x16xf32>, vector<2x16x16x16xf32>, vector<2x16x16x16xf32>, vector<2x16x16x16xf32>, vector<2x16x16x16xf32> -> vector<2x16x16x144xf32>
    %24 = vector.shape_cast %23 : vector<2x16x16x144xf32> to vector<512x144xf32>
    %cst_17 = arith.constant dense<0.000000e+00> : vector<512x16xf32>
    %25 = tpu.matmul %24, %7, %cst_17 {dimension_numbers = #tpu.dot_dimension_numbers<[1], [0], [0], [1], [0, 0, 1, 1], [], []>} : vector<512x144xf32>, vector<144x16xf32>, vector<512x16xf32> -> vector<512x16xf32>
    %26 = vector.shape_cast %25 : vector<512x16xf32> to vector<2x16x16x16xf32>
    %27 = arith.mulf %5, %5 : vector<2x16xf32>
    %cst_18 = arith.constant dense<0.000000e+00> : vector<2x16xf32>
    %28 = tpu.matmul %27, %8, %cst_18 {dimension_numbers = #tpu.dot_dimension_numbers<[1], [0], [0], [1], [0, 0, 1, 1], [], []>} : vector<2x16xf32>, vector<16x16xf32>, vector<2x16xf32> -> vector<2x16xf32>
    %cst_19 = arith.constant 9.99999993E-9 : f32
    %29 = vector.broadcast %cst_19 : f32 to vector<2x16xf32>
    %30 = arith.addf %28, %29 : vector<2x16xf32>
    %31 = math.rsqrt %30 : vector<2x16xf32>
    %32 = vector.shape_cast %31 : vector<2x16xf32> to vector<2x1x1x16xf32>
    %33 = vector.broadcast %32 : vector<2x1x1x16xf32> to vector<2x16x16x16xf32>
    %34 = arith.mulf %26, %33 : vector<2x16x16x16xf32>
    %35 = vector.shape_cast %9 : vector<16x16xf32> to vector<1x16x16x1xf32>
    %36 = vector.broadcast %35 : vector<1x16x16x1xf32> to vector<2x16x16x16xf32>
    %37 = arith.addf %34, %36 : vector<2x16x16x16xf32>
    %38 = vector.shape_cast %10 : vector<1x16xf32> to vector<1x1x1x16xf32>
    %39 = vector.broadcast %38 : vector<1x1x1x16xf32> to vector<2x16x16x16xf32>
    %40 = arith.addf %37, %39 : vector<2x16x16x16xf32>
    %cst_20 = arith.constant 0.000000e+00 : f32
    %41 = vector.broadcast %cst_20 : f32 to vector<2x16x16x16xf32>
    %42 = arith.cmpf oge, %40, %41 : vector<2x16x16x16xf32>
    %cst_21 = arith.constant 2.000000e-01 : f32
    %43 = vector.broadcast %cst_21 : f32 to vector<2x16x16x16xf32>
    %44 = arith.mulf %43, %40 : vector<2x16x16x16xf32>
    %45 = arith.select %42, %40, %44 : vector<2x16x16x16xi1>, vector<2x16x16x16xf32>
    %cst_22 = arith.constant 1.41421354 : f32
    %46 = vector.broadcast %cst_22 : f32 to vector<2x16x16x16xf32>
    %47 = arith.mulf %45, %46 : vector<2x16x16x16xf32>
    %c0_23 = arith.constant 0 : index
    %c0_24 = arith.constant 0 : index
    %c0_25 = arith.constant 0 : index
    %c0_26 = arith.constant 0 : index
    %48 = vector.load %arg13[%c0_23, %c0_24, %c0_25, %c0_26] : memref<2x16x16x16xf32, #tpu.memory_space<vmem>>, vector<2x16x16x16xf32>
    tpu.vector_store %arg13[%c0_23, %c0_24, %c0_25, %c0_26], %47 {strides = array<i32>} : memref<2x16x16x16xf32, #tpu.memory_space<vmem>>, vector<2x16x16x16xf32>,
    %c0_27 = arith.constant 0 : index
    %c0_28 = arith.constant 0 : index
    %49 = vector.load %arg8[%c0_27, %c0_28] : memref<2x32xf32, #tpu.memory_space<vmem>>, vector<2x32xf32>
    %c0_29 = arith.constant 0 : index
    %c0_30 = arith.constant 0 : index
    %50 = vector.load %arg9[%c0_29, %c0_30] : memref<32x16xf32, #tpu.memory_space<vmem>>, vector<32x16xf32>
    %c0_31 = arith.constant 0 : index
    %c0_32 = arith.constant 0 : index
    %51 = vector.load %arg10[%c0_31, %c0_32] : memref<1x16xf32, #tpu.memory_space<vmem>>, vector<1x16xf32>
    %cst_33 = arith.constant dense<0.000000e+00> : vector<2x16xf32>
    %52 = tpu.matmul %49, %50, %cst_33 {dimension_numbers = #tpu.dot_dimension_numbers<[1], [0], [0], [1], [0, 0, 1, 1], [], []>} : vector<2x32xf32>, vector<32x16xf32>, vector<2x16xf32> -> vector<2x16xf32>
    %53 = vector.broadcast %51 : vector<1x16xf32> to vector<2x16xf32>
    %54 = arith.addf %52, %53 : vector<2x16xf32>
    %c0_34 = arith.constant 0 : index
    %c0_35 = arith.constant 0 : index
    %55 = vector.load %arg11[%c0_34, %c0_35] : memref<16x3xf32, #tpu.memory_space<vmem>>, vector<16x3xf32>
    %c0_36 = arith.constant 0 : index
    %c0_37 = arith.constant 0 : index
    %56 = vector.load %arg12[%c0_36, %c0_37] : memref<1x3xf32, #tpu.memory_space<vmem>>, vector<1x3xf32>
    %57 = vector.shape_cast %54 : vector<2x16xf32> to vector<2x1x1x16xf32>
    %58 = vector.broadcast %57 : vector<2x1x1x16xf32> to vector<2x16x16x16xf32>
    %59 = arith.mulf %47, %58 : vector<2x16x16x16xf32>
    %60 = vector.shape_cast %59 : vector<2x16x16x16xf32> to vector<512x16xf32>
    %cst_38 = arith.constant dense<0.000000e+00> : vector<512x3xf32>
    %61 = tpu.matmul %60, %55, %cst_38 {dimension_numbers = #tpu.dot_dimension_numbers<[1], [0], [0], [1], [0, 0, 1, 1], [], []>} : vector<512x16xf32>, vector<16x3xf32>, vector<512x3xf32> -> vector<512x3xf32>
    %62 = vector.shape_cast %61 : vector<512x3xf32> to vector<2x16x16x3xf32>
    %63 = vector.shape_cast %56 : vector<1x3xf32> to vector<1x1x1x3xf32>
    %64 = vector.broadcast %63 : vector<1x1x1x3xf32> to vector<2x16x16x3xf32>
    %65 = arith.addf %62, %64 : vector<2x16x16x3xf32>
    %c0_39 = arith.constant 0 : index
    %c0_40 = arith.constant 0 : index
    %c0_41 = arith.constant 0 : index
    %c0_42 = arith.constant 0 : index
    %66 = vector.load %arg14[%c0_39, %c0_40, %c0_41, %c0_42] : memref<2x16x16x3xf32, #tpu.memory_space<vmem>>, vector<2x16x16x3xf32>
    tpu.vector_store %arg14[%c0_39, %c0_40, %c0_41, %c0_42], %65 {strides = array<i32>} : memref<2x16x16x3xf32, #tpu.memory_space<vmem>>, vector<2x16x16x3xf32>,
    return
  }
}

module attributes {stable_mosaic.version = 11 : i64} {
  func.func @_conv_layer_kernel(%arg0: memref<2x32xf32, #tpu.memory_space<vmem>>, %arg1: memref<32x16xf32, #tpu.memory_space<vmem>>, %arg2: memref<1x16xf32, #tpu.memory_space<vmem>>, %arg3: memref<2x18x18x16xf32, #tpu.memory_space<vmem>>, %arg4: memref<144x16xf32, #tpu.memory_space<vmem>>, %arg5: memref<16x16xf32, #tpu.memory_space<vmem>>, %arg6: memref<16x16xf32, #tpu.memory_space<vmem>>, %arg7: memref<1x16xf32, #tpu.memory_space<vmem>>, %arg8: memref<2x16x16x16xf32, #tpu.memory_space<vmem>>) attributes {dimension_semantics = [], scalar_prefetch = 0 : i64, scratch_operands = 0 : i64, tpu.core_type = #tpu.core_type<tc>} {
    %c0 = arith.constant 0 : index
    %c0_0 = arith.constant 0 : index
    %0 = vector.load %arg0[%c0, %c0_0] : memref<2x32xf32, #tpu.memory_space<vmem>>, vector<2x32xf32>
    %c0_1 = arith.constant 0 : index
    %c0_2 = arith.constant 0 : index
    %1 = vector.load %arg1[%c0_1, %c0_2] : memref<32x16xf32, #tpu.memory_space<vmem>>, vector<32x16xf32>
    %c0_3 = arith.constant 0 : index
    %c0_4 = arith.constant 0 : index
    %2 = vector.load %arg2[%c0_3, %c0_4] : memref<1x16xf32, #tpu.memory_space<vmem>>, vector<1x16xf32>
    %cst = arith.constant dense<0.000000e+00> : vector<2x16xf32>
    %3 = tpu.matmul %0, %1, %cst {dimension_numbers = #tpu.dot_dimension_numbers<[1], [0], [0], [1], [0, 0, 1, 1], [], []>} : vector<2x32xf32>, vector<32x16xf32>, vector<2x16xf32> -> vector<2x16xf32>
    %4 = vector.broadcast %2 : vector<1x16xf32> to vector<2x16xf32>
    %5 = arith.addf %3, %4 : vector<2x16xf32>
    %c0_5 = arith.constant 0 : index
    %c0_6 = arith.constant 0 : index
    %c0_7 = arith.constant 0 : index
    %c0_8 = arith.constant 0 : index
    %6 = vector.load %arg3[%c0_5, %c0_6, %c0_7, %c0_8] : memref<2x18x18x16xf32, #tpu.memory_space<vmem>>, vector<2x18x18x16xf32>
    %c0_9 = arith.constant 0 : index
    %c0_10 = arith.constant 0 : index
    %7 = vector.load %arg4[%c0_9, %c0_10] : memref<144x16xf32, #tpu.memory_space<vmem>>, vector<144x16xf32>
    %c0_11 = arith.constant 0 : index
    %c0_12 = arith.constant 0 : index
    %8 = vector.load %arg5[%c0_11, %c0_12] : memref<16x16xf32, #tpu.memory_space<vmem>>, vector<16x16xf32>
    %c0_13 = arith.constant 0 : index
    %c0_14 = arith.constant 0 : index
    %9 = vector.load %arg6[%c0_13, %c0_14] : memref<16x16xf32, #tpu.memory_space<vmem>>, vector<16x16xf32>
    %c0_15 = arith.constant 0 : index
    %c0_16 = arith.constant 0 : index
    %10 = vector.load %arg7[%c0_15, %c0_16] : memref<1x16xf32, #tpu.memory_space<vmem>>, vector<1x16xf32>
    %11 = vector.shape_cast %5 : vector<2x16xf32> to vector<2x1x1x16xf32>
    %12 = vector.broadcast %11 : vector<2x1x1x16xf32> to vector<2x18x18x16xf32>
    %13 = arith.mulf %6, %12 : vector<2x18x18x16xf32>
    %14 = vector.extract_strided_slice %13 {offsets = [0, 0, 0, 0], sizes = [2, 16, 16, 16], strides = [1, 1, 1, 1]} : vector<2x18x18x16xf32> to vector<2x16x16x16xf32>
    %15 = vector.extract_strided_slice %13 {offsets = [0, 0, 1, 0], sizes = [2, 16, 16, 16], strides = [1, 1, 1, 1]} : vector<2x18x18x16xf32> to vector<2x16x16x16xf32>
    %16 = vector.extract_strided_slice %13 {offsets = [0, 0, 2, 0], sizes = [2, 16, 16, 16], strides = [1, 1, 1, 1]} : vector<2x18x18x16xf32> to vector<2x16x16x16xf32>
    %17 = vector.extract_strided_slice %13 {offsets = [0, 1, 0, 0], sizes = [2, 16, 16, 16], strides = [1, 1, 1, 1]} : vector<2x18x18x16xf32> to vector<2x16x16x16xf32>
    %18 = vector.extract_strided_slice %13 {offsets = [0, 1, 1, 0], sizes = [2, 16, 16, 16], strides = [1, 1, 1, 1]} : vector<2x18x18x16xf32> to vector<2x16x16x16xf32>
    %19 = vector.extract_strided_slice %13 {offsets = [0, 1, 2, 0], sizes = [2, 16, 16, 16], strides = [1, 1, 1, 1]} : vector<2x18x18x16xf32> to vector<2x16x16x16xf32>
    %20 = vector.extract_strided_slice %13 {offsets = [0, 2, 0, 0], sizes = [2, 16, 16, 16], strides = [1, 1, 1, 1]} : vector<2x18x18x16xf32> to vector<2x16x16x16xf32>
    %21 = vector.extract_strided_slice %13 {offsets = [0, 2, 1, 0], sizes = [2, 16, 16, 16], strides = [1, 1, 1, 1]} : vector<2x18x18x16xf32> to vector<2x16x16x16xf32>
    %22 = vector.extract_strided_slice %13 {offsets = [0, 2, 2, 0], sizes = [2, 16, 16, 16], strides = [1, 1, 1, 1]} : vector<2x18x18x16xf32> to vector<2x16x16x16xf32>
    %23 = tpu.concatenate %14, %15, %16, %17, %18, %19, %20, %21, %22 in 3 : vector<2x16x16x16xf32>, vector<2x16x16x16xf32>, vector<2x16x16x16xf32>, vector<2x16x16x16xf32>, vector<2x16x16x16xf32>, vector<2x16x16x16xf32>, vector<2x16x16x16xf32>, vector<2x16x16x16xf32>, vector<2x16x16x16xf32> -> vector<2x16x16x144xf32>
    %24 = vector.shape_cast %23 : vector<2x16x16x144xf32> to vector<512x144xf32>
    %cst_17 = arith.constant dense<0.000000e+00> : vector<512x16xf32>
    %25 = tpu.matmul %24, %7, %cst_17 {dimension_numbers = #tpu.dot_dimension_numbers<[1], [0], [0], [1], [0, 0, 1, 1], [], []>} : vector<512x144xf32>, vector<144x16xf32>, vector<512x16xf32> -> vector<512x16xf32>
    %26 = vector.shape_cast %25 : vector<512x16xf32> to vector<2x16x16x16xf32>
    %27 = arith.mulf %5, %5 : vector<2x16xf32>
    %cst_18 = arith.constant dense<0.000000e+00> : vector<2x16xf32>
    %28 = tpu.matmul %27, %8, %cst_18 {dimension_numbers = #tpu.dot_dimension_numbers<[1], [0], [0], [1], [0, 0, 1, 1], [], []>} : vector<2x16xf32>, vector<16x16xf32>, vector<2x16xf32> -> vector<2x16xf32>
    %cst_19 = arith.constant 9.99999993E-9 : f32
    %29 = vector.broadcast %cst_19 : f32 to vector<2x16xf32>
    %30 = arith.addf %28, %29 : vector<2x16xf32>
    %31 = math.rsqrt %30 : vector<2x16xf32>
    %32 = vector.shape_cast %31 : vector<2x16xf32> to vector<2x1x1x16xf32>
    %33 = vector.broadcast %32 : vector<2x1x1x16xf32> to vector<2x16x16x16xf32>
    %34 = arith.mulf %26, %33 : vector<2x16x16x16xf32>
    %35 = vector.shape_cast %9 : vector<16x16xf32> to vector<1x16x16x1xf32>
    %36 = vector.broadcast %35 : vector<1x16x16x1xf32> to vector<2x16x16x16xf32>
    %37 = arith.addf %34, %36 : vector<2x16x16x16xf32>
    %38 = vector.shape_cast %10 : vector<1x16xf32> to vector<1x1x1x16xf32>
    %39 = vector.broadcast %38 : vector<1x1x1x16xf32> to vector<2x16x16x16xf32>
    %40 = arith.addf %37, %39 : vector<2x16x16x16xf32>
    %cst_20 = arith.constant 0.000000e+00 : f32
    %41 = vector.broadcast %cst_20 : f32 to vector<2x16x16x16xf32>
    %42 = arith.cmpf oge, %40, %41 : vector<2x16x16x16xf32>
    %cst_21 = arith.constant 2.000000e-01 : f32
    %43 = vector.broadcast %cst_21 : f32 to vector<2x16x16x16xf32>
    %44 = arith.mulf %43, %40 : vector<2x16x16x16xf32>
    %45 = arith.select %42, %40, %44 : vector<2x16x16x16xi1>, vector<2x16x16x16xf32>
    %cst_22 = arith.constant 1.41421354 : f32
    %46 = vector.broadcast %cst_22 : f32 to vector<2x16x16x16xf32>
    %47 = arith.mulf %45, %46 : vector<2x16x16x16xf32>
    %c0_23 = arith.constant 0 : index
    %c0_24 = arith.constant 0 : index
    %c0_25 = arith.constant 0 : index
    %c0_26 = arith.constant 0 : index
    %48 = vector.load %arg8[%c0_23, %c0_24, %c0_25, %c0_26] : memref<2x16x16x16xf32, #tpu.memory_space<vmem>>, vector<2x16x16x16xf32>
    tpu.vector_store %arg8[%c0_23, %c0_24, %c0_25, %c0_26], %47 {strides = array<i32>} : memref<2x16x16x16xf32, #tpu.memory_space<vmem>>, vector<2x16x16x16xf32>,
    return
  }
}

</mosaic_0001>

<llo_original>
// kernel: _forward.5
$region0: #{_forward.5}
  #allocation0 [shape = 'u32[]', space=smem, size = 0x4, offset = 0x4, fixed_abs, tag = 'smem constant byte address 0x4 - core index']
  #allocation1 [shape = 'u32[72,128]{1,0:T(1,128)}', space=vmem, size = 0x9000, scoped, tag = 'internal scratch']
  %s0 = inlined_call_operand.hbm [shape: f32[2,32], index: 0, kind: input, shape index: {}, may-alias: {0,8}]
  %s1 = inlined_call_operand.vmem [shape: f32[32,16], index: 1, kind: input, shape index: {}]
  %s2 = inlined_call_operand.vmem [shape: f32[1,16], index: 2, kind: input, shape index: {}, may-alias: {2,10}]
  %s3 = inlined_call_operand.vmem [shape: f32[2,6,6,16], index: 3, kind: input, shape index: {}]
  %s4 = inlined_call_operand.vmem [shape: f32[144,16], index: 4, kind: input, shape index: {}]
  %s5 = inlined_call_operand.vmem [shape: f32[16,16], index: 5, kind: input, shape index: {}]
  %s6 = inlined_call_operand.hbm [shape: f32[4,4], index: 6, kind: input, shape index: {}]
  %s7 = inlined_call_operand.vmem [shape: f32[1,16], index: 7, kind: input, shape index: {}]
  %s8 = inlined_call_operand.hbm [shape: f32[2,32], index: 8, kind: input, shape index: {}, may-alias: {0,8}]
  %s9 = inlined_call_operand.hbm [shape: f32[32,16], index: 9, kind: input, shape index: {}]
  %s10 = inlined_call_operand.vmem [shape: f32[1,16], index: 10, kind: input, shape index: {}, may-alias: {2,10}]
  %s11 = inlined_call_operand.hbm [shape: f32[16,3], index: 11, kind: input, shape index: {}]
  %s12 = inlined_call_operand.vmem [shape: f32[1,3], index: 12, kind: input, shape index: {}]
  %s13 = inlined_call_operand.vmem [shape: f32[2,4,4,16], index: 13, kind: output, shape index: {0}]
  %s14 = inlined_call_operand.vmem [shape: f32[2,4,4,3], index: 14, kind: output, shape index: {1}]
  %15 = xla_tuple %s13, %s14
  %s16 = sld [smem:[#allocation0]]
  $region90: #{_forward.5} parent=0
    _
  %s18 = ssub.s32 1, %s16
  %s19 = scalar_select 0, %s18, %s16
  $region1: #{_forward.5} parent=0
    #allocation2 [shape = 'u8[1024]{0}', space=vmem, size = 0x400, scoped, tag = 'input window, operand 0, single buffered']
    #allocation3 [shape = 's32[1]{0}', space=sflag, size = 0x4, scoped, tag = 'scoped memory for _forward.5']
    #allocation4 [shape = 'u8[2048]{0}', space=vmem, size = 0x800, scoped, tag = 'input window, operand 6, single buffered']
    #allocation5 [shape = 's32[1]{0}', space=sflag, size = 0x4, scoped, tag = 'scoped memory for _forward.5']
    #allocation6 [shape = 'u8[1024]{0}', space=vmem, size = 0x400, scoped, tag = 'input window, operand 8, single buffered']
    #allocation7 [shape = 'u8[16384]{0}', space=vmem, size = 0x4000, scoped, tag = 'input window, operand 9, single buffered']
    #allocation8 [shape = 's32[1]{0}', space=sflag, size = 0x4, scoped, tag = 'scoped memory for _forward.5']
    #allocation9 [shape = 'u8[8192]{0}', space=vmem, size = 0x2000, scoped, tag = 'input window, operand 11, single buffered']
    %20 = vsyncpa [#allocation3], 0
    %21 = vsyncpa [#allocation5], 0
    %22 = vsyncpa [#allocation8], 0
    // Predicated region
    $region2: #{_forward.5} parent=1 // pred_check
      _
    $region3: #{_forward.5} parent=1 // pred_check_branch
      %24 = sbr.rel (0) target = $region5
    $region4: #{_forward.5} parent=1 // pred_region
      %26 = vsyncadd [#allocation3], 0
      %s28 = sshll.u32 %s0, 4
      %s29 = int_to_ptr.hbm [resolvable:$true] %s28
      %s30 = sshll.u32 [#allocation2], 4
      %s31 = int_to_ptr.vmem [resolvable:$true] %s30
      %33 = dma.hbm_to_vmem [thread:$0]  %s29, 32, %s31, [#allocation3]
    $region5: #{_forward.5} parent=1 // pred_fallthru
      _
    // Predicated region
    $region6: #{_forward.5} parent=1 // pred_check
      _
    $region7: #{_forward.5} parent=1 // pred_check_branch
      %35 = sbr.rel (0) target = $region9
    $region8: #{_forward.5} parent=1 // pred_region
      _
    $region9: #{_forward.5} parent=1 // pred_fallthru
      _
    // Predicated region
    $region10: #{_forward.5} parent=1 // pred_check
      _
    $region11: #{_forward.5} parent=1 // pred_check_branch
      %37 = sbr.rel (0) target = $region13
    $region12: #{_forward.5} parent=1 // pred_region
      _
    $region13: #{_forward.5} parent=1 // pred_fallthru
      _
    // Predicated region
    $region14: #{_forward.5} parent=1 // pred_check
      _
    $region15: #{_forward.5} parent=1 // pred_check_branch
      %39 = sbr.rel (0) target = $region17
    $region16: #{_forward.5} parent=1 // pred_region
      _
    $region17: #{_forward.5} parent=1 // pred_fallthru
      _
    // Predicated region
    $region18: #{_forward.5} parent=1 // pred_check
      _
    $region19: #{_forward.5} parent=1 // pred_check_branch
      %41 = sbr.rel (0) target = $region21
    $region20: #{_forward.5} parent=1 // pred_region
      _
    $region21: #{_forward.5} parent=1 // pred_fallthru
      _
    // Predicated region
    $region22: #{_forward.5} parent=1 // pred_check
      _
    $region23: #{_forward.5} parent=1 // pred_check_branch
      %43 = sbr.rel (0) target = $region25
    $region24: #{_forward.5} parent=1 // pred_region
      _
    $region25: #{_forward.5} parent=1 // pred_fallthru
      _
    // Predicated region
    $region26: #{_forward.5} parent=1 // pred_check
      _
    $region27: #{_forward.5} parent=1 // pred_check_branch
      %45 = sbr.rel (0) target = $region29
    $region28: #{_forward.5} parent=1 // pred_region
      %47 = vsyncadd [#allocation5], 0
      %s49 = sshll.u32 %s6, 4
      %s50 = int_to_ptr.hbm [resolvable:$true] %s49
      %s51 = sshll.u32 [#allocation4], 4
      %s52 = int_to_ptr.vmem [resolvable:$true] %s51
      %54 = dma.hbm_to_vmem [thread:$0]  %s50, 64, %s52, [#allocation5]
    $region29: #{_forward.5} parent=1 // pred_fallthru
      _
    // Predicated region
    $region30: #{_forward.5} parent=1 // pred_check
      _
    $region31: #{_forward.5} parent=1 // pred_check_branch
      %56 = sbr.rel (0) target = $region33
    $region32: #{_forward.5} parent=1 // pred_region
      _
    $region33: #{_forward.5} parent=1 // pred_fallthru
      _
    // Predicated region
    $region34: #{_forward.5} parent=1 // pred_check
      _
    $region35: #{_forward.5} parent=1 // pred_check_branch
      %58 = sbr.rel (0) target = $region37
    $region36: #{_forward.5} parent=1 // pred_region
      %60 = vsyncadd [#allocation5], 0
      %s62 = sshll.u32 %s8, 4
      %s63 = int_to_ptr.hbm [resolvable:$true] %s62
      %s64 = sshll.u32 [#allocation6], 4
      %s65 = int_to_ptr.vmem [resolvable:$true] %s64
      %67 = dma.hbm_to_vmem [thread:$0]  %s63, 32, %s65, [#allocation5]
    $region37: #{_forward.5} parent=1 // pred_fallthru
      _
    // Predicated region
    $region38: #{_forward.5} parent=1 // pred_check
      _
    $region39: #{_forward.5} parent=1 // pred_check_branch
      %69 = sbr.rel (0) target = $region41
    $region40: #{_forward.5} parent=1 // pred_region
      %71 = vsyncadd [#allocation8], 0
      %s72 = sshll.u32 %s9, 4
      %s73 = int_to_ptr.hbm [resolvable:$true] %s72
      %s74 = sshll.u32 [#allocation7], 4
      %s75 = int_to_ptr.vmem [resolvable:$true] %s74
      %80 = dma.hbm_to_vmem [thread:$0]  %s73, 512, %s75, [#allocation8], 128, 128, 8
    $region41: #{_forward.5} parent=1 // pred_fallthru
      _
    // Predicated region
    $region42: #{_forward.5} parent=1 // pred_check
      _
    $region43: #{_forward.5} parent=1 // pred_check_branch
      %82 = sbr.rel (0) target = $region45
    $region44: #{_forward.5} parent=1 // pred_region
      _
    $region45: #{_forward.5} parent=1 // pred_fallthru
      _
    // Predicated region
    $region46: #{_forward.5} parent=1 // pred_check
      _
    $region47: #{_forward.5} parent=1 // pred_check_branch
      %84 = sbr.rel (0) target = $region49
    $region48: #{_forward.5} parent=1 // pred_region
      %86 = vsyncadd [#allocation8], 0
      %s87 = sshll.u32 %s11, 4
      %s88 = int_to_ptr.hbm [resolvable:$true] %s87
      %s89 = sshll.u32 [#allocation9], 4
      %s90 = int_to_ptr.vmem [resolvable:$true] %s89
      %95 = dma.hbm_to_vmem [thread:$0]  %s88, 256, %s90, [#allocation8], 128, 128, 8
    $region49: #{_forward.5} parent=1 // pred_fallthru
      _
    // Predicated region
    $region50: #{_forward.5} parent=1 // pred_check
      _
    $region51: #{_forward.5} parent=1 // pred_check_branch
      %97 = sbr.rel (0) target = $region53
    $region52: #{_forward.5} parent=1 // pred_region
      _
    $region53: #{_forward.5} parent=1 // pred_fallthru
      _
    // Predicated region
    $region54: #{_forward.5} parent=1 // pred_check
      _
    $region55: #{_forward.5} parent=1 // pred_check_branch
      %99 = sbr.rel (0) target = $region57
    $region56: #{_forward.5} parent=1 // pred_region
      %101 = dma.done [#allocation3], 32
    $region57: #{_forward.5} parent=1 // pred_fallthru
      _
    // Predicated region
    $region58: #{_forward.5} parent=1 // pred_check
      _
    $region59: #{_forward.5} parent=1 // pred_check_branch
      %103 = sbr.rel (0) target = $region61
    $region60: #{_forward.5} parent=1 // pred_region
      %105 = dma.done [#allocation5], 64
    $region61: #{_forward.5} parent=1 // pred_fallthru
      _
    // Predicated region
    $region62: #{_forward.5} parent=1 // pred_check
      _
    $region63: #{_forward.5} parent=1 // pred_check_branch
      %107 = sbr.rel (0) target = $region65
    $region64: #{_forward.5} parent=1 // pred_region
      %109 = dma.done [#allocation5], 32
    $region65: #{_forward.5} parent=1 // pred_fallthru
      _
    // Predicated region
    $region66: #{_forward.5} parent=1 // pred_check
      _
    $region67: #{_forward.5} parent=1 // pred_check_branch
      %111 = sbr.rel (0) target = $region69
    $region68: #{_forward.5} parent=1 // pred_region
      %113 = dma.done [#allocation8], 512
    $region69: #{_forward.5} parent=1 // pred_fallthru
      _
    // Predicated region
    $region70: #{_forward.5} parent=1 // pred_check
      _
    $region71: #{_forward.5} parent=1 // pred_check_branch
      %115 = sbr.rel (0) target = $region73
    $region72: #{_forward.5} parent=1 // pred_region
      %117 = dma.done [#allocation8], 256
    $region73: #{_forward.5} parent=1 // pred_fallthru
      _
    %v118 = vld [vmem:[#allocation2] sm:$0x3]
    %v119 = vld [vmem:[%s1] sm:$0xff]
    %v120 = vld [vmem:[%s1 + $0x8] sm:$0xff]
    %v121 = vld [vmem:[%s1 + $0x10] sm:$0xff]
    %v122 = vld [vmem:[%s1 + $0x18] sm:$0xff]
    %v123 = vld [vmem:[%s2] sm:$0x1]
    %v125 = vperm.slane %v123, 0
    %vm127 = vcmask 261120
    %v129 = vsel %vm127, %v118, 0
    %131 = vmatpush.msra.mxu0 0.0
    %132 = vmatpush.msra.mxu0 0.0
    %133 = vmatpush.msra.mxu0 0.0
    %134 = vmatpush.msra.mxu0 0.0
    %135 = vmatpush.msra.mxu0 0.0
    %136 = vmatpush.msra.mxu0 0.0
    %137 = vmatpush.msra.mxu0 0.0
    %138 = vmatpush.msra.mxu0 0.0
    %139 = vmatpush.msra.mxu0 0.0
    %140 = vmatpush.msra.mxu0 0.0
    %141 = vmatpush.msra.mxu0 0.0
    %142 = vmatpush.msra.mxu0 0.0
    %143 = vmatpush.msra.mxu0 %v122
    %144 = vmatpush.msra.mxu0 %v121
    %145 = vmatpush.msra.mxu0 %v120
    %146 = vmatpush.msra.mxu0 %v119
    %147 = vmatmul.f32.gmra.mxu0 %v129
    %v148 = vpop.f32.mrf.mxu0
    %v149 = vadd.f32 %v125, %v148
    %150 = vdwg.mxu0
    %v151 = vld [vmem:[%s3] sm:$0x3f]
    %v152 = vld [vmem:[%s3 + $0x8] sm:$0x3f]
    %v153 = vld [vmem:[%s3 + $0x10] sm:$0x3f]
    %v154 = vld [vmem:[%s3 + $0x18] sm:$0x3f]
    %v155 = vld [vmem:[%s3 + $0x20] sm:$0x3f]
    %v156 = vld [vmem:[%s3 + $0x28] sm:$0x3f]
    %v157 = vld [vmem:[%s3 + $0x30] sm:$0x3f]
    %v158 = vld [vmem:[%s3 + $0x38] sm:$0x3f]
    %v159 = vld [vmem:[%s3 + $0x40] sm:$0x3f]
    %v160 = vld [vmem:[%s3 + $0x48] sm:$0x3f]
    %v161 = vld [vmem:[%s3 + $0x50] sm:$0x3f]
    %v162 = vld [vmem:[%s3 + $0x58] sm:$0x3f]
    %v163 = vld [vmem:[%s4] sm:$0xff]
    %v164 = vld [vmem:[%s4 + $0x8] sm:$0xff]
    %v165 = vld [vmem:[%s4 + $0x10] sm:$0xff]
    %v166 = vld [vmem:[%s4 + $0x18] sm:$0xff]
    %v167 = vld [vmem:[%s4 + $0x20] sm:$0xff]
    %v168 = vld [vmem:[%s4 + $0x28] sm:$0xff]
    %v169 = vld [vmem:[%s4 + $0x30] sm:$0xff]
    %v170 = vld [vmem:[%s4 + $0x38] sm:$0xff]
    %v171 = vld [vmem:[%s4 + $0x40] sm:$0xff]
    %v172 = vld [vmem:[%s4 + $0x48] sm:$0xff]
    %v173 = vld [vmem:[%s4 + $0x50] sm:$0xff]
    %v174 = vld [vmem:[%s4 + $0x58] sm:$0xff]
    %v175 = vld [vmem:[%s4 + $0x60] sm:$0xff]
    %v176 = vld [vmem:[%s4 + $0x68] sm:$0xff]
    %v177 = vld [vmem:[%s4 + $0x70] sm:$0xff]
    %v178 = vld [vmem:[%s4 + $0x78] sm:$0xff]
    %v179 = vld [vmem:[%s4 + $0x80] sm:$0xff]
    %v180 = vld [vmem:[%s4 + $0x88] sm:$0xff]
    %v181 = vld [vmem:[%s5] sm:$0xff]
    %v182 = vld [vmem:[%s5 + $0x8] sm:$0xff]
    %v183 = vld [vmem:[#allocation4] sm:$0xf]
    %v184 = vld [vmem:[%s7] sm:$0x1]
    %v186 = vrot.slane %v149, 1
    %v187 = vperm.slane %v149, 0
    %v188 = vperm.slane %v186, 0
    %v191 = vmul.f32 %v151, %v187
    %v192 = vmul.f32 %v152, %v187
    %v193 = vmul.f32 %v153, %v187
    %v194 = vmul.f32 %v154, %v187
    %v195 = vmul.f32 %v155, %v187
    %v196 = vmul.f32 %v156, %v187
    %v197 = vmul.f32 %v157, %v188
    %v198 = vmul.f32 %v158, %v188
    %v199 = vmul.f32 %v159, %v188
    %v200 = vmul.f32 %v160, %v188
    %v201 = vmul.f32 %v161, %v188
    %v202 = vmul.f32 %v162, %v188
    %v211 = vrot.slane %v191, 1
    %v212 = vrot.slane %v192, 1
    %v213 = vrot.slane %v193, 1
    %v214 = vrot.slane %v194, 1
    %v215 = vrot.slane %v197, 1
    %v216 = vrot.slane %v198, 1
    %v217 = vrot.slane %v199, 1
    %v218 = vrot.slane %v200, 1
    %219 = vrot.lane.b32.xlu0 %v211, 16
    %v220 = vpop.permute.xlu0 %219
    %221 = vrot.lane.b32.xlu0 %v212, 16
    %v222 = vpop.permute.xlu0 %221
    %223 = vrot.lane.b32.xlu0 %v213, 16
    %v224 = vpop.permute.xlu0 %223
    %225 = vrot.lane.b32.xlu0 %v214, 16
    %v226 = vpop.permute.xlu0 %225
    %227 = vrot.lane.b32.xlu0 %v215, 16
    %v228 = vpop.permute.xlu0 %227
    %229 = vrot.lane.b32.xlu0 %v216, 16
    %v230 = vpop.permute.xlu0 %229
    %231 = vrot.lane.b32.xlu0 %v217, 16
    %v232 = vpop.permute.xlu0 %231
    %233 = vrot.lane.b32.xlu0 %v218, 16
    %v234 = vpop.permute.xlu0 %233
    %v243 = vrot.slane %v191, 2
    %v244 = vrot.slane %v192, 2
    %v245 = vrot.slane %v193, 2
    %v246 = vrot.slane %v194, 2
    %v247 = vrot.slane %v197, 2
    %v248 = vrot.slane %v198, 2
    %v249 = vrot.slane %v199, 2
    %v250 = vrot.slane %v200, 2
    %251 = vrot.lane.b32.xlu0 %v243, 32
    %v252 = vpop.permute.xlu0 %251
    %253 = vrot.lane.b32.xlu0 %v244, 32
    %v254 = vpop.permute.xlu0 %253
    %255 = vrot.lane.b32.xlu0 %v245, 32
    %v256 = vpop.permute.xlu0 %255
    %257 = vrot.lane.b32.xlu0 %v246, 32
    %v258 = vpop.permute.xlu0 %257
    %259 = vrot.lane.b32.xlu0 %v247, 32
    %v260 = vpop.permute.xlu0 %259
    %261 = vrot.lane.b32.xlu0 %v248, 32
    %v262 = vpop.permute.xlu0 %261
    %263 = vrot.lane.b32.xlu0 %v249, 32
    %v264 = vpop.permute.xlu0 %263
    %265 = vrot.lane.b32.xlu0 %v250, 32
    %v266 = vpop.permute.xlu0 %265
    %277 = vrot.lane.b32.xlu0 %v192, 48
    %v278 = vpop.permute.xlu0 %277
    %279 = vrot.lane.b32.xlu0 %v193, 48
    %v280 = vpop.permute.xlu0 %279
    %281 = vrot.lane.b32.xlu0 %v194, 48
    %v282 = vpop.permute.xlu0 %281
    %283 = vrot.lane.b32.xlu0 %v195, 48
    %v284 = vpop.permute.xlu0 %283
    %285 = vrot.lane.b32.xlu0 %v198, 48
    %v286 = vpop.permute.xlu0 %285
    %287 = vrot.lane.b32.xlu0 %v199, 48
    %v288 = vpop.permute.xlu0 %287
    %289 = vrot.lane.b32.xlu0 %v200, 48
    %v290 = vpop.permute.xlu0 %289
    %291 = vrot.lane.b32.xlu0 %v201, 48
    %v292 = vpop.permute.xlu0 %291
    %v301 = vrot.slane %v195, 1
    %v302 = vrot.slane %v201, 1
    %303 = vrot.lane.b32.xlu0 %v212, 64
    %v304 = vpop.permute.xlu0 %303
    %305 = vrot.lane.b32.xlu0 %v213, 64
    %v306 = vpop.permute.xlu0 %305
    %307 = vrot.lane.b32.xlu0 %v214, 64
    %v308 = vpop.permute.xlu0 %307
    %309 = vrot.lane.b32.xlu0 %v301, 64
    %v310 = vpop.permute.xlu0 %309
    %311 = vrot.lane.b32.xlu0 %v216, 64
    %v312 = vpop.permute.xlu0 %311
    %313 = vrot.lane.b32.xlu0 %v217, 64
    %v314 = vpop.permute.xlu0 %313
    %315 = vrot.lane.b32.xlu0 %v218, 64
    %v316 = vpop.permute.xlu0 %315
    %317 = vrot.lane.b32.xlu0 %v302, 64
    %v318 = vpop.permute.xlu0 %317
    %v327 = vrot.slane %v195, 2
    %v328 = vrot.slane %v201, 2
    %329 = vrot.lane.b32.xlu0 %v244, 80
    %v330 = vpop.permute.xlu0 %329
    %331 = vrot.lane.b32.xlu0 %v245, 80
    %v332 = vpop.permute.xlu0 %331
    %333 = vrot.lane.b32.xlu0 %v246, 80
    %v334 = vpop.permute.xlu0 %333
    %335 = vrot.lane.b32.xlu0 %v327, 80
    %v336 = vpop.permute.xlu0 %335
    %337 = vrot.lane.b32.xlu0 %v248, 80
    %v338 = vpop.permute.xlu0 %337
    %339 = vrot.lane.b32.xlu0 %v249, 80
    %v340 = vpop.permute.xlu0 %339
    %341 = vrot.lane.b32.xlu0 %v250, 80
    %v342 = vpop.permute.xlu0 %341
    %343 = vrot.lane.b32.xlu0 %v328, 80
    %v344 = vpop.permute.xlu0 %343
    %355 = vrot.lane.b32.xlu0 %v193, 96
    %v356 = vpop.permute.xlu0 %355
    %357 = vrot.lane.b32.xlu0 %v194, 96
    %v358 = vpop.permute.xlu0 %357
    %359 = vrot.lane.b32.xlu0 %v195, 96
    %v360 = vpop.permute.xlu0 %359
    %361 = vrot.lane.b32.xlu0 %v196, 96
    %v362 = vpop.permute.xlu0 %361
    %363 = vrot.lane.b32.xlu0 %v199, 96
    %v364 = vpop.permute.xlu0 %363
    %365 = vrot.lane.b32.xlu0 %v200, 96
    %v366 = vpop.permute.xlu0 %365
    %367 = vrot.lane.b32.xlu0 %v201, 96
    %v368 = vpop.permute.xlu0 %367
    %369 = vrot.lane.b32.xlu0 %v202, 96
    %v370 = vpop.permute.xlu0 %369
    %v379 = vrot.slane %v196, 1
    %v380 = vrot.slane %v202, 1
    %381 = vrot.lane.b32.xlu0 %v213, 112
    %v382 = vpop.permute.xlu0 %381
    %383 = vrot.lane.b32.xlu0 %v214, 112
    %v384 = vpop.permute.xlu0 %383
    %385 = vrot.lane.b32.xlu0 %v301, 112
    %v386 = vpop.permute.xlu0 %385
    %387 = vrot.lane.b32.xlu0 %v379, 112
    %v388 = vpop.permute.xlu0 %387
    %389 = vrot.lane.b32.xlu0 %v217, 112
    %v390 = vpop.permute.xlu0 %389
    %391 = vrot.lane.b32.xlu0 %v218, 112
    %v392 = vpop.permute.xlu0 %391
    %393 = vrot.lane.b32.xlu0 %v302, 112
    %v394 = vpop.permute.xlu0 %393
    %395 = vrot.lane.b32.xlu0 %v380, 112
    %v396 = vpop.permute.xlu0 %395
    %v405 = vrot.slane %v196, 2
    %v406 = vrot.slane %v202, 2
    %vm407 = vcmask 130048
    %v408 = vsel %vm407, %v191, %v220
    %v409 = vsel %vm407, %v192, %v222
    %v410 = vsel %vm407, %v193, %v224
    %v411 = vsel %vm407, %v194, %v226
    %v412 = vsel %vm407, %v197, %v228
    %v413 = vsel %vm407, %v198, %v230
    %v414 = vsel %vm407, %v199, %v232
    %v415 = vsel %vm407, %v200, %v234
    %v416 = vsel %vm127, %v408, %v252
    %v417 = vsel %vm127, %v409, %v254
    %v418 = vsel %vm127, %v410, %v256
    %v419 = vsel %vm127, %v411, %v258
    %v420 = vsel %vm127, %v412, %v260
    %v421 = vsel %vm127, %v413, %v262
    %v422 = vsel %vm127, %v414, %v264
    %v423 = vsel %vm127, %v415, %v266
    %vm424 = vcmask 392192
    %v425 = vsel %vm424, %v416, %v278
    %v426 = vsel %vm424, %v417, %v280
    %v427 = vsel %vm424, %v418, %v282
    %v428 = vsel %vm424, %v419, %v284
    %v429 = vsel %vm424, %v420, %v286
    %v430 = vsel %vm424, %v421, %v288
    %v431 = vsel %vm424, %v422, %v290
    %v432 = vsel %vm424, %v423, %v292
    %vm433 = vcmask 523264
    %v434 = vsel %vm433, %v425, %v304
    %v435 = vsel %vm433, %v426, %v306
    %v436 = vsel %vm433, %v427, %v308
    %v437 = vsel %vm433, %v428, %v310
    %v438 = vsel %vm433, %v429, %v312
    %v439 = vsel %vm433, %v430, %v314
    %v440 = vsel %vm433, %v431, %v316
    %v441 = vsel %vm433, %v432, %v318
    %vm442 = vcmask 654336
    %v443 = vsel %vm442, %v434, %v330
    %v444 = vsel %vm442, %v435, %v332
    %v445 = vsel %vm442, %v436, %v334
    %v446 = vsel %vm442, %v437, %v336
    %v447 = vsel %vm442, %v438, %v338
    %v448 = vsel %vm442, %v439, %v340
    %v449 = vsel %vm442, %v440, %v342
    %v450 = vsel %vm442, %v441, %v344
    %vm451 = vcmask 785408
    %v452 = vsel %vm451, %v443, %v356
    %v453 = vsel %vm451, %v444, %v358
    %v454 = vsel %vm451, %v445, %v360
    %v455 = vsel %vm451, %v446, %v362
    %v456 = vsel %vm451, %v447, %v364
    %v457 = vsel %vm451, %v448, %v366
    %v458 = vsel %vm451, %v449, %v368
    %v459 = vsel %vm451, %v450, %v370
    %vm460 = vcmask 916480
    %v461 = vsel %vm460, %v452, %v382
    %v462 = vsel %vm460, %v453, %v384
    %v463 = vsel %vm460, %v454, %v386
    %v464 = vsel %vm460, %v455, %v388
    %v465 = vsel %vm460, %v456, %v390
    %v466 = vsel %vm460, %v457, %v392
    %v467 = vsel %vm460, %v458, %v394
    %v468 = vsel %vm460, %v459, %v396
    %v477 = vrot.slane %v245, 4
    %v478 = vrot.slane %v246, 4
    %v479 = vrot.slane %v327, 4
    %v480 = vrot.slane %v405, 4
    %v481 = vrot.slane %v249, 4
    %v482 = vrot.slane %v250, 4
    %v483 = vrot.slane %v328, 4
    %v484 = vrot.slane %v406, 4
    %vm485 = vcmask 1043456
    %v486 = vsel %vm485, %v461, %v477
    %v487 = vsel %vm485, %v462, %v478
    %v488 = vsel %vm485, %v463, %v479
    %v489 = vsel %vm485, %v464, %v480
    %v490 = vsel %vm485, %v465, %v481
    %v491 = vsel %vm485, %v466, %v482
    %v492 = vsel %vm485, %v467, %v483
    %v493 = vsel %vm485, %v468, %v484
    %494 = vst [vmem:[#allocation1] ss:$2 sm:$0xff] %v486
    %s495 = scalar_lea.vmem [#allocation1], 1
    %496 = vst [vmem:[%s495] ss:$2 sm:$0xff] %v487
    %s497 = scalar_lea.vmem [#allocation1], 16
    %498 = vst [vmem:[%s497] ss:$2 sm:$0xff] %v488
    %s499 = scalar_lea.vmem [#allocation1], 17
    %500 = vst [vmem:[%s499] ss:$2 sm:$0xff] %v489
    %s501 = scalar_lea.vmem [#allocation1], 32
    %502 = vst [vmem:[%s501] ss:$2 sm:$0xff] %v490
    %s503 = scalar_lea.vmem [#allocation1], 33
    %504 = vst [vmem:[%s503] ss:$2 sm:$0xff] %v491
    %s505 = scalar_lea.vmem [#allocation1], 48
    %506 = vst [vmem:[%s505] ss:$2 sm:$0xff] %v492
    %s507 = scalar_lea.vmem [#allocation1], 49
    %508 = vst [vmem:[%s507] ss:$2 sm:$0xff] %v493
    %v509 = vld.sshfl [vmem:[#allocation1] sm:$0xff pattern:$0x75316420]
    %v510 = vld.sshfl [vmem:[#allocation1 + $0x8] sm:$0xff pattern:$0x75316420]
    %v511 = vld.sshfl [vmem:[#allocation1 + $0x10] sm:$0xff pattern:$0x75316420]
    %v512 = vld.sshfl [vmem:[#allocation1 + $0x18] sm:$0xff pattern:$0x75316420]
    %v513 = vld.sshfl [vmem:[#allocation1 + $0x20] sm:$0xff pattern:$0x75316420]
    %v514 = vld.sshfl [vmem:[#allocation1 + $0x28] sm:$0xff pattern:$0x75316420]
    %v515 = vld.sshfl [vmem:[#allocation1 + $0x30] sm:$0xff pattern:$0x75316420]
    %v516 = vld.sshfl [vmem:[#allocation1 + $0x38] sm:$0xff pattern:$0x75316420]
    %v521 = vsel %vm407, %v510, 0
    %v523 = vsel %vm407, %v512, 0
    %v525 = vsel %vm407, %v514, 0
    %v527 = vsel %vm407, %v516, 0
    %529 = vmatpush.msra.mxu0 %v178
    %530 = vmatpush.msra.mxu0 %v177
    %531 = vmatpush.msra.mxu0 %v176
    %532 = vmatpush.msra.mxu0 %v175
    %533 = vmatpush.msra.mxu0 %v174
    %534 = vmatpush.msra.mxu0 %v173
    %535 = vmatpush.msra.mxu0 %v172
    %536 = vmatpush.msra.mxu0 %v171
    %537 = vmatpush.msra.mxu0 %v170
    %538 = vmatpush.msra.mxu0 %v169
    %539 = vmatpush.msra.mxu0 %v168
    %540 = vmatpush.msra.mxu0 %v167
    %541 = vmatpush.msra.mxu0 %v166
    %542 = vmatpush.msra.mxu0 %v165
    %543 = vmatpush.msra.mxu0 %v164
    %544 = vmatpush.msra.mxu0 %v163
    %545 = vmatmul.f32.gmra.mxu0 %v509
    %v546 = vpop.f32.mrf.mxu0
    %v547 = vadd.f32 0.0, %v546
    %548 = vmatmul.f32.gmra.mxu0 %v511
    %v549 = vpop.f32.mrf.mxu0
    %v550 = vadd.f32 0.0, %v549
    %551 = vmatmul.f32.gmra.mxu0 %v513
    %v552 = vpop.f32.mrf.mxu0
    %v553 = vadd.f32 0.0, %v552
    %554 = vmatmul.f32.gmra.mxu0 %v515
    %v555 = vpop.f32.mrf.mxu0
    %v556 = vadd.f32 0.0, %v555
    %557 = vdwg.mxu0
    %558 = vmatpush.msra.mxu0 0.0
    %559 = vmatpush.msra.mxu0 0.0
    %560 = vmatpush.msra.mxu0 0.0
    %561 = vmatpush.msra.mxu0 0.0
    %562 = vmatpush.msra.mxu0 0.0
    %563 = vmatpush.msra.mxu0 0.0
    %564 = vmatpush.msra.mxu0 0.0
    %565 = vmatpush.msra.mxu0 0.0
    %566 = vmatpush.msra.mxu0 0.0
    %567 = vmatpush.msra.mxu0 0.0
    %568 = vmatpush.msra.mxu0 0.0
    %569 = vmatpush.msra.mxu0 0.0
    %570 = vmatpush.msra.mxu0 0.0
    %571 = vmatpush.msra.mxu0 0.0
    %572 = vmatpush.msra.mxu0 %v180
    %573 = vmatpush.msra.mxu0 %v179
    %574 = vmatmul.f32.gmra.mxu0 %v521
    %v575 = vpop.f32.mrf.mxu0
    %v576 = vadd.f32 %v547, %v575
    %577 = vmatmul.f32.gmra.mxu0 %v523
    %v578 = vpop.f32.mrf.mxu0
    %v579 = vadd.f32 %v550, %v578
    %580 = vmatmul.f32.gmra.mxu0 %v525
    %v581 = vpop.f32.mrf.mxu0
    %v582 = vadd.f32 %v553, %v581
    %583 = vmatmul.f32.gmra.mxu0 %v527
    %v584 = vpop.f32.mrf.mxu0
    %v585 = vadd.f32 %v556, %v584
    %586 = vdwg.mxu0
    %v591 = vrot.slane %v576, 4
    %v592 = vrot.slane %v579, 4
    %v593 = vrot.slane %v582, 4
    %v594 = vrot.slane %v585, 4
    %v599 = vmul.f32 %v149, %v149
    %v601 = vsel %vm407, %v599, 0
    %603 = vmatpush.msra.mxu0 0.0
    %604 = vmatpush.msra.mxu0 0.0
    %605 = vmatpush.msra.mxu0 0.0
    %606 = vmatpush.msra.mxu0 0.0
    %607 = vmatpush.msra.mxu0 0.0
    %608 = vmatpush.msra.mxu0 0.0
    %609 = vmatpush.msra.mxu0 0.0
    %610 = vmatpush.msra.mxu0 0.0
    %611 = vmatpush.msra.mxu0 0.0
    %612 = vmatpush.msra.mxu0 0.0
    %613 = vmatpush.msra.mxu0 0.0
    %614 = vmatpush.msra.mxu0 0.0
    %615 = vmatpush.msra.mxu0 0.0
    %616 = vmatpush.msra.mxu0 0.0
    %617 = vmatpush.msra.mxu0 %v182
    %618 = vmatpush.msra.mxu0 %v181
    %619 = vmatmul.f32.gmra.mxu0 %v601
    %v620 = vpop.f32.mrf.mxu0
    %v621 = vadd.f32 1e-08, %v620
    %622 = vdwg.mxu0
    %v623 = vrsqrt.pop %v621
    %v624 = vmul.f32 %v623, %v621
    %v625 = vmul.f32 %v624, %v623
    %v626 = vmul.f32 0.5, %v625
    %v627 = vsub.f32 1.5, %v626
    %v628 = vmul.f32 %v623, %v627
    %vm629 = vweird.f32 %v621
    %vm630 = vweird.f32 %v623
    %vm631 = vmor %vm629, %vm630
    %v632 = vsel %vm631, %v623, %v628
    %v634 = vrot.slane %v632, 1
    %v635 = vperm.slane %v632, 0
    %v636 = vperm.slane %v634, 0
    %v639 = vmul.f32 %v576, %v635
    %v640 = vmul.f32 %v591, %v635
    %v641 = vmul.f32 %v579, %v635
    %v642 = vmul.f32 %v592, %v635
    %v643 = vmul.f32 %v582, %v636
    %v644 = vmul.f32 %v593, %v636
    %v645 = vmul.f32 %v585, %v636
    %v646 = vmul.f32 %v594, %v636
    %v647 = vperm.slane %v183, 0
    %v648 = vlaneseq
    %v649 = vshrl.u32 %v648, 7
    %651 = vset.pattern.permute.xlu0 %v649
    %652 = vperm.xlu0 %651, %v647
    %v653 = vpop.permute.xlu0 %652
    %v654 = vperm.slane %v183, 1
    %v655 = vlaneseq
    %v656 = vshrl.u32 %v655, 7
    %658 = vset.pattern.permute.xlu0 %v656
    %659 = vperm.xlu0 %658, %v654
    %v660 = vpop.permute.xlu0 %659
    %v661 = vperm.slane %v183, 2
    %v662 = vlaneseq
    %v663 = vshrl.u32 %v662, 7
    %665 = vset.pattern.permute.xlu0 %v663
    %666 = vperm.xlu0 %665, %v661
    %v667 = vpop.permute.xlu0 %666
    %v668 = vperm.slane %v183, 3
    %v669 = vlaneseq
    %v670 = vshrl.u32 %v669, 7
    %672 = vset.pattern.permute.xlu0 %v670
    %673 = vperm.xlu0 %672, %v668
    %v674 = vpop.permute.xlu0 %673
    %v675 = vadd.f32 %v639, %v653
    %v676 = vadd.f32 %v640, %v660
    %v677 = vadd.f32 %v641, %v667
    %v678 = vadd.f32 %v642, %v674
    %v679 = vadd.f32 %v643, %v653
    %v680 = vadd.f32 %v644, %v660
    %v681 = vadd.f32 %v645, %v667
    %v682 = vadd.f32 %v646, %v674
    %v684 = vperm.slane %v184, 0
    %v686 = vadd.f32 %v675, %v684
    %v687 = vadd.f32 %v676, %v684
    %v688 = vadd.f32 %v677, %v684
    %v689 = vadd.f32 %v678, %v684
    %v690 = vadd.f32 %v679, %v684
    %v691 = vadd.f32 %v680, %v684
    %v692 = vadd.f32 %v681, %v684
    %v693 = vadd.f32 %v682, %v684
    %vm694 = vcmp.ge.f32.partialorder %v686, 0.0
    %vm695 = vcmp.ge.f32.partialorder %v687, 0.0
    %vm696 = vcmp.ge.f32.partialorder %v688, 0.0
    %vm697 = vcmp.ge.f32.partialorder %v689, 0.0
    %vm698 = vcmp.ge.f32.partialorder %v690, 0.0
    %vm699 = vcmp.ge.f32.partialorder %v691, 0.0
    %vm700 = vcmp.ge.f32.partialorder %v692, 0.0
    %vm701 = vcmp.ge.f32.partialorder %v693, 0.0
    %v702 = vmul.f32 %v686, 0.2
    %v703 = vmul.f32 %v687, 0.2
    %v704 = vmul.f32 %v688, 0.2
    %v705 = vmul.f32 %v689, 0.2
    %v706 = vmul.f32 %v690, 0.2
    %v707 = vmul.f32 %v691, 0.2
    %v708 = vmul.f32 %v692, 0.2
    %v709 = vmul.f32 %v693, 0.2
    %v710 = vsel %vm694, %v686, %v702
    %v711 = vsel %vm695, %v687, %v703
    %v712 = vsel %vm696, %v688, %v704
    %v713 = vsel %vm697, %v689, %v705
    %v714 = vsel %vm698, %v690, %v706
    %v715 = vsel %vm699, %v691, %v707
    %v716 = vsel %vm700, %v692, %v708
    %v717 = vsel %vm701, %v693, %v709
    %v718 = vmul.f32 %v710, 1.4142135
    %v719 = vmul.f32 %v711, 1.4142135
    %v720 = vmul.f32 %v712, 1.4142135
    %v721 = vmul.f32 %v713, 1.4142135
    %v722 = vmul.f32 %v714, 1.4142135
    %v723 = vmul.f32 %v715, 1.4142135
    %v724 = vmul.f32 %v716, 1.4142135
    %v725 = vmul.f32 %v717, 1.4142135
    %vm726 = vcmask 125952
    %727 = vst.msk [vmem:[%s13] sm:$0xf] %vm726, %v718
    %728 = vst.msk [vmem:[%s13 + $0x4] sm:$0xf] %vm726, %v719
    %729 = vst.msk [vmem:[%s13 + $0x8] sm:$0xf] %vm726, %v720
    %730 = vst.msk [vmem:[%s13 + $0xc] sm:$0xf] %vm726, %v721
    %731 = vst.msk [vmem:[%s13 + $0x10] sm:$0xf] %vm726, %v722
    %732 = vst.msk [vmem:[%s13 + $0x14] sm:$0xf] %vm726, %v723
    %733 = vst.msk [vmem:[%s13 + $0x18] sm:$0xf] %vm726, %v724
    %734 = vst.msk [vmem:[%s13 + $0x1c] sm:$0xf] %vm726, %v725
    %v735 = vld [vmem:[#allocation6] sm:$0x3]
    %v736 = vld [vmem:[#allocation7] sm:$0xff]
    %v737 = vld [vmem:[#allocation7 + $0x8] sm:$0xff]
    %v738 = vld [vmem:[#allocation7 + $0x10] sm:$0xff]
    %v739 = vld [vmem:[#allocation7 + $0x18] sm:$0xff]
    %v740 = vld [vmem:[%s10] sm:$0x1]
    %v742 = vperm.slane %v740, 0
    %v745 = vsel %vm127, %v735, 0
    %747 = vmatpush.msra.mxu0 0.0
    %748 = vmatpush.msra.mxu0 0.0
    %749 = vmatpush.msra.mxu0 0.0
    %750 = vmatpush.msra.mxu0 0.0
    %751 = vmatpush.msra.mxu0 0.0
    %752 = vmatpush.msra.mxu0 0.0
    %753 = vmatpush.msra.mxu0 0.0
    %754 = vmatpush.msra.mxu0 0.0
    %755 = vmatpush.msra.mxu0 0.0
    %756 = vmatpush.msra.mxu0 0.0
    %757 = vmatpush.msra.mxu0 0.0
    %758 = vmatpush.msra.mxu0 0.0
    %759 = vmatpush.msra.mxu0 %v739
    %760 = vmatpush.msra.mxu0 %v738
    %761 = vmatpush.msra.mxu0 %v737
    %762 = vmatpush.msra.mxu0 %v736
    %763 = vmatmul.f32.gmra.mxu0 %v745
    %v764 = vpop.f32.mrf.mxu0
    %v765 = vadd.f32 %v742, %v764
    %766 = vdwg.mxu0
    %v767 = vld [vmem:[#allocation9] sm:$0xff]
    %v768 = vld [vmem:[#allocation9 + $0x8] sm:$0xff]
    %v769 = vld [vmem:[%s12] sm:$0x1]
    %v771 = vrot.slane %v765, 1
    %v772 = vperm.slane %v765, 0
    %v773 = vperm.slane %v771, 0
    %v776 = vmul.f32 %v718, %v772
    %v777 = vmul.f32 %v719, %v772
    %v778 = vmul.f32 %v720, %v772
    %v779 = vmul.f32 %v721, %v772
    %v780 = vmul.f32 %v722, %v773
    %v781 = vmul.f32 %v723, %v773
    %v782 = vmul.f32 %v724, %v773
    %v783 = vmul.f32 %v725, %v773
    %792 = vst [vmem:[#allocation1] ss:$2 sm:$0xff] %v776
    %s793 = scalar_lea.vmem [#allocation1], 1
    %794 = vst [vmem:[%s793] ss:$2 sm:$0xff] %v777
    %s795 = scalar_lea.vmem [#allocation1], 16
    %796 = vst [vmem:[%s795] ss:$2 sm:$0xff] %v778
    %s797 = scalar_lea.vmem [#allocation1], 17
    %798 = vst [vmem:[%s797] ss:$2 sm:$0xff] %v779
    %s799 = scalar_lea.vmem [#allocation1], 32
    %800 = vst [vmem:[%s799] ss:$2 sm:$0xff] %v780
    %s801 = scalar_lea.vmem [#allocation1], 33
    %802 = vst [vmem:[%s801] ss:$2 sm:$0xff] %v781
    %s803 = scalar_lea.vmem [#allocation1], 48
    %804 = vst [vmem:[%s803] ss:$2 sm:$0xff] %v782
    %s805 = scalar_lea.vmem [#allocation1], 49
    %806 = vst [vmem:[%s805] ss:$2 sm:$0xff] %v783
    %v807 = vld.sshfl [vmem:[#allocation1] sm:$0xff pattern:$0x75316420]
    %v808 = vld.sshfl [vmem:[#allocation1 + $0x10] sm:$0xff pattern:$0x75316420]
    %v809 = vld.sshfl [vmem:[#allocation1 + $0x20] sm:$0xff pattern:$0x75316420]
    %v810 = vld.sshfl [vmem:[#allocation1 + $0x30] sm:$0xff pattern:$0x75316420]
    %v811 = vsel %vm407, %v807, 0
    %v813 = vsel %vm407, %v808, 0
    %v815 = vsel %vm407, %v809, 0
    %v817 = vsel %vm407, %v810, 0
    %819 = vmatpush.msra.mxu0 0.0
    %820 = vmatpush.msra.mxu0 0.0
    %821 = vmatpush.msra.mxu0 0.0
    %822 = vmatpush.msra.mxu0 0.0
    %823 = vmatpush.msra.mxu0 0.0
    %824 = vmatpush.msra.mxu0 0.0
    %825 = vmatpush.msra.mxu0 0.0
    %826 = vmatpush.msra.mxu0 0.0
    %827 = vmatpush.msra.mxu0 0.0
    %828 = vmatpush.msra.mxu0 0.0
    %829 = vmatpush.msra.mxu0 0.0
    %830 = vmatpush.msra.mxu0 0.0
    %831 = vmatpush.msra.mxu0 0.0
    %832 = vmatpush.msra.mxu0 0.0
    %833 = vmatpush.msra.mxu0 %v768
    %834 = vmatpush.msra.mxu0 %v767
    %835 = vmatmul.f32.gmra.mxu0 %v811
    %v836 = vpop.f32.mrf.mxu0
    %v837 = vadd.f32 0.0, %v836
    %838 = vmatmul.f32.gmra.mxu0 %v813
    %v839 = vpop.f32.mrf.mxu0
    %v840 = vadd.f32 0.0, %v839
    %841 = vmatmul.f32.gmra.mxu0 %v815
    %v842 = vpop.f32.mrf.mxu0
    %v843 = vadd.f32 0.0, %v842
    %844 = vmatmul.f32.gmra.mxu0 %v817
    %v845 = vpop.f32.mrf.mxu0
    %v846 = vadd.f32 0.0, %v845
    %847 = vdwg.mxu0
    %v852 = vrot.slane %v837, 4
    %v853 = vrot.slane %v840, 4
    %v854 = vrot.slane %v843, 4
    %v855 = vrot.slane %v846, 4
    %v861 = vperm.slane %v769, 0
    %v863 = vadd.f32 %v837, %v861
    %v864 = vadd.f32 %v852, %v861
    %v865 = vadd.f32 %v840, %v861
    %v866 = vadd.f32 %v853, %v861
    %v867 = vadd.f32 %v843, %v861
    %v868 = vadd.f32 %v854, %v861
    %v869 = vadd.f32 %v846, %v861
    %v870 = vadd.f32 %v855, %v861
    %vm871 = vcmask 19456
    %872 = vst.msk [vmem:[%s14] sm:$0xf] %vm871, %v863
    %873 = vst.msk [vmem:[%s14 + $0x4] sm:$0xf] %vm871, %v864
    %874 = vst.msk [vmem:[%s14 + $0x8] sm:$0xf] %vm871, %v865
    %875 = vst.msk [vmem:[%s14 + $0xc] sm:$0xf] %vm871, %v866
    %876 = vst.msk [vmem:[%s14 + $0x10] sm:$0xf] %vm871, %v867
    %877 = vst.msk [vmem:[%s14 + $0x14] sm:$0xf] %vm871, %v868
    %878 = vst.msk [vmem:[%s14 + $0x18] sm:$0xf] %vm871, %v869
    %879 = vst.msk [vmem:[%s14 + $0x1c] sm:$0xf] %vm871, %v870
    // Predicated region
    $region74: #{_forward.5} parent=1 // pred_check
      _
    $region75: #{_forward.5} parent=1 // pred_check_branch
      %881 = sbr.rel (0) target = $region77
    $region76: #{_forward.5} parent=1 // pred_region
      _
    $region77: #{_forward.5} parent=1 // pred_fallthru
      _
    // Predicated region
    $region78: #{_forward.5} parent=1 // pred_check
      _
    $region79: #{_forward.5} parent=1 // pred_check_branch
      %883 = sbr.rel (0) target = $region81
    $region80: #{_forward.5} parent=1 // pred_region
      _
    $region81: #{_forward.5} parent=1 // pred_fallthru
      _
    // Predicated region
    $region82: #{_forward.5} parent=1 // pred_check
      _
    $region83: #{_forward.5} parent=1 // pred_check_branch
      %885 = sbr.rel (0) target = $region85
    $region84: #{_forward.5} parent=1 // pred_region
      _
    $region85: #{_forward.5} parent=1 // pred_fallthru
      _
    // Predicated region
    $region86: #{_forward.5} parent=1 // pred_check
      _
    $region87: #{_forward.5} parent=1 // pred_check_branch
      %887 = sbr.rel (0) target = $region89
    $region88: #{_forward.5} parent=1 // pred_region
      _
    $region89: #{_forward.5} parent=1 // pred_fallthru
      _
    %888 = vsyncpa [#allocation3], 1
    %889 = vsyncpa [#allocation5], 1
    %890 = vsyncpa [#allocation8], 1

// kernel: _forward.7
$region0: #{_forward.7}
  #allocation0 [shape = 'u32[]', space=smem, size = 0x4, offset = 0x4, fixed_abs, tag = 'smem constant byte address 0x4 - core index']
  #allocation1 [shape = 'u32[72,128]{1,0:T(1,128)}', space=vmem, size = 0x9000, scoped, tag = 'internal scratch']
  %s0 = inlined_call_operand.vmem [shape: f32[2,32], index: 0, kind: input, shape index: {}, may-alias: {0,8}]
  %s1 = inlined_call_operand.vmem [shape: f32[32,16], index: 1, kind: input, shape index: {}]
  %s2 = inlined_call_operand.vmem [shape: f32[1,16], index: 2, kind: input, shape index: {}, may-alias: {2,10}]
  %s3 = inlined_call_operand.vmem [shape: f32[2,10,10,16], index: 3, kind: input, shape index: {}]
  %s4 = inlined_call_operand.vmem [shape: f32[144,16], index: 4, kind: input, shape index: {}]
  %s5 = inlined_call_operand.vmem [shape: f32[16,16], index: 5, kind: input, shape index: {}]
  %s6 = inlined_call_operand.vmem [shape: f32[8,8], index: 6, kind: input, shape index: {}]
  %s7 = inlined_call_operand.vmem [shape: f32[1,16], index: 7, kind: input, shape index: {}]
  %s8 = inlined_call_operand.vmem [shape: f32[2,32], index: 8, kind: input, shape index: {}, may-alias: {0,8}]
  %s9 = inlined_call_operand.vmem [shape: f32[32,16], index: 9, kind: input, shape index: {}]
  %s10 = inlined_call_operand.vmem [shape: f32[1,16], index: 10, kind: input, shape index: {}, may-alias: {2,10}]
  %s11 = inlined_call_operand.vmem [shape: f32[16,3], index: 11, kind: input, shape index: {}]
  %s12 = inlined_call_operand.vmem [shape: f32[1,3], index: 12, kind: input, shape index: {}]
  %s13 = inlined_call_operand.vmem [shape: f32[2,8,8,16], index: 13, kind: output, shape index: {0}]
  %s14 = inlined_call_operand.vmem [shape: f32[2,8,8,3], index: 14, kind: output, shape index: {1}]
  %15 = xla_tuple %s13, %s14
  %s16 = sld [smem:[#allocation0]]
  $region70: #{_forward.7} parent=0
    _
  %s18 = ssub.s32 1, %s16
  %s19 = scalar_select 0, %s18, %s16
  // Predicated region
  $region2: #{_forward.7} parent=0 // pred_check
    _
  $region3: #{_forward.7} parent=0 // pred_check_branch
    %21 = sbr.rel (0) target = $region5
  $region4: #{_forward.7} parent=0 // pred_region
    _
  $region5: #{_forward.7} parent=0 // pred_fallthru
    _
  // Predicated region
  $region6: #{_forward.7} parent=0 // pred_check
    _
  $region7: #{_forward.7} parent=0 // pred_check_branch
    %23 = sbr.rel (0) target = $region9
  $region8: #{_forward.7} parent=0 // pred_region
    _
  $region9: #{_forward.7} parent=0 // pred_fallthru
    _
  // Predicated region
  $region10: #{_forward.7} parent=0 // pred_check
    _
  $region11: #{_forward.7} parent=0 // pred_check_branch
    %25 = sbr.rel (0) target = $region13
  $region12: #{_forward.7} parent=0 // pred_region
    _
  $region13: #{_forward.7} parent=0 // pred_fallthru
    _
  // Predicated region
  $region14: #{_forward.7} parent=0 // pred_check
    _
  $region15: #{_forward.7} parent=0 // pred_check_branch
    %27 = sbr.rel (0) target = $region17
  $region16: #{_forward.7} parent=0 // pred_region
    _
  $region17: #{_forward.7} parent=0 // pred_fallthru
    _
  // Predicated region
  $region18: #{_forward.7} parent=0 // pred_check
    _
  $region19: #{_forward.7} parent=0 // pred_check_branch
    %29 = sbr.rel (0) target = $region21
  $region20: #{_forward.7} parent=0 // pred_region
    _
  $region21: #{_forward.7} parent=0 // pred_fallthru
    _
  // Predicated region
  $region22: #{_forward.7} parent=0 // pred_check
    _
  $region23: #{_forward.7} parent=0 // pred_check_branch
    %31 = sbr.rel (0) target = $region25
  $region24: #{_forward.7} parent=0 // pred_region
    _
  $region25: #{_forward.7} parent=0 // pred_fallthru
    _
  // Predicated region
  $region26: #{_forward.7} parent=0 // pred_check
    _
  $region27: #{_forward.7} parent=0 // pred_check_branch
    %33 = sbr.rel (0) target = $region29
  $region28: #{_forward.7} parent=0 // pred_region
    _
  $region29: #{_forward.7} parent=0 // pred_fallthru
    _
  // Predicated region
  $region30: #{_forward.7} parent=0 // pred_check
    _
  $region31: #{_forward.7} parent=0 // pred_check_branch
    %35 = sbr.rel (0) target = $region33
  $region32: #{_forward.7} parent=0 // pred_region
    _
  $region33: #{_forward.7} parent=0 // pred_fallthru
    _
  // Predicated region
  $region34: #{_forward.7} parent=0 // pred_check
    _
  $region35: #{_forward.7} parent=0 // pred_check_branch
    %37 = sbr.rel (0) target = $region37
  $region36: #{_forward.7} parent=0 // pred_region
    _
  $region37: #{_forward.7} parent=0 // pred_fallthru
    _
  // Predicated region
  $region38: #{_forward.7} parent=0 // pred_check
    _
  $region39: #{_forward.7} parent=0 // pred_check_branch
    %39 = sbr.rel (0) target = $region41
  $region40: #{_forward.7} parent=0 // pred_region
    _
  $region41: #{_forward.7} parent=0 // pred_fallthru
    _
  // Predicated region
  $region42: #{_forward.7} parent=0 // pred_check
    _
  $region43: #{_forward.7} parent=0 // pred_check_branch
    %41 = sbr.rel (0) target = $region45
  $region44: #{_forward.7} parent=0 // pred_region
    _
  $region45: #{_forward.7} parent=0 // pred_fallthru
    _
  // Predicated region
  $region46: #{_forward.7} parent=0 // pred_check
    _
  $region47: #{_forward.7} parent=0 // pred_check_branch
    %43 = sbr.rel (0) target = $region49
  $region48: #{_forward.7} parent=0 // pred_region
    _
  $region49: #{_forward.7} parent=0 // pred_fallthru
    _
  // Predicated region
  $region50: #{_forward.7} parent=0 // pred_check
    _
  $region51: #{_forward.7} parent=0 // pred_check_branch
    %45 = sbr.rel (0) target = $region53
  $region52: #{_forward.7} parent=0 // pred_region
    _
  $region53: #{_forward.7} parent=0 // pred_fallthru
    _
  %v46 = vld [vmem:[%s0] sm:$0x3]
  %v47 = vld [vmem:[%s1] sm:$0xff]
  %v48 = vld [vmem:[%s1 + $0x8] sm:$0xff]
  %v49 = vld [vmem:[%s1 + $0x10] sm:$0xff]
  %v50 = vld [vmem:[%s1 + $0x18] sm:$0xff]
  %v51 = vld [vmem:[%s2] sm:$0x1]
  %v53 = vperm.slane %v51, 0
  %vm55 = vcmask 261120
  %v57 = vsel %vm55, %v46, 0
  %59 = vmatpush.msra.mxu0 0.0
  %60 = vmatpush.msra.mxu0 0.0
  %61 = vmatpush.msra.mxu0 0.0
  %62 = vmatpush.msra.mxu0 0.0
  %63 = vmatpush.msra.mxu0 0.0
  %64 = vmatpush.msra.mxu0 0.0
  %65 = vmatpush.msra.mxu0 0.0
  %66 = vmatpush.msra.mxu0 0.0
  %67 = vmatpush.msra.mxu0 0.0
  %68 = vmatpush.msra.mxu0 0.0
  %69 = vmatpush.msra.mxu0 0.0
  %70 = vmatpush.msra.mxu0 0.0
  %71 = vmatpush.msra.mxu0 %v50
  %72 = vmatpush.msra.mxu0 %v49
  %73 = vmatpush.msra.mxu0 %v48
  %74 = vmatpush.msra.mxu0 %v47
  %75 = vmatmul.f32.gmra.mxu0 %v57
  %v76 = vpop.f32.mrf.mxu0
  %v77 = vadd.f32 %v53, %v76
  %78 = vdwg.mxu0
  %v79 = vld [vmem:[%s3] sm:$0xff]
  %v80 = vld [vmem:[%s3 + $0x8] sm:$0x3]
  %v81 = vld [vmem:[%s3 + $0x10] sm:$0xff]
  %v82 = vld [vmem:[%s3 + $0x18] sm:$0x3]
  %v83 = vld [vmem:[%s3 + $0x20] sm:$0xff]
  %v84 = vld [vmem:[%s3 + $0x28] sm:$0x3]
  %v85 = vld [vmem:[%s3 + $0x30] sm:$0xff]
  %v86 = vld [vmem:[%s3 + $0x38] sm:$0x3]
  %v87 = vld [vmem:[%s3 + $0x40] sm:$0xff]
  %v88 = vld [vmem:[%s3 + $0x48] sm:$0x3]
  %v89 = vld [vmem:[%s3 + $0x50] sm:$0xff]
  %v90 = vld [vmem:[%s3 + $0x58] sm:$0x3]
  %v91 = vld [vmem:[%s3 + $0x60] sm:$0xff]
  %v92 = vld [vmem:[%s3 + $0x68] sm:$0x3]
  %v93 = vld [vmem:[%s3 + $0x70] sm:$0xff]
  %v94 = vld [vmem:[%s3 + $0x78] sm:$0x3]
  %v95 = vld [vmem:[%s3 + $0x80] sm:$0xff]
  %v96 = vld [vmem:[%s3 + $0x88] sm:$0x3]
  %v97 = vld [vmem:[%s3 + $0x90] sm:$0xff]
  %v98 = vld [vmem:[%s3 + $0x98] sm:$0x3]
  %v99 = vld [vmem:[%s3 + $0xa0] sm:$0xff]
  %v100 = vld [vmem:[%s3 + $0xa8] sm:$0x3]
  %v101 = vld [vmem:[%s3 + $0xb0] sm:$0xff]
  %v102 = vld [vmem:[%s3 + $0xb8] sm:$0x3]
  %v103 = vld [vmem:[%s3 + $0xc0] sm:$0xff]
  %v104 = vld [vmem:[%s3 + $0xc8] sm:$0x3]
  %v105 = vld [vmem:[%s3 + $0xd0] sm:$0xff]
  %v106 = vld [vmem:[%s3 + $0xd8] sm:$0x3]
  %v107 = vld [vmem:[%s3 + $0xe0] sm:$0xff]
  %v108 = vld [vmem:[%s3 + $0xe8] sm:$0x3]
  %v109 = vld [vmem:[%s3 + $0xf0] sm:$0xff]
  %v110 = vld [vmem:[%s3 + $0xf8] sm:$0x3]
  %v111 = vld [vmem:[%s3 + $0x100] sm:$0xff]
  %v112 = vld [vmem:[%s3 + $0x108] sm:$0x3]
  %v113 = vld [vmem:[%s3 + $0x110] sm:$0xff]
  %v114 = vld [vmem:[%s3 + $0x118] sm:$0x3]
  %v115 = vld [vmem:[%s3 + $0x120] sm:$0xff]
  %v116 = vld [vmem:[%s3 + $0x128] sm:$0x3]
  %v117 = vld [vmem:[%s3 + $0x130] sm:$0xff]
  %v118 = vld [vmem:[%s3 + $0x138] sm:$0x3]
  %v119 = vld [vmem:[%s4] sm:$0xff]
  %v120 = vld [vmem:[%s4 + $0x8] sm:$0xff]
  %v121 = vld [vmem:[%s4 + $0x10] sm:$0xff]
  %v122 = vld [vmem:[%s4 + $0x18] sm:$0xff]
  %v123 = vld [vmem:[%s4 + $0x20] sm:$0xff]
  %v124 = vld [vmem:[%s4 + $0x28] sm:$0xff]
  %v125 = vld [vmem:[%s4 + $0x30] sm:$0xff]
  %v126 = vld [vmem:[%s4 + $0x38] sm:$0xff]
  %v127 = vld [vmem:[%s4 + $0x40] sm:$0xff]
  %v128 = vld [vmem:[%s4 + $0x48] sm:$0xff]
  %v129 = vld [vmem:[%s4 + $0x50] sm:$0xff]
  %v130 = vld [vmem:[%s4 + $0x58] sm:$0xff]
  %v131 = vld [vmem:[%s4 + $0x60] sm:$0xff]
  %v132 = vld [vmem:[%s4 + $0x68] sm:$0xff]
  %v133 = vld [vmem:[%s4 + $0x70] sm:$0xff]
  %v134 = vld [vmem:[%s4 + $0x78] sm:$0xff]
  %v135 = vld [vmem:[%s4 + $0x80] sm:$0xff]
  %v136 = vld [vmem:[%s4 + $0x88] sm:$0xff]
  %v137 = vld [vmem:[%s5] sm:$0xff]
  %v138 = vld [vmem:[%s5 + $0x8] sm:$0xff]
  %v139 = vld [vmem:[%s6] sm:$0xff]
  %v140 = vld [vmem:[%s7] sm:$0x1]
  %v142 = vrot.slane %v77, 1
  %v143 = vperm.slane %v77, 0
  %v144 = vperm.slane %v142, 0
  %v147 = vmul.f32 %v79, %v143
  %v148 = vmul.f32 %v80, %v143
  %v149 = vmul.f32 %v81, %v143
  %v150 = vmul.f32 %v82, %v143
  %v151 = vmul.f32 %v83, %v143
  %v152 = vmul.f32 %v84, %v143
  %v153 = vmul.f32 %v85, %v143
  %v154 = vmul.f32 %v86, %v143
  %v155 = vmul.f32 %v87, %v143
  %v156 = vmul.f32 %v88, %v143
  %v157 = vmul.f32 %v89, %v143
  %v158 = vmul.f32 %v90, %v143
  %v159 = vmul.f32 %v91, %v143
  %v160 = vmul.f32 %v92, %v143
  %v161 = vmul.f32 %v93, %v143
  %v162 = vmul.f32 %v94, %v143
  %v163 = vmul.f32 %v95, %v143
  %v164 = vmul.f32 %v96, %v143
  %v165 = vmul.f32 %v97, %v143
  %v166 = vmul.f32 %v98, %v143
  %v167 = vmul.f32 %v99, %v144
  %v168 = vmul.f32 %v100, %v144
  %v169 = vmul.f32 %v101, %v144
  %v170 = vmul.f32 %v102, %v144
  %v171 = vmul.f32 %v103, %v144
  %v172 = vmul.f32 %v104, %v144
  %v173 = vmul.f32 %v105, %v144
  %v174 = vmul.f32 %v106, %v144
  %v175 = vmul.f32 %v107, %v144
  %v176 = vmul.f32 %v108, %v144
  %v177 = vmul.f32 %v109, %v144
  %v178 = vmul.f32 %v110, %v144
  %v179 = vmul.f32 %v111, %v144
  %v180 = vmul.f32 %v112, %v144
  %v181 = vmul.f32 %v113, %v144
  %v182 = vmul.f32 %v114, %v144
  %v183 = vmul.f32 %v115, %v144
  %v184 = vmul.f32 %v116, %v144
  %v185 = vmul.f32 %v117, %v144
  %v186 = vmul.f32 %v118, %v144
  %vm219 = vcmask 1046528
  %v220 = vrot.slane %v147, 1
  %v221 = vrot.slane %v148, 1
  %v222 = vsel %vm219, %v220, %v221
  %v223 = vrot.slane %v149, 1
  %v224 = vrot.slane %v150, 1
  %v225 = vsel %vm219, %v223, %v224
  %v226 = vrot.slane %v151, 1
  %v227 = vrot.slane %v152, 1
  %v228 = vsel %vm219, %v226, %v227
  %v229 = vrot.slane %v153, 1
  %v230 = vrot.slane %v154, 1
  %v231 = vsel %vm219, %v229, %v230
  %v232 = vrot.slane %v155, 1
  %v233 = vrot.slane %v156, 1
  %v234 = vsel %vm219, %v232, %v233
  %v235 = vrot.slane %v157, 1
  %v236 = vrot.slane %v158, 1
  %v237 = vsel %vm219, %v235, %v236
  %v238 = vrot.slane %v159, 1
  %v239 = vrot.slane %v160, 1
  %v240 = vsel %vm219, %v238, %v239
  %v241 = vrot.slane %v161, 1
  %v242 = vrot.slane %v162, 1
  %v243 = vsel %vm219, %v241, %v242
  %v244 = vrot.slane %v167, 1
  %v245 = vrot.slane %v168, 1
  %v246 = vsel %vm219, %v244, %v245
  %v247 = vrot.slane %v169, 1
  %v248 = vrot.slane %v170, 1
  %v249 = vsel %vm219, %v247, %v248
  %v250 = vrot.slane %v171, 1
  %v251 = vrot.slane %v172, 1
  %v252 = vsel %vm219, %v250, %v251
  %v253 = vrot.slane %v173, 1
  %v254 = vrot.slane %v174, 1
  %v255 = vsel %vm219, %v253, %v254
  %v256 = vrot.slane %v175, 1
  %v257 = vrot.slane %v176, 1
  %v258 = vsel %vm219, %v256, %v257
  %v259 = vrot.slane %v177, 1
  %v260 = vrot.slane %v178, 1
  %v261 = vsel %vm219, %v259, %v260
  %v262 = vrot.slane %v179, 1
  %v263 = vrot.slane %v180, 1
  %v264 = vsel %vm219, %v262, %v263
  %v265 = vrot.slane %v181, 1
  %v266 = vrot.slane %v182, 1
  %v267 = vsel %vm219, %v265, %v266
  %268 = vrot.lane.b32.xlu0 %v222, 16
  %v269 = vpop.permute.xlu0 %268
  %270 = vrot.lane.b32.xlu0 %v225, 16
  %v271 = vpop.permute.xlu0 %270
  %272 = vrot.lane.b32.xlu0 %v228, 16
  %v273 = vpop.permute.xlu0 %272
  %274 = vrot.lane.b32.xlu0 %v231, 16
  %v275 = vpop.permute.xlu0 %274
  %276 = vrot.lane.b32.xlu0 %v234, 16
  %v277 = vpop.permute.xlu0 %276
  %278 = vrot.lane.b32.xlu0 %v237, 16
  %v279 = vpop.permute.xlu0 %278
  %280 = vrot.lane.b32.xlu0 %v240, 16
  %v281 = vpop.permute.xlu0 %280
  %282 = vrot.lane.b32.xlu0 %v243, 16
  %v283 = vpop.permute.xlu0 %282
  %284 = vrot.lane.b32.xlu0 %v246, 16
  %v285 = vpop.permute.xlu0 %284
  %286 = vrot.lane.b32.xlu0 %v249, 16
  %v287 = vpop.permute.xlu0 %286
  %288 = vrot.lane.b32.xlu0 %v252, 16
  %v289 = vpop.permute.xlu0 %288
  %290 = vrot.lane.b32.xlu0 %v255, 16
  %v291 = vpop.permute.xlu0 %290
  %292 = vrot.lane.b32.xlu0 %v258, 16
  %v293 = vpop.permute.xlu0 %292
  %294 = vrot.lane.b32.xlu0 %v261, 16
  %v295 = vpop.permute.xlu0 %294
  %296 = vrot.lane.b32.xlu0 %v264, 16
  %v297 = vpop.permute.xlu0 %296
  %298 = vrot.lane.b32.xlu0 %v267, 16
  %v299 = vpop.permute.xlu0 %298
  %vm316 = vcmask 1045504
  %v317 = vrot.slane %v147, 2
  %v318 = vrot.slane %v148, 2
  %v319 = vsel %vm316, %v317, %v318
  %v320 = vrot.slane %v149, 2
  %v321 = vrot.slane %v150, 2
  %v322 = vsel %vm316, %v320, %v321
  %v323 = vrot.slane %v151, 2
  %v324 = vrot.slane %v152, 2
  %v325 = vsel %vm316, %v323, %v324
  %v326 = vrot.slane %v153, 2
  %v327 = vrot.slane %v154, 2
  %v328 = vsel %vm316, %v326, %v327
  %v329 = vrot.slane %v155, 2
  %v330 = vrot.slane %v156, 2
  %v331 = vsel %vm316, %v329, %v330
  %v332 = vrot.slane %v157, 2
  %v333 = vrot.slane %v158, 2
  %v334 = vsel %vm316, %v332, %v333
  %v335 = vrot.slane %v159, 2
  %v336 = vrot.slane %v160, 2
  %v337 = vsel %vm316, %v335, %v336
  %v338 = vrot.slane %v161, 2
  %v339 = vrot.slane %v162, 2
  %v340 = vsel %vm316, %v338, %v339
  %v341 = vrot.slane %v167, 2
  %v342 = vrot.slane %v168, 2
  %v343 = vsel %vm316, %v341, %v342
  %v344 = vrot.slane %v169, 2
  %v345 = vrot.slane %v170, 2
  %v346 = vsel %vm316, %v344, %v345
  %v347 = vrot.slane %v171, 2
  %v348 = vrot.slane %v172, 2
  %v349 = vsel %vm316, %v347, %v348
  %v350 = vrot.slane %v173, 2
  %v351 = vrot.slane %v174, 2
  %v352 = vsel %vm316, %v350, %v351
  %v353 = vrot.slane %v175, 2
  %v354 = vrot.slane %v176, 2
  %v355 = vsel %vm316, %v353, %v354
  %v356 = vrot.slane %v177, 2
  %v357 = vrot.slane %v178, 2
  %v358 = vsel %vm316, %v356, %v357
  %v359 = vrot.slane %v179, 2
  %v360 = vrot.slane %v180, 2
  %v361 = vsel %vm316, %v359, %v360
  %v362 = vrot.slane %v181, 2
  %v363 = vrot.slane %v182, 2
  %v364 = vsel %vm316, %v362, %v363
  %365 = vrot.lane.b32.xlu0 %v319, 32
  %v366 = vpop.permute.xlu0 %365
  %367 = vrot.lane.b32.xlu0 %v322, 32
  %v368 = vpop.permute.xlu0 %367
  %369 = vrot.lane.b32.xlu0 %v325, 32
  %v370 = vpop.permute.xlu0 %369
  %371 = vrot.lane.b32.xlu0 %v328, 32
  %v372 = vpop.permute.xlu0 %371
  %373 = vrot.lane.b32.xlu0 %v331, 32
  %v374 = vpop.permute.xlu0 %373
  %375 = vrot.lane.b32.xlu0 %v334, 32
  %v376 = vpop.permute.xlu0 %375
  %377 = vrot.lane.b32.xlu0 %v337, 32
  %v378 = vpop.permute.xlu0 %377
  %379 = vrot.lane.b32.xlu0 %v340, 32
  %v380 = vpop.permute.xlu0 %379
  %381 = vrot.lane.b32.xlu0 %v343, 32
  %v382 = vpop.permute.xlu0 %381
  %383 = vrot.lane.b32.xlu0 %v346, 32
  %v384 = vpop.permute.xlu0 %383
  %385 = vrot.lane.b32.xlu0 %v349, 32
  %v386 = vpop.permute.xlu0 %385
  %387 = vrot.lane.b32.xlu0 %v352, 32
  %v388 = vpop.permute.xlu0 %387
  %389 = vrot.lane.b32.xlu0 %v355, 32
  %v390 = vpop.permute.xlu0 %389
  %391 = vrot.lane.b32.xlu0 %v358, 32
  %v392 = vpop.permute.xlu0 %391
  %393 = vrot.lane.b32.xlu0 %v361, 32
  %v394 = vpop.permute.xlu0 %393
  %395 = vrot.lane.b32.xlu0 %v364, 32
  %v396 = vpop.permute.xlu0 %395
  %415 = vrot.lane.b32.xlu0 %v149, 48
  %v416 = vpop.permute.xlu0 %415
  %417 = vrot.lane.b32.xlu0 %v151, 48
  %v418 = vpop.permute.xlu0 %417
  %419 = vrot.lane.b32.xlu0 %v153, 48
  %v420 = vpop.permute.xlu0 %419
  %421 = vrot.lane.b32.xlu0 %v155, 48
  %v422 = vpop.permute.xlu0 %421
  %423 = vrot.lane.b32.xlu0 %v157, 48
  %v424 = vpop.permute.xlu0 %423
  %425 = vrot.lane.b32.xlu0 %v159, 48
  %v426 = vpop.permute.xlu0 %425
  %427 = vrot.lane.b32.xlu0 %v161, 48
  %v428 = vpop.permute.xlu0 %427
  %429 = vrot.lane.b32.xlu0 %v163, 48
  %v430 = vpop.permute.xlu0 %429
  %431 = vrot.lane.b32.xlu0 %v169, 48
  %v432 = vpop.permute.xlu0 %431
  %433 = vrot.lane.b32.xlu0 %v171, 48
  %v434 = vpop.permute.xlu0 %433
  %435 = vrot.lane.b32.xlu0 %v173, 48
  %v436 = vpop.permute.xlu0 %435
  %437 = vrot.lane.b32.xlu0 %v175, 48
  %v438 = vpop.permute.xlu0 %437
  %439 = vrot.lane.b32.xlu0 %v177, 48
  %v440 = vpop.permute.xlu0 %439
  %441 = vrot.lane.b32.xlu0 %v179, 48
  %v442 = vpop.permute.xlu0 %441
  %443 = vrot.lane.b32.xlu0 %v181, 48
  %v444 = vpop.permute.xlu0 %443
  %445 = vrot.lane.b32.xlu0 %v183, 48
  %v446 = vpop.permute.xlu0 %445
  %v465 = vrot.slane %v163, 1
  %v466 = vrot.slane %v164, 1
  %v467 = vsel %vm219, %v465, %v466
  %v468 = vrot.slane %v183, 1
  %v469 = vrot.slane %v184, 1
  %v470 = vsel %vm219, %v468, %v469
  %471 = vrot.lane.b32.xlu0 %v225, 64
  %v472 = vpop.permute.xlu0 %471
  %473 = vrot.lane.b32.xlu0 %v228, 64
  %v474 = vpop.permute.xlu0 %473
  %475 = vrot.lane.b32.xlu0 %v231, 64
  %v476 = vpop.permute.xlu0 %475
  %477 = vrot.lane.b32.xlu0 %v234, 64
  %v478 = vpop.permute.xlu0 %477
  %479 = vrot.lane.b32.xlu0 %v237, 64
  %v480 = vpop.permute.xlu0 %479
  %481 = vrot.lane.b32.xlu0 %v240, 64
  %v482 = vpop.permute.xlu0 %481
  %483 = vrot.lane.b32.xlu0 %v243, 64
  %v484 = vpop.permute.xlu0 %483
  %485 = vrot.lane.b32.xlu0 %v467, 64
  %v486 = vpop.permute.xlu0 %485
  %487 = vrot.lane.b32.xlu0 %v249, 64
  %v488 = vpop.permute.xlu0 %487
  %489 = vrot.lane.b32.xlu0 %v252, 64
  %v490 = vpop.permute.xlu0 %489
  %491 = vrot.lane.b32.xlu0 %v255, 64
  %v492 = vpop.permute.xlu0 %491
  %493 = vrot.lane.b32.xlu0 %v258, 64
  %v494 = vpop.permute.xlu0 %493
  %495 = vrot.lane.b32.xlu0 %v261, 64
  %v496 = vpop.permute.xlu0 %495
  %497 = vrot.lane.b32.xlu0 %v264, 64
  %v498 = vpop.permute.xlu0 %497
  %499 = vrot.lane.b32.xlu0 %v267, 64
  %v500 = vpop.permute.xlu0 %499
  %501 = vrot.lane.b32.xlu0 %v470, 64
  %v502 = vpop.permute.xlu0 %501
  %v519 = vrot.slane %v163, 2
  %v520 = vrot.slane %v164, 2
  %v521 = vsel %vm316, %v519, %v520
  %v522 = vrot.slane %v183, 2
  %v523 = vrot.slane %v184, 2
  %v524 = vsel %vm316, %v522, %v523
  %525 = vrot.lane.b32.xlu0 %v322, 80
  %v526 = vpop.permute.xlu0 %525
  %527 = vrot.lane.b32.xlu0 %v325, 80
  %v528 = vpop.permute.xlu0 %527
  %529 = vrot.lane.b32.xlu0 %v328, 80
  %v530 = vpop.permute.xlu0 %529
  %531 = vrot.lane.b32.xlu0 %v331, 80
  %v532 = vpop.permute.xlu0 %531
  %533 = vrot.lane.b32.xlu0 %v334, 80
  %v534 = vpop.permute.xlu0 %533
  %535 = vrot.lane.b32.xlu0 %v337, 80
  %v536 = vpop.permute.xlu0 %535
  %537 = vrot.lane.b32.xlu0 %v340, 80
  %v538 = vpop.permute.xlu0 %537
  %539 = vrot.lane.b32.xlu0 %v521, 80
  %v540 = vpop.permute.xlu0 %539
  %541 = vrot.lane.b32.xlu0 %v346, 80
  %v542 = vpop.permute.xlu0 %541
  %543 = vrot.lane.b32.xlu0 %v349, 80
  %v544 = vpop.permute.xlu0 %543
  %545 = vrot.lane.b32.xlu0 %v352, 80
  %v546 = vpop.permute.xlu0 %545
  %547 = vrot.lane.b32.xlu0 %v355, 80
  %v548 = vpop.permute.xlu0 %547
  %549 = vrot.lane.b32.xlu0 %v358, 80
  %v550 = vpop.permute.xlu0 %549
  %551 = vrot.lane.b32.xlu0 %v361, 80
  %v552 = vpop.permute.xlu0 %551
  %553 = vrot.lane.b32.xlu0 %v364, 80
  %v554 = vpop.permute.xlu0 %553
  %555 = vrot.lane.b32.xlu0 %v524, 80
  %v556 = vpop.permute.xlu0 %555
  %575 = vrot.lane.b32.xlu0 %v151, 96
  %v576 = vpop.permute.xlu0 %575
  %577 = vrot.lane.b32.xlu0 %v153, 96
  %v578 = vpop.permute.xlu0 %577
  %579 = vrot.lane.b32.xlu0 %v155, 96
  %v580 = vpop.permute.xlu0 %579
  %581 = vrot.lane.b32.xlu0 %v157, 96
  %v582 = vpop.permute.xlu0 %581
  %583 = vrot.lane.b32.xlu0 %v159, 96
  %v584 = vpop.permute.xlu0 %583
  %585 = vrot.lane.b32.xlu0 %v161, 96
  %v586 = vpop.permute.xlu0 %585
  %587 = vrot.lane.b32.xlu0 %v163, 96
  %v588 = vpop.permute.xlu0 %587
  %589 = vrot.lane.b32.xlu0 %v165, 96
  %v590 = vpop.permute.xlu0 %589
  %591 = vrot.lane.b32.xlu0 %v171, 96
  %v592 = vpop.permute.xlu0 %591
  %593 = vrot.lane.b32.xlu0 %v173, 96
  %v594 = vpop.permute.xlu0 %593
  %595 = vrot.lane.b32.xlu0 %v175, 96
  %v596 = vpop.permute.xlu0 %595
  %597 = vrot.lane.b32.xlu0 %v177, 96
  %v598 = vpop.permute.xlu0 %597
  %599 = vrot.lane.b32.xlu0 %v179, 96
  %v600 = vpop.permute.xlu0 %599
  %601 = vrot.lane.b32.xlu0 %v181, 96
  %v602 = vpop.permute.xlu0 %601
  %603 = vrot.lane.b32.xlu0 %v183, 96
  %v604 = vpop.permute.xlu0 %603
  %605 = vrot.lane.b32.xlu0 %v185, 96
  %v606 = vpop.permute.xlu0 %605
  %v625 = vrot.slane %v165, 1
  %v626 = vrot.slane %v166, 1
  %v627 = vsel %vm219, %v625, %v626
  %v628 = vrot.slane %v185, 1
  %v629 = vrot.slane %v186, 1
  %v630 = vsel %vm219, %v628, %v629
  %631 = vrot.lane.b32.xlu0 %v228, 112
  %v632 = vpop.permute.xlu0 %631
  %633 = vrot.lane.b32.xlu0 %v231, 112
  %v634 = vpop.permute.xlu0 %633
  %635 = vrot.lane.b32.xlu0 %v234, 112
  %v636 = vpop.permute.xlu0 %635
  %637 = vrot.lane.b32.xlu0 %v237, 112
  %v638 = vpop.permute.xlu0 %637
  %639 = vrot.lane.b32.xlu0 %v240, 112
  %v640 = vpop.permute.xlu0 %639
  %641 = vrot.lane.b32.xlu0 %v243, 112
  %v642 = vpop.permute.xlu0 %641
  %643 = vrot.lane.b32.xlu0 %v467, 112
  %v644 = vpop.permute.xlu0 %643
  %645 = vrot.lane.b32.xlu0 %v627, 112
  %v646 = vpop.permute.xlu0 %645
  %647 = vrot.lane.b32.xlu0 %v252, 112
  %v648 = vpop.permute.xlu0 %647
  %649 = vrot.lane.b32.xlu0 %v255, 112
  %v650 = vpop.permute.xlu0 %649
  %651 = vrot.lane.b32.xlu0 %v258, 112
  %v652 = vpop.permute.xlu0 %651
  %653 = vrot.lane.b32.xlu0 %v261, 112
  %v654 = vpop.permute.xlu0 %653
  %655 = vrot.lane.b32.xlu0 %v264, 112
  %v656 = vpop.permute.xlu0 %655
  %657 = vrot.lane.b32.xlu0 %v267, 112
  %v658 = vpop.permute.xlu0 %657
  %659 = vrot.lane.b32.xlu0 %v470, 112
  %v660 = vpop.permute.xlu0 %659
  %661 = vrot.lane.b32.xlu0 %v630, 112
  %v662 = vpop.permute.xlu0 %661
  %v679 = vrot.slane %v165, 2
  %v680 = vrot.slane %v166, 2
  %v681 = vsel %vm316, %v679, %v680
  %v682 = vrot.slane %v185, 2
  %v683 = vrot.slane %v186, 2
  %v684 = vsel %vm316, %v682, %v683
  %vm685 = vcmask 130048
  %v686 = vsel %vm685, %v147, %v269
  %v687 = vsel %vm685, %v149, %v271
  %v688 = vsel %vm685, %v151, %v273
  %v689 = vsel %vm685, %v153, %v275
  %v690 = vsel %vm685, %v155, %v277
  %v691 = vsel %vm685, %v157, %v279
  %v692 = vsel %vm685, %v159, %v281
  %v693 = vsel %vm685, %v161, %v283
  %v694 = vsel %vm685, %v167, %v285
  %v695 = vsel %vm685, %v169, %v287
  %v696 = vsel %vm685, %v171, %v289
  %v697 = vsel %vm685, %v173, %v291
  %v698 = vsel %vm685, %v175, %v293
  %v699 = vsel %vm685, %v177, %v295
  %v700 = vsel %vm685, %v179, %v297
  %v701 = vsel %vm685, %v181, %v299
  %v702 = vsel %vm55, %v686, %v366
  %v703 = vsel %vm55, %v687, %v368
  %v704 = vsel %vm55, %v688, %v370
  %v705 = vsel %vm55, %v689, %v372
  %v706 = vsel %vm55, %v690, %v374
  %v707 = vsel %vm55, %v691, %v376
  %v708 = vsel %vm55, %v692, %v378
  %v709 = vsel %vm55, %v693, %v380
  %v710 = vsel %vm55, %v694, %v382
  %v711 = vsel %vm55, %v695, %v384
  %v712 = vsel %vm55, %v696, %v386
  %v713 = vsel %vm55, %v697, %v388
  %v714 = vsel %vm55, %v698, %v390
  %v715 = vsel %vm55, %v699, %v392
  %v716 = vsel %vm55, %v700, %v394
  %v717 = vsel %vm55, %v701, %v396
  %vm718 = vcmask 392192
  %v719 = vsel %vm718, %v702, %v416
  %v720 = vsel %vm718, %v703, %v418
  %v721 = vsel %vm718, %v704, %v420
  %v722 = vsel %vm718, %v705, %v422
  %v723 = vsel %vm718, %v706, %v424
  %v724 = vsel %vm718, %v707, %v426
  %v725 = vsel %vm718, %v708, %v428
  %v726 = vsel %vm718, %v709, %v430
  %v727 = vsel %vm718, %v710, %v432
  %v728 = vsel %vm718, %v711, %v434
  %v729 = vsel %vm718, %v712, %v436
  %v730 = vsel %vm718, %v713, %v438
  %v731 = vsel %vm718, %v714, %v440
  %v732 = vsel %vm718, %v715, %v442
  %v733 = vsel %vm718, %v716, %v444
  %v734 = vsel %vm718, %v717, %v446
  %vm735 = vcmask 523264
  %v736 = vsel %vm735, %v719, %v472
  %v737 = vsel %vm735, %v720, %v474
  %v738 = vsel %vm735, %v721, %v476
  %v739 = vsel %vm735, %v722, %v478
  %v740 = vsel %vm735, %v723, %v480
  %v741 = vsel %vm735, %v724, %v482
  %v742 = vsel %vm735, %v725, %v484
  %v743 = vsel %vm735, %v726, %v486
  %v744 = vsel %vm735, %v727, %v488
  %v745 = vsel %vm735, %v728, %v490
  %v746 = vsel %vm735, %v729, %v492
  %v747 = vsel %vm735, %v730, %v494
  %v748 = vsel %vm735, %v731, %v496
  %v749 = vsel %vm735, %v732, %v498
  %v750 = vsel %vm735, %v733, %v500
  %v751 = vsel %vm735, %v734, %v502
  %vm752 = vcmask 654336
  %v753 = vsel %vm752, %v736, %v526
  %v754 = vsel %vm752, %v737, %v528
  %v755 = vsel %vm752, %v738, %v530
  %v756 = vsel %vm752, %v739, %v532
  %v757 = vsel %vm752, %v740, %v534
  %v758 = vsel %vm752, %v741, %v536
  %v759 = vsel %vm752, %v742, %v538
  %v760 = vsel %vm752, %v743, %v540
  %v761 = vsel %vm752, %v744, %v542
  %v762 = vsel %vm752, %v745, %v544
  %v763 = vsel %vm752, %v746, %v546
  %v764 = vsel %vm752, %v747, %v548
  %v765 = vsel %vm752, %v748, %v550
  %v766 = vsel %vm752, %v749, %v552
  %v767 = vsel %vm752, %v750, %v554
  %v768 = vsel %vm752, %v751, %v556
  %vm769 = vcmask 785408
  %v770 = vsel %vm769, %v753, %v576
  %v771 = vsel %vm769, %v754, %v578
  %v772 = vsel %vm769, %v755, %v580
  %v773 = vsel %vm769, %v756, %v582
  %v774 = vsel %vm769, %v757, %v584
  %v775 = vsel %vm769, %v758, %v586
  %v776 = vsel %vm769, %v759, %v588
  %v777 = vsel %vm769, %v760, %v590
  %v778 = vsel %vm769, %v761, %v592
  %v779 = vsel %vm769, %v762, %v594
  %v780 = vsel %vm769, %v763, %v596
  %v781 = vsel %vm769, %v764, %v598
  %v782 = vsel %vm769, %v765, %v600
  %v783 = vsel %vm769, %v766, %v602
  %v784 = vsel %vm769, %v767, %v604
  %v785 = vsel %vm769, %v768, %v606
  %vm786 = vcmask 916480
  %v787 = vsel %vm786, %v770, %v632
  %v788 = vsel %vm786, %v771, %v634
  %v789 = vsel %vm786, %v772, %v636
  %v790 = vsel %vm786, %v773, %v638
  %v791 = vsel %vm786, %v774, %v640
  %v792 = vsel %vm786, %v775, %v642
  %v793 = vsel %vm786, %v776, %v644
  %v794 = vsel %vm786, %v777, %v646
  %v795 = vsel %vm786, %v778, %v648
  %v796 = vsel %vm786, %v779, %v650
  %v797 = vsel %vm786, %v780, %v652
  %v798 = vsel %vm786, %v781, %v654
  %v799 = vsel %vm786, %v782, %v656
  %v800 = vsel %vm786, %v783, %v658
  %v801 = vsel %vm786, %v784, %v660
  %v802 = vsel %vm786, %v785, %v662
  %v803 = vsel %vm685, %v325, 0
  %v805 = vsel %vm685, %v328, 0
  %v807 = vsel %vm685, %v331, 0
  %v809 = vsel %vm685, %v334, 0
  %v811 = vsel %vm685, %v337, 0
  %v813 = vsel %vm685, %v340, 0
  %v815 = vsel %vm685, %v521, 0
  %v817 = vsel %vm685, %v681, 0
  %v819 = vsel %vm685, %v349, 0
  %v821 = vsel %vm685, %v352, 0
  %v823 = vsel %vm685, %v355, 0
  %v825 = vsel %vm685, %v358, 0
  %v827 = vsel %vm685, %v361, 0
  %v829 = vsel %vm685, %v364, 0
  %v831 = vsel %vm685, %v524, 0
  %v833 = vsel %vm685, %v684, 0
  %835 = vmatpush.msra.mxu0 %v134
  %836 = vmatpush.msra.mxu0 %v133
  %837 = vmatpush.msra.mxu0 %v132
  %838 = vmatpush.msra.mxu0 %v131
  %839 = vmatpush.msra.mxu0 %v130
  %840 = vmatpush.msra.mxu0 %v129
  %841 = vmatpush.msra.mxu0 %v128
  %842 = vmatpush.msra.mxu0 %v127
  %843 = vmatpush.msra.mxu0 %v126
  %844 = vmatpush.msra.mxu0 %v125
  %845 = vmatpush.msra.mxu0 %v124
  %846 = vmatpush.msra.mxu0 %v123
  %847 = vmatpush.msra.mxu0 %v122
  %848 = vmatpush.msra.mxu0 %v121
  %849 = vmatpush.msra.mxu0 %v120
  %850 = vmatpush.msra.mxu0 %v119
  %851 = vmatmul.f32.gmra.mxu0 %v787
  %v852 = vpop.f32.mrf.mxu0
  %v853 = vadd.f32 0.0, %v852
  %854 = vmatmul.f32.gmra.mxu0 %v788
  %v855 = vpop.f32.mrf.mxu0
  %v856 = vadd.f32 0.0, %v855
  %857 = vmatmul.f32.gmra.mxu0 %v789
  %v858 = vpop.f32.mrf.mxu0
  %v859 = vadd.f32 0.0, %v858
  %860 = vmatmul.f32.gmra.mxu0 %v790
  %v861 = vpop.f32.mrf.mxu0
  %v862 = vadd.f32 0.0, %v861
  %863 = vmatmul.f32.gmra.mxu0 %v791
  %v864 = vpop.f32.mrf.mxu0
  %v865 = vadd.f32 0.0, %v864
  %866 = vmatmul.f32.gmra.mxu0 %v792
  %v867 = vpop.f32.mrf.mxu0
  %v868 = vadd.f32 0.0, %v867
  %869 = vmatmul.f32.gmra.mxu0 %v793
  %v870 = vpop.f32.mrf.mxu0
  %v871 = vadd.f32 0.0, %v870
  %872 = vmatmul.f32.gmra.mxu0 %v794
  %v873 = vpop.f32.mrf.mxu0
  %v874 = vadd.f32 0.0, %v873
  %875 = vmatmul.f32.gmra.mxu0 %v795
  %v876 = vpop.f32.mrf.mxu0
  %v877 = vadd.f32 0.0, %v876
  %878 = vmatmul.f32.gmra.mxu0 %v796
  %v879 = vpop.f32.mrf.mxu0
  %v880 = vadd.f32 0.0, %v879
  %881 = vmatmul.f32.gmra.mxu0 %v797
  %v882 = vpop.f32.mrf.mxu0
  %v883 = vadd.f32 0.0, %v882
  %884 = vmatmul.f32.gmra.mxu0 %v798
  %v885 = vpop.f32.mrf.mxu0
  %v886 = vadd.f32 0.0, %v885
  %887 = vmatmul.f32.gmra.mxu0 %v799
  %v888 = vpop.f32.mrf.mxu0
  %v889 = vadd.f32 0.0, %v888
  %890 = vmatmul.f32.gmra.mxu0 %v800
  %v891 = vpop.f32.mrf.mxu0
  %v892 = vadd.f32 0.0, %v891
  %893 = vmatmul.f32.gmra.mxu0 %v801
  %v894 = vpop.f32.mrf.mxu0
  %v895 = vadd.f32 0.0, %v894
  %896 = vmatmul.f32.gmra.mxu0 %v802
  %v897 = vpop.f32.mrf.mxu0
  %v898 = vadd.f32 0.0, %v897
  %899 = vdwg.mxu0
  %900 = vmatpush.msra.mxu0 0.0
  %901 = vmatpush.msra.mxu0 0.0
  %902 = vmatpush.msra.mxu0 0.0
  %903 = vmatpush.msra.mxu0 0.0
  %904 = vmatpush.msra.mxu0 0.0
  %905 = vmatpush.msra.mxu0 0.0
  %906 = vmatpush.msra.mxu0 0.0
  %907 = vmatpush.msra.mxu0 0.0
  %908 = vmatpush.msra.mxu0 0.0
  %909 = vmatpush.msra.mxu0 0.0
  %910 = vmatpush.msra.mxu0 0.0
  %911 = vmatpush.msra.mxu0 0.0
  %912 = vmatpush.msra.mxu0 0.0
  %913 = vmatpush.msra.mxu0 0.0
  %914 = vmatpush.msra.mxu0 %v136
  %915 = vmatpush.msra.mxu0 %v135
  %916 = vmatmul.f32.gmra.mxu0 %v803
  %v917 = vpop.f32.mrf.mxu0
  %v918 = vadd.f32 %v853, %v917
  %919 = vmatmul.f32.gmra.mxu0 %v805
  %v920 = vpop.f32.mrf.mxu0
  %v921 = vadd.f32 %v856, %v920
  %922 = vmatmul.f32.gmra.mxu0 %v807
  %v923 = vpop.f32.mrf.mxu0
  %v924 = vadd.f32 %v859, %v923
  %925 = vmatmul.f32.gmra.mxu0 %v809
  %v926 = vpop.f32.mrf.mxu0
  %v927 = vadd.f32 %v862, %v926
  %928 = vmatmul.f32.gmra.mxu0 %v811
  %v929 = vpop.f32.mrf.mxu0
  %v930 = vadd.f32 %v865, %v929
  %931 = vmatmul.f32.gmra.mxu0 %v813
  %v932 = vpop.f32.mrf.mxu0
  %v933 = vadd.f32 %v868, %v932
  %934 = vmatmul.f32.gmra.mxu0 %v815
  %v935 = vpop.f32.mrf.mxu0
  %v936 = vadd.f32 %v871, %v935
  %937 = vmatmul.f32.gmra.mxu0 %v817
  %v938 = vpop.f32.mrf.mxu0
  %v939 = vadd.f32 %v874, %v938
  %940 = vmatmul.f32.gmra.mxu0 %v819
  %v941 = vpop.f32.mrf.mxu0
  %v942 = vadd.f32 %v877, %v941
  %943 = vmatmul.f32.gmra.mxu0 %v821
  %v944 = vpop.f32.mrf.mxu0
  %v945 = vadd.f32 %v880, %v944
  %946 = vmatmul.f32.gmra.mxu0 %v823
  %v947 = vpop.f32.mrf.mxu0
  %v948 = vadd.f32 %v883, %v947
  %949 = vmatmul.f32.gmra.mxu0 %v825
  %v950 = vpop.f32.mrf.mxu0
  %v951 = vadd.f32 %v886, %v950
  %952 = vmatmul.f32.gmra.mxu0 %v827
  %v953 = vpop.f32.mrf.mxu0
  %v954 = vadd.f32 %v889, %v953
  %955 = vmatmul.f32.gmra.mxu0 %v829
  %v956 = vpop.f32.mrf.mxu0
  %v957 = vadd.f32 %v892, %v956
  %958 = vmatmul.f32.gmra.mxu0 %v831
  %v959 = vpop.f32.mrf.mxu0
  %v960 = vadd.f32 %v895, %v959
  %961 = vmatmul.f32.gmra.mxu0 %v833
  %v962 = vpop.f32.mrf.mxu0
  %v963 = vadd.f32 %v898, %v962
  %964 = vdwg.mxu0
  %v965 = vmul.f32 %v77, %v77
  %v967 = vsel %vm685, %v965, 0
  %969 = vmatpush.msra.mxu0 0.0
  %970 = vmatpush.msra.mxu0 0.0
  %971 = vmatpush.msra.mxu0 0.0
  %972 = vmatpush.msra.mxu0 0.0
  %973 = vmatpush.msra.mxu0 0.0
  %974 = vmatpush.msra.mxu0 0.0
  %975 = vmatpush.msra.mxu0 0.0
  %976 = vmatpush.msra.mxu0 0.0
  %977 = vmatpush.msra.mxu0 0.0
  %978 = vmatpush.msra.mxu0 0.0
  %979 = vmatpush.msra.mxu0 0.0
  %980 = vmatpush.msra.mxu0 0.0
  %981 = vmatpush.msra.mxu0 0.0
  %982 = vmatpush.msra.mxu0 0.0
  %983 = vmatpush.msra.mxu0 %v138
  %984 = vmatpush.msra.mxu0 %v137
  %985 = vmatmul.f32.gmra.mxu0 %v967
  %v986 = vpop.f32.mrf.mxu0
  %v987 = vadd.f32 1e-08, %v986
  %988 = vdwg.mxu0
  %v989 = vrsqrt.pop %v987
  %v990 = vmul.f32 %v989, %v987
  %v991 = vmul.f32 %v990, %v989
  %v992 = vmul.f32 0.5, %v991
  %v993 = vsub.f32 1.5, %v992
  %v994 = vmul.f32 %v989, %v993
  %vm995 = vweird.f32 %v987
  %vm996 = vweird.f32 %v989
  %vm997 = vmor %vm995, %vm996
  %v998 = vsel %vm997, %v989, %v994
  %v1000 = vrot.slane %v998, 1
  %v1001 = vperm.slane %v998, 0
  %v1002 = vperm.slane %v1000, 0
  %v1005 = vmul.f32 %v918, %v1001
  %v1006 = vmul.f32 %v921, %v1001
  %v1007 = vmul.f32 %v924, %v1001
  %v1008 = vmul.f32 %v927, %v1001
  %v1009 = vmul.f32 %v930, %v1001
  %v1010 = vmul.f32 %v933, %v1001
  %v1011 = vmul.f32 %v936, %v1001
  %v1012 = vmul.f32 %v939, %v1001
  %v1013 = vmul.f32 %v942, %v1002
  %v1014 = vmul.f32 %v945, %v1002
  %v1015 = vmul.f32 %v948, %v1002
  %v1016 = vmul.f32 %v951, %v1002
  %v1017 = vmul.f32 %v954, %v1002
  %v1018 = vmul.f32 %v957, %v1002
  %v1019 = vmul.f32 %v960, %v1002
  %v1020 = vmul.f32 %v963, %v1002
  %v1021 = vperm.slane %v139, 0
  %v1022 = vlaneseq
  %v1023 = vshrl.u32 %v1022, 7
  %1025 = vset.pattern.permute.xlu0 %v1023
  %1026 = vperm.xlu0 %1025, %v1021
  %v1027 = vpop.permute.xlu0 %1026
  %v1028 = vperm.slane %v139, 1
  %v1029 = vlaneseq
  %v1030 = vshrl.u32 %v1029, 7
  %1032 = vset.pattern.permute.xlu0 %v1030
  %1033 = vperm.xlu0 %1032, %v1028
  %v1034 = vpop.permute.xlu0 %1033
  %v1035 = vperm.slane %v139, 2
  %v1036 = vlaneseq
  %v1037 = vshrl.u32 %v1036, 7
  %1039 = vset.pattern.permute.xlu0 %v1037
  %1040 = vperm.xlu0 %1039, %v1035
  %v1041 = vpop.permute.xlu0 %1040
  %v1042 = vperm.slane %v139, 3
  %v1043 = vlaneseq
  %v1044 = vshrl.u32 %v1043, 7
  %1046 = vset.pattern.permute.xlu0 %v1044
  %1047 = vperm.xlu0 %1046, %v1042
  %v1048 = vpop.permute.xlu0 %1047
  %v1049 = vperm.slane %v139, 4
  %v1050 = vlaneseq
  %v1051 = vshrl.u32 %v1050, 7
  %1053 = vset.pattern.permute.xlu0 %v1051
  %1054 = vperm.xlu0 %1053, %v1049
  %v1055 = vpop.permute.xlu0 %1054
  %v1056 = vperm.slane %v139, 5
  %v1057 = vlaneseq
  %v1058 = vshrl.u32 %v1057, 7
  %1060 = vset.pattern.permute.xlu0 %v1058
  %1061 = vperm.xlu0 %1060, %v1056
  %v1062 = vpop.permute.xlu0 %1061
  %v1063 = vperm.slane %v139, 6
  %v1064 = vlaneseq
  %v1065 = vshrl.u32 %v1064, 7
  %1067 = vset.pattern.permute.xlu0 %v1065
  %1068 = vperm.xlu0 %1067, %v1063
  %v1069 = vpop.permute.xlu0 %1068
  %v1070 = vperm.slane %v139, 7
  %v1071 = vlaneseq
  %v1072 = vshrl.u32 %v1071, 7
  %1074 = vset.pattern.permute.xlu0 %v1072
  %1075 = vperm.xlu0 %1074, %v1070
  %v1076 = vpop.permute.xlu0 %1075
  %v1077 = vadd.f32 %v1005, %v1027
  %v1078 = vadd.f32 %v1006, %v1034
  %v1079 = vadd.f32 %v1007, %v1041
  %v1080 = vadd.f32 %v1008, %v1048
  %v1081 = vadd.f32 %v1009, %v1055
  %v1082 = vadd.f32 %v1010, %v1062
  %v1083 = vadd.f32 %v1011, %v1069
  %v1084 = vadd.f32 %v1012, %v1076
  %v1085 = vadd.f32 %v1013, %v1027
  %v1086 = vadd.f32 %v1014, %v1034
  %v1087 = vadd.f32 %v1015, %v1041
  %v1088 = vadd.f32 %v1016, %v1048
  %v1089 = vadd.f32 %v1017, %v1055
  %v1090 = vadd.f32 %v1018, %v1062
  %v1091 = vadd.f32 %v1019, %v1069
  %v1092 = vadd.f32 %v1020, %v1076
  %v1094 = vperm.slane %v140, 0
  %v1096 = vadd.f32 %v1077, %v1094
  %v1097 = vadd.f32 %v1078, %v1094
  %v1098 = vadd.f32 %v1079, %v1094
  %v1099 = vadd.f32 %v1080, %v1094
  %v1100 = vadd.f32 %v1081, %v1094
  %v1101 = vadd.f32 %v1082, %v1094
  %v1102 = vadd.f32 %v1083, %v1094
  %v1103 = vadd.f32 %v1084, %v1094
  %v1104 = vadd.f32 %v1085, %v1094
  %v1105 = vadd.f32 %v1086, %v1094
  %v1106 = vadd.f32 %v1087, %v1094
  %v1107 = vadd.f32 %v1088, %v1094
  %v1108 = vadd.f32 %v1089, %v1094
  %v1109 = vadd.f32 %v1090, %v1094
  %v1110 = vadd.f32 %v1091, %v1094
  %v1111 = vadd.f32 %v1092, %v1094
  %vm1112 = vcmp.ge.f32.partialorder %v1096, 0.0
  %vm1113 = vcmp.ge.f32.partialorder %v1097, 0.0
  %vm1114 = vcmp.ge.f32.partialorder %v1098, 0.0
  %vm1115 = vcmp.ge.f32.partialorder %v1099, 0.0
  %vm1116 = vcmp.ge.f32.partialorder %v1100, 0.0
  %vm1117 = vcmp.ge.f32.partialorder %v1101, 0.0
  %vm1118 = vcmp.ge.f32.partialorder %v1102, 0.0
  %vm1119 = vcmp.ge.f32.partialorder %v1103, 0.0
  %vm1120 = vcmp.ge.f32.partialorder %v1104, 0.0
  %vm1121 = vcmp.ge.f32.partialorder %v1105, 0.0
  %vm1122 = vcmp.ge.f32.partialorder %v1106, 0.0
  %vm1123 = vcmp.ge.f32.partialorder %v1107, 0.0
  %vm1124 = vcmp.ge.f32.partialorder %v1108, 0.0
  %vm1125 = vcmp.ge.f32.partialorder %v1109, 0.0
  %vm1126 = vcmp.ge.f32.partialorder %v1110, 0.0
  %vm1127 = vcmp.ge.f32.partialorder %v1111, 0.0
  %v1128 = vmul.f32 %v1096, 0.2
  %v1129 = vmul.f32 %v1097, 0.2
  %v1130 = vmul.f32 %v1098, 0.2
  %v1131 = vmul.f32 %v1099, 0.2
  %v1132 = vmul.f32 %v1100, 0.2
  %v1133 = vmul.f32 %v1101, 0.2
  %v1134 = vmul.f32 %v1102, 0.2
  %v1135 = vmul.f32 %v1103, 0.2
  %v1136 = vmul.f32 %v1104, 0.2
  %v1137 = vmul.f32 %v1105, 0.2
  %v1138 = vmul.f32 %v1106, 0.2
  %v1139 = vmul.f32 %v1107, 0.2
  %v1140 = vmul.f32 %v1108, 0.2
  %v1141 = vmul.f32 %v1109, 0.2
  %v1142 = vmul.f32 %v1110, 0.2
  %v1143 = vmul.f32 %v1111, 0.2
  %v1144 = vsel %vm1112, %v1096, %v1128
  %v1145 = vsel %vm1113, %v1097, %v1129
  %v1146 = vsel %vm1114, %v1098, %v1130
  %v1147 = vsel %vm1115, %v1099, %v1131
  %v1148 = vsel %vm1116, %v1100, %v1132
  %v1149 = vsel %vm1117, %v1101, %v1133
  %v1150 = vsel %vm1118, %v1102, %v1134
  %v1151 = vsel %vm1119, %v1103, %v1135
  %v1152 = vsel %vm1120, %v1104, %v1136
  %v1153 = vsel %vm1121, %v1105, %v1137
  %v1154 = vsel %vm1122, %v1106, %v1138
  %v1155 = vsel %vm1123, %v1107, %v1139
  %v1156 = vsel %vm1124, %v1108, %v1140
  %v1157 = vsel %vm1125, %v1109, %v1141
  %v1158 = vsel %vm1126, %v1110, %v1142
  %v1159 = vsel %vm1127, %v1111, %v1143
  %v1160 = vmul.f32 %v1144, 1.4142135
  %v1161 = vmul.f32 %v1145, 1.4142135
  %v1162 = vmul.f32 %v1146, 1.4142135
  %v1163 = vmul.f32 %v1147, 1.4142135
  %v1164 = vmul.f32 %v1148, 1.4142135
  %v1165 = vmul.f32 %v1149, 1.4142135
  %v1166 = vmul.f32 %v1150, 1.4142135
  %v1167 = vmul.f32 %v1151, 1.4142135
  %v1168 = vmul.f32 %v1152, 1.4142135
  %v1169 = vmul.f32 %v1153, 1.4142135
  %v1170 = vmul.f32 %v1154, 1.4142135
  %v1171 = vmul.f32 %v1155, 1.4142135
  %v1172 = vmul.f32 %v1156, 1.4142135
  %v1173 = vmul.f32 %v1157, 1.4142135
  %v1174 = vmul.f32 %v1158, 1.4142135
  %v1175 = vmul.f32 %v1159, 1.4142135
  %1176 = vst.msk [vmem:[%s13] sm:$0xff] %vm685, %v1160
  %1177 = vst.msk [vmem:[%s13 + $0x8] sm:$0xff] %vm685, %v1161
  %1178 = vst.msk [vmem:[%s13 + $0x10] sm:$0xff] %vm685, %v1162
  %1179 = vst.msk [vmem:[%s13 + $0x18] sm:$0xff] %vm685, %v1163
  %1180 = vst.msk [vmem:[%s13 + $0x20] sm:$0xff] %vm685, %v1164
  %1181 = vst.msk [vmem:[%s13 + $0x28] sm:$0xff] %vm685, %v1165
  %1182 = vst.msk [vmem:[%s13 + $0x30] sm:$0xff] %vm685, %v1166
  %1183 = vst.msk [vmem:[%s13 + $0x38] sm:$0xff] %vm685, %v1167
  %1184 = vst.msk [vmem:[%s13 + $0x40] sm:$0xff] %vm685, %v1168
  %1185 = vst.msk [vmem:[%s13 + $0x48] sm:$0xff] %vm685, %v1169
  %1186 = vst.msk [vmem:[%s13 + $0x50] sm:$0xff] %vm685, %v1170
  %1187 = vst.msk [vmem:[%s13 + $0x58] sm:$0xff] %vm685, %v1171
  %1188 = vst.msk [vmem:[%s13 + $0x60] sm:$0xff] %vm685, %v1172
  %1189 = vst.msk [vmem:[%s13 + $0x68] sm:$0xff] %vm685, %v1173
  %1190 = vst.msk [vmem:[%s13 + $0x70] sm:$0xff] %vm685, %v1174
  %1191 = vst.msk [vmem:[%s13 + $0x78] sm:$0xff] %vm685, %v1175
  %v1192 = vld [vmem:[%s8] sm:$0x3]
  %v1193 = vld [vmem:[%s9] sm:$0xff]
  %v1194 = vld [vmem:[%s9 + $0x8] sm:$0xff]
  %v1195 = vld [vmem:[%s9 + $0x10] sm:$0xff]
  %v1196 = vld [vmem:[%s9 + $0x18] sm:$0xff]
  %v1197 = vld [vmem:[%s10] sm:$0x1]
  %v1199 = vperm.slane %v1197, 0
  %v1202 = vsel %vm55, %v1192, 0
  %1204 = vmatpush.msra.mxu0 0.0
  %1205 = vmatpush.msra.mxu0 0.0
  %1206 = vmatpush.msra.mxu0 0.0
  %1207 = vmatpush.msra.mxu0 0.0
  %1208 = vmatpush.msra.mxu0 0.0
  %1209 = vmatpush.msra.mxu0 0.0
  %1210 = vmatpush.msra.mxu0 0.0
  %1211 = vmatpush.msra.mxu0 0.0
  %1212 = vmatpush.msra.mxu0 0.0
  %1213 = vmatpush.msra.mxu0 0.0
  %1214 = vmatpush.msra.mxu0 0.0
  %1215 = vmatpush.msra.mxu0 0.0
  %1216 = vmatpush.msra.mxu0 %v1196
  %1217 = vmatpush.msra.mxu0 %v1195
  %1218 = vmatpush.msra.mxu0 %v1194
  %1219 = vmatpush.msra.mxu0 %v1193
  %1220 = vmatmul.f32.gmra.mxu0 %v1202
  %v1221 = vpop.f32.mrf.mxu0
  %v1222 = vadd.f32 %v1199, %v1221
  %1223 = vdwg.mxu0
  %v1224 = vld [vmem:[%s11] sm:$0xff]
  %v1225 = vld [vmem:[%s11 + $0x8] sm:$0xff]
  %v1226 = vld [vmem:[%s12] sm:$0x1]
  %v1228 = vrot.slane %v1222, 1
  %v1229 = vperm.slane %v1222, 0
  %v1230 = vperm.slane %v1228, 0
  %v1233 = vmul.f32 %v1160, %v1229
  %v1234 = vmul.f32 %v1161, %v1229
  %v1235 = vmul.f32 %v1162, %v1229
  %v1236 = vmul.f32 %v1163, %v1229
  %v1237 = vmul.f32 %v1164, %v1229
  %v1238 = vmul.f32 %v1165, %v1229
  %v1239 = vmul.f32 %v1166, %v1229
  %v1240 = vmul.f32 %v1167, %v1229
  %v1241 = vmul.f32 %v1168, %v1230
  %v1242 = vmul.f32 %v1169, %v1230
  %v1243 = vmul.f32 %v1170, %v1230
  %v1244 = vmul.f32 %v1171, %v1230
  %v1245 = vmul.f32 %v1172, %v1230
  %v1246 = vmul.f32 %v1173, %v1230
  %v1247 = vmul.f32 %v1174, %v1230
  %v1248 = vmul.f32 %v1175, %v1230
  %v1250 = vsel %vm685, %v1233, 0
  %v1253 = vsel %vm685, %v1234, 0
  %v1256 = vsel %vm685, %v1235, 0
  %v1259 = vsel %vm685, %v1236, 0
  %v1262 = vsel %vm685, %v1237, 0
  %v1265 = vsel %vm685, %v1238, 0
  %v1268 = vsel %vm685, %v1239, 0
  %v1271 = vsel %vm685, %v1240, 0
  %v1274 = vsel %vm685, %v1241, 0
  %v1277 = vsel %vm685, %v1242, 0
  %v1280 = vsel %vm685, %v1243, 0
  %v1283 = vsel %vm685, %v1244, 0
  %v1286 = vsel %vm685, %v1245, 0
  %v1289 = vsel %vm685, %v1246, 0
  %v1292 = vsel %vm685, %v1247, 0
  %v1295 = vsel %vm685, %v1248, 0
  %1297 = vmatpush.msra.mxu0 0.0
  %1298 = vmatpush.msra.mxu0 0.0
  %1299 = vmatpush.msra.mxu0 0.0
  %1300 = vmatpush.msra.mxu0 0.0
  %1301 = vmatpush.msra.mxu0 0.0
  %1302 = vmatpush.msra.mxu0 0.0
  %1303 = vmatpush.msra.mxu0 0.0
  %1304 = vmatpush.msra.mxu0 0.0
  %1305 = vmatpush.msra.mxu0 0.0
  %1306 = vmatpush.msra.mxu0 0.0
  %1307 = vmatpush.msra.mxu0 0.0
  %1308 = vmatpush.msra.mxu0 0.0
  %1309 = vmatpush.msra.mxu0 0.0
  %1310 = vmatpush.msra.mxu0 0.0
  %1311 = vmatpush.msra.mxu0 %v1225
  %1312 = vmatpush.msra.mxu0 %v1224
  %1313 = vmatmul.f32.gmra.mxu0 %v1250
  %v1314 = vpop.f32.mrf.mxu0
  %v1315 = vadd.f32 0.0, %v1314
  %1316 = vmatmul.f32.gmra.mxu0 %v1253
  %v1317 = vpop.f32.mrf.mxu0
  %v1318 = vadd.f32 0.0, %v1317
  %1319 = vmatmul.f32.gmra.mxu0 %v1256
  %v1320 = vpop.f32.mrf.mxu0
  %v1321 = vadd.f32 0.0, %v1320
  %1322 = vmatmul.f32.gmra.mxu0 %v1259
  %v1323 = vpop.f32.mrf.mxu0
  %v1324 = vadd.f32 0.0, %v1323
  %1325 = vmatmul.f32.gmra.mxu0 %v1262
  %v1326 = vpop.f32.mrf.mxu0
  %v1327 = vadd.f32 0.0, %v1326
  %1328 = vmatmul.f32.gmra.mxu0 %v1265
  %v1329 = vpop.f32.mrf.mxu0
  %v1330 = vadd.f32 0.0, %v1329
  %1331 = vmatmul.f32.gmra.mxu0 %v1268
  %v1332 = vpop.f32.mrf.mxu0
  %v1333 = vadd.f32 0.0, %v1332
  %1334 = vmatmul.f32.gmra.mxu0 %v1271
  %v1335 = vpop.f32.mrf.mxu0
  %v1336 = vadd.f32 0.0, %v1335
  %1337 = vmatmul.f32.gmra.mxu0 %v1274
  %v1338 = vpop.f32.mrf.mxu0
  %v1339 = vadd.f32 0.0, %v1338
  %1340 = vmatmul.f32.gmra.mxu0 %v1277
  %v1341 = vpop.f32.mrf.mxu0
  %v1342 = vadd.f32 0.0, %v1341
  %1343 = vmatmul.f32.gmra.mxu0 %v1280
  %v1344 = vpop.f32.mrf.mxu0
  %v1345 = vadd.f32 0.0, %v1344
  %1346 = vmatmul.f32.gmra.mxu0 %v1283
  %v1347 = vpop.f32.mrf.mxu0
  %v1348 = vadd.f32 0.0, %v1347
  %1349 = vmatmul.f32.gmra.mxu0 %v1286
  %v1350 = vpop.f32.mrf.mxu0
  %v1351 = vadd.f32 0.0, %v1350
  %1352 = vmatmul.f32.gmra.mxu0 %v1289
  %v1353 = vpop.f32.mrf.mxu0
  %v1354 = vadd.f32 0.0, %v1353
  %1355 = vmatmul.f32.gmra.mxu0 %v1292
  %v1356 = vpop.f32.mrf.mxu0
  %v1357 = vadd.f32 0.0, %v1356
  %1358 = vmatmul.f32.gmra.mxu0 %v1295
  %v1359 = vpop.f32.mrf.mxu0
  %v1360 = vadd.f32 0.0, %v1359
  %1361 = vdwg.mxu0
  %v1363 = vperm.slane %v1226, 0
  %v1365 = vadd.f32 %v1315, %v1363
  %v1366 = vadd.f32 %v1318, %v1363
  %v1367 = vadd.f32 %v1321, %v1363
  %v1368 = vadd.f32 %v1324, %v1363
  %v1369 = vadd.f32 %v1327, %v1363
  %v1370 = vadd.f32 %v1330, %v1363
  %v1371 = vadd.f32 %v1333, %v1363
  %v1372 = vadd.f32 %v1336, %v1363
  %v1373 = vadd.f32 %v1339, %v1363
  %v1374 = vadd.f32 %v1342, %v1363
  %v1375 = vadd.f32 %v1345, %v1363
  %v1376 = vadd.f32 %v1348, %v1363
  %v1377 = vadd.f32 %v1351, %v1363
  %v1378 = vadd.f32 %v1354, %v1363
  %v1379 = vadd.f32 %v1357, %v1363
  %v1380 = vadd.f32 %v1360, %v1363
  %vm1381 = vcmask 23552
  %1382 = vst.msk [vmem:[%s14] sm:$0xff] %vm1381, %v1365
  %1383 = vst.msk [vmem:[%s14 + $0x8] sm:$0xff] %vm1381, %v1366
  %1384 = vst.msk [vmem:[%s14 + $0x10] sm:$0xff] %vm1381, %v1367
  %1385 = vst.msk [vmem:[%s14 + $0x18] sm:$0xff] %vm1381, %v1368
  %1386 = vst.msk [vmem:[%s14 + $0x20] sm:$0xff] %vm1381, %v1369
  %1387 = vst.msk [vmem:[%s14 + $0x28] sm:$0xff] %vm1381, %v1370
  %1388 = vst.msk [vmem:[%s14 + $0x30] sm:$0xff] %vm1381, %v1371
  %1389 = vst.msk [vmem:[%s14 + $0x38] sm:$0xff] %vm1381, %v1372
  %1390 = vst.msk [vmem:[%s14 + $0x40] sm:$0xff] %vm1381, %v1373
  %1391 = vst.msk [vmem:[%s14 + $0x48] sm:$0xff] %vm1381, %v1374
  %1392 = vst.msk [vmem:[%s14 + $0x50] sm:$0xff] %vm1381, %v1375
  %1393 = vst.msk [vmem:[%s14 + $0x58] sm:$0xff] %vm1381, %v1376
  %1394 = vst.msk [vmem:[%s14 + $0x60] sm:$0xff] %vm1381, %v1377
  %1395 = vst.msk [vmem:[%s14 + $0x68] sm:$0xff] %vm1381, %v1378
  %1396 = vst.msk [vmem:[%s14 + $0x70] sm:$0xff] %vm1381, %v1379
  %1397 = vst.msk [vmem:[%s14 + $0x78] sm:$0xff] %vm1381, %v1380
  // Predicated region
  $region54: #{_forward.7} parent=0 // pred_check
    _
  $region55: #{_forward.7} parent=0 // pred_check_branch
    %1399 = sbr.rel (0) target = $region57
  $region56: #{_forward.7} parent=0 // pred_region
    _
  $region57: #{_forward.7} parent=0 // pred_fallthru
    _
  // Predicated region
  $region58: #{_forward.7} parent=0 // pred_check
    _
  $region59: #{_forward.7} parent=0 // pred_check_branch
    %1401 = sbr.rel (0) target = $region61
  $region60: #{_forward.7} parent=0 // pred_region
    _
  $region61: #{_forward.7} parent=0 // pred_fallthru
    _
  // Predicated region
  $region62: #{_forward.7} parent=0 // pred_check
    _
  $region63: #{_forward.7} parent=0 // pred_check_branch
    %1403 = sbr.rel (0) target = $region65
  $region64: #{_forward.7} parent=0 // pred_region
    _
  $region65: #{_forward.7} parent=0 // pred_fallthru
    _
  // Predicated region
  $region66: #{_forward.7} parent=0 // pred_check
    _
  $region67: #{_forward.7} parent=0 // pred_check_branch
    %1405 = sbr.rel (0) target = $region69
  $region68: #{_forward.7} parent=0 // pred_region
    _
  $region69: #{_forward.7} parent=0 // pred_fallthru
    _

// kernel: _forward.6
$region0: #{_forward.6}
  #allocation0 [shape = 'u32[]', space=smem, size = 0x4, offset = 0x4, fixed_abs, tag = 'smem constant byte address 0x4 - core index']
  #allocation1 [shape = 'u32[72,128]{1,0:T(1,128)}', space=vmem, size = 0x9000, scoped, tag = 'internal scratch']
  %s0 = inlined_call_operand.vmem [shape: f32[2,32], index: 0, kind: input, shape index: {}]
  %s1 = inlined_call_operand.vmem [shape: f32[32,16], index: 1, kind: input, shape index: {}]
  %s2 = inlined_call_operand.vmem [shape: f32[1,16], index: 2, kind: input, shape index: {}]
  %s3 = inlined_call_operand.vmem [shape: f32[2,10,10,16], index: 3, kind: input, shape index: {}]
  %s4 = inlined_call_operand.vmem [shape: f32[144,16], index: 4, kind: input, shape index: {}]
  %s5 = inlined_call_operand.vmem [shape: f32[16,16], index: 5, kind: input, shape index: {}]
  %s6 = inlined_call_operand.vmem [shape: f32[8,8], index: 6, kind: input, shape index: {}]
  %s7 = inlined_call_operand.vmem [shape: f32[1,16], index: 7, kind: input, shape index: {}]
  %s8 = inlined_call_operand.vmem [shape: f32[2,8,8,16], index: 8, kind: output, shape index: {}]
  %s9 = sld [smem:[#allocation0]]
  $region42: #{_forward.6} parent=0
    _
  %s11 = ssub.s32 1, %s9
  %s12 = scalar_select 0, %s11, %s9
  // Predicated region
  $region2: #{_forward.6} parent=0 // pred_check
    _
  $region3: #{_forward.6} parent=0 // pred_check_branch
    %14 = sbr.rel (0) target = $region5
  $region4: #{_forward.6} parent=0 // pred_region
    _
  $region5: #{_forward.6} parent=0 // pred_fallthru
    _
  // Predicated region
  $region6: #{_forward.6} parent=0 // pred_check
    _
  $region7: #{_forward.6} parent=0 // pred_check_branch
    %16 = sbr.rel (0) target = $region9
  $region8: #{_forward.6} parent=0 // pred_region
    _
  $region9: #{_forward.6} parent=0 // pred_fallthru
    _
  // Predicated region
  $region10: #{_forward.6} parent=0 // pred_check
    _
  $region11: #{_forward.6} parent=0 // pred_check_branch
    %18 = sbr.rel (0) target = $region13
  $region12: #{_forward.6} parent=0 // pred_region
    _
  $region13: #{_forward.6} parent=0 // pred_fallthru
    _
  // Predicated region
  $region14: #{_forward.6} parent=0 // pred_check
    _
  $region15: #{_forward.6} parent=0 // pred_check_branch
    %20 = sbr.rel (0) target = $region17
  $region16: #{_forward.6} parent=0 // pred_region
    _
  $region17: #{_forward.6} parent=0 // pred_fallthru
    _
  // Predicated region
  $region18: #{_forward.6} parent=0 // pred_check
    _
  $region19: #{_forward.6} parent=0 // pred_check_branch
    %22 = sbr.rel (0) target = $region21
  $region20: #{_forward.6} parent=0 // pred_region
    _
  $region21: #{_forward.6} parent=0 // pred_fallthru
    _
  // Predicated region
  $region22: #{_forward.6} parent=0 // pred_check
    _
  $region23: #{_forward.6} parent=0 // pred_check_branch
    %24 = sbr.rel (0) target = $region25
  $region24: #{_forward.6} parent=0 // pred_region
    _
  $region25: #{_forward.6} parent=0 // pred_fallthru
    _
  // Predicated region
  $region26: #{_forward.6} parent=0 // pred_check
    _
  $region27: #{_forward.6} parent=0 // pred_check_branch
    %26 = sbr.rel (0) target = $region29
  $region28: #{_forward.6} parent=0 // pred_region
    _
  $region29: #{_forward.6} parent=0 // pred_fallthru
    _
  // Predicated region
  $region30: #{_forward.6} parent=0 // pred_check
    _
  $region31: #{_forward.6} parent=0 // pred_check_branch
    %28 = sbr.rel (0) target = $region33
  $region32: #{_forward.6} parent=0 // pred_region
    _
  $region33: #{_forward.6} parent=0 // pred_fallthru
    _
  %v29 = vld [vmem:[%s0] sm:$0x3]
  %v30 = vld [vmem:[%s1] sm:$0xff]
  %v31 = vld [vmem:[%s1 + $0x8] sm:$0xff]
  %v32 = vld [vmem:[%s1 + $0x10] sm:$0xff]
  %v33 = vld [vmem:[%s1 + $0x18] sm:$0xff]
  %v34 = vld [vmem:[%s2] sm:$0x1]
  %v36 = vperm.slane %v34, 0
  %vm38 = vcmask 261120
  %v40 = vsel %vm38, %v29, 0
  %42 = vmatpush.msra.mxu0 0.0
  %43 = vmatpush.msra.mxu0 0.0
  %44 = vmatpush.msra.mxu0 0.0
  %45 = vmatpush.msra.mxu0 0.0
  %46 = vmatpush.msra.mxu0 0.0
  %47 = vmatpush.msra.mxu0 0.0
  %48 = vmatpush.msra.mxu0 0.0
  %49 = vmatpush.msra.mxu0 0.0
  %50 = vmatpush.msra.mxu0 0.0
  %51 = vmatpush.msra.mxu0 0.0
  %52 = vmatpush.msra.mxu0 0.0
  %53 = vmatpush.msra.mxu0 0.0
  %54 = vmatpush.msra.mxu0 %v33
  %55 = vmatpush.msra.mxu0 %v32
  %56 = vmatpush.msra.mxu0 %v31
  %57 = vmatpush.msra.mxu0 %v30
  %58 = vmatmul.f32.gmra.mxu0 %v40
  %v59 = vpop.f32.mrf.mxu0
  %v60 = vadd.f32 %v36, %v59
  %61 = vdwg.mxu0
  %v62 = vld [vmem:[%s3] sm:$0xff]
  %v63 = vld [vmem:[%s3 + $0x8] sm:$0x3]
  %v64 = vld [vmem:[%s3 + $0x10] sm:$0xff]
  %v65 = vld [vmem:[%s3 + $0x18] sm:$0x3]
  %v66 = vld [vmem:[%s3 + $0x20] sm:$0xff]
  %v67 = vld [vmem:[%s3 + $0x28] sm:$0x3]
  %v68 = vld [vmem:[%s3 + $0x30] sm:$0xff]
  %v69 = vld [vmem:[%s3 + $0x38] sm:$0x3]
  %v70 = vld [vmem:[%s3 + $0x40] sm:$0xff]
  %v71 = vld [vmem:[%s3 + $0x48] sm:$0x3]
  %v72 = vld [vmem:[%s3 + $0x50] sm:$0xff]
  %v73 = vld [vmem:[%s3 + $0x58] sm:$0x3]
  %v74 = vld [vmem:[%s3 + $0x60] sm:$0xff]
  %v75 = vld [vmem:[%s3 + $0x68] sm:$0x3]
  %v76 = vld [vmem:[%s3 + $0x70] sm:$0xff]
  %v77 = vld [vmem:[%s3 + $0x78] sm:$0x3]
  %v78 = vld [vmem:[%s3 + $0x80] sm:$0xff]
  %v79 = vld [vmem:[%s3 + $0x88] sm:$0x3]
  %v80 = vld [vmem:[%s3 + $0x90] sm:$0xff]
  %v81 = vld [vmem:[%s3 + $0x98] sm:$0x3]
  %v82 = vld [vmem:[%s3 + $0xa0] sm:$0xff]
  %v83 = vld [vmem:[%s3 + $0xa8] sm:$0x3]
  %v84 = vld [vmem:[%s3 + $0xb0] sm:$0xff]
  %v85 = vld [vmem:[%s3 + $0xb8] sm:$0x3]
  %v86 = vld [vmem:[%s3 + $0xc0] sm:$0xff]
  %v87 = vld [vmem:[%s3 + $0xc8] sm:$0x3]
  %v88 = vld [vmem:[%s3 + $0xd0] sm:$0xff]
  %v89 = vld [vmem:[%s3 + $0xd8] sm:$0x3]
  %v90 = vld [vmem:[%s3 + $0xe0] sm:$0xff]
  %v91 = vld [vmem:[%s3 + $0xe8] sm:$0x3]
  %v92 = vld [vmem:[%s3 + $0xf0] sm:$0xff]
  %v93 = vld [vmem:[%s3 + $0xf8] sm:$0x3]
  %v94 = vld [vmem:[%s3 + $0x100] sm:$0xff]
  %v95 = vld [vmem:[%s3 + $0x108] sm:$0x3]
  %v96 = vld [vmem:[%s3 + $0x110] sm:$0xff]
  %v97 = vld [vmem:[%s3 + $0x118] sm:$0x3]
  %v98 = vld [vmem:[%s3 + $0x120] sm:$0xff]
  %v99 = vld [vmem:[%s3 + $0x128] sm:$0x3]
  %v100 = vld [vmem:[%s3 + $0x130] sm:$0xff]
  %v101 = vld [vmem:[%s3 + $0x138] sm:$0x3]
  %v102 = vld [vmem:[%s4] sm:$0xff]
  %v103 = vld [vmem:[%s4 + $0x8] sm:$0xff]
  %v104 = vld [vmem:[%s4 + $0x10] sm:$0xff]
  %v105 = vld [vmem:[%s4 + $0x18] sm:$0xff]
  %v106 = vld [vmem:[%s4 + $0x20] sm:$0xff]
  %v107 = vld [vmem:[%s4 + $0x28] sm:$0xff]
  %v108 = vld [vmem:[%s4 + $0x30] sm:$0xff]
  %v109 = vld [vmem:[%s4 + $0x38] sm:$0xff]
  %v110 = vld [vmem:[%s4 + $0x40] sm:$0xff]
  %v111 = vld [vmem:[%s4 + $0x48] sm:$0xff]
  %v112 = vld [vmem:[%s4 + $0x50] sm:$0xff]
  %v113 = vld [vmem:[%s4 + $0x58] sm:$0xff]
  %v114 = vld [vmem:[%s4 + $0x60] sm:$0xff]
  %v115 = vld [vmem:[%s4 + $0x68] sm:$0xff]
  %v116 = vld [vmem:[%s4 + $0x70] sm:$0xff]
  %v117 = vld [vmem:[%s4 + $0x78] sm:$0xff]
  %v118 = vld [vmem:[%s4 + $0x80] sm:$0xff]
  %v119 = vld [vmem:[%s4 + $0x88] sm:$0xff]
  %v120 = vld [vmem:[%s5] sm:$0xff]
  %v121 = vld [vmem:[%s5 + $0x8] sm:$0xff]
  %v122 = vld [vmem:[%s6] sm:$0xff]
  %v123 = vld [vmem:[%s7] sm:$0x1]
  %v125 = vrot.slane %v60, 1
  %v126 = vperm.slane %v60, 0
  %v127 = vperm.slane %v125, 0
  %v130 = vmul.f32 %v62, %v126
  %v131 = vmul.f32 %v63, %v126
  %v132 = vmul.f32 %v64, %v126
  %v133 = vmul.f32 %v65, %v126
  %v134 = vmul.f32 %v66, %v126
  %v135 = vmul.f32 %v67, %v126
  %v136 = vmul.f32 %v68, %v126
  %v137 = vmul.f32 %v69, %v126
  %v138 = vmul.f32 %v70, %v126
  %v139 = vmul.f32 %v71, %v126
  %v140 = vmul.f32 %v72, %v126
  %v141 = vmul.f32 %v73, %v126
  %v142 = vmul.f32 %v74, %v126
  %v143 = vmul.f32 %v75, %v126
  %v144 = vmul.f32 %v76, %v126
  %v145 = vmul.f32 %v77, %v126
  %v146 = vmul.f32 %v78, %v126
  %v147 = vmul.f32 %v79, %v126
  %v148 = vmul.f32 %v80, %v126
  %v149 = vmul.f32 %v81, %v126
  %v150 = vmul.f32 %v82, %v127
  %v151 = vmul.f32 %v83, %v127
  %v152 = vmul.f32 %v84, %v127
  %v153 = vmul.f32 %v85, %v127
  %v154 = vmul.f32 %v86, %v127
  %v155 = vmul.f32 %v87, %v127
  %v156 = vmul.f32 %v88, %v127
  %v157 = vmul.f32 %v89, %v127
  %v158 = vmul.f32 %v90, %v127
  %v159 = vmul.f32 %v91, %v127
  %v160 = vmul.f32 %v92, %v127
  %v161 = vmul.f32 %v93, %v127
  %v162 = vmul.f32 %v94, %v127
  %v163 = vmul.f32 %v95, %v127
  %v164 = vmul.f32 %v96, %v127
  %v165 = vmul.f32 %v97, %v127
  %v166 = vmul.f32 %v98, %v127
  %v167 = vmul.f32 %v99, %v127
  %v168 = vmul.f32 %v100, %v127
  %v169 = vmul.f32 %v101, %v127
  %vm202 = vcmask 1046528
  %v203 = vrot.slane %v130, 1
  %v204 = vrot.slane %v131, 1
  %v205 = vsel %vm202, %v203, %v204
  %v206 = vrot.slane %v132, 1
  %v207 = vrot.slane %v133, 1
  %v208 = vsel %vm202, %v206, %v207
  %v209 = vrot.slane %v134, 1
  %v210 = vrot.slane %v135, 1
  %v211 = vsel %vm202, %v209, %v210
  %v212 = vrot.slane %v136, 1
  %v213 = vrot.slane %v137, 1
  %v214 = vsel %vm202, %v212, %v213
  %v215 = vrot.slane %v138, 1
  %v216 = vrot.slane %v139, 1
  %v217 = vsel %vm202, %v215, %v216
  %v218 = vrot.slane %v140, 1
  %v219 = vrot.slane %v141, 1
  %v220 = vsel %vm202, %v218, %v219
  %v221 = vrot.slane %v142, 1
  %v222 = vrot.slane %v143, 1
  %v223 = vsel %vm202, %v221, %v222
  %v224 = vrot.slane %v144, 1
  %v225 = vrot.slane %v145, 1
  %v226 = vsel %vm202, %v224, %v225
  %v227 = vrot.slane %v150, 1
  %v228 = vrot.slane %v151, 1
  %v229 = vsel %vm202, %v227, %v228
  %v230 = vrot.slane %v152, 1
  %v231 = vrot.slane %v153, 1
  %v232 = vsel %vm202, %v230, %v231
  %v233 = vrot.slane %v154, 1
  %v234 = vrot.slane %v155, 1
  %v235 = vsel %vm202, %v233, %v234
  %v236 = vrot.slane %v156, 1
  %v237 = vrot.slane %v157, 1
  %v238 = vsel %vm202, %v236, %v237
  %v239 = vrot.slane %v158, 1
  %v240 = vrot.slane %v159, 1
  %v241 = vsel %vm202, %v239, %v240
  %v242 = vrot.slane %v160, 1
  %v243 = vrot.slane %v161, 1
  %v244 = vsel %vm202, %v242, %v243
  %v245 = vrot.slane %v162, 1
  %v246 = vrot.slane %v163, 1
  %v247 = vsel %vm202, %v245, %v246
  %v248 = vrot.slane %v164, 1
  %v249 = vrot.slane %v165, 1
  %v250 = vsel %vm202, %v248, %v249
  %251 = vrot.lane.b32.xlu0 %v205, 16
  %v252 = vpop.permute.xlu0 %251
  %253 = vrot.lane.b32.xlu0 %v208, 16
  %v254 = vpop.permute.xlu0 %253
  %255 = vrot.lane.b32.xlu0 %v211, 16
  %v256 = vpop.permute.xlu0 %255
  %257 = vrot.lane.b32.xlu0 %v214, 16
  %v258 = vpop.permute.xlu0 %257
  %259 = vrot.lane.b32.xlu0 %v217, 16
  %v260 = vpop.permute.xlu0 %259
  %261 = vrot.lane.b32.xlu0 %v220, 16
  %v262 = vpop.permute.xlu0 %261
  %263 = vrot.lane.b32.xlu0 %v223, 16
  %v264 = vpop.permute.xlu0 %263
  %265 = vrot.lane.b32.xlu0 %v226, 16
  %v266 = vpop.permute.xlu0 %265
  %267 = vrot.lane.b32.xlu0 %v229, 16
  %v268 = vpop.permute.xlu0 %267
  %269 = vrot.lane.b32.xlu0 %v232, 16
  %v270 = vpop.permute.xlu0 %269
  %271 = vrot.lane.b32.xlu0 %v235, 16
  %v272 = vpop.permute.xlu0 %271
  %273 = vrot.lane.b32.xlu0 %v238, 16
  %v274 = vpop.permute.xlu0 %273
  %275 = vrot.lane.b32.xlu0 %v241, 16
  %v276 = vpop.permute.xlu0 %275
  %277 = vrot.lane.b32.xlu0 %v244, 16
  %v278 = vpop.permute.xlu0 %277
  %279 = vrot.lane.b32.xlu0 %v247, 16
  %v280 = vpop.permute.xlu0 %279
  %281 = vrot.lane.b32.xlu0 %v250, 16
  %v282 = vpop.permute.xlu0 %281
  %vm299 = vcmask 1045504
  %v300 = vrot.slane %v130, 2
  %v301 = vrot.slane %v131, 2
  %v302 = vsel %vm299, %v300, %v301
  %v303 = vrot.slane %v132, 2
  %v304 = vrot.slane %v133, 2
  %v305 = vsel %vm299, %v303, %v304
  %v306 = vrot.slane %v134, 2
  %v307 = vrot.slane %v135, 2
  %v308 = vsel %vm299, %v306, %v307
  %v309 = vrot.slane %v136, 2
  %v310 = vrot.slane %v137, 2
  %v311 = vsel %vm299, %v309, %v310
  %v312 = vrot.slane %v138, 2
  %v313 = vrot.slane %v139, 2
  %v314 = vsel %vm299, %v312, %v313
  %v315 = vrot.slane %v140, 2
  %v316 = vrot.slane %v141, 2
  %v317 = vsel %vm299, %v315, %v316
  %v318 = vrot.slane %v142, 2
  %v319 = vrot.slane %v143, 2
  %v320 = vsel %vm299, %v318, %v319
  %v321 = vrot.slane %v144, 2
  %v322 = vrot.slane %v145, 2
  %v323 = vsel %vm299, %v321, %v322
  %v324 = vrot.slane %v150, 2
  %v325 = vrot.slane %v151, 2
  %v326 = vsel %vm299, %v324, %v325
  %v327 = vrot.slane %v152, 2
  %v328 = vrot.slane %v153, 2
  %v329 = vsel %vm299, %v327, %v328
  %v330 = vrot.slane %v154, 2
  %v331 = vrot.slane %v155, 2
  %v332 = vsel %vm299, %v330, %v331
  %v333 = vrot.slane %v156, 2
  %v334 = vrot.slane %v157, 2
  %v335 = vsel %vm299, %v333, %v334
  %v336 = vrot.slane %v158, 2
  %v337 = vrot.slane %v159, 2
  %v338 = vsel %vm299, %v336, %v337
  %v339 = vrot.slane %v160, 2
  %v340 = vrot.slane %v161, 2
  %v341 = vsel %vm299, %v339, %v340
  %v342 = vrot.slane %v162, 2
  %v343 = vrot.slane %v163, 2
  %v344 = vsel %vm299, %v342, %v343
  %v345 = vrot.slane %v164, 2
  %v346 = vrot.slane %v165, 2
  %v347 = vsel %vm299, %v345, %v346
  %348 = vrot.lane.b32.xlu0 %v302, 32
  %v349 = vpop.permute.xlu0 %348
  %350 = vrot.lane.b32.xlu0 %v305, 32
  %v351 = vpop.permute.xlu0 %350
  %352 = vrot.lane.b32.xlu0 %v308, 32
  %v353 = vpop.permute.xlu0 %352
  %354 = vrot.lane.b32.xlu0 %v311, 32
  %v355 = vpop.permute.xlu0 %354
  %356 = vrot.lane.b32.xlu0 %v314, 32
  %v357 = vpop.permute.xlu0 %356
  %358 = vrot.lane.b32.xlu0 %v317, 32
  %v359 = vpop.permute.xlu0 %358
  %360 = vrot.lane.b32.xlu0 %v320, 32
  %v361 = vpop.permute.xlu0 %360
  %362 = vrot.lane.b32.xlu0 %v323, 32
  %v363 = vpop.permute.xlu0 %362
  %364 = vrot.lane.b32.xlu0 %v326, 32
  %v365 = vpop.permute.xlu0 %364
  %366 = vrot.lane.b32.xlu0 %v329, 32
  %v367 = vpop.permute.xlu0 %366
  %368 = vrot.lane.b32.xlu0 %v332, 32
  %v369 = vpop.permute.xlu0 %368
  %370 = vrot.lane.b32.xlu0 %v335, 32
  %v371 = vpop.permute.xlu0 %370
  %372 = vrot.lane.b32.xlu0 %v338, 32
  %v373 = vpop.permute.xlu0 %372
  %374 = vrot.lane.b32.xlu0 %v341, 32
  %v375 = vpop.permute.xlu0 %374
  %376 = vrot.lane.b32.xlu0 %v344, 32
  %v377 = vpop.permute.xlu0 %376
  %378 = vrot.lane.b32.xlu0 %v347, 32
  %v379 = vpop.permute.xlu0 %378
  %398 = vrot.lane.b32.xlu0 %v132, 48
  %v399 = vpop.permute.xlu0 %398
  %400 = vrot.lane.b32.xlu0 %v134, 48
  %v401 = vpop.permute.xlu0 %400
  %402 = vrot.lane.b32.xlu0 %v136, 48
  %v403 = vpop.permute.xlu0 %402
  %404 = vrot.lane.b32.xlu0 %v138, 48
  %v405 = vpop.permute.xlu0 %404
  %406 = vrot.lane.b32.xlu0 %v140, 48
  %v407 = vpop.permute.xlu0 %406
  %408 = vrot.lane.b32.xlu0 %v142, 48
  %v409 = vpop.permute.xlu0 %408
  %410 = vrot.lane.b32.xlu0 %v144, 48
  %v411 = vpop.permute.xlu0 %410
  %412 = vrot.lane.b32.xlu0 %v146, 48
  %v413 = vpop.permute.xlu0 %412
  %414 = vrot.lane.b32.xlu0 %v152, 48
  %v415 = vpop.permute.xlu0 %414
  %416 = vrot.lane.b32.xlu0 %v154, 48
  %v417 = vpop.permute.xlu0 %416
  %418 = vrot.lane.b32.xlu0 %v156, 48
  %v419 = vpop.permute.xlu0 %418
  %420 = vrot.lane.b32.xlu0 %v158, 48
  %v421 = vpop.permute.xlu0 %420
  %422 = vrot.lane.b32.xlu0 %v160, 48
  %v423 = vpop.permute.xlu0 %422
  %424 = vrot.lane.b32.xlu0 %v162, 48
  %v425 = vpop.permute.xlu0 %424
  %426 = vrot.lane.b32.xlu0 %v164, 48
  %v427 = vpop.permute.xlu0 %426
  %428 = vrot.lane.b32.xlu0 %v166, 48
  %v429 = vpop.permute.xlu0 %428
  %v448 = vrot.slane %v146, 1
  %v449 = vrot.slane %v147, 1
  %v450 = vsel %vm202, %v448, %v449
  %v451 = vrot.slane %v166, 1
  %v452 = vrot.slane %v167, 1
  %v453 = vsel %vm202, %v451, %v452
  %454 = vrot.lane.b32.xlu0 %v208, 64
  %v455 = vpop.permute.xlu0 %454
  %456 = vrot.lane.b32.xlu0 %v211, 64
  %v457 = vpop.permute.xlu0 %456
  %458 = vrot.lane.b32.xlu0 %v214, 64
  %v459 = vpop.permute.xlu0 %458
  %460 = vrot.lane.b32.xlu0 %v217, 64
  %v461 = vpop.permute.xlu0 %460
  %462 = vrot.lane.b32.xlu0 %v220, 64
  %v463 = vpop.permute.xlu0 %462
  %464 = vrot.lane.b32.xlu0 %v223, 64
  %v465 = vpop.permute.xlu0 %464
  %466 = vrot.lane.b32.xlu0 %v226, 64
  %v467 = vpop.permute.xlu0 %466
  %468 = vrot.lane.b32.xlu0 %v450, 64
  %v469 = vpop.permute.xlu0 %468
  %470 = vrot.lane.b32.xlu0 %v232, 64
  %v471 = vpop.permute.xlu0 %470
  %472 = vrot.lane.b32.xlu0 %v235, 64
  %v473 = vpop.permute.xlu0 %472
  %474 = vrot.lane.b32.xlu0 %v238, 64
  %v475 = vpop.permute.xlu0 %474
  %476 = vrot.lane.b32.xlu0 %v241, 64
  %v477 = vpop.permute.xlu0 %476
  %478 = vrot.lane.b32.xlu0 %v244, 64
  %v479 = vpop.permute.xlu0 %478
  %480 = vrot.lane.b32.xlu0 %v247, 64
  %v481 = vpop.permute.xlu0 %480
  %482 = vrot.lane.b32.xlu0 %v250, 64
  %v483 = vpop.permute.xlu0 %482
  %484 = vrot.lane.b32.xlu0 %v453, 64
  %v485 = vpop.permute.xlu0 %484
  %v502 = vrot.slane %v146, 2
  %v503 = vrot.slane %v147, 2
  %v504 = vsel %vm299, %v502, %v503
  %v505 = vrot.slane %v166, 2
  %v506 = vrot.slane %v167, 2
  %v507 = vsel %vm299, %v505, %v506
  %508 = vrot.lane.b32.xlu0 %v305, 80
  %v509 = vpop.permute.xlu0 %508
  %510 = vrot.lane.b32.xlu0 %v308, 80
  %v511 = vpop.permute.xlu0 %510
  %512 = vrot.lane.b32.xlu0 %v311, 80
  %v513 = vpop.permute.xlu0 %512
  %514 = vrot.lane.b32.xlu0 %v314, 80
  %v515 = vpop.permute.xlu0 %514
  %516 = vrot.lane.b32.xlu0 %v317, 80
  %v517 = vpop.permute.xlu0 %516
  %518 = vrot.lane.b32.xlu0 %v320, 80
  %v519 = vpop.permute.xlu0 %518
  %520 = vrot.lane.b32.xlu0 %v323, 80
  %v521 = vpop.permute.xlu0 %520
  %522 = vrot.lane.b32.xlu0 %v504, 80
  %v523 = vpop.permute.xlu0 %522
  %524 = vrot.lane.b32.xlu0 %v329, 80
  %v525 = vpop.permute.xlu0 %524
  %526 = vrot.lane.b32.xlu0 %v332, 80
  %v527 = vpop.permute.xlu0 %526
  %528 = vrot.lane.b32.xlu0 %v335, 80
  %v529 = vpop.permute.xlu0 %528
  %530 = vrot.lane.b32.xlu0 %v338, 80
  %v531 = vpop.permute.xlu0 %530
  %532 = vrot.lane.b32.xlu0 %v341, 80
  %v533 = vpop.permute.xlu0 %532
  %534 = vrot.lane.b32.xlu0 %v344, 80
  %v535 = vpop.permute.xlu0 %534
  %536 = vrot.lane.b32.xlu0 %v347, 80
  %v537 = vpop.permute.xlu0 %536
  %538 = vrot.lane.b32.xlu0 %v507, 80
  %v539 = vpop.permute.xlu0 %538
  %558 = vrot.lane.b32.xlu0 %v134, 96
  %v559 = vpop.permute.xlu0 %558
  %560 = vrot.lane.b32.xlu0 %v136, 96
  %v561 = vpop.permute.xlu0 %560
  %562 = vrot.lane.b32.xlu0 %v138, 96
  %v563 = vpop.permute.xlu0 %562
  %564 = vrot.lane.b32.xlu0 %v140, 96
  %v565 = vpop.permute.xlu0 %564
  %566 = vrot.lane.b32.xlu0 %v142, 96
  %v567 = vpop.permute.xlu0 %566
  %568 = vrot.lane.b32.xlu0 %v144, 96
  %v569 = vpop.permute.xlu0 %568
  %570 = vrot.lane.b32.xlu0 %v146, 96
  %v571 = vpop.permute.xlu0 %570
  %572 = vrot.lane.b32.xlu0 %v148, 96
  %v573 = vpop.permute.xlu0 %572
  %574 = vrot.lane.b32.xlu0 %v154, 96
  %v575 = vpop.permute.xlu0 %574
  %576 = vrot.lane.b32.xlu0 %v156, 96
  %v577 = vpop.permute.xlu0 %576
  %578 = vrot.lane.b32.xlu0 %v158, 96
  %v579 = vpop.permute.xlu0 %578
  %580 = vrot.lane.b32.xlu0 %v160, 96
  %v581 = vpop.permute.xlu0 %580
  %582 = vrot.lane.b32.xlu0 %v162, 96
  %v583 = vpop.permute.xlu0 %582
  %584 = vrot.lane.b32.xlu0 %v164, 96
  %v585 = vpop.permute.xlu0 %584
  %586 = vrot.lane.b32.xlu0 %v166, 96
  %v587 = vpop.permute.xlu0 %586
  %588 = vrot.lane.b32.xlu0 %v168, 96
  %v589 = vpop.permute.xlu0 %588
  %v608 = vrot.slane %v148, 1
  %v609 = vrot.slane %v149, 1
  %v610 = vsel %vm202, %v608, %v609
  %v611 = vrot.slane %v168, 1
  %v612 = vrot.slane %v169, 1
  %v613 = vsel %vm202, %v611, %v612
  %614 = vrot.lane.b32.xlu0 %v211, 112
  %v615 = vpop.permute.xlu0 %614
  %616 = vrot.lane.b32.xlu0 %v214, 112
  %v617 = vpop.permute.xlu0 %616
  %618 = vrot.lane.b32.xlu0 %v217, 112
  %v619 = vpop.permute.xlu0 %618
  %620 = vrot.lane.b32.xlu0 %v220, 112
  %v621 = vpop.permute.xlu0 %620
  %622 = vrot.lane.b32.xlu0 %v223, 112
  %v623 = vpop.permute.xlu0 %622
  %624 = vrot.lane.b32.xlu0 %v226, 112
  %v625 = vpop.permute.xlu0 %624
  %626 = vrot.lane.b32.xlu0 %v450, 112
  %v627 = vpop.permute.xlu0 %626
  %628 = vrot.lane.b32.xlu0 %v610, 112
  %v629 = vpop.permute.xlu0 %628
  %630 = vrot.lane.b32.xlu0 %v235, 112
  %v631 = vpop.permute.xlu0 %630
  %632 = vrot.lane.b32.xlu0 %v238, 112
  %v633 = vpop.permute.xlu0 %632
  %634 = vrot.lane.b32.xlu0 %v241, 112
  %v635 = vpop.permute.xlu0 %634
  %636 = vrot.lane.b32.xlu0 %v244, 112
  %v637 = vpop.permute.xlu0 %636
  %638 = vrot.lane.b32.xlu0 %v247, 112
  %v639 = vpop.permute.xlu0 %638
  %640 = vrot.lane.b32.xlu0 %v250, 112
  %v641 = vpop.permute.xlu0 %640
  %642 = vrot.lane.b32.xlu0 %v453, 112
  %v643 = vpop.permute.xlu0 %642
  %644 = vrot.lane.b32.xlu0 %v613, 112
  %v645 = vpop.permute.xlu0 %644
  %v662 = vrot.slane %v148, 2
  %v663 = vrot.slane %v149, 2
  %v664 = vsel %vm299, %v662, %v663
  %v665 = vrot.slane %v168, 2
  %v666 = vrot.slane %v169, 2
  %v667 = vsel %vm299, %v665, %v666
  %vm668 = vcmask 130048
  %v669 = vsel %vm668, %v130, %v252
  %v670 = vsel %vm668, %v132, %v254
  %v671 = vsel %vm668, %v134, %v256
  %v672 = vsel %vm668, %v136, %v258
  %v673 = vsel %vm668, %v138, %v260
  %v674 = vsel %vm668, %v140, %v262
  %v675 = vsel %vm668, %v142, %v264
  %v676 = vsel %vm668, %v144, %v266
  %v677 = vsel %vm668, %v150, %v268
  %v678 = vsel %vm668, %v152, %v270
  %v679 = vsel %vm668, %v154, %v272
  %v680 = vsel %vm668, %v156, %v274
  %v681 = vsel %vm668, %v158, %v276
  %v682 = vsel %vm668, %v160, %v278
  %v683 = vsel %vm668, %v162, %v280
  %v684 = vsel %vm668, %v164, %v282
  %v685 = vsel %vm38, %v669, %v349
  %v686 = vsel %vm38, %v670, %v351
  %v687 = vsel %vm38, %v671, %v353
  %v688 = vsel %vm38, %v672, %v355
  %v689 = vsel %vm38, %v673, %v357
  %v690 = vsel %vm38, %v674, %v359
  %v691 = vsel %vm38, %v675, %v361
  %v692 = vsel %vm38, %v676, %v363
  %v693 = vsel %vm38, %v677, %v365
  %v694 = vsel %vm38, %v678, %v367
  %v695 = vsel %vm38, %v679, %v369
  %v696 = vsel %vm38, %v680, %v371
  %v697 = vsel %vm38, %v681, %v373
  %v698 = vsel %vm38, %v682, %v375
  %v699 = vsel %vm38, %v683, %v377
  %v700 = vsel %vm38, %v684, %v379
  %vm701 = vcmask 392192
  %v702 = vsel %vm701, %v685, %v399
  %v703 = vsel %vm701, %v686, %v401
  %v704 = vsel %vm701, %v687, %v403
  %v705 = vsel %vm701, %v688, %v405
  %v706 = vsel %vm701, %v689, %v407
  %v707 = vsel %vm701, %v690, %v409
  %v708 = vsel %vm701, %v691, %v411
  %v709 = vsel %vm701, %v692, %v413
  %v710 = vsel %vm701, %v693, %v415
  %v711 = vsel %vm701, %v694, %v417
  %v712 = vsel %vm701, %v695, %v419
  %v713 = vsel %vm701, %v696, %v421
  %v714 = vsel %vm701, %v697, %v423
  %v715 = vsel %vm701, %v698, %v425
  %v716 = vsel %vm701, %v699, %v427
  %v717 = vsel %vm701, %v700, %v429
  %vm718 = vcmask 523264
  %v719 = vsel %vm718, %v702, %v455
  %v720 = vsel %vm718, %v703, %v457
  %v721 = vsel %vm718, %v704, %v459
  %v722 = vsel %vm718, %v705, %v461
  %v723 = vsel %vm718, %v706, %v463
  %v724 = vsel %vm718, %v707, %v465
  %v725 = vsel %vm718, %v708, %v467
  %v726 = vsel %vm718, %v709, %v469
  %v727 = vsel %vm718, %v710, %v471
  %v728 = vsel %vm718, %v711, %v473
  %v729 = vsel %vm718, %v712, %v475
  %v730 = vsel %vm718, %v713, %v477
  %v731 = vsel %vm718, %v714, %v479
  %v732 = vsel %vm718, %v715, %v481
  %v733 = vsel %vm718, %v716, %v483
  %v734 = vsel %vm718, %v717, %v485
  %vm735 = vcmask 654336
  %v736 = vsel %vm735, %v719, %v509
  %v737 = vsel %vm735, %v720, %v511
  %v738 = vsel %vm735, %v721, %v513
  %v739 = vsel %vm735, %v722, %v515
  %v740 = vsel %vm735, %v723, %v517
  %v741 = vsel %vm735, %v724, %v519
  %v742 = vsel %vm735, %v725, %v521
  %v743 = vsel %vm735, %v726, %v523
  %v744 = vsel %vm735, %v727, %v525
  %v745 = vsel %vm735, %v728, %v527
  %v746 = vsel %vm735, %v729, %v529
  %v747 = vsel %vm735, %v730, %v531
  %v748 = vsel %vm735, %v731, %v533
  %v749 = vsel %vm735, %v732, %v535
  %v750 = vsel %vm735, %v733, %v537
  %v751 = vsel %vm735, %v734, %v539
  %vm752 = vcmask 785408
  %v753 = vsel %vm752, %v736, %v559
  %v754 = vsel %vm752, %v737, %v561
  %v755 = vsel %vm752, %v738, %v563
  %v756 = vsel %vm752, %v739, %v565
  %v757 = vsel %vm752, %v740, %v567
  %v758 = vsel %vm752, %v741, %v569
  %v759 = vsel %vm752, %v742, %v571
  %v760 = vsel %vm752, %v743, %v573
  %v761 = vsel %vm752, %v744, %v575
  %v762 = vsel %vm752, %v745, %v577
  %v763 = vsel %vm752, %v746, %v579
  %v764 = vsel %vm752, %v747, %v581
  %v765 = vsel %vm752, %v748, %v583
  %v766 = vsel %vm752, %v749, %v585
  %v767 = vsel %vm752, %v750, %v587
  %v768 = vsel %vm752, %v751, %v589
  %vm769 = vcmask 916480
  %v770 = vsel %vm769, %v753, %v615
  %v771 = vsel %vm769, %v754, %v617
  %v772 = vsel %vm769, %v755, %v619
  %v773 = vsel %vm769, %v756, %v621
  %v774 = vsel %vm769, %v757, %v623
  %v775 = vsel %vm769, %v758, %v625
  %v776 = vsel %vm769, %v759, %v627
  %v777 = vsel %vm769, %v760, %v629
  %v778 = vsel %vm769, %v761, %v631
  %v779 = vsel %vm769, %v762, %v633
  %v780 = vsel %vm769, %v763, %v635
  %v781 = vsel %vm769, %v764, %v637
  %v782 = vsel %vm769, %v765, %v639
  %v783 = vsel %vm769, %v766, %v641
  %v784 = vsel %vm769, %v767, %v643
  %v785 = vsel %vm769, %v768, %v645
  %v786 = vsel %vm668, %v308, 0
  %v788 = vsel %vm668, %v311, 0
  %v790 = vsel %vm668, %v314, 0
  %v792 = vsel %vm668, %v317, 0
  %v794 = vsel %vm668, %v320, 0
  %v796 = vsel %vm668, %v323, 0
  %v798 = vsel %vm668, %v504, 0
  %v800 = vsel %vm668, %v664, 0
  %v802 = vsel %vm668, %v332, 0
  %v804 = vsel %vm668, %v335, 0
  %v806 = vsel %vm668, %v338, 0
  %v808 = vsel %vm668, %v341, 0
  %v810 = vsel %vm668, %v344, 0
  %v812 = vsel %vm668, %v347, 0
  %v814 = vsel %vm668, %v507, 0
  %v816 = vsel %vm668, %v667, 0
  %818 = vmatpush.msra.mxu0 %v117
  %819 = vmatpush.msra.mxu0 %v116
  %820 = vmatpush.msra.mxu0 %v115
  %821 = vmatpush.msra.mxu0 %v114
  %822 = vmatpush.msra.mxu0 %v113
  %823 = vmatpush.msra.mxu0 %v112
  %824 = vmatpush.msra.mxu0 %v111
  %825 = vmatpush.msra.mxu0 %v110
  %826 = vmatpush.msra.mxu0 %v109
  %827 = vmatpush.msra.mxu0 %v108
  %828 = vmatpush.msra.mxu0 %v107
  %829 = vmatpush.msra.mxu0 %v106
  %830 = vmatpush.msra.mxu0 %v105
  %831 = vmatpush.msra.mxu0 %v104
  %832 = vmatpush.msra.mxu0 %v103
  %833 = vmatpush.msra.mxu0 %v102
  %834 = vmatmul.f32.gmra.mxu0 %v770
  %v835 = vpop.f32.mrf.mxu0
  %v836 = vadd.f32 0.0, %v835
  %837 = vmatmul.f32.gmra.mxu0 %v771
  %v838 = vpop.f32.mrf.mxu0
  %v839 = vadd.f32 0.0, %v838
  %840 = vmatmul.f32.gmra.mxu0 %v772
  %v841 = vpop.f32.mrf.mxu0
  %v842 = vadd.f32 0.0, %v841
  %843 = vmatmul.f32.gmra.mxu0 %v773
  %v844 = vpop.f32.mrf.mxu0
  %v845 = vadd.f32 0.0, %v844
  %846 = vmatmul.f32.gmra.mxu0 %v774
  %v847 = vpop.f32.mrf.mxu0
  %v848 = vadd.f32 0.0, %v847
  %849 = vmatmul.f32.gmra.mxu0 %v775
  %v850 = vpop.f32.mrf.mxu0
  %v851 = vadd.f32 0.0, %v850
  %852 = vmatmul.f32.gmra.mxu0 %v776
  %v853 = vpop.f32.mrf.mxu0
  %v854 = vadd.f32 0.0, %v853
  %855 = vmatmul.f32.gmra.mxu0 %v777
  %v856 = vpop.f32.mrf.mxu0
  %v857 = vadd.f32 0.0, %v856
  %858 = vmatmul.f32.gmra.mxu0 %v778
  %v859 = vpop.f32.mrf.mxu0
  %v860 = vadd.f32 0.0, %v859
  %861 = vmatmul.f32.gmra.mxu0 %v779
  %v862 = vpop.f32.mrf.mxu0
  %v863 = vadd.f32 0.0, %v862
  %864 = vmatmul.f32.gmra.mxu0 %v780
  %v865 = vpop.f32.mrf.mxu0
  %v866 = vadd.f32 0.0, %v865
  %867 = vmatmul.f32.gmra.mxu0 %v781
  %v868 = vpop.f32.mrf.mxu0
  %v869 = vadd.f32 0.0, %v868
  %870 = vmatmul.f32.gmra.mxu0 %v782
  %v871 = vpop.f32.mrf.mxu0
  %v872 = vadd.f32 0.0, %v871
  %873 = vmatmul.f32.gmra.mxu0 %v783
  %v874 = vpop.f32.mrf.mxu0
  %v875 = vadd.f32 0.0, %v874
  %876 = vmatmul.f32.gmra.mxu0 %v784
  %v877 = vpop.f32.mrf.mxu0
  %v878 = vadd.f32 0.0, %v877
  %879 = vmatmul.f32.gmra.mxu0 %v785
  %v880 = vpop.f32.mrf.mxu0
  %v881 = vadd.f32 0.0, %v880
  %882 = vdwg.mxu0
  %883 = vmatpush.msra.mxu0 0.0
  %884 = vmatpush.msra.mxu0 0.0
  %885 = vmatpush.msra.mxu0 0.0
  %886 = vmatpush.msra.mxu0 0.0
  %887 = vmatpush.msra.mxu0 0.0
  %888 = vmatpush.msra.mxu0 0.0
  %889 = vmatpush.msra.mxu0 0.0
  %890 = vmatpush.msra.mxu0 0.0
  %891 = vmatpush.msra.mxu0 0.0
  %892 = vmatpush.msra.mxu0 0.0
  %893 = vmatpush.msra.mxu0 0.0
  %894 = vmatpush.msra.mxu0 0.0
  %895 = vmatpush.msra.mxu0 0.0
  %896 = vmatpush.msra.mxu0 0.0
  %897 = vmatpush.msra.mxu0 %v119
  %898 = vmatpush.msra.mxu0 %v118
  %899 = vmatmul.f32.gmra.mxu0 %v786
  %v900 = vpop.f32.mrf.mxu0
  %v901 = vadd.f32 %v836, %v900
  %902 = vmatmul.f32.gmra.mxu0 %v788
  %v903 = vpop.f32.mrf.mxu0
  %v904 = vadd.f32 %v839, %v903
  %905 = vmatmul.f32.gmra.mxu0 %v790
  %v906 = vpop.f32.mrf.mxu0
  %v907 = vadd.f32 %v842, %v906
  %908 = vmatmul.f32.gmra.mxu0 %v792
  %v909 = vpop.f32.mrf.mxu0
  %v910 = vadd.f32 %v845, %v909
  %911 = vmatmul.f32.gmra.mxu0 %v794
  %v912 = vpop.f32.mrf.mxu0
  %v913 = vadd.f32 %v848, %v912
  %914 = vmatmul.f32.gmra.mxu0 %v796
  %v915 = vpop.f32.mrf.mxu0
  %v916 = vadd.f32 %v851, %v915
  %917 = vmatmul.f32.gmra.mxu0 %v798
  %v918 = vpop.f32.mrf.mxu0
  %v919 = vadd.f32 %v854, %v918
  %920 = vmatmul.f32.gmra.mxu0 %v800
  %v921 = vpop.f32.mrf.mxu0
  %v922 = vadd.f32 %v857, %v921
  %923 = vmatmul.f32.gmra.mxu0 %v802
  %v924 = vpop.f32.mrf.mxu0
  %v925 = vadd.f32 %v860, %v924
  %926 = vmatmul.f32.gmra.mxu0 %v804
  %v927 = vpop.f32.mrf.mxu0
  %v928 = vadd.f32 %v863, %v927
  %929 = vmatmul.f32.gmra.mxu0 %v806
  %v930 = vpop.f32.mrf.mxu0
  %v931 = vadd.f32 %v866, %v930
  %932 = vmatmul.f32.gmra.mxu0 %v808
  %v933 = vpop.f32.mrf.mxu0
  %v934 = vadd.f32 %v869, %v933
  %935 = vmatmul.f32.gmra.mxu0 %v810
  %v936 = vpop.f32.mrf.mxu0
  %v937 = vadd.f32 %v872, %v936
  %938 = vmatmul.f32.gmra.mxu0 %v812
  %v939 = vpop.f32.mrf.mxu0
  %v940 = vadd.f32 %v875, %v939
  %941 = vmatmul.f32.gmra.mxu0 %v814
  %v942 = vpop.f32.mrf.mxu0
  %v943 = vadd.f32 %v878, %v942
  %944 = vmatmul.f32.gmra.mxu0 %v816
  %v945 = vpop.f32.mrf.mxu0
  %v946 = vadd.f32 %v881, %v945
  %947 = vdwg.mxu0
  %v948 = vmul.f32 %v60, %v60
  %v950 = vsel %vm668, %v948, 0
  %952 = vmatpush.msra.mxu0 0.0
  %953 = vmatpush.msra.mxu0 0.0
  %954 = vmatpush.msra.mxu0 0.0
  %955 = vmatpush.msra.mxu0 0.0
  %956 = vmatpush.msra.mxu0 0.0
  %957 = vmatpush.msra.mxu0 0.0
  %958 = vmatpush.msra.mxu0 0.0
  %959 = vmatpush.msra.mxu0 0.0
  %960 = vmatpush.msra.mxu0 0.0
  %961 = vmatpush.msra.mxu0 0.0
  %962 = vmatpush.msra.mxu0 0.0
  %963 = vmatpush.msra.mxu0 0.0
  %964 = vmatpush.msra.mxu0 0.0
  %965 = vmatpush.msra.mxu0 0.0
  %966 = vmatpush.msra.mxu0 %v121
  %967 = vmatpush.msra.mxu0 %v120
  %968 = vmatmul.f32.gmra.mxu0 %v950
  %v969 = vpop.f32.mrf.mxu0
  %v970 = vadd.f32 1e-08, %v969
  %971 = vdwg.mxu0
  %v972 = vrsqrt.pop %v970
  %v973 = vmul.f32 %v972, %v970
  %v974 = vmul.f32 %v973, %v972
  %v975 = vmul.f32 0.5, %v974
  %v976 = vsub.f32 1.5, %v975
  %v977 = vmul.f32 %v972, %v976
  %vm978 = vweird.f32 %v970
  %vm979 = vweird.f32 %v972
  %vm980 = vmor %vm978, %vm979
  %v981 = vsel %vm980, %v972, %v977
  %v983 = vrot.slane %v981, 1
  %v984 = vperm.slane %v981, 0
  %v985 = vperm.slane %v983, 0
  %v988 = vmul.f32 %v901, %v984
  %v989 = vmul.f32 %v904, %v984
  %v990 = vmul.f32 %v907, %v984
  %v991 = vmul.f32 %v910, %v984
  %v992 = vmul.f32 %v913, %v984
  %v993 = vmul.f32 %v916, %v984
  %v994 = vmul.f32 %v919, %v984
  %v995 = vmul.f32 %v922, %v984
  %v996 = vmul.f32 %v925, %v985
  %v997 = vmul.f32 %v928, %v985
  %v998 = vmul.f32 %v931, %v985
  %v999 = vmul.f32 %v934, %v985
  %v1000 = vmul.f32 %v937, %v985
  %v1001 = vmul.f32 %v940, %v985
  %v1002 = vmul.f32 %v943, %v985
  %v1003 = vmul.f32 %v946, %v985
  %v1004 = vperm.slane %v122, 0
  %v1005 = vlaneseq
  %v1006 = vshrl.u32 %v1005, 7
  %1008 = vset.pattern.permute.xlu0 %v1006
  %1009 = vperm.xlu0 %1008, %v1004
  %v1010 = vpop.permute.xlu0 %1009
  %v1011 = vperm.slane %v122, 1
  %v1012 = vlaneseq
  %v1013 = vshrl.u32 %v1012, 7
  %1015 = vset.pattern.permute.xlu0 %v1013
  %1016 = vperm.xlu0 %1015, %v1011
  %v1017 = vpop.permute.xlu0 %1016
  %v1018 = vperm.slane %v122, 2
  %v1019 = vlaneseq
  %v1020 = vshrl.u32 %v1019, 7
  %1022 = vset.pattern.permute.xlu0 %v1020
  %1023 = vperm.xlu0 %1022, %v1018
  %v1024 = vpop.permute.xlu0 %1023
  %v1025 = vperm.slane %v122, 3
  %v1026 = vlaneseq
  %v1027 = vshrl.u32 %v1026, 7
  %1029 = vset.pattern.permute.xlu0 %v1027
  %1030 = vperm.xlu0 %1029, %v1025
  %v1031 = vpop.permute.xlu0 %1030
  %v1032 = vperm.slane %v122, 4
  %v1033 = vlaneseq
  %v1034 = vshrl.u32 %v1033, 7
  %1036 = vset.pattern.permute.xlu0 %v1034
  %1037 = vperm.xlu0 %1036, %v1032
  %v1038 = vpop.permute.xlu0 %1037
  %v1039 = vperm.slane %v122, 5
  %v1040 = vlaneseq
  %v1041 = vshrl.u32 %v1040, 7
  %1043 = vset.pattern.permute.xlu0 %v1041
  %1044 = vperm.xlu0 %1043, %v1039
  %v1045 = vpop.permute.xlu0 %1044
  %v1046 = vperm.slane %v122, 6
  %v1047 = vlaneseq
  %v1048 = vshrl.u32 %v1047, 7
  %1050 = vset.pattern.permute.xlu0 %v1048
  %1051 = vperm.xlu0 %1050, %v1046
  %v1052 = vpop.permute.xlu0 %1051
  %v1053 = vperm.slane %v122, 7
  %v1054 = vlaneseq
  %v1055 = vshrl.u32 %v1054, 7
  %1057 = vset.pattern.permute.xlu0 %v1055
  %1058 = vperm.xlu0 %1057, %v1053
  %v1059 = vpop.permute.xlu0 %1058
  %v1060 = vadd.f32 %v988, %v1010
  %v1061 = vadd.f32 %v989, %v1017
  %v1062 = vadd.f32 %v990, %v1024
  %v1063 = vadd.f32 %v991, %v1031
  %v1064 = vadd.f32 %v992, %v1038
  %v1065 = vadd.f32 %v993, %v1045
  %v1066 = vadd.f32 %v994, %v1052
  %v1067 = vadd.f32 %v995, %v1059
  %v1068 = vadd.f32 %v996, %v1010
  %v1069 = vadd.f32 %v997, %v1017
  %v1070 = vadd.f32 %v998, %v1024
  %v1071 = vadd.f32 %v999, %v1031
  %v1072 = vadd.f32 %v1000, %v1038
  %v1073 = vadd.f32 %v1001, %v1045
  %v1074 = vadd.f32 %v1002, %v1052
  %v1075 = vadd.f32 %v1003, %v1059
  %v1077 = vperm.slane %v123, 0
  %v1079 = vadd.f32 %v1060, %v1077
  %v1080 = vadd.f32 %v1061, %v1077
  %v1081 = vadd.f32 %v1062, %v1077
  %v1082 = vadd.f32 %v1063, %v1077
  %v1083 = vadd.f32 %v1064, %v1077
  %v1084 = vadd.f32 %v1065, %v1077
  %v1085 = vadd.f32 %v1066, %v1077
  %v1086 = vadd.f32 %v1067, %v1077
  %v1087 = vadd.f32 %v1068, %v1077
  %v1088 = vadd.f32 %v1069, %v1077
  %v1089 = vadd.f32 %v1070, %v1077
  %v1090 = vadd.f32 %v1071, %v1077
  %v1091 = vadd.f32 %v1072, %v1077
  %v1092 = vadd.f32 %v1073, %v1077
  %v1093 = vadd.f32 %v1074, %v1077
  %v1094 = vadd.f32 %v1075, %v1077
  %vm1095 = vcmp.ge.f32.partialorder %v1079, 0.0
  %vm1096 = vcmp.ge.f32.partialorder %v1080, 0.0
  %vm1097 = vcmp.ge.f32.partialorder %v1081, 0.0
  %vm1098 = vcmp.ge.f32.partialorder %v1082, 0.0
  %vm1099 = vcmp.ge.f32.partialorder %v1083, 0.0
  %vm1100 = vcmp.ge.f32.partialorder %v1084, 0.0
  %vm1101 = vcmp.ge.f32.partialorder %v1085, 0.0
  %vm1102 = vcmp.ge.f32.partialorder %v1086, 0.0
  %vm1103 = vcmp.ge.f32.partialorder %v1087, 0.0
  %vm1104 = vcmp.ge.f32.partialorder %v1088, 0.0
  %vm1105 = vcmp.ge.f32.partialorder %v1089, 0.0
  %vm1106 = vcmp.ge.f32.partialorder %v1090, 0.0
  %vm1107 = vcmp.ge.f32.partialorder %v1091, 0.0
  %vm1108 = vcmp.ge.f32.partialorder %v1092, 0.0
  %vm1109 = vcmp.ge.f32.partialorder %v1093, 0.0
  %vm1110 = vcmp.ge.f32.partialorder %v1094, 0.0
  %v1111 = vmul.f32 %v1079, 0.2
  %v1112 = vmul.f32 %v1080, 0.2
  %v1113 = vmul.f32 %v1081, 0.2
  %v1114 = vmul.f32 %v1082, 0.2
  %v1115 = vmul.f32 %v1083, 0.2
  %v1116 = vmul.f32 %v1084, 0.2
  %v1117 = vmul.f32 %v1085, 0.2
  %v1118 = vmul.f32 %v1086, 0.2
  %v1119 = vmul.f32 %v1087, 0.2
  %v1120 = vmul.f32 %v1088, 0.2
  %v1121 = vmul.f32 %v1089, 0.2
  %v1122 = vmul.f32 %v1090, 0.2
  %v1123 = vmul.f32 %v1091, 0.2
  %v1124 = vmul.f32 %v1092, 0.2
  %v1125 = vmul.f32 %v1093, 0.2
  %v1126 = vmul.f32 %v1094, 0.2
  %v1127 = vsel %vm1095, %v1079, %v1111
  %v1128 = vsel %vm1096, %v1080, %v1112
  %v1129 = vsel %vm1097, %v1081, %v1113
  %v1130 = vsel %vm1098, %v1082, %v1114
  %v1131 = vsel %vm1099, %v1083, %v1115
  %v1132 = vsel %vm1100, %v1084, %v1116
  %v1133 = vsel %vm1101, %v1085, %v1117
  %v1134 = vsel %vm1102, %v1086, %v1118
  %v1135 = vsel %vm1103, %v1087, %v1119
  %v1136 = vsel %vm1104, %v1088, %v1120
  %v1137 = vsel %vm1105, %v1089, %v1121
  %v1138 = vsel %vm1106, %v1090, %v1122
  %v1139 = vsel %vm1107, %v1091, %v1123
  %v1140 = vsel %vm1108, %v1092, %v1124
  %v1141 = vsel %vm1109, %v1093, %v1125
  %v1142 = vsel %vm1110, %v1094, %v1126
  %v1143 = vmul.f32 %v1127, 1.4142135
  %v1144 = vmul.f32 %v1128, 1.4142135
  %v1145 = vmul.f32 %v1129, 1.4142135
  %v1146 = vmul.f32 %v1130, 1.4142135
  %v1147 = vmul.f32 %v1131, 1.4142135
  %v1148 = vmul.f32 %v1132, 1.4142135
  %v1149 = vmul.f32 %v1133, 1.4142135
  %v1150 = vmul.f32 %v1134, 1.4142135
  %v1151 = vmul.f32 %v1135, 1.4142135
  %v1152 = vmul.f32 %v1136, 1.4142135
  %v1153 = vmul.f32 %v1137, 1.4142135
  %v1154 = vmul.f32 %v1138, 1.4142135
  %v1155 = vmul.f32 %v1139, 1.4142135
  %v1156 = vmul.f32 %v1140, 1.4142135
  %v1157 = vmul.f32 %v1141, 1.4142135
  %v1158 = vmul.f32 %v1142, 1.4142135
  %1159 = vst.msk [vmem:[%s8] sm:$0xff] %vm668, %v1143
  %1160 = vst.msk [vmem:[%s8 + $0x8] sm:$0xff] %vm668, %v1144
  %1161 = vst.msk [vmem:[%s8 + $0x10] sm:$0xff] %vm668, %v1145
  %1162 = vst.msk [vmem:[%s8 + $0x18] sm:$0xff] %vm668, %v1146
  %1163 = vst.msk [vmem:[%s8 + $0x20] sm:$0xff] %vm668, %v1147
  %1164 = vst.msk [vmem:[%s8 + $0x28] sm:$0xff] %vm668, %v1148
  %1165 = vst.msk [vmem:[%s8 + $0x30] sm:$0xff] %vm668, %v1149
  %1166 = vst.msk [vmem:[%s8 + $0x38] sm:$0xff] %vm668, %v1150
  %1167 = vst.msk [vmem:[%s8 + $0x40] sm:$0xff] %vm668, %v1151
  %1168 = vst.msk [vmem:[%s8 + $0x48] sm:$0xff] %vm668, %v1152
  %1169 = vst.msk [vmem:[%s8 + $0x50] sm:$0xff] %vm668, %v1153
  %1170 = vst.msk [vmem:[%s8 + $0x58] sm:$0xff] %vm668, %v1154
  %1171 = vst.msk [vmem:[%s8 + $0x60] sm:$0xff] %vm668, %v1155
  %1172 = vst.msk [vmem:[%s8 + $0x68] sm:$0xff] %vm668, %v1156
  %1173 = vst.msk [vmem:[%s8 + $0x70] sm:$0xff] %vm668, %v1157
  %1174 = vst.msk [vmem:[%s8 + $0x78] sm:$0xff] %vm668, %v1158
  // Predicated region
  $region34: #{_forward.6} parent=0 // pred_check
    _
  $region35: #{_forward.6} parent=0 // pred_check_branch
    %1176 = sbr.rel (0) target = $region37
  $region36: #{_forward.6} parent=0 // pred_region
    _
  $region37: #{_forward.6} parent=0 // pred_fallthru
    _
  // Predicated region
  $region38: #{_forward.6} parent=0 // pred_check
    _
  $region39: #{_forward.6} parent=0 // pred_check_branch
    %1178 = sbr.rel (0) target = $region41
  $region40: #{_forward.6} parent=0 // pred_region
    _
  $region41: #{_forward.6} parent=0 // pred_fallthru
    _

// kernel: _forward.9
$region0: #{_forward.9}
  #allocation0 [shape = 'u32[]', space=smem, size = 0x4, offset = 0x4, fixed_abs, tag = 'smem constant byte address 0x4 - core index']
  #allocation1 [shape = 'u32[72,128]{1,0:T(1,128)}', space=vmem, size = 0x9000, scoped, tag = 'internal scratch']
  %s0 = inlined_call_operand.vmem [shape: f32[2,32], index: 0, kind: input, shape index: {}, may-alias: {0,8}]
  %s1 = inlined_call_operand.vmem [shape: f32[32,16], index: 1, kind: input, shape index: {}]
  %s2 = inlined_call_operand.vmem [shape: f32[1,16], index: 2, kind: input, shape index: {}, may-alias: {2,10}]
  %s3 = inlined_call_operand.vmem [shape: f32[2,18,18,16], index: 3, kind: input, shape index: {}]
  %s4 = inlined_call_operand.vmem [shape: f32[144,16], index: 4, kind: input, shape index: {}]
  %s5 = inlined_call_operand.vmem [shape: f32[16,16], index: 5, kind: input, shape index: {}]
  %s6 = inlined_call_operand.vmem [shape: f32[16,16], index: 6, kind: input, shape index: {}]
  %s7 = inlined_call_operand.vmem [shape: f32[1,16], index: 7, kind: input, shape index: {}]
  %s8 = inlined_call_operand.vmem [shape: f32[2,32], index: 8, kind: input, shape index: {}, may-alias: {0,8}]
  %s9 = inlined_call_operand.vmem [shape: f32[32,16], index: 9, kind: input, shape index: {}]
  %s10 = inlined_call_operand.vmem [shape: f32[1,16], index: 10, kind: input, shape index: {}, may-alias: {2,10}]
  %s11 = inlined_call_operand.vmem [shape: f32[16,3], index: 11, kind: input, shape index: {}]
  %s12 = inlined_call_operand.vmem [shape: f32[1,3], index: 12, kind: input, shape index: {}]
  %s13 = inlined_call_operand.hbm [shape: f32[2,16,16,16], index: 13, kind: output, shape index: {0}]
  %s14 = inlined_call_operand.vmem [shape: f32[2,16,16,3], index: 14, kind: output, shape index: {1}]
  %15 = xla_tuple %s13, %s14
  %s16 = sld [smem:[#allocation0]]
  $region70: #{_forward.9} parent=0
    _
  %s18 = ssub.s32 1, %s16
  %s19 = scalar_select 0, %s18, %s16
  $region1: #{_forward.9} parent=0
    #allocation2 [shape = 'u8[262144]{0}', space=vmem, size = 0x40000, scoped, tag = 'output window, operand 0, single buffered']
    #allocation3 [shape = 's32[1]{0}', space=sflag, size = 0x4, scoped, tag = 'scoped memory for _forward.9']
    %20 = vsyncpa [#allocation3], 0
    // Predicated region
    $region2: #{_forward.9} parent=1 // pred_check
      _
    $region3: #{_forward.9} parent=1 // pred_check_branch
      %22 = sbr.rel (0) target = $region5
    $region4: #{_forward.9} parent=1 // pred_region
      _
    $region5: #{_forward.9} parent=1 // pred_fallthru
      _
    // Predicated region
    $region6: #{_forward.9} parent=1 // pred_check
      _
    $region7: #{_forward.9} parent=1 // pred_check_branch
      %24 = sbr.rel (0) target = $region9
    $region8: #{_forward.9} parent=1 // pred_region
      _
    $region9: #{_forward.9} parent=1 // pred_fallthru
      _
    // Predicated region
    $region10: #{_forward.9} parent=1 // pred_check
      _
    $region11: #{_forward.9} parent=1 // pred_check_branch
      %26 = sbr.rel (0) target = $region13
    $region12: #{_forward.9} parent=1 // pred_region
      _
    $region13: #{_forward.9} parent=1 // pred_fallthru
      _
    // Predicated region
    $region14: #{_forward.9} parent=1 // pred_check
      _
    $region15: #{_forward.9} parent=1 // pred_check_branch
      %28 = sbr.rel (0) target = $region17
    $region16: #{_forward.9} parent=1 // pred_region
      _
    $region17: #{_forward.9} parent=1 // pred_fallthru
      _
    // Predicated region
    $region18: #{_forward.9} parent=1 // pred_check
      _
    $region19: #{_forward.9} parent=1 // pred_check_branch
      %30 = sbr.rel (0) target = $region21
    $region20: #{_forward.9} parent=1 // pred_region
      _
    $region21: #{_forward.9} parent=1 // pred_fallthru
      _
    // Predicated region
    $region22: #{_forward.9} parent=1 // pred_check
      _
    $region23: #{_forward.9} parent=1 // pred_check_branch
      %32 = sbr.rel (0) target = $region25
    $region24: #{_forward.9} parent=1 // pred_region
      _
    $region25: #{_forward.9} parent=1 // pred_fallthru
      _
    // Predicated region
    $region26: #{_forward.9} parent=1 // pred_check
      _
    $region27: #{_forward.9} parent=1 // pred_check_branch
      %34 = sbr.rel (0) target = $region29
    $region28: #{_forward.9} parent=1 // pred_region
      _
    $region29: #{_forward.9} parent=1 // pred_fallthru
      _
    // Predicated region
    $region30: #{_forward.9} parent=1 // pred_check
      _
    $region31: #{_forward.9} parent=1 // pred_check_branch
      %36 = sbr.rel (0) target = $region33
    $region32: #{_forward.9} parent=1 // pred_region
      _
    $region33: #{_forward.9} parent=1 // pred_fallthru
      _
    // Predicated region
    $region34: #{_forward.9} parent=1 // pred_check
      _
    $region35: #{_forward.9} parent=1 // pred_check_branch
      %38 = sbr.rel (0) target = $region37
    $region36: #{_forward.9} parent=1 // pred_region
      _
    $region37: #{_forward.9} parent=1 // pred_fallthru
      _
    // Predicated region
    $region38: #{_forward.9} parent=1 // pred_check
      _
    $region39: #{_forward.9} parent=1 // pred_check_branch
      %40 = sbr.rel (0) target = $region41
    $region40: #{_forward.9} parent=1 // pred_region
      _
    $region41: #{_forward.9} parent=1 // pred_fallthru
      _
    // Predicated region
    $region42: #{_forward.9} parent=1 // pred_check
      _
    $region43: #{_forward.9} parent=1 // pred_check_branch
      %42 = sbr.rel (0) target = $region45
    $region44: #{_forward.9} parent=1 // pred_region
      _
    $region45: #{_forward.9} parent=1 // pred_fallthru
      _
    // Predicated region
    $region46: #{_forward.9} parent=1 // pred_check
      _
    $region47: #{_forward.9} parent=1 // pred_check_branch
      %44 = sbr.rel (0) target = $region49
    $region48: #{_forward.9} parent=1 // pred_region
      _
    $region49: #{_forward.9} parent=1 // pred_fallthru
      _
    // Predicated region
    $region50: #{_forward.9} parent=1 // pred_check
      _
    $region51: #{_forward.9} parent=1 // pred_check_branch
      %46 = sbr.rel (0) target = $region53
    $region52: #{_forward.9} parent=1 // pred_region
      _
    $region53: #{_forward.9} parent=1 // pred_fallthru
      _
    %v47 = vld [vmem:[%s0] sm:$0x3]
    %v48 = vld [vmem:[%s1] sm:$0xff]
    %v49 = vld [vmem:[%s1 + $0x8] sm:$0xff]
    %v50 = vld [vmem:[%s1 + $0x10] sm:$0xff]
    %v51 = vld [vmem:[%s1 + $0x18] sm:$0xff]
    %v52 = vld [vmem:[%s2] sm:$0x1]
    %v54 = vperm.slane %v52, 0
    %vm56 = vcmask 261120
    %v58 = vsel %vm56, %v47, 0
    %60 = vmatpush.msra.mxu0 0.0
    %61 = vmatpush.msra.mxu0 0.0
    %62 = vmatpush.msra.mxu0 0.0
    %63 = vmatpush.msra.mxu0 0.0
    %64 = vmatpush.msra.mxu0 0.0
    %65 = vmatpush.msra.mxu0 0.0
    %66 = vmatpush.msra.mxu0 0.0
    %67 = vmatpush.msra.mxu0 0.0
    %68 = vmatpush.msra.mxu0 0.0
    %69 = vmatpush.msra.mxu0 0.0
    %70 = vmatpush.msra.mxu0 0.0
    %71 = vmatpush.msra.mxu0 0.0
    %72 = vmatpush.msra.mxu0 %v51
    %73 = vmatpush.msra.mxu0 %v50
    %74 = vmatpush.msra.mxu0 %v49
    %75 = vmatpush.msra.mxu0 %v48
    %76 = vmatmul.f32.gmra.mxu0 %v58
    %v77 = vpop.f32.mrf.mxu0
    %v78 = vadd.f32 %v54, %v77
    %79 = vdwg.mxu0
    %v80 = vld [vmem:[%s3] sm:$0xff]
    %v81 = vld [vmem:[%s3 + $0x8] sm:$0xff]
    %v82 = vld [vmem:[%s3 + $0x10] sm:$0x3]
    %v83 = vld [vmem:[%s3 + $0x18] sm:$0xff]
    %v84 = vld [vmem:[%s3 + $0x20] sm:$0xff]
    %v85 = vld [vmem:[%s3 + $0x28] sm:$0x3]
    %v86 = vld [vmem:[%s3 + $0x30] sm:$0xff]
    %v87 = vld [vmem:[%s3 + $0x38] sm:$0xff]
    %v88 = vld [vmem:[%s3 + $0x40] sm:$0x3]
    %v89 = vld [vmem:[%s3 + $0x48] sm:$0xff]
    %v90 = vld [vmem:[%s3 + $0x50] sm:$0xff]
    %v91 = vld [vmem:[%s3 + $0x58] sm:$0x3]
    %v92 = vld [vmem:[%s3 + $0x60] sm:$0xff]
    %v93 = vld [vmem:[%s3 + $0x68] sm:$0xff]
    %v94 = vld [vmem:[%s3 + $0x70] sm:$0x3]
    %v95 = vld [vmem:[%s3 + $0x78] sm:$0xff]
    %v96 = vld [vmem:[%s3 + $0x80] sm:$0xff]
    %v97 = vld [vmem:[%s3 + $0x88] sm:$0x3]
    %v98 = vld [vmem:[%s3 + $0x90] sm:$0xff]
    %v99 = vld [vmem:[%s3 + $0x98] sm:$0xff]
    %v100 = vld [vmem:[%s3 + $0xa0] sm:$0x3]
    %v101 = vld [vmem:[%s3 + $0xa8] sm:$0xff]
    %v102 = vld [vmem:[%s3 + $0xb0] sm:$0xff]
    %v103 = vld [vmem:[%s3 + $0xb8] sm:$0x3]
    %v104 = vld [vmem:[%s3 + $0xc0] sm:$0xff]
    %v105 = vld [vmem:[%s3 + $0xc8] sm:$0xff]
    %v106 = vld [vmem:[%s3 + $0xd0] sm:$0x3]
    %v107 = vld [vmem:[%s3 + $0xd8] sm:$0xff]
    %v108 = vld [vmem:[%s3 + $0xe0] sm:$0xff]
    %v109 = vld [vmem:[%s3 + $0xe8] sm:$0x3]
    %v110 = vld [vmem:[%s3 + $0xf0] sm:$0xff]
    %v111 = vld [vmem:[%s3 + $0xf8] sm:$0xff]
    %v112 = vld [vmem:[%s3 + $0x100] sm:$0x3]
    %v113 = vld [vmem:[%s3 + $0x108] sm:$0xff]
    %v114 = vld [vmem:[%s3 + $0x110] sm:$0xff]
    %v115 = vld [vmem:[%s3 + $0x118] sm:$0x3]
    %v116 = vld [vmem:[%s3 + $0x120] sm:$0xff]
    %v117 = vld [vmem:[%s3 + $0x128] sm:$0xff]
    %v118 = vld [vmem:[%s3 + $0x130] sm:$0x3]
    %v119 = vld [vmem:[%s3 + $0x138] sm:$0xff]
    %v120 = vld [vmem:[%s3 + $0x140] sm:$0xff]
    %v121 = vld [vmem:[%s3 + $0x148] sm:$0x3]
    %v122 = vld [vmem:[%s3 + $0x150] sm:$0xff]
    %v123 = vld [vmem:[%s3 + $0x158] sm:$0xff]
    %v124 = vld [vmem:[%s3 + $0x160] sm:$0x3]
    %v125 = vld [vmem:[%s3 + $0x168] sm:$0xff]
    %v126 = vld [vmem:[%s3 + $0x170] sm:$0xff]
    %v127 = vld [vmem:[%s3 + $0x178] sm:$0x3]
    %v128 = vld [vmem:[%s3 + $0x180] sm:$0xff]
    %v129 = vld [vmem:[%s3 + $0x188] sm:$0xff]
    %v130 = vld [vmem:[%s3 + $0x190] sm:$0x3]
    %v131 = vld [vmem:[%s3 + $0x198] sm:$0xff]
    %v132 = vld [vmem:[%s3 + $0x1a0] sm:$0xff]
    %v133 = vld [vmem:[%s3 + $0x1a8] sm:$0x3]
    %v134 = vld [vmem:[%s3 + $0x1b0] sm:$0xff]
    %v135 = vld [vmem:[%s3 + $0x1b8] sm:$0xff]
    %v136 = vld [vmem:[%s3 + $0x1c0] sm:$0x3]
    %v137 = vld [vmem:[%s3 + $0x1c8] sm:$0xff]
    %v138 = vld [vmem:[%s3 + $0x1d0] sm:$0xff]
    %v139 = vld [vmem:[%s3 + $0x1d8] sm:$0x3]
    %v140 = vld [vmem:[%s3 + $0x1e0] sm:$0xff]
    %v141 = vld [vmem:[%s3 + $0x1e8] sm:$0xff]
    %v142 = vld [vmem:[%s3 + $0x1f0] sm:$0x3]
    %v143 = vld [vmem:[%s3 + $0x1f8] sm:$0xff]
    %v144 = vld [vmem:[%s3 + $0x200] sm:$0xff]
    %v145 = vld [vmem:[%s3 + $0x208] sm:$0x3]
    %v146 = vld [vmem:[%s3 + $0x210] sm:$0xff]
    %v147 = vld [vmem:[%s3 + $0x218] sm:$0xff]
    %v148 = vld [vmem:[%s3 + $0x220] sm:$0x3]
    %v149 = vld [vmem:[%s3 + $0x228] sm:$0xff]
    %v150 = vld [vmem:[%s3 + $0x230] sm:$0xff]
    %v151 = vld [vmem:[%s3 + $0x238] sm:$0x3]
    %v152 = vld [vmem:[%s3 + $0x240] sm:$0xff]
    %v153 = vld [vmem:[%s3 + $0x248] sm:$0xff]
    %v154 = vld [vmem:[%s3 + $0x250] sm:$0x3]
    %v155 = vld [vmem:[%s3 + $0x258] sm:$0xff]
    %v156 = vld [vmem:[%s3 + $0x260] sm:$0xff]
    %v157 = vld [vmem:[%s3 + $0x268] sm:$0x3]
    %v158 = vld [vmem:[%s3 + $0x270] sm:$0xff]
    %v159 = vld [vmem:[%s3 + $0x278] sm:$0xff]
    %v160 = vld [vmem:[%s3 + $0x280] sm:$0x3]
    %v161 = vld [vmem:[%s3 + $0x288] sm:$0xff]
    %v162 = vld [vmem:[%s3 + $0x290] sm:$0xff]
    %v163 = vld [vmem:[%s3 + $0x298] sm:$0x3]
    %v164 = vld [vmem:[%s3 + $0x2a0] sm:$0xff]
    %v165 = vld [vmem:[%s3 + $0x2a8] sm:$0xff]
    %v166 = vld [vmem:[%s3 + $0x2b0] sm:$0x3]
    %v167 = vld [vmem:[%s3 + $0x2b8] sm:$0xff]
    %v168 = vld [vmem:[%s3 + $0x2c0] sm:$0xff]
    %v169 = vld [vmem:[%s3 + $0x2c8] sm:$0x3]
    %v170 = vld [vmem:[%s3 + $0x2d0] sm:$0xff]
    %v171 = vld [vmem:[%s3 + $0x2d8] sm:$0xff]
    %v172 = vld [vmem:[%s3 + $0x2e0] sm:$0x3]
    %v173 = vld [vmem:[%s3 + $0x2e8] sm:$0xff]
    %v174 = vld [vmem:[%s3 + $0x2f0] sm:$0xff]
    %v175 = vld [vmem:[%s3 + $0x2f8] sm:$0x3]
    %v176 = vld [vmem:[%s3 + $0x300] sm:$0xff]
    %v177 = vld [vmem:[%s3 + $0x308] sm:$0xff]
    %v178 = vld [vmem:[%s3 + $0x310] sm:$0x3]
    %v179 = vld [vmem:[%s3 + $0x318] sm:$0xff]
    %v180 = vld [vmem:[%s3 + $0x320] sm:$0xff]
    %v181 = vld [vmem:[%s3 + $0x328] sm:$0x3]
    %v182 = vld [vmem:[%s3 + $0x330] sm:$0xff]
    %v183 = vld [vmem:[%s3 + $0x338] sm:$0xff]
    %v184 = vld [vmem:[%s3 + $0x340] sm:$0x3]
    %v185 = vld [vmem:[%s3 + $0x348] sm:$0xff]
    %v186 = vld [vmem:[%s3 + $0x350] sm:$0xff]
    %v187 = vld [vmem:[%s3 + $0x358] sm:$0x3]
    %v188 = vld [vmem:[%s4] sm:$0xff]
    %v189 = vld [vmem:[%s4 + $0x8] sm:$0xff]
    %v190 = vld [vmem:[%s4 + $0x10] sm:$0xff]
    %v191 = vld [vmem:[%s4 + $0x18] sm:$0xff]
    %v192 = vld [vmem:[%s4 + $0x20] sm:$0xff]
    %v193 = vld [vmem:[%s4 + $0x28] sm:$0xff]
    %v194 = vld [vmem:[%s4 + $0x30] sm:$0xff]
    %v195 = vld [vmem:[%s4 + $0x38] sm:$0xff]
    %v196 = vld [vmem:[%s4 + $0x40] sm:$0xff]
    %v197 = vld [vmem:[%s4 + $0x48] sm:$0xff]
    %v198 = vld [vmem:[%s4 + $0x50] sm:$0xff]
    %v199 = vld [vmem:[%s4 + $0x58] sm:$0xff]
    %v200 = vld [vmem:[%s4 + $0x60] sm:$0xff]
    %v201 = vld [vmem:[%s4 + $0x68] sm:$0xff]
    %v202 = vld [vmem:[%s4 + $0x70] sm:$0xff]
    %v203 = vld [vmem:[%s4 + $0x78] sm:$0xff]
    %v204 = vld [vmem:[%s4 + $0x80] sm:$0xff]
    %v205 = vld [vmem:[%s4 + $0x88] sm:$0xff]
    %v206 = vld [vmem:[%s5] sm:$0xff]
    %v207 = vld [vmem:[%s5 + $0x8] sm:$0xff]
    %v208 = vld [vmem:[%s6] sm:$0xff]
    %v209 = vld [vmem:[%s6 + $0x8] sm:$0xff]
    %v210 = vld [vmem:[%s7] sm:$0x1]
    %v212 = vrot.slane %v78, 1
    %v213 = vperm.slane %v78, 0
    %v214 = vperm.slane %v212, 0
    %v217 = vmul.f32 %v80, %v213
    %v218 = vmul.f32 %v81, %v213
    %v219 = vmul.f32 %v82, %v213
    %v220 = vmul.f32 %v83, %v213
    %v221 = vmul.f32 %v84, %v213
    %v222 = vmul.f32 %v85, %v213
    %v223 = vmul.f32 %v86, %v213
    %v224 = vmul.f32 %v87, %v213
    %v225 = vmul.f32 %v88, %v213
    %v226 = vmul.f32 %v89, %v213
    %v227 = vmul.f32 %v90, %v213
    %v228 = vmul.f32 %v91, %v213
    %v229 = vmul.f32 %v92, %v213
    %v230 = vmul.f32 %v93, %v213
    %v231 = vmul.f32 %v94, %v213
    %v232 = vmul.f32 %v95, %v213
    %v233 = vmul.f32 %v96, %v213
    %v234 = vmul.f32 %v97, %v213
    %v235 = vmul.f32 %v98, %v213
    %v236 = vmul.f32 %v99, %v213
    %v237 = vmul.f32 %v100, %v213
    %v238 = vmul.f32 %v101, %v213
    %v239 = vmul.f32 %v102, %v213
    %v240 = vmul.f32 %v103, %v213
    %v241 = vmul.f32 %v104, %v213
    %v242 = vmul.f32 %v105, %v213
    %v243 = vmul.f32 %v106, %v213
    %v244 = vmul.f32 %v107, %v213
    %v245 = vmul.f32 %v108, %v213
    %v246 = vmul.f32 %v109, %v213
    %v247 = vmul.f32 %v110, %v213
    %v248 = vmul.f32 %v111, %v213
    %v249 = vmul.f32 %v112, %v213
    %v250 = vmul.f32 %v113, %v213
    %v251 = vmul.f32 %v114, %v213
    %v252 = vmul.f32 %v115, %v213
    %v253 = vmul.f32 %v116, %v213
    %v254 = vmul.f32 %v117, %v213
    %v255 = vmul.f32 %v118, %v213
    %v256 = vmul.f32 %v119, %v213
    %v257 = vmul.f32 %v120, %v213
    %v258 = vmul.f32 %v121, %v213
    %v259 = vmul.f32 %v122, %v213
    %v260 = vmul.f32 %v123, %v213
    %v261 = vmul.f32 %v124, %v213
    %v262 = vmul.f32 %v125, %v213
    %v263 = vmul.f32 %v126, %v213
    %v264 = vmul.f32 %v127, %v213
    %v265 = vmul.f32 %v128, %v213
    %v266 = vmul.f32 %v129, %v213
    %v267 = vmul.f32 %v130, %v213
    %v268 = vmul.f32 %v131, %v213
    %v269 = vmul.f32 %v132, %v213
    %v270 = vmul.f32 %v133, %v213
    %v271 = vmul.f32 %v134, %v214
    %v272 = vmul.f32 %v135, %v214
    %v273 = vmul.f32 %v136, %v214
    %v274 = vmul.f32 %v137, %v214
    %v275 = vmul.f32 %v138, %v214
    %v276 = vmul.f32 %v139, %v214
    %v277 = vmul.f32 %v140, %v214
    %v278 = vmul.f32 %v141, %v214
    %v279 = vmul.f32 %v142, %v214
    %v280 = vmul.f32 %v143, %v214
    %v281 = vmul.f32 %v144, %v214
    %v282 = vmul.f32 %v145, %v214
    %v283 = vmul.f32 %v146, %v214
    %v284 = vmul.f32 %v147, %v214
    %v285 = vmul.f32 %v148, %v214
    %v286 = vmul.f32 %v149, %v214
    %v287 = vmul.f32 %v150, %v214
    %v288 = vmul.f32 %v151, %v214
    %v289 = vmul.f32 %v152, %v214
    %v290 = vmul.f32 %v153, %v214
    %v291 = vmul.f32 %v154, %v214
    %v292 = vmul.f32 %v155, %v214
    %v293 = vmul.f32 %v156, %v214
    %v294 = vmul.f32 %v157, %v214
    %v295 = vmul.f32 %v158, %v214
    %v296 = vmul.f32 %v159, %v214
    %v297 = vmul.f32 %v160, %v214
    %v298 = vmul.f32 %v161, %v214
    %v299 = vmul.f32 %v162, %v214
    %v300 = vmul.f32 %v163, %v214
    %v301 = vmul.f32 %v164, %v214
    %v302 = vmul.f32 %v165, %v214
    %v303 = vmul.f32 %v166, %v214
    %v304 = vmul.f32 %v167, %v214
    %v305 = vmul.f32 %v168, %v214
    %v306 = vmul.f32 %v169, %v214
    %v307 = vmul.f32 %v170, %v214
    %v308 = vmul.f32 %v171, %v214
    %v309 = vmul.f32 %v172, %v214
    %v310 = vmul.f32 %v173, %v214
    %v311 = vmul.f32 %v174, %v214
    %v312 = vmul.f32 %v175, %v214
    %v313 = vmul.f32 %v176, %v214
    %v314 = vmul.f32 %v177, %v214
    %v315 = vmul.f32 %v178, %v214
    %v316 = vmul.f32 %v179, %v214
    %v317 = vmul.f32 %v180, %v214
    %v318 = vmul.f32 %v181, %v214
    %v319 = vmul.f32 %v182, %v214
    %v320 = vmul.f32 %v183, %v214
    %v321 = vmul.f32 %v184, %v214
    %v322 = vmul.f32 %v185, %v214
    %v323 = vmul.f32 %v186, %v214
    %v324 = vmul.f32 %v187, %v214
    %vm421 = vcmask 1046528
    %v422 = vrot.slane %v217, 1
    %v423 = vrot.slane %v218, 1
    %v424 = vsel %vm421, %v422, %v423
    %v425 = vrot.slane %v219, 1
    %v426 = vsel %vm421, %v423, %v425
    %v427 = vrot.slane %v220, 1
    %v428 = vrot.slane %v221, 1
    %v429 = vsel %vm421, %v427, %v428
    %v430 = vrot.slane %v222, 1
    %v431 = vsel %vm421, %v428, %v430
    %v432 = vrot.slane %v223, 1
    %v433 = vrot.slane %v224, 1
    %v434 = vsel %vm421, %v432, %v433
    %v435 = vrot.slane %v225, 1
    %v436 = vsel %vm421, %v433, %v435
    %v437 = vrot.slane %v226, 1
    %v438 = vrot.slane %v227, 1
    %v439 = vsel %vm421, %v437, %v438
    %v440 = vrot.slane %v228, 1
    %v441 = vsel %vm421, %v438, %v440
    %v442 = vrot.slane %v229, 1
    %v443 = vrot.slane %v230, 1
    %v444 = vsel %vm421, %v442, %v443
    %v445 = vrot.slane %v231, 1
    %v446 = vsel %vm421, %v443, %v445
    %v447 = vrot.slane %v232, 1
    %v448 = vrot.slane %v233, 1
    %v449 = vsel %vm421, %v447, %v448
    %v450 = vrot.slane %v234, 1
    %v451 = vsel %vm421, %v448, %v450
    %v452 = vrot.slane %v235, 1
    %v453 = vrot.slane %v236, 1
    %v454 = vsel %vm421, %v452, %v453
    %v455 = vrot.slane %v237, 1
    %v456 = vsel %vm421, %v453, %v455
    %v457 = vrot.slane %v238, 1
    %v458 = vrot.slane %v239, 1
    %v459 = vsel %vm421, %v457, %v458
    %v460 = vrot.slane %v240, 1
    %v461 = vsel %vm421, %v458, %v460
    %v462 = vrot.slane %v241, 1
    %v463 = vrot.slane %v242, 1
    %v464 = vsel %vm421, %v462, %v463
    %v465 = vrot.slane %v243, 1
    %v466 = vsel %vm421, %v463, %v465
    %v467 = vrot.slane %v244, 1
    %v468 = vrot.slane %v245, 1
    %v469 = vsel %vm421, %v467, %v468
    %v470 = vrot.slane %v246, 1
    %v471 = vsel %vm421, %v468, %v470
    %v472 = vrot.slane %v247, 1
    %v473 = vrot.slane %v248, 1
    %v474 = vsel %vm421, %v472, %v473
    %v475 = vrot.slane %v249, 1
    %v476 = vsel %vm421, %v473, %v475
    %v477 = vrot.slane %v250, 1
    %v478 = vrot.slane %v251, 1
    %v479 = vsel %vm421, %v477, %v478
    %v480 = vrot.slane %v252, 1
    %v481 = vsel %vm421, %v478, %v480
    %v482 = vrot.slane %v253, 1
    %v483 = vrot.slane %v254, 1
    %v484 = vsel %vm421, %v482, %v483
    %v485 = vrot.slane %v255, 1
    %v486 = vsel %vm421, %v483, %v485
    %v487 = vrot.slane %v256, 1
    %v488 = vrot.slane %v257, 1
    %v489 = vsel %vm421, %v487, %v488
    %v490 = vrot.slane %v258, 1
    %v491 = vsel %vm421, %v488, %v490
    %v492 = vrot.slane %v259, 1
    %v493 = vrot.slane %v260, 1
    %v494 = vsel %vm421, %v492, %v493
    %v495 = vrot.slane %v261, 1
    %v496 = vsel %vm421, %v493, %v495
    %v497 = vrot.slane %v262, 1
    %v498 = vrot.slane %v263, 1
    %v499 = vsel %vm421, %v497, %v498
    %v500 = vrot.slane %v264, 1
    %v501 = vsel %vm421, %v498, %v500
    %v502 = vrot.slane %v271, 1
    %v503 = vrot.slane %v272, 1
    %v504 = vsel %vm421, %v502, %v503
    %v505 = vrot.slane %v273, 1
    %v506 = vsel %vm421, %v503, %v505
    %v507 = vrot.slane %v274, 1
    %v508 = vrot.slane %v275, 1
    %v509 = vsel %vm421, %v507, %v508
    %v510 = vrot.slane %v276, 1
    %v511 = vsel %vm421, %v508, %v510
    %v512 = vrot.slane %v277, 1
    %v513 = vrot.slane %v278, 1
    %v514 = vsel %vm421, %v512, %v513
    %v515 = vrot.slane %v279, 1
    %v516 = vsel %vm421, %v513, %v515
    %v517 = vrot.slane %v280, 1
    %v518 = vrot.slane %v281, 1
    %v519 = vsel %vm421, %v517, %v518
    %v520 = vrot.slane %v282, 1
    %v521 = vsel %vm421, %v518, %v520
    %v522 = vrot.slane %v283, 1
    %v523 = vrot.slane %v284, 1
    %v524 = vsel %vm421, %v522, %v523
    %v525 = vrot.slane %v285, 1
    %v526 = vsel %vm421, %v523, %v525
    %v527 = vrot.slane %v286, 1
    %v528 = vrot.slane %v287, 1
    %v529 = vsel %vm421, %v527, %v528
    %v530 = vrot.slane %v288, 1
    %v531 = vsel %vm421, %v528, %v530
    %v532 = vrot.slane %v289, 1
    %v533 = vrot.slane %v290, 1
    %v534 = vsel %vm421, %v532, %v533
    %v535 = vrot.slane %v291, 1
    %v536 = vsel %vm421, %v533, %v535
    %v537 = vrot.slane %v292, 1
    %v538 = vrot.slane %v293, 1
    %v539 = vsel %vm421, %v537, %v538
    %v540 = vrot.slane %v294, 1
    %v541 = vsel %vm421, %v538, %v540
    %v542 = vrot.slane %v295, 1
    %v543 = vrot.slane %v296, 1
    %v544 = vsel %vm421, %v542, %v543
    %v545 = vrot.slane %v297, 1
    %v546 = vsel %vm421, %v543, %v545
    %v547 = vrot.slane %v298, 1
    %v548 = vrot.slane %v299, 1
    %v549 = vsel %vm421, %v547, %v548
    %v550 = vrot.slane %v300, 1
    %v551 = vsel %vm421, %v548, %v550
    %v552 = vrot.slane %v301, 1
    %v553 = vrot.slane %v302, 1
    %v554 = vsel %vm421, %v552, %v553
    %v555 = vrot.slane %v303, 1
    %v556 = vsel %vm421, %v553, %v555
    %v557 = vrot.slane %v304, 1
    %v558 = vrot.slane %v305, 1
    %v559 = vsel %vm421, %v557, %v558
    %v560 = vrot.slane %v306, 1
    %v561 = vsel %vm421, %v558, %v560
    %v562 = vrot.slane %v307, 1
    %v563 = vrot.slane %v308, 1
    %v564 = vsel %vm421, %v562, %v563
    %v565 = vrot.slane %v309, 1
    %v566 = vsel %vm421, %v563, %v565
    %v567 = vrot.slane %v310, 1
    %v568 = vrot.slane %v311, 1
    %v569 = vsel %vm421, %v567, %v568
    %v570 = vrot.slane %v312, 1
    %v571 = vsel %vm421, %v568, %v570
    %v572 = vrot.slane %v313, 1
    %v573 = vrot.slane %v314, 1
    %v574 = vsel %vm421, %v572, %v573
    %v575 = vrot.slane %v315, 1
    %v576 = vsel %vm421, %v573, %v575
    %v577 = vrot.slane %v316, 1
    %v578 = vrot.slane %v317, 1
    %v579 = vsel %vm421, %v577, %v578
    %v580 = vrot.slane %v318, 1
    %v581 = vsel %vm421, %v578, %v580
    %582 = vrot.lane.b32.xlu0 %v424, 16
    %v583 = vpop.permute.xlu0 %582
    %584 = vrot.lane.b32.xlu0 %v426, 16
    %v585 = vpop.permute.xlu0 %584
    %586 = vrot.lane.b32.xlu0 %v429, 16
    %v587 = vpop.permute.xlu0 %586
    %588 = vrot.lane.b32.xlu0 %v431, 16
    %v589 = vpop.permute.xlu0 %588
    %590 = vrot.lane.b32.xlu0 %v434, 16
    %v591 = vpop.permute.xlu0 %590
    %592 = vrot.lane.b32.xlu0 %v436, 16
    %v593 = vpop.permute.xlu0 %592
    %594 = vrot.lane.b32.xlu0 %v439, 16
    %v595 = vpop.permute.xlu0 %594
    %596 = vrot.lane.b32.xlu0 %v441, 16
    %v597 = vpop.permute.xlu0 %596
    %598 = vrot.lane.b32.xlu0 %v444, 16
    %v599 = vpop.permute.xlu0 %598
    %600 = vrot.lane.b32.xlu0 %v446, 16
    %v601 = vpop.permute.xlu0 %600
    %602 = vrot.lane.b32.xlu0 %v449, 16
    %v603 = vpop.permute.xlu0 %602
    %604 = vrot.lane.b32.xlu0 %v451, 16
    %v605 = vpop.permute.xlu0 %604
    %606 = vrot.lane.b32.xlu0 %v454, 16
    %v607 = vpop.permute.xlu0 %606
    %608 = vrot.lane.b32.xlu0 %v456, 16
    %v609 = vpop.permute.xlu0 %608
    %610 = vrot.lane.b32.xlu0 %v459, 16
    %v611 = vpop.permute.xlu0 %610
    %612 = vrot.lane.b32.xlu0 %v461, 16
    %v613 = vpop.permute.xlu0 %612
    %614 = vrot.lane.b32.xlu0 %v464, 16
    %v615 = vpop.permute.xlu0 %614
    %616 = vrot.lane.b32.xlu0 %v466, 16
    %v617 = vpop.permute.xlu0 %616
    %618 = vrot.lane.b32.xlu0 %v469, 16
    %v619 = vpop.permute.xlu0 %618
    %620 = vrot.lane.b32.xlu0 %v471, 16
    %v621 = vpop.permute.xlu0 %620
    %622 = vrot.lane.b32.xlu0 %v474, 16
    %v623 = vpop.permute.xlu0 %622
    %624 = vrot.lane.b32.xlu0 %v476, 16
    %v625 = vpop.permute.xlu0 %624
    %626 = vrot.lane.b32.xlu0 %v479, 16
    %v627 = vpop.permute.xlu0 %626
    %628 = vrot.lane.b32.xlu0 %v481, 16
    %v629 = vpop.permute.xlu0 %628
    %630 = vrot.lane.b32.xlu0 %v484, 16
    %v631 = vpop.permute.xlu0 %630
    %632 = vrot.lane.b32.xlu0 %v486, 16
    %v633 = vpop.permute.xlu0 %632
    %634 = vrot.lane.b32.xlu0 %v489, 16
    %v635 = vpop.permute.xlu0 %634
    %636 = vrot.lane.b32.xlu0 %v491, 16
    %v637 = vpop.permute.xlu0 %636
    %638 = vrot.lane.b32.xlu0 %v494, 16
    %v639 = vpop.permute.xlu0 %638
    %640 = vrot.lane.b32.xlu0 %v496, 16
    %v641 = vpop.permute.xlu0 %640
    %642 = vrot.lane.b32.xlu0 %v499, 16
    %v643 = vpop.permute.xlu0 %642
    %644 = vrot.lane.b32.xlu0 %v501, 16
    %v645 = vpop.permute.xlu0 %644
    %646 = vrot.lane.b32.xlu0 %v504, 16
    %v647 = vpop.permute.xlu0 %646
    %648 = vrot.lane.b32.xlu0 %v506, 16
    %v649 = vpop.permute.xlu0 %648
    %650 = vrot.lane.b32.xlu0 %v509, 16
    %v651 = vpop.permute.xlu0 %650
    %652 = vrot.lane.b32.xlu0 %v511, 16
    %v653 = vpop.permute.xlu0 %652
    %654 = vrot.lane.b32.xlu0 %v514, 16
    %v655 = vpop.permute.xlu0 %654
    %656 = vrot.lane.b32.xlu0 %v516, 16
    %v657 = vpop.permute.xlu0 %656
    %658 = vrot.lane.b32.xlu0 %v519, 16
    %v659 = vpop.permute.xlu0 %658
    %660 = vrot.lane.b32.xlu0 %v521, 16
    %v661 = vpop.permute.xlu0 %660
    %662 = vrot.lane.b32.xlu0 %v524, 16
    %v663 = vpop.permute.xlu0 %662
    %664 = vrot.lane.b32.xlu0 %v526, 16
    %v665 = vpop.permute.xlu0 %664
    %666 = vrot.lane.b32.xlu0 %v529, 16
    %v667 = vpop.permute.xlu0 %666
    %668 = vrot.lane.b32.xlu0 %v531, 16
    %v669 = vpop.permute.xlu0 %668
    %670 = vrot.lane.b32.xlu0 %v534, 16
    %v671 = vpop.permute.xlu0 %670
    %672 = vrot.lane.b32.xlu0 %v536, 16
    %v673 = vpop.permute.xlu0 %672
    %674 = vrot.lane.b32.xlu0 %v539, 16
    %v675 = vpop.permute.xlu0 %674
    %676 = vrot.lane.b32.xlu0 %v541, 16
    %v677 = vpop.permute.xlu0 %676
    %678 = vrot.lane.b32.xlu0 %v544, 16
    %v679 = vpop.permute.xlu0 %678
    %680 = vrot.lane.b32.xlu0 %v546, 16
    %v681 = vpop.permute.xlu0 %680
    %682 = vrot.lane.b32.xlu0 %v549, 16
    %v683 = vpop.permute.xlu0 %682
    %684 = vrot.lane.b32.xlu0 %v551, 16
    %v685 = vpop.permute.xlu0 %684
    %686 = vrot.lane.b32.xlu0 %v554, 16
    %v687 = vpop.permute.xlu0 %686
    %688 = vrot.lane.b32.xlu0 %v556, 16
    %v689 = vpop.permute.xlu0 %688
    %690 = vrot.lane.b32.xlu0 %v559, 16
    %v691 = vpop.permute.xlu0 %690
    %692 = vrot.lane.b32.xlu0 %v561, 16
    %v693 = vpop.permute.xlu0 %692
    %694 = vrot.lane.b32.xlu0 %v564, 16
    %v695 = vpop.permute.xlu0 %694
    %696 = vrot.lane.b32.xlu0 %v566, 16
    %v697 = vpop.permute.xlu0 %696
    %698 = vrot.lane.b32.xlu0 %v569, 16
    %v699 = vpop.permute.xlu0 %698
    %700 = vrot.lane.b32.xlu0 %v571, 16
    %v701 = vpop.permute.xlu0 %700
    %702 = vrot.lane.b32.xlu0 %v574, 16
    %v703 = vpop.permute.xlu0 %702
    %704 = vrot.lane.b32.xlu0 %v576, 16
    %v705 = vpop.permute.xlu0 %704
    %706 = vrot.lane.b32.xlu0 %v579, 16
    %v707 = vpop.permute.xlu0 %706
    %708 = vrot.lane.b32.xlu0 %v581, 16
    %v709 = vpop.permute.xlu0 %708
    %vm774 = vcmask 1045504
    %v775 = vrot.slane %v217, 2
    %v776 = vrot.slane %v218, 2
    %v777 = vsel %vm774, %v775, %v776
    %v778 = vrot.slane %v219, 2
    %v779 = vsel %vm774, %v776, %v778
    %v780 = vrot.slane %v220, 2
    %v781 = vrot.slane %v221, 2
    %v782 = vsel %vm774, %v780, %v781
    %v783 = vrot.slane %v222, 2
    %v784 = vsel %vm774, %v781, %v783
    %v785 = vrot.slane %v223, 2
    %v786 = vrot.slane %v224, 2
    %v787 = vsel %vm774, %v785, %v786
    %v788 = vrot.slane %v225, 2
    %v789 = vsel %vm774, %v786, %v788
    %v790 = vrot.slane %v226, 2
    %v791 = vrot.slane %v227, 2
    %v792 = vsel %vm774, %v790, %v791
    %v793 = vrot.slane %v228, 2
    %v794 = vsel %vm774, %v791, %v793
    %v795 = vrot.slane %v229, 2
    %v796 = vrot.slane %v230, 2
    %v797 = vsel %vm774, %v795, %v796
    %v798 = vrot.slane %v231, 2
    %v799 = vsel %vm774, %v796, %v798
    %v800 = vrot.slane %v232, 2
    %v801 = vrot.slane %v233, 2
    %v802 = vsel %vm774, %v800, %v801
    %v803 = vrot.slane %v234, 2
    %v804 = vsel %vm774, %v801, %v803
    %v805 = vrot.slane %v235, 2
    %v806 = vrot.slane %v236, 2
    %v807 = vsel %vm774, %v805, %v806
    %v808 = vrot.slane %v237, 2
    %v809 = vsel %vm774, %v806, %v808
    %v810 = vrot.slane %v238, 2
    %v811 = vrot.slane %v239, 2
    %v812 = vsel %vm774, %v810, %v811
    %v813 = vrot.slane %v240, 2
    %v814 = vsel %vm774, %v811, %v813
    %v815 = vrot.slane %v241, 2
    %v816 = vrot.slane %v242, 2
    %v817 = vsel %vm774, %v815, %v816
    %v818 = vrot.slane %v243, 2
    %v819 = vsel %vm774, %v816, %v818
    %v820 = vrot.slane %v244, 2
    %v821 = vrot.slane %v245, 2
    %v822 = vsel %vm774, %v820, %v821
    %v823 = vrot.slane %v246, 2
    %v824 = vsel %vm774, %v821, %v823
    %v825 = vrot.slane %v247, 2
    %v826 = vrot.slane %v248, 2
    %v827 = vsel %vm774, %v825, %v826
    %v828 = vrot.slane %v249, 2
    %v829 = vsel %vm774, %v826, %v828
    %v830 = vrot.slane %v250, 2
    %v831 = vrot.slane %v251, 2
    %v832 = vsel %vm774, %v830, %v831
    %v833 = vrot.slane %v252, 2
    %v834 = vsel %vm774, %v831, %v833
    %v835 = vrot.slane %v253, 2
    %v836 = vrot.slane %v254, 2
    %v837 = vsel %vm774, %v835, %v836
    %v838 = vrot.slane %v255, 2
    %v839 = vsel %vm774, %v836, %v838
    %v840 = vrot.slane %v256, 2
    %v841 = vrot.slane %v257, 2
    %v842 = vsel %vm774, %v840, %v841
    %v843 = vrot.slane %v258, 2
    %v844 = vsel %vm774, %v841, %v843
    %v845 = vrot.slane %v259, 2
    %v846 = vrot.slane %v260, 2
    %v847 = vsel %vm774, %v845, %v846
    %v848 = vrot.slane %v261, 2
    %v849 = vsel %vm774, %v846, %v848
    %v850 = vrot.slane %v262, 2
    %v851 = vrot.slane %v263, 2
    %v852 = vsel %vm774, %v850, %v851
    %v853 = vrot.slane %v264, 2
    %v854 = vsel %vm774, %v851, %v853
    %v855 = vrot.slane %v271, 2
    %v856 = vrot.slane %v272, 2
    %v857 = vsel %vm774, %v855, %v856
    %v858 = vrot.slane %v273, 2
    %v859 = vsel %vm774, %v856, %v858
    %v860 = vrot.slane %v274, 2
    %v861 = vrot.slane %v275, 2
    %v862 = vsel %vm774, %v860, %v861
    %v863 = vrot.slane %v276, 2
    %v864 = vsel %vm774, %v861, %v863
    %v865 = vrot.slane %v277, 2
    %v866 = vrot.slane %v278, 2
    %v867 = vsel %vm774, %v865, %v866
    %v868 = vrot.slane %v279, 2
    %v869 = vsel %vm774, %v866, %v868
    %v870 = vrot.slane %v280, 2
    %v871 = vrot.slane %v281, 2
    %v872 = vsel %vm774, %v870, %v871
    %v873 = vrot.slane %v282, 2
    %v874 = vsel %vm774, %v871, %v873
    %v875 = vrot.slane %v283, 2
    %v876 = vrot.slane %v284, 2
    %v877 = vsel %vm774, %v875, %v876
    %v878 = vrot.slane %v285, 2
    %v879 = vsel %vm774, %v876, %v878
    %v880 = vrot.slane %v286, 2
    %v881 = vrot.slane %v287, 2
    %v882 = vsel %vm774, %v880, %v881
    %v883 = vrot.slane %v288, 2
    %v884 = vsel %vm774, %v881, %v883
    %v885 = vrot.slane %v289, 2
    %v886 = vrot.slane %v290, 2
    %v887 = vsel %vm774, %v885, %v886
    %v888 = vrot.slane %v291, 2
    %v889 = vsel %vm774, %v886, %v888
    %v890 = vrot.slane %v292, 2
    %v891 = vrot.slane %v293, 2
    %v892 = vsel %vm774, %v890, %v891
    %v893 = vrot.slane %v294, 2
    %v894 = vsel %vm774, %v891, %v893
    %v895 = vrot.slane %v295, 2
    %v896 = vrot.slane %v296, 2
    %v897 = vsel %vm774, %v895, %v896
    %v898 = vrot.slane %v297, 2
    %v899 = vsel %vm774, %v896, %v898
    %v900 = vrot.slane %v298, 2
    %v901 = vrot.slane %v299, 2
    %v902 = vsel %vm774, %v900, %v901
    %v903 = vrot.slane %v300, 2
    %v904 = vsel %vm774, %v901, %v903
    %v905 = vrot.slane %v301, 2
    %v906 = vrot.slane %v302, 2
    %v907 = vsel %vm774, %v905, %v906
    %v908 = vrot.slane %v303, 2
    %v909 = vsel %vm774, %v906, %v908
    %v910 = vrot.slane %v304, 2
    %v911 = vrot.slane %v305, 2
    %v912 = vsel %vm774, %v910, %v911
    %v913 = vrot.slane %v306, 2
    %v914 = vsel %vm774, %v911, %v913
    %v915 = vrot.slane %v307, 2
    %v916 = vrot.slane %v308, 2
    %v917 = vsel %vm774, %v915, %v916
    %v918 = vrot.slane %v309, 2
    %v919 = vsel %vm774, %v916, %v918
    %v920 = vrot.slane %v310, 2
    %v921 = vrot.slane %v311, 2
    %v922 = vsel %vm774, %v920, %v921
    %v923 = vrot.slane %v312, 2
    %v924 = vsel %vm774, %v921, %v923
    %v925 = vrot.slane %v313, 2
    %v926 = vrot.slane %v314, 2
    %v927 = vsel %vm774, %v925, %v926
    %v928 = vrot.slane %v315, 2
    %v929 = vsel %vm774, %v926, %v928
    %v930 = vrot.slane %v316, 2
    %v931 = vrot.slane %v317, 2
    %v932 = vsel %vm774, %v930, %v931
    %v933 = vrot.slane %v318, 2
    %v934 = vsel %vm774, %v931, %v933
    %935 = vrot.lane.b32.xlu0 %v777, 32
    %v936 = vpop.permute.xlu0 %935
    %937 = vrot.lane.b32.xlu0 %v779, 32
    %v938 = vpop.permute.xlu0 %937
    %939 = vrot.lane.b32.xlu0 %v782, 32
    %v940 = vpop.permute.xlu0 %939
    %941 = vrot.lane.b32.xlu0 %v784, 32
    %v942 = vpop.permute.xlu0 %941
    %943 = vrot.lane.b32.xlu0 %v787, 32
    %v944 = vpop.permute.xlu0 %943
    %945 = vrot.lane.b32.xlu0 %v789, 32
    %v946 = vpop.permute.xlu0 %945
    %947 = vrot.lane.b32.xlu0 %v792, 32
    %v948 = vpop.permute.xlu0 %947
    %949 = vrot.lane.b32.xlu0 %v794, 32
    %v950 = vpop.permute.xlu0 %949
    %951 = vrot.lane.b32.xlu0 %v797, 32
    %v952 = vpop.permute.xlu0 %951
    %953 = vrot.lane.b32.xlu0 %v799, 32
    %v954 = vpop.permute.xlu0 %953
    %955 = vrot.lane.b32.xlu0 %v802, 32
    %v956 = vpop.permute.xlu0 %955
    %957 = vrot.lane.b32.xlu0 %v804, 32
    %v958 = vpop.permute.xlu0 %957
    %959 = vrot.lane.b32.xlu0 %v807, 32
    %v960 = vpop.permute.xlu0 %959
    %961 = vrot.lane.b32.xlu0 %v809, 32
    %v962 = vpop.permute.xlu0 %961
    %963 = vrot.lane.b32.xlu0 %v812, 32
    %v964 = vpop.permute.xlu0 %963
    %965 = vrot.lane.b32.xlu0 %v814, 32
    %v966 = vpop.permute.xlu0 %965
    %967 = vrot.lane.b32.xlu0 %v817, 32
    %v968 = vpop.permute.xlu0 %967
    %969 = vrot.lane.b32.xlu0 %v819, 32
    %v970 = vpop.permute.xlu0 %969
    %971 = vrot.lane.b32.xlu0 %v822, 32
    %v972 = vpop.permute.xlu0 %971
    %973 = vrot.lane.b32.xlu0 %v824, 32
    %v974 = vpop.permute.xlu0 %973
    %975 = vrot.lane.b32.xlu0 %v827, 32
    %v976 = vpop.permute.xlu0 %975
    %977 = vrot.lane.b32.xlu0 %v829, 32
    %v978 = vpop.permute.xlu0 %977
    %979 = vrot.lane.b32.xlu0 %v832, 32
    %v980 = vpop.permute.xlu0 %979
    %981 = vrot.lane.b32.xlu0 %v834, 32
    %v982 = vpop.permute.xlu0 %981
    %983 = vrot.lane.b32.xlu0 %v837, 32
    %v984 = vpop.permute.xlu0 %983
    %985 = vrot.lane.b32.xlu0 %v839, 32
    %v986 = vpop.permute.xlu0 %985
    %987 = vrot.lane.b32.xlu0 %v842, 32
    %v988 = vpop.permute.xlu0 %987
    %989 = vrot.lane.b32.xlu0 %v844, 32
    %v990 = vpop.permute.xlu0 %989
    %991 = vrot.lane.b32.xlu0 %v847, 32
    %v992 = vpop.permute.xlu0 %991
    %993 = vrot.lane.b32.xlu0 %v849, 32
    %v994 = vpop.permute.xlu0 %993
    %995 = vrot.lane.b32.xlu0 %v852, 32
    %v996 = vpop.permute.xlu0 %995
    %997 = vrot.lane.b32.xlu0 %v854, 32
    %v998 = vpop.permute.xlu0 %997
    %999 = vrot.lane.b32.xlu0 %v857, 32
    %v1000 = vpop.permute.xlu0 %999
    %1001 = vrot.lane.b32.xlu0 %v859, 32
    %v1002 = vpop.permute.xlu0 %1001
    %1003 = vrot.lane.b32.xlu0 %v862, 32
    %v1004 = vpop.permute.xlu0 %1003
    %1005 = vrot.lane.b32.xlu0 %v864, 32
    %v1006 = vpop.permute.xlu0 %1005
    %1007 = vrot.lane.b32.xlu0 %v867, 32
    %v1008 = vpop.permute.xlu0 %1007
    %1009 = vrot.lane.b32.xlu0 %v869, 32
    %v1010 = vpop.permute.xlu0 %1009
    %1011 = vrot.lane.b32.xlu0 %v872, 32
    %v1012 = vpop.permute.xlu0 %1011
    %1013 = vrot.lane.b32.xlu0 %v874, 32
    %v1014 = vpop.permute.xlu0 %1013
    %1015 = vrot.lane.b32.xlu0 %v877, 32
    %v1016 = vpop.permute.xlu0 %1015
    %1017 = vrot.lane.b32.xlu0 %v879, 32
    %v1018 = vpop.permute.xlu0 %1017
    %1019 = vrot.lane.b32.xlu0 %v882, 32
    %v1020 = vpop.permute.xlu0 %1019
    %1021 = vrot.lane.b32.xlu0 %v884, 32
    %v1022 = vpop.permute.xlu0 %1021
    %1023 = vrot.lane.b32.xlu0 %v887, 32
    %v1024 = vpop.permute.xlu0 %1023
    %1025 = vrot.lane.b32.xlu0 %v889, 32
    %v1026 = vpop.permute.xlu0 %1025
    %1027 = vrot.lane.b32.xlu0 %v892, 32
    %v1028 = vpop.permute.xlu0 %1027
    %1029 = vrot.lane.b32.xlu0 %v894, 32
    %v1030 = vpop.permute.xlu0 %1029
    %1031 = vrot.lane.b32.xlu0 %v897, 32
    %v1032 = vpop.permute.xlu0 %1031
    %1033 = vrot.lane.b32.xlu0 %v899, 32
    %v1034 = vpop.permute.xlu0 %1033
    %1035 = vrot.lane.b32.xlu0 %v902, 32
    %v1036 = vpop.permute.xlu0 %1035
    %1037 = vrot.lane.b32.xlu0 %v904, 32
    %v1038 = vpop.permute.xlu0 %1037
    %1039 = vrot.lane.b32.xlu0 %v907, 32
    %v1040 = vpop.permute.xlu0 %1039
    %1041 = vrot.lane.b32.xlu0 %v909, 32
    %v1042 = vpop.permute.xlu0 %1041
    %1043 = vrot.lane.b32.xlu0 %v912, 32
    %v1044 = vpop.permute.xlu0 %1043
    %1045 = vrot.lane.b32.xlu0 %v914, 32
    %v1046 = vpop.permute.xlu0 %1045
    %1047 = vrot.lane.b32.xlu0 %v917, 32
    %v1048 = vpop.permute.xlu0 %1047
    %1049 = vrot.lane.b32.xlu0 %v919, 32
    %v1050 = vpop.permute.xlu0 %1049
    %1051 = vrot.lane.b32.xlu0 %v922, 32
    %v1052 = vpop.permute.xlu0 %1051
    %1053 = vrot.lane.b32.xlu0 %v924, 32
    %v1054 = vpop.permute.xlu0 %1053
    %1055 = vrot.lane.b32.xlu0 %v927, 32
    %v1056 = vpop.permute.xlu0 %1055
    %1057 = vrot.lane.b32.xlu0 %v929, 32
    %v1058 = vpop.permute.xlu0 %1057
    %1059 = vrot.lane.b32.xlu0 %v932, 32
    %v1060 = vpop.permute.xlu0 %1059
    %1061 = vrot.lane.b32.xlu0 %v934, 32
    %v1062 = vpop.permute.xlu0 %1061
    %1131 = vrot.lane.b32.xlu0 %v220, 48
    %v1132 = vpop.permute.xlu0 %1131
    %1133 = vrot.lane.b32.xlu0 %v221, 48
    %v1134 = vpop.permute.xlu0 %1133
    %1135 = vrot.lane.b32.xlu0 %v223, 48
    %v1136 = vpop.permute.xlu0 %1135
    %1137 = vrot.lane.b32.xlu0 %v224, 48
    %v1138 = vpop.permute.xlu0 %1137
    %1139 = vrot.lane.b32.xlu0 %v226, 48
    %v1140 = vpop.permute.xlu0 %1139
    %1141 = vrot.lane.b32.xlu0 %v227, 48
    %v1142 = vpop.permute.xlu0 %1141
    %1143 = vrot.lane.b32.xlu0 %v229, 48
    %v1144 = vpop.permute.xlu0 %1143
    %1145 = vrot.lane.b32.xlu0 %v230, 48
    %v1146 = vpop.permute.xlu0 %1145
    %1147 = vrot.lane.b32.xlu0 %v232, 48
    %v1148 = vpop.permute.xlu0 %1147
    %1149 = vrot.lane.b32.xlu0 %v233, 48
    %v1150 = vpop.permute.xlu0 %1149
    %1151 = vrot.lane.b32.xlu0 %v235, 48
    %v1152 = vpop.permute.xlu0 %1151
    %1153 = vrot.lane.b32.xlu0 %v236, 48
    %v1154 = vpop.permute.xlu0 %1153
    %1155 = vrot.lane.b32.xlu0 %v238, 48
    %v1156 = vpop.permute.xlu0 %1155
    %1157 = vrot.lane.b32.xlu0 %v239, 48
    %v1158 = vpop.permute.xlu0 %1157
    %1159 = vrot.lane.b32.xlu0 %v241, 48
    %v1160 = vpop.permute.xlu0 %1159
    %1161 = vrot.lane.b32.xlu0 %v242, 48
    %v1162 = vpop.permute.xlu0 %1161
    %1163 = vrot.lane.b32.xlu0 %v244, 48
    %v1164 = vpop.permute.xlu0 %1163
    %1165 = vrot.lane.b32.xlu0 %v245, 48
    %v1166 = vpop.permute.xlu0 %1165
    %1167 = vrot.lane.b32.xlu0 %v247, 48
    %v1168 = vpop.permute.xlu0 %1167
    %1169 = vrot.lane.b32.xlu0 %v248, 48
    %v1170 = vpop.permute.xlu0 %1169
    %1171 = vrot.lane.b32.xlu0 %v250, 48
    %v1172 = vpop.permute.xlu0 %1171
    %1173 = vrot.lane.b32.xlu0 %v251, 48
    %v1174 = vpop.permute.xlu0 %1173
    %1175 = vrot.lane.b32.xlu0 %v253, 48
    %v1176 = vpop.permute.xlu0 %1175
    %1177 = vrot.lane.b32.xlu0 %v254, 48
    %v1178 = vpop.permute.xlu0 %1177
    %1179 = vrot.lane.b32.xlu0 %v256, 48
    %v1180 = vpop.permute.xlu0 %1179
    %1181 = vrot.lane.b32.xlu0 %v257, 48
    %v1182 = vpop.permute.xlu0 %1181
    %1183 = vrot.lane.b32.xlu0 %v259, 48
    %v1184 = vpop.permute.xlu0 %1183
    %1185 = vrot.lane.b32.xlu0 %v260, 48
    %v1186 = vpop.permute.xlu0 %1185
    %1187 = vrot.lane.b32.xlu0 %v262, 48
    %v1188 = vpop.permute.xlu0 %1187
    %1189 = vrot.lane.b32.xlu0 %v263, 48
    %v1190 = vpop.permute.xlu0 %1189
    %1191 = vrot.lane.b32.xlu0 %v265, 48
    %v1192 = vpop.permute.xlu0 %1191
    %1193 = vrot.lane.b32.xlu0 %v266, 48
    %v1194 = vpop.permute.xlu0 %1193
    %1195 = vrot.lane.b32.xlu0 %v274, 48
    %v1196 = vpop.permute.xlu0 %1195
    %1197 = vrot.lane.b32.xlu0 %v275, 48
    %v1198 = vpop.permute.xlu0 %1197
    %1199 = vrot.lane.b32.xlu0 %v277, 48
    %v1200 = vpop.permute.xlu0 %1199
    %1201 = vrot.lane.b32.xlu0 %v278, 48
    %v1202 = vpop.permute.xlu0 %1201
    %1203 = vrot.lane.b32.xlu0 %v280, 48
    %v1204 = vpop.permute.xlu0 %1203
    %1205 = vrot.lane.b32.xlu0 %v281, 48
    %v1206 = vpop.permute.xlu0 %1205
    %1207 = vrot.lane.b32.xlu0 %v283, 48
    %v1208 = vpop.permute.xlu0 %1207
    %1209 = vrot.lane.b32.xlu0 %v284, 48
    %v1210 = vpop.permute.xlu0 %1209
    %1211 = vrot.lane.b32.xlu0 %v286, 48
    %v1212 = vpop.permute.xlu0 %1211
    %1213 = vrot.lane.b32.xlu0 %v287, 48
    %v1214 = vpop.permute.xlu0 %1213
    %1215 = vrot.lane.b32.xlu0 %v289, 48
    %v1216 = vpop.permute.xlu0 %1215
    %1217 = vrot.lane.b32.xlu0 %v290, 48
    %v1218 = vpop.permute.xlu0 %1217
    %1219 = vrot.lane.b32.xlu0 %v292, 48
    %v1220 = vpop.permute.xlu0 %1219
    %1221 = vrot.lane.b32.xlu0 %v293, 48
    %v1222 = vpop.permute.xlu0 %1221
    %1223 = vrot.lane.b32.xlu0 %v295, 48
    %v1224 = vpop.permute.xlu0 %1223
    %1225 = vrot.lane.b32.xlu0 %v296, 48
    %v1226 = vpop.permute.xlu0 %1225
    %1227 = vrot.lane.b32.xlu0 %v298, 48
    %v1228 = vpop.permute.xlu0 %1227
    %1229 = vrot.lane.b32.xlu0 %v299, 48
    %v1230 = vpop.permute.xlu0 %1229
    %1231 = vrot.lane.b32.xlu0 %v301, 48
    %v1232 = vpop.permute.xlu0 %1231
    %1233 = vrot.lane.b32.xlu0 %v302, 48
    %v1234 = vpop.permute.xlu0 %1233
    %1235 = vrot.lane.b32.xlu0 %v304, 48
    %v1236 = vpop.permute.xlu0 %1235
    %1237 = vrot.lane.b32.xlu0 %v305, 48
    %v1238 = vpop.permute.xlu0 %1237
    %1239 = vrot.lane.b32.xlu0 %v307, 48
    %v1240 = vpop.permute.xlu0 %1239
    %1241 = vrot.lane.b32.xlu0 %v308, 48
    %v1242 = vpop.permute.xlu0 %1241
    %1243 = vrot.lane.b32.xlu0 %v310, 48
    %v1244 = vpop.permute.xlu0 %1243
    %1245 = vrot.lane.b32.xlu0 %v311, 48
    %v1246 = vpop.permute.xlu0 %1245
    %1247 = vrot.lane.b32.xlu0 %v313, 48
    %v1248 = vpop.permute.xlu0 %1247
    %1249 = vrot.lane.b32.xlu0 %v314, 48
    %v1250 = vpop.permute.xlu0 %1249
    %1251 = vrot.lane.b32.xlu0 %v316, 48
    %v1252 = vpop.permute.xlu0 %1251
    %1253 = vrot.lane.b32.xlu0 %v317, 48
    %v1254 = vpop.permute.xlu0 %1253
    %1255 = vrot.lane.b32.xlu0 %v319, 48
    %v1256 = vpop.permute.xlu0 %1255
    %1257 = vrot.lane.b32.xlu0 %v320, 48
    %v1258 = vpop.permute.xlu0 %1257
    %v1325 = vrot.slane %v265, 1
    %v1326 = vrot.slane %v266, 1
    %v1327 = vsel %vm421, %v1325, %v1326
    %v1328 = vrot.slane %v267, 1
    %v1329 = vsel %vm421, %v1326, %v1328
    %v1330 = vrot.slane %v319, 1
    %v1331 = vrot.slane %v320, 1
    %v1332 = vsel %vm421, %v1330, %v1331
    %v1333 = vrot.slane %v321, 1
    %v1334 = vsel %vm421, %v1331, %v1333
    %1335 = vrot.lane.b32.xlu0 %v429, 64
    %v1336 = vpop.permute.xlu0 %1335
    %1337 = vrot.lane.b32.xlu0 %v431, 64
    %v1338 = vpop.permute.xlu0 %1337
    %1339 = vrot.lane.b32.xlu0 %v434, 64
    %v1340 = vpop.permute.xlu0 %1339
    %1341 = vrot.lane.b32.xlu0 %v436, 64
    %v1342 = vpop.permute.xlu0 %1341
    %1343 = vrot.lane.b32.xlu0 %v439, 64
    %v1344 = vpop.permute.xlu0 %1343
    %1345 = vrot.lane.b32.xlu0 %v441, 64
    %v1346 = vpop.permute.xlu0 %1345
    %1347 = vrot.lane.b32.xlu0 %v444, 64
    %v1348 = vpop.permute.xlu0 %1347
    %1349 = vrot.lane.b32.xlu0 %v446, 64
    %v1350 = vpop.permute.xlu0 %1349
    %1351 = vrot.lane.b32.xlu0 %v449, 64
    %v1352 = vpop.permute.xlu0 %1351
    %1353 = vrot.lane.b32.xlu0 %v451, 64
    %v1354 = vpop.permute.xlu0 %1353
    %1355 = vrot.lane.b32.xlu0 %v454, 64
    %v1356 = vpop.permute.xlu0 %1355
    %1357 = vrot.lane.b32.xlu0 %v456, 64
    %v1358 = vpop.permute.xlu0 %1357
    %1359 = vrot.lane.b32.xlu0 %v459, 64
    %v1360 = vpop.permute.xlu0 %1359
    %1361 = vrot.lane.b32.xlu0 %v461, 64
    %v1362 = vpop.permute.xlu0 %1361
    %1363 = vrot.lane.b32.xlu0 %v464, 64
    %v1364 = vpop.permute.xlu0 %1363
    %1365 = vrot.lane.b32.xlu0 %v466, 64
    %v1366 = vpop.permute.xlu0 %1365
    %1367 = vrot.lane.b32.xlu0 %v469, 64
    %v1368 = vpop.permute.xlu0 %1367
    %1369 = vrot.lane.b32.xlu0 %v471, 64
    %v1370 = vpop.permute.xlu0 %1369
    %1371 = vrot.lane.b32.xlu0 %v474, 64
    %v1372 = vpop.permute.xlu0 %1371
    %1373 = vrot.lane.b32.xlu0 %v476, 64
    %v1374 = vpop.permute.xlu0 %1373
    %1375 = vrot.lane.b32.xlu0 %v479, 64
    %v1376 = vpop.permute.xlu0 %1375
    %1377 = vrot.lane.b32.xlu0 %v481, 64
    %v1378 = vpop.permute.xlu0 %1377
    %1379 = vrot.lane.b32.xlu0 %v484, 64
    %v1380 = vpop.permute.xlu0 %1379
    %1381 = vrot.lane.b32.xlu0 %v486, 64
    %v1382 = vpop.permute.xlu0 %1381
    %1383 = vrot.lane.b32.xlu0 %v489, 64
    %v1384 = vpop.permute.xlu0 %1383
    %1385 = vrot.lane.b32.xlu0 %v491, 64
    %v1386 = vpop.permute.xlu0 %1385
    %1387 = vrot.lane.b32.xlu0 %v494, 64
    %v1388 = vpop.permute.xlu0 %1387
    %1389 = vrot.lane.b32.xlu0 %v496, 64
    %v1390 = vpop.permute.xlu0 %1389
    %1391 = vrot.lane.b32.xlu0 %v499, 64
    %v1392 = vpop.permute.xlu0 %1391
    %1393 = vrot.lane.b32.xlu0 %v501, 64
    %v1394 = vpop.permute.xlu0 %1393
    %1395 = vrot.lane.b32.xlu0 %v1327, 64
    %v1396 = vpop.permute.xlu0 %1395
    %1397 = vrot.lane.b32.xlu0 %v1329, 64
    %v1398 = vpop.permute.xlu0 %1397
    %1399 = vrot.lane.b32.xlu0 %v509, 64
    %v1400 = vpop.permute.xlu0 %1399
    %1401 = vrot.lane.b32.xlu0 %v511, 64
    %v1402 = vpop.permute.xlu0 %1401
    %1403 = vrot.lane.b32.xlu0 %v514, 64
    %v1404 = vpop.permute.xlu0 %1403
    %1405 = vrot.lane.b32.xlu0 %v516, 64
    %v1406 = vpop.permute.xlu0 %1405
    %1407 = vrot.lane.b32.xlu0 %v519, 64
    %v1408 = vpop.permute.xlu0 %1407
    %1409 = vrot.lane.b32.xlu0 %v521, 64
    %v1410 = vpop.permute.xlu0 %1409
    %1411 = vrot.lane.b32.xlu0 %v524, 64
    %v1412 = vpop.permute.xlu0 %1411
    %1413 = vrot.lane.b32.xlu0 %v526, 64
    %v1414 = vpop.permute.xlu0 %1413
    %1415 = vrot.lane.b32.xlu0 %v529, 64
    %v1416 = vpop.permute.xlu0 %1415
    %1417 = vrot.lane.b32.xlu0 %v531, 64
    %v1418 = vpop.permute.xlu0 %1417
    %1419 = vrot.lane.b32.xlu0 %v534, 64
    %v1420 = vpop.permute.xlu0 %1419
    %1421 = vrot.lane.b32.xlu0 %v536, 64
    %v1422 = vpop.permute.xlu0 %1421
    %1423 = vrot.lane.b32.xlu0 %v539, 64
    %v1424 = vpop.permute.xlu0 %1423
    %1425 = vrot.lane.b32.xlu0 %v541, 64
    %v1426 = vpop.permute.xlu0 %1425
    %1427 = vrot.lane.b32.xlu0 %v544, 64
    %v1428 = vpop.permute.xlu0 %1427
    %1429 = vrot.lane.b32.xlu0 %v546, 64
    %v1430 = vpop.permute.xlu0 %1429
    %1431 = vrot.lane.b32.xlu0 %v549, 64
    %v1432 = vpop.permute.xlu0 %1431
    %1433 = vrot.lane.b32.xlu0 %v551, 64
    %v1434 = vpop.permute.xlu0 %1433
    %1435 = vrot.lane.b32.xlu0 %v554, 64
    %v1436 = vpop.permute.xlu0 %1435
    %1437 = vrot.lane.b32.xlu0 %v556, 64
    %v1438 = vpop.permute.xlu0 %1437
    %1439 = vrot.lane.b32.xlu0 %v559, 64
    %v1440 = vpop.permute.xlu0 %1439
    %1441 = vrot.lane.b32.xlu0 %v561, 64
    %v1442 = vpop.permute.xlu0 %1441
    %1443 = vrot.lane.b32.xlu0 %v564, 64
    %v1444 = vpop.permute.xlu0 %1443
    %1445 = vrot.lane.b32.xlu0 %v566, 64
    %v1446 = vpop.permute.xlu0 %1445
    %1447 = vrot.lane.b32.xlu0 %v569, 64
    %v1448 = vpop.permute.xlu0 %1447
    %1449 = vrot.lane.b32.xlu0 %v571, 64
    %v1450 = vpop.permute.xlu0 %1449
    %1451 = vrot.lane.b32.xlu0 %v574, 64
    %v1452 = vpop.permute.xlu0 %1451
    %1453 = vrot.lane.b32.xlu0 %v576, 64
    %v1454 = vpop.permute.xlu0 %1453
    %1455 = vrot.lane.b32.xlu0 %v579, 64
    %v1456 = vpop.permute.xlu0 %1455
    %1457 = vrot.lane.b32.xlu0 %v581, 64
    %v1458 = vpop.permute.xlu0 %1457
    %1459 = vrot.lane.b32.xlu0 %v1332, 64
    %v1460 = vpop.permute.xlu0 %1459
    %1461 = vrot.lane.b32.xlu0 %v1334, 64
    %v1462 = vpop.permute.xlu0 %1461
    %v1527 = vrot.slane %v265, 2
    %v1528 = vrot.slane %v266, 2
    %v1529 = vsel %vm774, %v1527, %v1528
    %v1530 = vrot.slane %v267, 2
    %v1531 = vsel %vm774, %v1528, %v1530
    %v1532 = vrot.slane %v319, 2
    %v1533 = vrot.slane %v320, 2
    %v1534 = vsel %vm774, %v1532, %v1533
    %v1535 = vrot.slane %v321, 2
    %v1536 = vsel %vm774, %v1533, %v1535
    %1537 = vrot.lane.b32.xlu0 %v782, 80
    %v1538 = vpop.permute.xlu0 %1537
    %1539 = vrot.lane.b32.xlu0 %v784, 80
    %v1540 = vpop.permute.xlu0 %1539
    %1541 = vrot.lane.b32.xlu0 %v787, 80
    %v1542 = vpop.permute.xlu0 %1541
    %1543 = vrot.lane.b32.xlu0 %v789, 80
    %v1544 = vpop.permute.xlu0 %1543
    %1545 = vrot.lane.b32.xlu0 %v792, 80
    %v1546 = vpop.permute.xlu0 %1545
    %1547 = vrot.lane.b32.xlu0 %v794, 80
    %v1548 = vpop.permute.xlu0 %1547
    %1549 = vrot.lane.b32.xlu0 %v797, 80
    %v1550 = vpop.permute.xlu0 %1549
    %1551 = vrot.lane.b32.xlu0 %v799, 80
    %v1552 = vpop.permute.xlu0 %1551
    %1553 = vrot.lane.b32.xlu0 %v802, 80
    %v1554 = vpop.permute.xlu0 %1553
    %1555 = vrot.lane.b32.xlu0 %v804, 80
    %v1556 = vpop.permute.xlu0 %1555
    %1557 = vrot.lane.b32.xlu0 %v807, 80
    %v1558 = vpop.permute.xlu0 %1557
    %1559 = vrot.lane.b32.xlu0 %v809, 80
    %v1560 = vpop.permute.xlu0 %1559
    %1561 = vrot.lane.b32.xlu0 %v812, 80
    %v1562 = vpop.permute.xlu0 %1561
    %1563 = vrot.lane.b32.xlu0 %v814, 80
    %v1564 = vpop.permute.xlu0 %1563
    %1565 = vrot.lane.b32.xlu0 %v817, 80
    %v1566 = vpop.permute.xlu0 %1565
    %1567 = vrot.lane.b32.xlu0 %v819, 80
    %v1568 = vpop.permute.xlu0 %1567
    %1569 = vrot.lane.b32.xlu0 %v822, 80
    %v1570 = vpop.permute.xlu0 %1569
    %1571 = vrot.lane.b32.xlu0 %v824, 80
    %v1572 = vpop.permute.xlu0 %1571
    %1573 = vrot.lane.b32.xlu0 %v827, 80
    %v1574 = vpop.permute.xlu0 %1573
    %1575 = vrot.lane.b32.xlu0 %v829, 80
    %v1576 = vpop.permute.xlu0 %1575
    %1577 = vrot.lane.b32.xlu0 %v832, 80
    %v1578 = vpop.permute.xlu0 %1577
    %1579 = vrot.lane.b32.xlu0 %v834, 80
    %v1580 = vpop.permute.xlu0 %1579
    %1581 = vrot.lane.b32.xlu0 %v837, 80
    %v1582 = vpop.permute.xlu0 %1581
    %1583 = vrot.lane.b32.xlu0 %v839, 80
    %v1584 = vpop.permute.xlu0 %1583
    %1585 = vrot.lane.b32.xlu0 %v842, 80
    %v1586 = vpop.permute.xlu0 %1585
    %1587 = vrot.lane.b32.xlu0 %v844, 80
    %v1588 = vpop.permute.xlu0 %1587
    %1589 = vrot.lane.b32.xlu0 %v847, 80
    %v1590 = vpop.permute.xlu0 %1589
    %1591 = vrot.lane.b32.xlu0 %v849, 80
    %v1592 = vpop.permute.xlu0 %1591
    %1593 = vrot.lane.b32.xlu0 %v852, 80
    %v1594 = vpop.permute.xlu0 %1593
    %1595 = vrot.lane.b32.xlu0 %v854, 80
    %v1596 = vpop.permute.xlu0 %1595
    %1597 = vrot.lane.b32.xlu0 %v1529, 80
    %v1598 = vpop.permute.xlu0 %1597
    %1599 = vrot.lane.b32.xlu0 %v1531, 80
    %v1600 = vpop.permute.xlu0 %1599
    %1601 = vrot.lane.b32.xlu0 %v862, 80
    %v1602 = vpop.permute.xlu0 %1601
    %1603 = vrot.lane.b32.xlu0 %v864, 80
    %v1604 = vpop.permute.xlu0 %1603
    %1605 = vrot.lane.b32.xlu0 %v867, 80
    %v1606 = vpop.permute.xlu0 %1605
    %1607 = vrot.lane.b32.xlu0 %v869, 80
    %v1608 = vpop.permute.xlu0 %1607
    %1609 = vrot.lane.b32.xlu0 %v872, 80
    %v1610 = vpop.permute.xlu0 %1609
    %1611 = vrot.lane.b32.xlu0 %v874, 80
    %v1612 = vpop.permute.xlu0 %1611
    %1613 = vrot.lane.b32.xlu0 %v877, 80
    %v1614 = vpop.permute.xlu0 %1613
    %1615 = vrot.lane.b32.xlu0 %v879, 80
    %v1616 = vpop.permute.xlu0 %1615
    %1617 = vrot.lane.b32.xlu0 %v882, 80
    %v1618 = vpop.permute.xlu0 %1617
    %1619 = vrot.lane.b32.xlu0 %v884, 80
    %v1620 = vpop.permute.xlu0 %1619
    %1621 = vrot.lane.b32.xlu0 %v887, 80
    %v1622 = vpop.permute.xlu0 %1621
    %1623 = vrot.lane.b32.xlu0 %v889, 80
    %v1624 = vpop.permute.xlu0 %1623
    %1625 = vrot.lane.b32.xlu0 %v892, 80
    %v1626 = vpop.permute.xlu0 %1625
    %1627 = vrot.lane.b32.xlu0 %v894, 80
    %v1628 = vpop.permute.xlu0 %1627
    %1629 = vrot.lane.b32.xlu0 %v897, 80
    %v1630 = vpop.permute.xlu0 %1629
    %1631 = vrot.lane.b32.xlu0 %v899, 80
    %v1632 = vpop.permute.xlu0 %1631
    %1633 = vrot.lane.b32.xlu0 %v902, 80
    %v1634 = vpop.permute.xlu0 %1633
    %1635 = vrot.lane.b32.xlu0 %v904, 80
    %v1636 = vpop.permute.xlu0 %1635
    %1637 = vrot.lane.b32.xlu0 %v907, 80
    %v1638 = vpop.permute.xlu0 %1637
    %1639 = vrot.lane.b32.xlu0 %v909, 80
    %v1640 = vpop.permute.xlu0 %1639
    %1641 = vrot.lane.b32.xlu0 %v912, 80
    %v1642 = vpop.permute.xlu0 %1641
    %1643 = vrot.lane.b32.xlu0 %v914, 80
    %v1644 = vpop.permute.xlu0 %1643
    %1645 = vrot.lane.b32.xlu0 %v917, 80
    %v1646 = vpop.permute.xlu0 %1645
    %1647 = vrot.lane.b32.xlu0 %v919, 80
    %v1648 = vpop.permute.xlu0 %1647
    %1649 = vrot.lane.b32.xlu0 %v922, 80
    %v1650 = vpop.permute.xlu0 %1649
    %1651 = vrot.lane.b32.xlu0 %v924, 80
    %v1652 = vpop.permute.xlu0 %1651
    %1653 = vrot.lane.b32.xlu0 %v927, 80
    %v1654 = vpop.permute.xlu0 %1653
    %1655 = vrot.lane.b32.xlu0 %v929, 80
    %v1656 = vpop.permute.xlu0 %1655
    %1657 = vrot.lane.b32.xlu0 %v932, 80
    %v1658 = vpop.permute.xlu0 %1657
    %1659 = vrot.lane.b32.xlu0 %v934, 80
    %v1660 = vpop.permute.xlu0 %1659
    %1661 = vrot.lane.b32.xlu0 %v1534, 80
    %v1662 = vpop.permute.xlu0 %1661
    %1663 = vrot.lane.b32.xlu0 %v1536, 80
    %v1664 = vpop.permute.xlu0 %1663
    %1733 = vrot.lane.b32.xlu0 %v223, 96
    %v1734 = vpop.permute.xlu0 %1733
    %1735 = vrot.lane.b32.xlu0 %v224, 96
    %v1736 = vpop.permute.xlu0 %1735
    %1737 = vrot.lane.b32.xlu0 %v226, 96
    %v1738 = vpop.permute.xlu0 %1737
    %1739 = vrot.lane.b32.xlu0 %v227, 96
    %v1740 = vpop.permute.xlu0 %1739
    %1741 = vrot.lane.b32.xlu0 %v229, 96
    %v1742 = vpop.permute.xlu0 %1741
    %1743 = vrot.lane.b32.xlu0 %v230, 96
    %v1744 = vpop.permute.xlu0 %1743
    %1745 = vrot.lane.b32.xlu0 %v232, 96
    %v1746 = vpop.permute.xlu0 %1745
    %1747 = vrot.lane.b32.xlu0 %v233, 96
    %v1748 = vpop.permute.xlu0 %1747
    %1749 = vrot.lane.b32.xlu0 %v235, 96
    %v1750 = vpop.permute.xlu0 %1749
    %1751 = vrot.lane.b32.xlu0 %v236, 96
    %v1752 = vpop.permute.xlu0 %1751
    %1753 = vrot.lane.b32.xlu0 %v238, 96
    %v1754 = vpop.permute.xlu0 %1753
    %1755 = vrot.lane.b32.xlu0 %v239, 96
    %v1756 = vpop.permute.xlu0 %1755
    %1757 = vrot.lane.b32.xlu0 %v241, 96
    %v1758 = vpop.permute.xlu0 %1757
    %1759 = vrot.lane.b32.xlu0 %v242, 96
    %v1760 = vpop.permute.xlu0 %1759
    %1761 = vrot.lane.b32.xlu0 %v244, 96
    %v1762 = vpop.permute.xlu0 %1761
    %1763 = vrot.lane.b32.xlu0 %v245, 96
    %v1764 = vpop.permute.xlu0 %1763
    %1765 = vrot.lane.b32.xlu0 %v247, 96
    %v1766 = vpop.permute.xlu0 %1765
    %1767 = vrot.lane.b32.xlu0 %v248, 96
    %v1768 = vpop.permute.xlu0 %1767
    %1769 = vrot.lane.b32.xlu0 %v250, 96
    %v1770 = vpop.permute.xlu0 %1769
    %1771 = vrot.lane.b32.xlu0 %v251, 96
    %v1772 = vpop.permute.xlu0 %1771
    %1773 = vrot.lane.b32.xlu0 %v253, 96
    %v1774 = vpop.permute.xlu0 %1773
    %1775 = vrot.lane.b32.xlu0 %v254, 96
    %v1776 = vpop.permute.xlu0 %1775
    %1777 = vrot.lane.b32.xlu0 %v256, 96
    %v1778 = vpop.permute.xlu0 %1777
    %1779 = vrot.lane.b32.xlu0 %v257, 96
    %v1780 = vpop.permute.xlu0 %1779
    %1781 = vrot.lane.b32.xlu0 %v259, 96
    %v1782 = vpop.permute.xlu0 %1781
    %1783 = vrot.lane.b32.xlu0 %v260, 96
    %v1784 = vpop.permute.xlu0 %1783
    %1785 = vrot.lane.b32.xlu0 %v262, 96
    %v1786 = vpop.permute.xlu0 %1785
    %1787 = vrot.lane.b32.xlu0 %v263, 96
    %v1788 = vpop.permute.xlu0 %1787
    %1789 = vrot.lane.b32.xlu0 %v265, 96
    %v1790 = vpop.permute.xlu0 %1789
    %1791 = vrot.lane.b32.xlu0 %v266, 96
    %v1792 = vpop.permute.xlu0 %1791
    %1793 = vrot.lane.b32.xlu0 %v268, 96
    %v1794 = vpop.permute.xlu0 %1793
    %1795 = vrot.lane.b32.xlu0 %v269, 96
    %v1796 = vpop.permute.xlu0 %1795
    %1797 = vrot.lane.b32.xlu0 %v277, 96
    %v1798 = vpop.permute.xlu0 %1797
    %1799 = vrot.lane.b32.xlu0 %v278, 96
    %v1800 = vpop.permute.xlu0 %1799
    %1801 = vrot.lane.b32.xlu0 %v280, 96
    %v1802 = vpop.permute.xlu0 %1801
    %1803 = vrot.lane.b32.xlu0 %v281, 96
    %v1804 = vpop.permute.xlu0 %1803
    %1805 = vrot.lane.b32.xlu0 %v283, 96
    %v1806 = vpop.permute.xlu0 %1805
    %1807 = vrot.lane.b32.xlu0 %v284, 96
    %v1808 = vpop.permute.xlu0 %1807
    %1809 = vrot.lane.b32.xlu0 %v286, 96
    %v1810 = vpop.permute.xlu0 %1809
    %1811 = vrot.lane.b32.xlu0 %v287, 96
    %v1812 = vpop.permute.xlu0 %1811
    %1813 = vrot.lane.b32.xlu0 %v289, 96
    %v1814 = vpop.permute.xlu0 %1813
    %1815 = vrot.lane.b32.xlu0 %v290, 96
    %v1816 = vpop.permute.xlu0 %1815
    %1817 = vrot.lane.b32.xlu0 %v292, 96
    %v1818 = vpop.permute.xlu0 %1817
    %1819 = vrot.lane.b32.xlu0 %v293, 96
    %v1820 = vpop.permute.xlu0 %1819
    %1821 = vrot.lane.b32.xlu0 %v295, 96
    %v1822 = vpop.permute.xlu0 %1821
    %1823 = vrot.lane.b32.xlu0 %v296, 96
    %v1824 = vpop.permute.xlu0 %1823
    %1825 = vrot.lane.b32.xlu0 %v298, 96
    %v1826 = vpop.permute.xlu0 %1825
    %1827 = vrot.lane.b32.xlu0 %v299, 96
    %v1828 = vpop.permute.xlu0 %1827
    %1829 = vrot.lane.b32.xlu0 %v301, 96
    %v1830 = vpop.permute.xlu0 %1829
    %1831 = vrot.lane.b32.xlu0 %v302, 96
    %v1832 = vpop.permute.xlu0 %1831
    %1833 = vrot.lane.b32.xlu0 %v304, 96
    %v1834 = vpop.permute.xlu0 %1833
    %1835 = vrot.lane.b32.xlu0 %v305, 96
    %v1836 = vpop.permute.xlu0 %1835
    %1837 = vrot.lane.b32.xlu0 %v307, 96
    %v1838 = vpop.permute.xlu0 %1837
    %1839 = vrot.lane.b32.xlu0 %v308, 96
    %v1840 = vpop.permute.xlu0 %1839
    %1841 = vrot.lane.b32.xlu0 %v310, 96
    %v1842 = vpop.permute.xlu0 %1841
    %1843 = vrot.lane.b32.xlu0 %v311, 96
    %v1844 = vpop.permute.xlu0 %1843
    %1845 = vrot.lane.b32.xlu0 %v313, 96
    %v1846 = vpop.permute.xlu0 %1845
    %1847 = vrot.lane.b32.xlu0 %v314, 96
    %v1848 = vpop.permute.xlu0 %1847
    %1849 = vrot.lane.b32.xlu0 %v316, 96
    %v1850 = vpop.permute.xlu0 %1849
    %1851 = vrot.lane.b32.xlu0 %v317, 96
    %v1852 = vpop.permute.xlu0 %1851
    %1853 = vrot.lane.b32.xlu0 %v319, 96
    %v1854 = vpop.permute.xlu0 %1853
    %1855 = vrot.lane.b32.xlu0 %v320, 96
    %v1856 = vpop.permute.xlu0 %1855
    %1857 = vrot.lane.b32.xlu0 %v322, 96
    %v1858 = vpop.permute.xlu0 %1857
    %1859 = vrot.lane.b32.xlu0 %v323, 96
    %v1860 = vpop.permute.xlu0 %1859
    %v1927 = vrot.slane %v268, 1
    %v1928 = vrot.slane %v269, 1
    %v1929 = vsel %vm421, %v1927, %v1928
    %v1930 = vrot.slane %v270, 1
    %v1931 = vsel %vm421, %v1928, %v1930
    %v1932 = vrot.slane %v322, 1
    %v1933 = vrot.slane %v323, 1
    %v1934 = vsel %vm421, %v1932, %v1933
    %v1935 = vrot.slane %v324, 1
    %v1936 = vsel %vm421, %v1933, %v1935
    %1937 = vrot.lane.b32.xlu0 %v434, 112
    %v1938 = vpop.permute.xlu0 %1937
    %1939 = vrot.lane.b32.xlu0 %v436, 112
    %v1940 = vpop.permute.xlu0 %1939
    %1941 = vrot.lane.b32.xlu0 %v439, 112
    %v1942 = vpop.permute.xlu0 %1941
    %1943 = vrot.lane.b32.xlu0 %v441, 112
    %v1944 = vpop.permute.xlu0 %1943
    %1945 = vrot.lane.b32.xlu0 %v444, 112
    %v1946 = vpop.permute.xlu0 %1945
    %1947 = vrot.lane.b32.xlu0 %v446, 112
    %v1948 = vpop.permute.xlu0 %1947
    %1949 = vrot.lane.b32.xlu0 %v449, 112
    %v1950 = vpop.permute.xlu0 %1949
    %1951 = vrot.lane.b32.xlu0 %v451, 112
    %v1952 = vpop.permute.xlu0 %1951
    %1953 = vrot.lane.b32.xlu0 %v454, 112
    %v1954 = vpop.permute.xlu0 %1953
    %1955 = vrot.lane.b32.xlu0 %v456, 112
    %v1956 = vpop.permute.xlu0 %1955
    %1957 = vrot.lane.b32.xlu0 %v459, 112
    %v1958 = vpop.permute.xlu0 %1957
    %1959 = vrot.lane.b32.xlu0 %v461, 112
    %v1960 = vpop.permute.xlu0 %1959
    %1961 = vrot.lane.b32.xlu0 %v464, 112
    %v1962 = vpop.permute.xlu0 %1961
    %1963 = vrot.lane.b32.xlu0 %v466, 112
    %v1964 = vpop.permute.xlu0 %1963
    %1965 = vrot.lane.b32.xlu0 %v469, 112
    %v1966 = vpop.permute.xlu0 %1965
    %1967 = vrot.lane.b32.xlu0 %v471, 112
    %v1968 = vpop.permute.xlu0 %1967
    %1969 = vrot.lane.b32.xlu0 %v474, 112
    %v1970 = vpop.permute.xlu0 %1969
    %1971 = vrot.lane.b32.xlu0 %v476, 112
    %v1972 = vpop.permute.xlu0 %1971
    %1973 = vrot.lane.b32.xlu0 %v479, 112
    %v1974 = vpop.permute.xlu0 %1973
    %1975 = vrot.lane.b32.xlu0 %v481, 112
    %v1976 = vpop.permute.xlu0 %1975
    %1977 = vrot.lane.b32.xlu0 %v484, 112
    %v1978 = vpop.permute.xlu0 %1977
    %1979 = vrot.lane.b32.xlu0 %v486, 112
    %v1980 = vpop.permute.xlu0 %1979
    %1981 = vrot.lane.b32.xlu0 %v489, 112
    %v1982 = vpop.permute.xlu0 %1981
    %1983 = vrot.lane.b32.xlu0 %v491, 112
    %v1984 = vpop.permute.xlu0 %1983
    %1985 = vrot.lane.b32.xlu0 %v494, 112
    %v1986 = vpop.permute.xlu0 %1985
    %1987 = vrot.lane.b32.xlu0 %v496, 112
    %v1988 = vpop.permute.xlu0 %1987
    %1989 = vrot.lane.b32.xlu0 %v499, 112
    %v1990 = vpop.permute.xlu0 %1989
    %1991 = vrot.lane.b32.xlu0 %v501, 112
    %v1992 = vpop.permute.xlu0 %1991
    %1993 = vrot.lane.b32.xlu0 %v1327, 112
    %v1994 = vpop.permute.xlu0 %1993
    %1995 = vrot.lane.b32.xlu0 %v1329, 112
    %v1996 = vpop.permute.xlu0 %1995
    %1997 = vrot.lane.b32.xlu0 %v1929, 112
    %v1998 = vpop.permute.xlu0 %1997
    %1999 = vrot.lane.b32.xlu0 %v1931, 112
    %v2000 = vpop.permute.xlu0 %1999
    %2001 = vrot.lane.b32.xlu0 %v514, 112
    %v2002 = vpop.permute.xlu0 %2001
    %2003 = vrot.lane.b32.xlu0 %v516, 112
    %v2004 = vpop.permute.xlu0 %2003
    %2005 = vrot.lane.b32.xlu0 %v519, 112
    %v2006 = vpop.permute.xlu0 %2005
    %2007 = vrot.lane.b32.xlu0 %v521, 112
    %v2008 = vpop.permute.xlu0 %2007
    %2009 = vrot.lane.b32.xlu0 %v524, 112
    %v2010 = vpop.permute.xlu0 %2009
    %2011 = vrot.lane.b32.xlu0 %v526, 112
    %v2012 = vpop.permute.xlu0 %2011
    %2013 = vrot.lane.b32.xlu0 %v529, 112
    %v2014 = vpop.permute.xlu0 %2013
    %2015 = vrot.lane.b32.xlu0 %v531, 112
    %v2016 = vpop.permute.xlu0 %2015
    %2017 = vrot.lane.b32.xlu0 %v534, 112
    %v2018 = vpop.permute.xlu0 %2017
    %2019 = vrot.lane.b32.xlu0 %v536, 112
    %v2020 = vpop.permute.xlu0 %2019
    %2021 = vrot.lane.b32.xlu0 %v539, 112
    %v2022 = vpop.permute.xlu0 %2021
    %2023 = vrot.lane.b32.xlu0 %v541, 112
    %v2024 = vpop.permute.xlu0 %2023
    %2025 = vrot.lane.b32.xlu0 %v544, 112
    %v2026 = vpop.permute.xlu0 %2025
    %2027 = vrot.lane.b32.xlu0 %v546, 112
    %v2028 = vpop.permute.xlu0 %2027
    %2029 = vrot.lane.b32.xlu0 %v549, 112
    %v2030 = vpop.permute.xlu0 %2029
    %2031 = vrot.lane.b32.xlu0 %v551, 112
    %v2032 = vpop.permute.xlu0 %2031
    %2033 = vrot.lane.b32.xlu0 %v554, 112
    %v2034 = vpop.permute.xlu0 %2033
    %2035 = vrot.lane.b32.xlu0 %v556, 112
    %v2036 = vpop.permute.xlu0 %2035
    %2037 = vrot.lane.b32.xlu0 %v559, 112
    %v2038 = vpop.permute.xlu0 %2037
    %2039 = vrot.lane.b32.xlu0 %v561, 112
    %v2040 = vpop.permute.xlu0 %2039
    %2041 = vrot.lane.b32.xlu0 %v564, 112
    %v2042 = vpop.permute.xlu0 %2041
    %2043 = vrot.lane.b32.xlu0 %v566, 112
    %v2044 = vpop.permute.xlu0 %2043
    %2045 = vrot.lane.b32.xlu0 %v569, 112
    %v2046 = vpop.permute.xlu0 %2045
    %2047 = vrot.lane.b32.xlu0 %v571, 112
    %v2048 = vpop.permute.xlu0 %2047
    %2049 = vrot.lane.b32.xlu0 %v574, 112
    %v2050 = vpop.permute.xlu0 %2049
    %2051 = vrot.lane.b32.xlu0 %v576, 112
    %v2052 = vpop.permute.xlu0 %2051
    %2053 = vrot.lane.b32.xlu0 %v579, 112
    %v2054 = vpop.permute.xlu0 %2053
    %2055 = vrot.lane.b32.xlu0 %v581, 112
    %v2056 = vpop.permute.xlu0 %2055
    %2057 = vrot.lane.b32.xlu0 %v1332, 112
    %v2058 = vpop.permute.xlu0 %2057
    %2059 = vrot.lane.b32.xlu0 %v1334, 112
    %v2060 = vpop.permute.xlu0 %2059
    %2061 = vrot.lane.b32.xlu0 %v1934, 112
    %v2062 = vpop.permute.xlu0 %2061
    %2063 = vrot.lane.b32.xlu0 %v1936, 112
    %v2064 = vpop.permute.xlu0 %2063
    %v2129 = vrot.slane %v268, 2
    %v2130 = vrot.slane %v269, 2
    %v2131 = vsel %vm774, %v2129, %v2130
    %v2132 = vrot.slane %v270, 2
    %v2133 = vsel %vm774, %v2130, %v2132
    %v2134 = vrot.slane %v322, 2
    %v2135 = vrot.slane %v323, 2
    %v2136 = vsel %vm774, %v2134, %v2135
    %v2137 = vrot.slane %v324, 2
    %v2138 = vsel %vm774, %v2135, %v2137
    %vm2139 = vcmask 130048
    %v2140 = vsel %vm2139, %v217, %v583
    %v2141 = vsel %vm2139, %v218, %v585
    %v2142 = vsel %vm2139, %v220, %v587
    %v2143 = vsel %vm2139, %v221, %v589
    %v2144 = vsel %vm2139, %v223, %v591
    %v2145 = vsel %vm2139, %v224, %v593
    %v2146 = vsel %vm2139, %v226, %v595
    %v2147 = vsel %vm2139, %v227, %v597
    %v2148 = vsel %vm2139, %v229, %v599
    %v2149 = vsel %vm2139, %v230, %v601
    %v2150 = vsel %vm2139, %v232, %v603
    %v2151 = vsel %vm2139, %v233, %v605
    %v2152 = vsel %vm2139, %v235, %v607
    %v2153 = vsel %vm2139, %v236, %v609
    %v2154 = vsel %vm2139, %v238, %v611
    %v2155 = vsel %vm2139, %v239, %v613
    %v2156 = vsel %vm2139, %v241, %v615
    %v2157 = vsel %vm2139, %v242, %v617
    %v2158 = vsel %vm2139, %v244, %v619
    %v2159 = vsel %vm2139, %v245, %v621
    %v2160 = vsel %vm2139, %v247, %v623
    %v2161 = vsel %vm2139, %v248, %v625
    %v2162 = vsel %vm2139, %v250, %v627
    %v2163 = vsel %vm2139, %v251, %v629
    %v2164 = vsel %vm2139, %v253, %v631
    %v2165 = vsel %vm2139, %v254, %v633
    %v2166 = vsel %vm2139, %v256, %v635
    %v2167 = vsel %vm2139, %v257, %v637
    %v2168 = vsel %vm2139, %v259, %v639
    %v2169 = vsel %vm2139, %v260, %v641
    %v2170 = vsel %vm2139, %v262, %v643
    %v2171 = vsel %vm2139, %v263, %v645
    %v2172 = vsel %vm2139, %v271, %v647
    %v2173 = vsel %vm2139, %v272, %v649
    %v2174 = vsel %vm2139, %v274, %v651
    %v2175 = vsel %vm2139, %v275, %v653
    %v2176 = vsel %vm2139, %v277, %v655
    %v2177 = vsel %vm2139, %v278, %v657
    %v2178 = vsel %vm2139, %v280, %v659
    %v2179 = vsel %vm2139, %v281, %v661
    %v2180 = vsel %vm2139, %v283, %v663
    %v2181 = vsel %vm2139, %v284, %v665
    %v2182 = vsel %vm2139, %v286, %v667
    %v2183 = vsel %vm2139, %v287, %v669
    %v2184 = vsel %vm2139, %v289, %v671
    %v2185 = vsel %vm2139, %v290, %v673
    %v2186 = vsel %vm2139, %v292, %v675
    %v2187 = vsel %vm2139, %v293, %v677
    %v2188 = vsel %vm2139, %v295, %v679
    %v2189 = vsel %vm2139, %v296, %v681
    %v2190 = vsel %vm2139, %v298, %v683
    %v2191 = vsel %vm2139, %v299, %v685
    %v2192 = vsel %vm2139, %v301, %v687
    %v2193 = vsel %vm2139, %v302, %v689
    %v2194 = vsel %vm2139, %v304, %v691
    %v2195 = vsel %vm2139, %v305, %v693
    %v2196 = vsel %vm2139, %v307, %v695
    %v2197 = vsel %vm2139, %v308, %v697
    %v2198 = vsel %vm2139, %v310, %v699
    %v2199 = vsel %vm2139, %v311, %v701
    %v2200 = vsel %vm2139, %v313, %v703
    %v2201 = vsel %vm2139, %v314, %v705
    %v2202 = vsel %vm2139, %v316, %v707
    %v2203 = vsel %vm2139, %v317, %v709
    %v2204 = vsel %vm56, %v2140, %v936
    %v2205 = vsel %vm56, %v2141, %v938
    %v2206 = vsel %vm56, %v2142, %v940
    %v2207 = vsel %vm56, %v2143, %v942
    %v2208 = vsel %vm56, %v2144, %v944
    %v2209 = vsel %vm56, %v2145, %v946
    %v2210 = vsel %vm56, %v2146, %v948
    %v2211 = vsel %vm56, %v2147, %v950
    %v2212 = vsel %vm56, %v2148, %v952
    %v2213 = vsel %vm56, %v2149, %v954
    %v2214 = vsel %vm56, %v2150, %v956
    %v2215 = vsel %vm56, %v2151, %v958
    %v2216 = vsel %vm56, %v2152, %v960
    %v2217 = vsel %vm56, %v2153, %v962
    %v2218 = vsel %vm56, %v2154, %v964
    %v2219 = vsel %vm56, %v2155, %v966
    %v2220 = vsel %vm56, %v2156, %v968
    %v2221 = vsel %vm56, %v2157, %v970
    %v2222 = vsel %vm56, %v2158, %v972
    %v2223 = vsel %vm56, %v2159, %v974
    %v2224 = vsel %vm56, %v2160, %v976
    %v2225 = vsel %vm56, %v2161, %v978
    %v2226 = vsel %vm56, %v2162, %v980
    %v2227 = vsel %vm56, %v2163, %v982
    %v2228 = vsel %vm56, %v2164, %v984
    %v2229 = vsel %vm56, %v2165, %v986
    %v2230 = vsel %vm56, %v2166, %v988
    %v2231 = vsel %vm56, %v2167, %v990
    %v2232 = vsel %vm56, %v2168, %v992
    %v2233 = vsel %vm56, %v2169, %v994
    %v2234 = vsel %vm56, %v2170, %v996
    %v2235 = vsel %vm56, %v2171, %v998
    %v2236 = vsel %vm56, %v2172, %v1000
    %v2237 = vsel %vm56, %v2173, %v1002
    %v2238 = vsel %vm56, %v2174, %v1004
    %v2239 = vsel %vm56, %v2175, %v1006
    %v2240 = vsel %vm56, %v2176, %v1008
    %v2241 = vsel %vm56, %v2177, %v1010
    %v2242 = vsel %vm56, %v2178, %v1012
    %v2243 = vsel %vm56, %v2179, %v1014
    %v2244 = vsel %vm56, %v2180, %v1016
    %v2245 = vsel %vm56, %v2181, %v1018
    %v2246 = vsel %vm56, %v2182, %v1020
    %v2247 = vsel %vm56, %v2183, %v1022
    %v2248 = vsel %vm56, %v2184, %v1024
    %v2249 = vsel %vm56, %v2185, %v1026
    %v2250 = vsel %vm56, %v2186, %v1028
    %v2251 = vsel %vm56, %v2187, %v1030
    %v2252 = vsel %vm56, %v2188, %v1032
    %v2253 = vsel %vm56, %v2189, %v1034
    %v2254 = vsel %vm56, %v2190, %v1036
    %v2255 = vsel %vm56, %v2191, %v1038
    %v2256 = vsel %vm56, %v2192, %v1040
    %v2257 = vsel %vm56, %v2193, %v1042
    %v2258 = vsel %vm56, %v2194, %v1044
    %v2259 = vsel %vm56, %v2195, %v1046
    %v2260 = vsel %vm56, %v2196, %v1048
    %v2261 = vsel %vm56, %v2197, %v1050
    %v2262 = vsel %vm56, %v2198, %v1052
    %v2263 = vsel %vm56, %v2199, %v1054
    %v2264 = vsel %vm56, %v2200, %v1056
    %v2265 = vsel %vm56, %v2201, %v1058
    %v2266 = vsel %vm56, %v2202, %v1060
    %v2267 = vsel %vm56, %v2203, %v1062
    %vm2268 = vcmask 392192
    %v2269 = vsel %vm2268, %v2204, %v1132
    %v2270 = vsel %vm2268, %v2205, %v1134
    %v2271 = vsel %vm2268, %v2206, %v1136
    %v2272 = vsel %vm2268, %v2207, %v1138
    %v2273 = vsel %vm2268, %v2208, %v1140
    %v2274 = vsel %vm2268, %v2209, %v1142
    %v2275 = vsel %vm2268, %v2210, %v1144
    %v2276 = vsel %vm2268, %v2211, %v1146
    %v2277 = vsel %vm2268, %v2212, %v1148
    %v2278 = vsel %vm2268, %v2213, %v1150
    %v2279 = vsel %vm2268, %v2214, %v1152
    %v2280 = vsel %vm2268, %v2215, %v1154
    %v2281 = vsel %vm2268, %v2216, %v1156
    %v2282 = vsel %vm2268, %v2217, %v1158
    %v2283 = vsel %vm2268, %v2218, %v1160
    %v2284 = vsel %vm2268, %v2219, %v1162
    %v2285 = vsel %vm2268, %v2220, %v1164
    %v2286 = vsel %vm2268, %v2221, %v1166
    %v2287 = vsel %vm2268, %v2222, %v1168
    %v2288 = vsel %vm2268, %v2223, %v1170
    %v2289 = vsel %vm2268, %v2224, %v1172
    %v2290 = vsel %vm2268, %v2225, %v1174
    %v2291 = vsel %vm2268, %v2226, %v1176
    %v2292 = vsel %vm2268, %v2227, %v1178
    %v2293 = vsel %vm2268, %v2228, %v1180
    %v2294 = vsel %vm2268, %v2229, %v1182
    %v2295 = vsel %vm2268, %v2230, %v1184
    %v2296 = vsel %vm2268, %v2231, %v1186
    %v2297 = vsel %vm2268, %v2232, %v1188
    %v2298 = vsel %vm2268, %v2233, %v1190
    %v2299 = vsel %vm2268, %v2234, %v1192
    %v2300 = vsel %vm2268, %v2235, %v1194
    %v2301 = vsel %vm2268, %v2236, %v1196
    %v2302 = vsel %vm2268, %v2237, %v1198
    %v2303 = vsel %vm2268, %v2238, %v1200
    %v2304 = vsel %vm2268, %v2239, %v1202
    %v2305 = vsel %vm2268, %v2240, %v1204
    %v2306 = vsel %vm2268, %v2241, %v1206
    %v2307 = vsel %vm2268, %v2242, %v1208
    %v2308 = vsel %vm2268, %v2243, %v1210
    %v2309 = vsel %vm2268, %v2244, %v1212
    %v2310 = vsel %vm2268, %v2245, %v1214
    %v2311 = vsel %vm2268, %v2246, %v1216
    %v2312 = vsel %vm2268, %v2247, %v1218
    %v2313 = vsel %vm2268, %v2248, %v1220
    %v2314 = vsel %vm2268, %v2249, %v1222
    %v2315 = vsel %vm2268, %v2250, %v1224
    %v2316 = vsel %vm2268, %v2251, %v1226
    %v2317 = vsel %vm2268, %v2252, %v1228
    %v2318 = vsel %vm2268, %v2253, %v1230
    %v2319 = vsel %vm2268, %v2254, %v1232
    %v2320 = vsel %vm2268, %v2255, %v1234
    %v2321 = vsel %vm2268, %v2256, %v1236
    %v2322 = vsel %vm2268, %v2257, %v1238
    %v2323 = vsel %vm2268, %v2258, %v1240
    %v2324 = vsel %vm2268, %v2259, %v1242
    %v2325 = vsel %vm2268, %v2260, %v1244
    %v2326 = vsel %vm2268, %v2261, %v1246
    %v2327 = vsel %vm2268, %v2262, %v1248
    %v2328 = vsel %vm2268, %v2263, %v1250
    %v2329 = vsel %vm2268, %v2264, %v1252
    %v2330 = vsel %vm2268, %v2265, %v1254
    %v2331 = vsel %vm2268, %v2266, %v1256
    %v2332 = vsel %vm2268, %v2267, %v1258
    %vm2333 = vcmask 523264
    %v2334 = vsel %vm2333, %v2269, %v1336
    %v2335 = vsel %vm2333, %v2270, %v1338
    %v2336 = vsel %vm2333, %v2271, %v1340
    %v2337 = vsel %vm2333, %v2272, %v1342
    %v2338 = vsel %vm2333, %v2273, %v1344
    %v2339 = vsel %vm2333, %v2274, %v1346
    %v2340 = vsel %vm2333, %v2275, %v1348
    %v2341 = vsel %vm2333, %v2276, %v1350
    %v2342 = vsel %vm2333, %v2277, %v1352
    %v2343 = vsel %vm2333, %v2278, %v1354
    %v2344 = vsel %vm2333, %v2279, %v1356
    %v2345 = vsel %vm2333, %v2280, %v1358
    %v2346 = vsel %vm2333, %v2281, %v1360
    %v2347 = vsel %vm2333, %v2282, %v1362
    %v2348 = vsel %vm2333, %v2283, %v1364
    %v2349 = vsel %vm2333, %v2284, %v1366
    %v2350 = vsel %vm2333, %v2285, %v1368
    %v2351 = vsel %vm2333, %v2286, %v1370
    %v2352 = vsel %vm2333, %v2287, %v1372
    %v2353 = vsel %vm2333, %v2288, %v1374
    %v2354 = vsel %vm2333, %v2289, %v1376
    %v2355 = vsel %vm2333, %v2290, %v1378
    %v2356 = vsel %vm2333, %v2291, %v1380
    %v2357 = vsel %vm2333, %v2292, %v1382
    %v2358 = vsel %vm2333, %v2293, %v1384
    %v2359 = vsel %vm2333, %v2294, %v1386
    %v2360 = vsel %vm2333, %v2295, %v1388
    %v2361 = vsel %vm2333, %v2296, %v1390
    %v2362 = vsel %vm2333, %v2297, %v1392
    %v2363 = vsel %vm2333, %v2298, %v1394
    %v2364 = vsel %vm2333, %v2299, %v1396
    %v2365 = vsel %vm2333, %v2300, %v1398
    %v2366 = vsel %vm2333, %v2301, %v1400
    %v2367 = vsel %vm2333, %v2302, %v1402
    %v2368 = vsel %vm2333, %v2303, %v1404
    %v2369 = vsel %vm2333, %v2304, %v1406
    %v2370 = vsel %vm2333, %v2305, %v1408
    %v2371 = vsel %vm2333, %v2306, %v1410
    %v2372 = vsel %vm2333, %v2307, %v1412
    %v2373 = vsel %vm2333, %v2308, %v1414
    %v2374 = vsel %vm2333, %v2309, %v1416
    %v2375 = vsel %vm2333, %v2310, %v1418
    %v2376 = vsel %vm2333, %v2311, %v1420
    %v2377 = vsel %vm2333, %v2312, %v1422
    %v2378 = vsel %vm2333, %v2313, %v1424
    %v2379 = vsel %vm2333, %v2314, %v1426
    %v2380 = vsel %vm2333, %v2315, %v1428
    %v2381 = vsel %vm2333, %v2316, %v1430
    %v2382 = vsel %vm2333, %v2317, %v1432
    %v2383 = vsel %vm2333, %v2318, %v1434
    %v2384 = vsel %vm2333, %v2319, %v1436
    %v2385 = vsel %vm2333, %v2320, %v1438
    %v2386 = vsel %vm2333, %v2321, %v1440
    %v2387 = vsel %vm2333, %v2322, %v1442
    %v2388 = vsel %vm2333, %v2323, %v1444
    %v2389 = vsel %vm2333, %v2324, %v1446
    %v2390 = vsel %vm2333, %v2325, %v1448
    %v2391 = vsel %vm2333, %v2326, %v1450
    %v2392 = vsel %vm2333, %v2327, %v1452
    %v2393 = vsel %vm2333, %v2328, %v1454
    %v2394 = vsel %vm2333, %v2329, %v1456
    %v2395 = vsel %vm2333, %v2330, %v1458
    %v2396 = vsel %vm2333, %v2331, %v1460
    %v2397 = vsel %vm2333, %v2332, %v1462
    %vm2398 = vcmask 654336
    %v2399 = vsel %vm2398, %v2334, %v1538
    %v2400 = vsel %vm2398, %v2335, %v1540
    %v2401 = vsel %vm2398, %v2336, %v1542
    %v2402 = vsel %vm2398, %v2337, %v1544
    %v2403 = vsel %vm2398, %v2338, %v1546
    %v2404 = vsel %vm2398, %v2339, %v1548
    %v2405 = vsel %vm2398, %v2340, %v1550
    %v2406 = vsel %vm2398, %v2341, %v1552
    %v2407 = vsel %vm2398, %v2342, %v1554
    %v2408 = vsel %vm2398, %v2343, %v1556
    %v2409 = vsel %vm2398, %v2344, %v1558
    %v2410 = vsel %vm2398, %v2345, %v1560
    %v2411 = vsel %vm2398, %v2346, %v1562
    %v2412 = vsel %vm2398, %v2347, %v1564
    %v2413 = vsel %vm2398, %v2348, %v1566
    %v2414 = vsel %vm2398, %v2349, %v1568
    %v2415 = vsel %vm2398, %v2350, %v1570
    %v2416 = vsel %vm2398, %v2351, %v1572
    %v2417 = vsel %vm2398, %v2352, %v1574
    %v2418 = vsel %vm2398, %v2353, %v1576
    %v2419 = vsel %vm2398, %v2354, %v1578
    %v2420 = vsel %vm2398, %v2355, %v1580
    %v2421 = vsel %vm2398, %v2356, %v1582
    %v2422 = vsel %vm2398, %v2357, %v1584
    %v2423 = vsel %vm2398, %v2358, %v1586
    %v2424 = vsel %vm2398, %v2359, %v1588
    %v2425 = vsel %vm2398, %v2360, %v1590
    %v2426 = vsel %vm2398, %v2361, %v1592
    %v2427 = vsel %vm2398, %v2362, %v1594
    %v2428 = vsel %vm2398, %v2363, %v1596
    %v2429 = vsel %vm2398, %v2364, %v1598
    %v2430 = vsel %vm2398, %v2365, %v1600
    %v2431 = vsel %vm2398, %v2366, %v1602
    %v2432 = vsel %vm2398, %v2367, %v1604
    %v2433 = vsel %vm2398, %v2368, %v1606
    %v2434 = vsel %vm2398, %v2369, %v1608
    %v2435 = vsel %vm2398, %v2370, %v1610
    %v2436 = vsel %vm2398, %v2371, %v1612
    %v2437 = vsel %vm2398, %v2372, %v1614
    %v2438 = vsel %vm2398, %v2373, %v1616
    %v2439 = vsel %vm2398, %v2374, %v1618
    %v2440 = vsel %vm2398, %v2375, %v1620
    %v2441 = vsel %vm2398, %v2376, %v1622
    %v2442 = vsel %vm2398, %v2377, %v1624
    %v2443 = vsel %vm2398, %v2378, %v1626
    %v2444 = vsel %vm2398, %v2379, %v1628
    %v2445 = vsel %vm2398, %v2380, %v1630
    %v2446 = vsel %vm2398, %v2381, %v1632
    %v2447 = vsel %vm2398, %v2382, %v1634
    %v2448 = vsel %vm2398, %v2383, %v1636
    %v2449 = vsel %vm2398, %v2384, %v1638
    %v2450 = vsel %vm2398, %v2385, %v1640
    %v2451 = vsel %vm2398, %v2386, %v1642
    %v2452 = vsel %vm2398, %v2387, %v1644
    %v2453 = vsel %vm2398, %v2388, %v1646
    %v2454 = vsel %vm2398, %v2389, %v1648
    %v2455 = vsel %vm2398, %v2390, %v1650
    %v2456 = vsel %vm2398, %v2391, %v1652
    %v2457 = vsel %vm2398, %v2392, %v1654
    %v2458 = vsel %vm2398, %v2393, %v1656
    %v2459 = vsel %vm2398, %v2394, %v1658
    %v2460 = vsel %vm2398, %v2395, %v1660
    %v2461 = vsel %vm2398, %v2396, %v1662
    %v2462 = vsel %vm2398, %v2397, %v1664
    %vm2463 = vcmask 785408
    %v2464 = vsel %vm2463, %v2399, %v1734
    %v2465 = vsel %vm2463, %v2400, %v1736
    %v2466 = vsel %vm2463, %v2401, %v1738
    %v2467 = vsel %vm2463, %v2402, %v1740
    %v2468 = vsel %vm2463, %v2403, %v1742
    %v2469 = vsel %vm2463, %v2404, %v1744
    %v2470 = vsel %vm2463, %v2405, %v1746
    %v2471 = vsel %vm2463, %v2406, %v1748
    %v2472 = vsel %vm2463, %v2407, %v1750
    %v2473 = vsel %vm2463, %v2408, %v1752
    %v2474 = vsel %vm2463, %v2409, %v1754
    %v2475 = vsel %vm2463, %v2410, %v1756
    %v2476 = vsel %vm2463, %v2411, %v1758
    %v2477 = vsel %vm2463, %v2412, %v1760
    %v2478 = vsel %vm2463, %v2413, %v1762
    %v2479 = vsel %vm2463, %v2414, %v1764
    %v2480 = vsel %vm2463, %v2415, %v1766
    %v2481 = vsel %vm2463, %v2416, %v1768
    %v2482 = vsel %vm2463, %v2417, %v1770
    %v2483 = vsel %vm2463, %v2418, %v1772
    %v2484 = vsel %vm2463, %v2419, %v1774
    %v2485 = vsel %vm2463, %v2420, %v1776
    %v2486 = vsel %vm2463, %v2421, %v1778
    %v2487 = vsel %vm2463, %v2422, %v1780
    %v2488 = vsel %vm2463, %v2423, %v1782
    %v2489 = vsel %vm2463, %v2424, %v1784
    %v2490 = vsel %vm2463, %v2425, %v1786
    %v2491 = vsel %vm2463, %v2426, %v1788
    %v2492 = vsel %vm2463, %v2427, %v1790
    %v2493 = vsel %vm2463, %v2428, %v1792
    %v2494 = vsel %vm2463, %v2429, %v1794
    %v2495 = vsel %vm2463, %v2430, %v1796
    %v2496 = vsel %vm2463, %v2431, %v1798
    %v2497 = vsel %vm2463, %v2432, %v1800
    %v2498 = vsel %vm2463, %v2433, %v1802
    %v2499 = vsel %vm2463, %v2434, %v1804
    %v2500 = vsel %vm2463, %v2435, %v1806
    %v2501 = vsel %vm2463, %v2436, %v1808
    %v2502 = vsel %vm2463, %v2437, %v1810
    %v2503 = vsel %vm2463, %v2438, %v1812
    %v2504 = vsel %vm2463, %v2439, %v1814
    %v2505 = vsel %vm2463, %v2440, %v1816
    %v2506 = vsel %vm2463, %v2441, %v1818
    %v2507 = vsel %vm2463, %v2442, %v1820
    %v2508 = vsel %vm2463, %v2443, %v1822
    %v2509 = vsel %vm2463, %v2444, %v1824
    %v2510 = vsel %vm2463, %v2445, %v1826
    %v2511 = vsel %vm2463, %v2446, %v1828
    %v2512 = vsel %vm2463, %v2447, %v1830
    %v2513 = vsel %vm2463, %v2448, %v1832
    %v2514 = vsel %vm2463, %v2449, %v1834
    %v2515 = vsel %vm2463, %v2450, %v1836
    %v2516 = vsel %vm2463, %v2451, %v1838
    %v2517 = vsel %vm2463, %v2452, %v1840
    %v2518 = vsel %vm2463, %v2453, %v1842
    %v2519 = vsel %vm2463, %v2454, %v1844
    %v2520 = vsel %vm2463, %v2455, %v1846
    %v2521 = vsel %vm2463, %v2456, %v1848
    %v2522 = vsel %vm2463, %v2457, %v1850
    %v2523 = vsel %vm2463, %v2458, %v1852
    %v2524 = vsel %vm2463, %v2459, %v1854
    %v2525 = vsel %vm2463, %v2460, %v1856
    %v2526 = vsel %vm2463, %v2461, %v1858
    %v2527 = vsel %vm2463, %v2462, %v1860
    %vm2528 = vcmask 916480
    %v2529 = vsel %vm2528, %v2464, %v1938
    %v2530 = vsel %vm2528, %v2465, %v1940
    %v2531 = vsel %vm2528, %v2466, %v1942
    %v2532 = vsel %vm2528, %v2467, %v1944
    %v2533 = vsel %vm2528, %v2468, %v1946
    %v2534 = vsel %vm2528, %v2469, %v1948
    %v2535 = vsel %vm2528, %v2470, %v1950
    %v2536 = vsel %vm2528, %v2471, %v1952
    %v2537 = vsel %vm2528, %v2472, %v1954
    %v2538 = vsel %vm2528, %v2473, %v1956
    %v2539 = vsel %vm2528, %v2474, %v1958
    %v2540 = vsel %vm2528, %v2475, %v1960
    %v2541 = vsel %vm2528, %v2476, %v1962
    %v2542 = vsel %vm2528, %v2477, %v1964
    %v2543 = vsel %vm2528, %v2478, %v1966
    %v2544 = vsel %vm2528, %v2479, %v1968
    %v2545 = vsel %vm2528, %v2480, %v1970
    %v2546 = vsel %vm2528, %v2481, %v1972
    %v2547 = vsel %vm2528, %v2482, %v1974
    %v2548 = vsel %vm2528, %v2483, %v1976
    %v2549 = vsel %vm2528, %v2484, %v1978
    %v2550 = vsel %vm2528, %v2485, %v1980
    %v2551 = vsel %vm2528, %v2486, %v1982
    %v2552 = vsel %vm2528, %v2487, %v1984
    %v2553 = vsel %vm2528, %v2488, %v1986
    %v2554 = vsel %vm2528, %v2489, %v1988
    %v2555 = vsel %vm2528, %v2490, %v1990
    %v2556 = vsel %vm2528, %v2491, %v1992
    %v2557 = vsel %vm2528, %v2492, %v1994
    %v2558 = vsel %vm2528, %v2493, %v1996
    %v2559 = vsel %vm2528, %v2494, %v1998
    %v2560 = vsel %vm2528, %v2495, %v2000
    %v2561 = vsel %vm2528, %v2496, %v2002
    %v2562 = vsel %vm2528, %v2497, %v2004
    %v2563 = vsel %vm2528, %v2498, %v2006
    %v2564 = vsel %vm2528, %v2499, %v2008
    %v2565 = vsel %vm2528, %v2500, %v2010
    %v2566 = vsel %vm2528, %v2501, %v2012
    %v2567 = vsel %vm2528, %v2502, %v2014
    %v2568 = vsel %vm2528, %v2503, %v2016
    %v2569 = vsel %vm2528, %v2504, %v2018
    %v2570 = vsel %vm2528, %v2505, %v2020
    %v2571 = vsel %vm2528, %v2506, %v2022
    %v2572 = vsel %vm2528, %v2507, %v2024
    %v2573 = vsel %vm2528, %v2508, %v2026
    %v2574 = vsel %vm2528, %v2509, %v2028
    %v2575 = vsel %vm2528, %v2510, %v2030
    %v2576 = vsel %vm2528, %v2511, %v2032
    %v2577 = vsel %vm2528, %v2512, %v2034
    %v2578 = vsel %vm2528, %v2513, %v2036
    %v2579 = vsel %vm2528, %v2514, %v2038
    %v2580 = vsel %vm2528, %v2515, %v2040
    %v2581 = vsel %vm2528, %v2516, %v2042
    %v2582 = vsel %vm2528, %v2517, %v2044
    %v2583 = vsel %vm2528, %v2518, %v2046
    %v2584 = vsel %vm2528, %v2519, %v2048
    %v2585 = vsel %vm2528, %v2520, %v2050
    %v2586 = vsel %vm2528, %v2521, %v2052
    %v2587 = vsel %vm2528, %v2522, %v2054
    %v2588 = vsel %vm2528, %v2523, %v2056
    %v2589 = vsel %vm2528, %v2524, %v2058
    %v2590 = vsel %vm2528, %v2525, %v2060
    %v2591 = vsel %vm2528, %v2526, %v2062
    %v2592 = vsel %vm2528, %v2527, %v2064
    %v2593 = vsel %vm2139, %v787, 0
    %v2595 = vsel %vm2139, %v789, 0
    %v2597 = vsel %vm2139, %v792, 0
    %v2599 = vsel %vm2139, %v794, 0
    %v2601 = vsel %vm2139, %v797, 0
    %v2603 = vsel %vm2139, %v799, 0
    %v2605 = vsel %vm2139, %v802, 0
    %v2607 = vsel %vm2139, %v804, 0
    %v2609 = vsel %vm2139, %v807, 0
    %v2611 = vsel %vm2139, %v809, 0
    %v2613 = vsel %vm2139, %v812, 0
    %v2615 = vsel %vm2139, %v814, 0
    %v2617 = vsel %vm2139, %v817, 0
    %v2619 = vsel %vm2139, %v819, 0
    %v2621 = vsel %vm2139, %v822, 0
    %v2623 = vsel %vm2139, %v824, 0
    %v2625 = vsel %vm2139, %v827, 0
    %v2627 = vsel %vm2139, %v829, 0
    %v2629 = vsel %vm2139, %v832, 0
    %v2631 = vsel %vm2139, %v834, 0
    %v2633 = vsel %vm2139, %v837, 0
    %v2635 = vsel %vm2139, %v839, 0
    %v2637 = vsel %vm2139, %v842, 0
    %v2639 = vsel %vm2139, %v844, 0
    %v2641 = vsel %vm2139, %v847, 0
    %v2643 = vsel %vm2139, %v849, 0
    %v2645 = vsel %vm2139, %v852, 0
    %v2647 = vsel %vm2139, %v854, 0
    %v2649 = vsel %vm2139, %v1529, 0
    %v2651 = vsel %vm2139, %v1531, 0
    %v2653 = vsel %vm2139, %v2131, 0
    %v2655 = vsel %vm2139, %v2133, 0
    %v2657 = vsel %vm2139, %v867, 0
    %v2659 = vsel %vm2139, %v869, 0
    %v2661 = vsel %vm2139, %v872, 0
    %v2663 = vsel %vm2139, %v874, 0
    %v2665 = vsel %vm2139, %v877, 0
    %v2667 = vsel %vm2139, %v879, 0
    %v2669 = vsel %vm2139, %v882, 0
    %v2671 = vsel %vm2139, %v884, 0
    %v2673 = vsel %vm2139, %v887, 0
    %v2675 = vsel %vm2139, %v889, 0
    %v2677 = vsel %vm2139, %v892, 0
    %v2679 = vsel %vm2139, %v894, 0
    %v2681 = vsel %vm2139, %v897, 0
    %v2683 = vsel %vm2139, %v899, 0
    %v2685 = vsel %vm2139, %v902, 0
    %v2687 = vsel %vm2139, %v904, 0
    %v2689 = vsel %vm2139, %v907, 0
    %v2691 = vsel %vm2139, %v909, 0
    %v2693 = vsel %vm2139, %v912, 0
    %v2695 = vsel %vm2139, %v914, 0
    %v2697 = vsel %vm2139, %v917, 0
    %v2699 = vsel %vm2139, %v919, 0
    %v2701 = vsel %vm2139, %v922, 0
    %v2703 = vsel %vm2139, %v924, 0
    %v2705 = vsel %vm2139, %v927, 0
    %v2707 = vsel %vm2139, %v929, 0
    %v2709 = vsel %vm2139, %v932, 0
    %v2711 = vsel %vm2139, %v934, 0
    %v2713 = vsel %vm2139, %v1534, 0
    %v2715 = vsel %vm2139, %v1536, 0
    %v2717 = vsel %vm2139, %v2136, 0
    %v2719 = vsel %vm2139, %v2138, 0
    %2721 = vmatpush.msra.mxu0 %v203
    %2722 = vmatpush.msra.mxu0 %v202
    %2723 = vmatpush.msra.mxu0 %v201
    %2724 = vmatpush.msra.mxu0 %v200
    %2725 = vmatpush.msra.mxu0 %v199
    %2726 = vmatpush.msra.mxu0 %v198
    %2727 = vmatpush.msra.mxu0 %v197
    %2728 = vmatpush.msra.mxu0 %v196
    %2729 = vmatpush.msra.mxu0 %v195
    %2730 = vmatpush.msra.mxu0 %v194
    %2731 = vmatpush.msra.mxu0 %v193
    %2732 = vmatpush.msra.mxu0 %v192
    %2733 = vmatpush.msra.mxu0 %v191
    %2734 = vmatpush.msra.mxu0 %v190
    %2735 = vmatpush.msra.mxu0 %v189
    %2736 = vmatpush.msra.mxu0 %v188
    %2737 = vmatmul.f32.gmra.mxu0 %v2529
    %v2738 = vpop.f32.mrf.mxu0
    %v2739 = vadd.f32 0.0, %v2738
    %2740 = vmatmul.f32.gmra.mxu0 %v2530
    %v2741 = vpop.f32.mrf.mxu0
    %v2742 = vadd.f32 0.0, %v2741
    %2743 = vmatmul.f32.gmra.mxu0 %v2531
    %v2744 = vpop.f32.mrf.mxu0
    %v2745 = vadd.f32 0.0, %v2744
    %2746 = vmatmul.f32.gmra.mxu0 %v2532
    %v2747 = vpop.f32.mrf.mxu0
    %v2748 = vadd.f32 0.0, %v2747
    %2749 = vmatmul.f32.gmra.mxu0 %v2533
    %v2750 = vpop.f32.mrf.mxu0
    %v2751 = vadd.f32 0.0, %v2750
    %2752 = vmatmul.f32.gmra.mxu0 %v2534
    %v2753 = vpop.f32.mrf.mxu0
    %v2754 = vadd.f32 0.0, %v2753
    %2755 = vmatmul.f32.gmra.mxu0 %v2535
    %v2756 = vpop.f32.mrf.mxu0
    %v2757 = vadd.f32 0.0, %v2756
    %2758 = vmatmul.f32.gmra.mxu0 %v2536
    %v2759 = vpop.f32.mrf.mxu0
    %v2760 = vadd.f32 0.0, %v2759
    %2761 = vmatmul.f32.gmra.mxu0 %v2537
    %v2762 = vpop.f32.mrf.mxu0
    %v2763 = vadd.f32 0.0, %v2762
    %2764 = vmatmul.f32.gmra.mxu0 %v2538
    %v2765 = vpop.f32.mrf.mxu0
    %v2766 = vadd.f32 0.0, %v2765
    %2767 = vmatmul.f32.gmra.mxu0 %v2539
    %v2768 = vpop.f32.mrf.mxu0
    %v2769 = vadd.f32 0.0, %v2768
    %2770 = vmatmul.f32.gmra.mxu0 %v2540
    %v2771 = vpop.f32.mrf.mxu0
    %v2772 = vadd.f32 0.0, %v2771
    %2773 = vmatmul.f32.gmra.mxu0 %v2541
    %v2774 = vpop.f32.mrf.mxu0
    %v2775 = vadd.f32 0.0, %v2774
    %2776 = vmatmul.f32.gmra.mxu0 %v2542
    %v2777 = vpop.f32.mrf.mxu0
    %v2778 = vadd.f32 0.0, %v2777
    %2779 = vmatmul.f32.gmra.mxu0 %v2543
    %v2780 = vpop.f32.mrf.mxu0
    %v2781 = vadd.f32 0.0, %v2780
    %2782 = vmatmul.f32.gmra.mxu0 %v2544
    %v2783 = vpop.f32.mrf.mxu0
    %v2784 = vadd.f32 0.0, %v2783
    %2785 = vmatmul.f32.gmra.mxu0 %v2545
    %v2786 = vpop.f32.mrf.mxu0
    %v2787 = vadd.f32 0.0, %v2786
    %2788 = vmatmul.f32.gmra.mxu0 %v2546
    %v2789 = vpop.f32.mrf.mxu0
    %v2790 = vadd.f32 0.0, %v2789
    %2791 = vmatmul.f32.gmra.mxu0 %v2547
    %v2792 = vpop.f32.mrf.mxu0
    %v2793 = vadd.f32 0.0, %v2792
    %2794 = vmatmul.f32.gmra.mxu0 %v2548
    %v2795 = vpop.f32.mrf.mxu0
    %v2796 = vadd.f32 0.0, %v2795
    %2797 = vmatmul.f32.gmra.mxu0 %v2549
    %v2798 = vpop.f32.mrf.mxu0
    %v2799 = vadd.f32 0.0, %v2798
    %2800 = vmatmul.f32.gmra.mxu0 %v2550
    %v2801 = vpop.f32.mrf.mxu0
    %v2802 = vadd.f32 0.0, %v2801
    %2803 = vmatmul.f32.gmra.mxu0 %v2551
    %v2804 = vpop.f32.mrf.mxu0
    %v2805 = vadd.f32 0.0, %v2804
    %2806 = vmatmul.f32.gmra.mxu0 %v2552
    %v2807 = vpop.f32.mrf.mxu0
    %v2808 = vadd.f32 0.0, %v2807
    %2809 = vmatmul.f32.gmra.mxu0 %v2553
    %v2810 = vpop.f32.mrf.mxu0
    %v2811 = vadd.f32 0.0, %v2810
    %2812 = vmatmul.f32.gmra.mxu0 %v2554
    %v2813 = vpop.f32.mrf.mxu0
    %v2814 = vadd.f32 0.0, %v2813
    %2815 = vmatmul.f32.gmra.mxu0 %v2555
    %v2816 = vpop.f32.mrf.mxu0
    %v2817 = vadd.f32 0.0, %v2816
    %2818 = vmatmul.f32.gmra.mxu0 %v2556
    %v2819 = vpop.f32.mrf.mxu0
    %v2820 = vadd.f32 0.0, %v2819
    %2821 = vmatmul.f32.gmra.mxu0 %v2557
    %v2822 = vpop.f32.mrf.mxu0
    %v2823 = vadd.f32 0.0, %v2822
    %2824 = vmatmul.f32.gmra.mxu0 %v2558
    %v2825 = vpop.f32.mrf.mxu0
    %v2826 = vadd.f32 0.0, %v2825
    %2827 = vmatmul.f32.gmra.mxu0 %v2559
    %v2828 = vpop.f32.mrf.mxu0
    %v2829 = vadd.f32 0.0, %v2828
    %2830 = vmatmul.f32.gmra.mxu0 %v2560
    %v2831 = vpop.f32.mrf.mxu0
    %v2832 = vadd.f32 0.0, %v2831
    %2833 = vmatmul.f32.gmra.mxu0 %v2561
    %v2834 = vpop.f32.mrf.mxu0
    %v2835 = vadd.f32 0.0, %v2834
    %2836 = vmatmul.f32.gmra.mxu0 %v2562
    %v2837 = vpop.f32.mrf.mxu0
    %v2838 = vadd.f32 0.0, %v2837
    %2839 = vmatmul.f32.gmra.mxu0 %v2563
    %v2840 = vpop.f32.mrf.mxu0
    %v2841 = vadd.f32 0.0, %v2840
    %2842 = vmatmul.f32.gmra.mxu0 %v2564
    %v2843 = vpop.f32.mrf.mxu0
    %v2844 = vadd.f32 0.0, %v2843
    %2845 = vmatmul.f32.gmra.mxu0 %v2565
    %v2846 = vpop.f32.mrf.mxu0
    %v2847 = vadd.f32 0.0, %v2846
    %2848 = vmatmul.f32.gmra.mxu0 %v2566
    %v2849 = vpop.f32.mrf.mxu0
    %v2850 = vadd.f32 0.0, %v2849
    %2851 = vmatmul.f32.gmra.mxu0 %v2567
    %v2852 = vpop.f32.mrf.mxu0
    %v2853 = vadd.f32 0.0, %v2852
    %2854 = vmatmul.f32.gmra.mxu0 %v2568
    %v2855 = vpop.f32.mrf.mxu0
    %v2856 = vadd.f32 0.0, %v2855
    %2857 = vmatmul.f32.gmra.mxu0 %v2569
    %v2858 = vpop.f32.mrf.mxu0
    %v2859 = vadd.f32 0.0, %v2858
    %2860 = vmatmul.f32.gmra.mxu0 %v2570
    %v2861 = vpop.f32.mrf.mxu0
    %v2862 = vadd.f32 0.0, %v2861
    %2863 = vmatmul.f32.gmra.mxu0 %v2571
    %v2864 = vpop.f32.mrf.mxu0
    %v2865 = vadd.f32 0.0, %v2864
    %2866 = vmatmul.f32.gmra.mxu0 %v2572
    %v2867 = vpop.f32.mrf.mxu0
    %v2868 = vadd.f32 0.0, %v2867
    %2869 = vmatmul.f32.gmra.mxu0 %v2573
    %v2870 = vpop.f32.mrf.mxu0
    %v2871 = vadd.f32 0.0, %v2870
    %2872 = vmatmul.f32.gmra.mxu0 %v2574
    %v2873 = vpop.f32.mrf.mxu0
    %v2874 = vadd.f32 0.0, %v2873
    %2875 = vmatmul.f32.gmra.mxu0 %v2575
    %v2876 = vpop.f32.mrf.mxu0
    %v2877 = vadd.f32 0.0, %v2876
    %2878 = vmatmul.f32.gmra.mxu0 %v2576
    %v2879 = vpop.f32.mrf.mxu0
    %v2880 = vadd.f32 0.0, %v2879
    %2881 = vmatmul.f32.gmra.mxu0 %v2577
    %v2882 = vpop.f32.mrf.mxu0
    %v2883 = vadd.f32 0.0, %v2882
    %2884 = vmatmul.f32.gmra.mxu0 %v2578
    %v2885 = vpop.f32.mrf.mxu0
    %v2886 = vadd.f32 0.0, %v2885
    %2887 = vmatmul.f32.gmra.mxu0 %v2579
    %v2888 = vpop.f32.mrf.mxu0
    %v2889 = vadd.f32 0.0, %v2888
    %2890 = vmatmul.f32.gmra.mxu0 %v2580
    %v2891 = vpop.f32.mrf.mxu0
    %v2892 = vadd.f32 0.0, %v2891
    %2893 = vmatmul.f32.gmra.mxu0 %v2581
    %v2894 = vpop.f32.mrf.mxu0
    %v2895 = vadd.f32 0.0, %v2894
    %2896 = vmatmul.f32.gmra.mxu0 %v2582
    %v2897 = vpop.f32.mrf.mxu0
    %v2898 = vadd.f32 0.0, %v2897
    %2899 = vmatmul.f32.gmra.mxu0 %v2583
    %v2900 = vpop.f32.mrf.mxu0
    %v2901 = vadd.f32 0.0, %v2900
    %2902 = vmatmul.f32.gmra.mxu0 %v2584
    %v2903 = vpop.f32.mrf.mxu0
    %v2904 = vadd.f32 0.0, %v2903
    %2905 = vmatmul.f32.gmra.mxu0 %v2585
    %v2906 = vpop.f32.mrf.mxu0
    %v2907 = vadd.f32 0.0, %v2906
    %2908 = vmatmul.f32.gmra.mxu0 %v2586
    %v2909 = vpop.f32.mrf.mxu0
    %v2910 = vadd.f32 0.0, %v2909
    %2911 = vmatmul.f32.gmra.mxu0 %v2587
    %v2912 = vpop.f32.mrf.mxu0
    %v2913 = vadd.f32 0.0, %v2912
    %2914 = vmatmul.f32.gmra.mxu0 %v2588
    %v2915 = vpop.f32.mrf.mxu0
    %v2916 = vadd.f32 0.0, %v2915
    %2917 = vmatmul.f32.gmra.mxu0 %v2589
    %v2918 = vpop.f32.mrf.mxu0
    %v2919 = vadd.f32 0.0, %v2918
    %2920 = vmatmul.f32.gmra.mxu0 %v2590
    %v2921 = vpop.f32.mrf.mxu0
    %v2922 = vadd.f32 0.0, %v2921
    %2923 = vmatmul.f32.gmra.mxu0 %v2591
    %v2924 = vpop.f32.mrf.mxu0
    %v2925 = vadd.f32 0.0, %v2924
    %2926 = vmatmul.f32.gmra.mxu0 %v2592
    %v2927 = vpop.f32.mrf.mxu0
    %v2928 = vadd.f32 0.0, %v2927
    %2929 = vdwg.mxu0
    %2930 = vmatpush.msra.mxu0 0.0
    %2931 = vmatpush.msra.mxu0 0.0
    %2932 = vmatpush.msra.mxu0 0.0
    %2933 = vmatpush.msra.mxu0 0.0
    %2934 = vmatpush.msra.mxu0 0.0
    %2935 = vmatpush.msra.mxu0 0.0
    %2936 = vmatpush.msra.mxu0 0.0
    %2937 = vmatpush.msra.mxu0 0.0
    %2938 = vmatpush.msra.mxu0 0.0
    %2939 = vmatpush.msra.mxu0 0.0
    %2940 = vmatpush.msra.mxu0 0.0
    %2941 = vmatpush.msra.mxu0 0.0
    %2942 = vmatpush.msra.mxu0 0.0
    %2943 = vmatpush.msra.mxu0 0.0
    %2944 = vmatpush.msra.mxu0 %v205
    %2945 = vmatpush.msra.mxu0 %v204
    %2946 = vmatmul.f32.gmra.mxu0 %v2593
    %v2947 = vpop.f32.mrf.mxu0
    %v2948 = vadd.f32 %v2739, %v2947
    %2949 = vmatmul.f32.gmra.mxu0 %v2595
    %v2950 = vpop.f32.mrf.mxu0
    %v2951 = vadd.f32 %v2742, %v2950
    %2952 = vmatmul.f32.gmra.mxu0 %v2597
    %v2953 = vpop.f32.mrf.mxu0
    %v2954 = vadd.f32 %v2745, %v2953
    %2955 = vmatmul.f32.gmra.mxu0 %v2599
    %v2956 = vpop.f32.mrf.mxu0
    %v2957 = vadd.f32 %v2748, %v2956
    %2958 = vmatmul.f32.gmra.mxu0 %v2601
    %v2959 = vpop.f32.mrf.mxu0
    %v2960 = vadd.f32 %v2751, %v2959
    %2961 = vmatmul.f32.gmra.mxu0 %v2603
    %v2962 = vpop.f32.mrf.mxu0
    %v2963 = vadd.f32 %v2754, %v2962
    %2964 = vmatmul.f32.gmra.mxu0 %v2605
    %v2965 = vpop.f32.mrf.mxu0
    %v2966 = vadd.f32 %v2757, %v2965
    %2967 = vmatmul.f32.gmra.mxu0 %v2607
    %v2968 = vpop.f32.mrf.mxu0
    %v2969 = vadd.f32 %v2760, %v2968
    %2970 = vmatmul.f32.gmra.mxu0 %v2609
    %v2971 = vpop.f32.mrf.mxu0
    %v2972 = vadd.f32 %v2763, %v2971
    %2973 = vmatmul.f32.gmra.mxu0 %v2611
    %v2974 = vpop.f32.mrf.mxu0
    %v2975 = vadd.f32 %v2766, %v2974
    %2976 = vmatmul.f32.gmra.mxu0 %v2613
    %v2977 = vpop.f32.mrf.mxu0
    %v2978 = vadd.f32 %v2769, %v2977
    %2979 = vmatmul.f32.gmra.mxu0 %v2615
    %v2980 = vpop.f32.mrf.mxu0
    %v2981 = vadd.f32 %v2772, %v2980
    %2982 = vmatmul.f32.gmra.mxu0 %v2617
    %v2983 = vpop.f32.mrf.mxu0
    %v2984 = vadd.f32 %v2775, %v2983
    %2985 = vmatmul.f32.gmra.mxu0 %v2619
    %v2986 = vpop.f32.mrf.mxu0
    %v2987 = vadd.f32 %v2778, %v2986
    %2988 = vmatmul.f32.gmra.mxu0 %v2621
    %v2989 = vpop.f32.mrf.mxu0
    %v2990 = vadd.f32 %v2781, %v2989
    %2991 = vmatmul.f32.gmra.mxu0 %v2623
    %v2992 = vpop.f32.mrf.mxu0
    %v2993 = vadd.f32 %v2784, %v2992
    %2994 = vmatmul.f32.gmra.mxu0 %v2625
    %v2995 = vpop.f32.mrf.mxu0
    %v2996 = vadd.f32 %v2787, %v2995
    %2997 = vmatmul.f32.gmra.mxu0 %v2627
    %v2998 = vpop.f32.mrf.mxu0
    %v2999 = vadd.f32 %v2790, %v2998
    %3000 = vmatmul.f32.gmra.mxu0 %v2629
    %v3001 = vpop.f32.mrf.mxu0
    %v3002 = vadd.f32 %v2793, %v3001
    %3003 = vmatmul.f32.gmra.mxu0 %v2631
    %v3004 = vpop.f32.mrf.mxu0
    %v3005 = vadd.f32 %v2796, %v3004
    %3006 = vmatmul.f32.gmra.mxu0 %v2633
    %v3007 = vpop.f32.mrf.mxu0
    %v3008 = vadd.f32 %v2799, %v3007
    %3009 = vmatmul.f32.gmra.mxu0 %v2635
    %v3010 = vpop.f32.mrf.mxu0
    %v3011 = vadd.f32 %v2802, %v3010
    %3012 = vmatmul.f32.gmra.mxu0 %v2637
    %v3013 = vpop.f32.mrf.mxu0
    %v3014 = vadd.f32 %v2805, %v3013
    %3015 = vmatmul.f32.gmra.mxu0 %v2639
    %v3016 = vpop.f32.mrf.mxu0
    %v3017 = vadd.f32 %v2808, %v3016
    %3018 = vmatmul.f32.gmra.mxu0 %v2641
    %v3019 = vpop.f32.mrf.mxu0
    %v3020 = vadd.f32 %v2811, %v3019
    %3021 = vmatmul.f32.gmra.mxu0 %v2643
    %v3022 = vpop.f32.mrf.mxu0
    %v3023 = vadd.f32 %v2814, %v3022
    %3024 = vmatmul.f32.gmra.mxu0 %v2645
    %v3025 = vpop.f32.mrf.mxu0
    %v3026 = vadd.f32 %v2817, %v3025
    %3027 = vmatmul.f32.gmra.mxu0 %v2647
    %v3028 = vpop.f32.mrf.mxu0
    %v3029 = vadd.f32 %v2820, %v3028
    %3030 = vmatmul.f32.gmra.mxu0 %v2649
    %v3031 = vpop.f32.mrf.mxu0
    %v3032 = vadd.f32 %v2823, %v3031
    %3033 = vmatmul.f32.gmra.mxu0 %v2651
    %v3034 = vpop.f32.mrf.mxu0
    %v3035 = vadd.f32 %v2826, %v3034
    %3036 = vmatmul.f32.gmra.mxu0 %v2653
    %v3037 = vpop.f32.mrf.mxu0
    %v3038 = vadd.f32 %v2829, %v3037
    %3039 = vmatmul.f32.gmra.mxu0 %v2655
    %v3040 = vpop.f32.mrf.mxu0
    %v3041 = vadd.f32 %v2832, %v3040
    %3042 = vmatmul.f32.gmra.mxu0 %v2657
    %v3043 = vpop.f32.mrf.mxu0
    %v3044 = vadd.f32 %v2835, %v3043
    %3045 = vmatmul.f32.gmra.mxu0 %v2659
    %v3046 = vpop.f32.mrf.mxu0
    %v3047 = vadd.f32 %v2838, %v3046
    %3048 = vmatmul.f32.gmra.mxu0 %v2661
    %v3049 = vpop.f32.mrf.mxu0
    %v3050 = vadd.f32 %v2841, %v3049
    %3051 = vmatmul.f32.gmra.mxu0 %v2663
    %v3052 = vpop.f32.mrf.mxu0
    %v3053 = vadd.f32 %v2844, %v3052
    %3054 = vmatmul.f32.gmra.mxu0 %v2665
    %v3055 = vpop.f32.mrf.mxu0
    %v3056 = vadd.f32 %v2847, %v3055
    %3057 = vmatmul.f32.gmra.mxu0 %v2667
    %v3058 = vpop.f32.mrf.mxu0
    %v3059 = vadd.f32 %v2850, %v3058
    %3060 = vmatmul.f32.gmra.mxu0 %v2669
    %v3061 = vpop.f32.mrf.mxu0
    %v3062 = vadd.f32 %v2853, %v3061
    %3063 = vmatmul.f32.gmra.mxu0 %v2671
    %v3064 = vpop.f32.mrf.mxu0
    %v3065 = vadd.f32 %v2856, %v3064
    %3066 = vmatmul.f32.gmra.mxu0 %v2673
    %v3067 = vpop.f32.mrf.mxu0
    %v3068 = vadd.f32 %v2859, %v3067
    %3069 = vmatmul.f32.gmra.mxu0 %v2675
    %v3070 = vpop.f32.mrf.mxu0
    %v3071 = vadd.f32 %v2862, %v3070
    %3072 = vmatmul.f32.gmra.mxu0 %v2677
    %v3073 = vpop.f32.mrf.mxu0
    %v3074 = vadd.f32 %v2865, %v3073
    %3075 = vmatmul.f32.gmra.mxu0 %v2679
    %v3076 = vpop.f32.mrf.mxu0
    %v3077 = vadd.f32 %v2868, %v3076
    %3078 = vmatmul.f32.gmra.mxu0 %v2681
    %v3079 = vpop.f32.mrf.mxu0
    %v3080 = vadd.f32 %v2871, %v3079
    %3081 = vmatmul.f32.gmra.mxu0 %v2683
    %v3082 = vpop.f32.mrf.mxu0
    %v3083 = vadd.f32 %v2874, %v3082
    %3084 = vmatmul.f32.gmra.mxu0 %v2685
    %v3085 = vpop.f32.mrf.mxu0
    %v3086 = vadd.f32 %v2877, %v3085
    %3087 = vmatmul.f32.gmra.mxu0 %v2687
    %v3088 = vpop.f32.mrf.mxu0
    %v3089 = vadd.f32 %v2880, %v3088
    %3090 = vmatmul.f32.gmra.mxu0 %v2689
    %v3091 = vpop.f32.mrf.mxu0
    %v3092 = vadd.f32 %v2883, %v3091
    %3093 = vmatmul.f32.gmra.mxu0 %v2691
    %v3094 = vpop.f32.mrf.mxu0
    %v3095 = vadd.f32 %v2886, %v3094
    %3096 = vmatmul.f32.gmra.mxu0 %v2693
    %v3097 = vpop.f32.mrf.mxu0
    %v3098 = vadd.f32 %v2889, %v3097
    %3099 = vmatmul.f32.gmra.mxu0 %v2695
    %v3100 = vpop.f32.mrf.mxu0
    %v3101 = vadd.f32 %v2892, %v3100
    %3102 = vmatmul.f32.gmra.mxu0 %v2697
    %v3103 = vpop.f32.mrf.mxu0
    %v3104 = vadd.f32 %v2895, %v3103
    %3105 = vmatmul.f32.gmra.mxu0 %v2699
    %v3106 = vpop.f32.mrf.mxu0
    %v3107 = vadd.f32 %v2898, %v3106
    %3108 = vmatmul.f32.gmra.mxu0 %v2701
    %v3109 = vpop.f32.mrf.mxu0
    %v3110 = vadd.f32 %v2901, %v3109
    %3111 = vmatmul.f32.gmra.mxu0 %v2703
    %v3112 = vpop.f32.mrf.mxu0
    %v3113 = vadd.f32 %v2904, %v3112
    %3114 = vmatmul.f32.gmra.mxu0 %v2705
    %v3115 = vpop.f32.mrf.mxu0
    %v3116 = vadd.f32 %v2907, %v3115
    %3117 = vmatmul.f32.gmra.mxu0 %v2707
    %v3118 = vpop.f32.mrf.mxu0
    %v3119 = vadd.f32 %v2910, %v3118
    %3120 = vmatmul.f32.gmra.mxu0 %v2709
    %v3121 = vpop.f32.mrf.mxu0
    %v3122 = vadd.f32 %v2913, %v3121
    %3123 = vmatmul.f32.gmra.mxu0 %v2711
    %v3124 = vpop.f32.mrf.mxu0
    %v3125 = vadd.f32 %v2916, %v3124
    %3126 = vmatmul.f32.gmra.mxu0 %v2713
    %v3127 = vpop.f32.mrf.mxu0
    %v3128 = vadd.f32 %v2919, %v3127
    %3129 = vmatmul.f32.gmra.mxu0 %v2715
    %v3130 = vpop.f32.mrf.mxu0
    %v3131 = vadd.f32 %v2922, %v3130
    %3132 = vmatmul.f32.gmra.mxu0 %v2717
    %v3133 = vpop.f32.mrf.mxu0
    %v3134 = vadd.f32 %v2925, %v3133
    %3135 = vmatmul.f32.gmra.mxu0 %v2719
    %v3136 = vpop.f32.mrf.mxu0
    %v3137 = vadd.f32 %v2928, %v3136
    %3138 = vdwg.mxu0
    %v3139 = vmul.f32 %v78, %v78
    %v3141 = vsel %vm2139, %v3139, 0
    %3143 = vmatpush.msra.mxu0 0.0
    %3144 = vmatpush.msra.mxu0 0.0
    %3145 = vmatpush.msra.mxu0 0.0
    %3146 = vmatpush.msra.mxu0 0.0
    %3147 = vmatpush.msra.mxu0 0.0
    %3148 = vmatpush.msra.mxu0 0.0
    %3149 = vmatpush.msra.mxu0 0.0
    %3150 = vmatpush.msra.mxu0 0.0
    %3151 = vmatpush.msra.mxu0 0.0
    %3152 = vmatpush.msra.mxu0 0.0
    %3153 = vmatpush.msra.mxu0 0.0
    %3154 = vmatpush.msra.mxu0 0.0
    %3155 = vmatpush.msra.mxu0 0.0
    %3156 = vmatpush.msra.mxu0 0.0
    %3157 = vmatpush.msra.mxu0 %v207
    %3158 = vmatpush.msra.mxu0 %v206
    %3159 = vmatmul.f32.gmra.mxu0 %v3141
    %v3160 = vpop.f32.mrf.mxu0
    %v3161 = vadd.f32 1e-08, %v3160
    %3162 = vdwg.mxu0
    %v3163 = vrsqrt.pop %v3161
    %v3164 = vmul.f32 %v3163, %v3161
    %v3165 = vmul.f32 %v3164, %v3163
    %v3166 = vmul.f32 0.5, %v3165
    %v3167 = vsub.f32 1.5, %v3166
    %v3168 = vmul.f32 %v3163, %v3167
    %vm3169 = vweird.f32 %v3161
    %vm3170 = vweird.f32 %v3163
    %vm3171 = vmor %vm3169, %vm3170
    %v3172 = vsel %vm3171, %v3163, %v3168
    %v3174 = vrot.slane %v3172, 1
    %v3175 = vperm.slane %v3172, 0
    %v3176 = vperm.slane %v3174, 0
    %v3179 = vmul.f32 %v2948, %v3175
    %v3180 = vmul.f32 %v2951, %v3175
    %v3181 = vmul.f32 %v2954, %v3175
    %v3182 = vmul.f32 %v2957, %v3175
    %v3183 = vmul.f32 %v2960, %v3175
    %v3184 = vmul.f32 %v2963, %v3175
    %v3185 = vmul.f32 %v2966, %v3175
    %v3186 = vmul.f32 %v2969, %v3175
    %v3187 = vmul.f32 %v2972, %v3175
    %v3188 = vmul.f32 %v2975, %v3175
    %v3189 = vmul.f32 %v2978, %v3175
    %v3190 = vmul.f32 %v2981, %v3175
    %v3191 = vmul.f32 %v2984, %v3175
    %v3192 = vmul.f32 %v2987, %v3175
    %v3193 = vmul.f32 %v2990, %v3175
    %v3194 = vmul.f32 %v2993, %v3175
    %v3195 = vmul.f32 %v2996, %v3175
    %v3196 = vmul.f32 %v2999, %v3175
    %v3197 = vmul.f32 %v3002, %v3175
    %v3198 = vmul.f32 %v3005, %v3175
    %v3199 = vmul.f32 %v3008, %v3175
    %v3200 = vmul.f32 %v3011, %v3175
    %v3201 = vmul.f32 %v3014, %v3175
    %v3202 = vmul.f32 %v3017, %v3175
    %v3203 = vmul.f32 %v3020, %v3175
    %v3204 = vmul.f32 %v3023, %v3175
    %v3205 = vmul.f32 %v3026, %v3175
    %v3206 = vmul.f32 %v3029, %v3175
    %v3207 = vmul.f32 %v3032, %v3175
    %v3208 = vmul.f32 %v3035, %v3175
    %v3209 = vmul.f32 %v3038, %v3175
    %v3210 = vmul.f32 %v3041, %v3175
    %v3211 = vmul.f32 %v3044, %v3176
    %v3212 = vmul.f32 %v3047, %v3176
    %v3213 = vmul.f32 %v3050, %v3176
    %v3214 = vmul.f32 %v3053, %v3176
    %v3215 = vmul.f32 %v3056, %v3176
    %v3216 = vmul.f32 %v3059, %v3176
    %v3217 = vmul.f32 %v3062, %v3176
    %v3218 = vmul.f32 %v3065, %v3176
    %v3219 = vmul.f32 %v3068, %v3176
    %v3220 = vmul.f32 %v3071, %v3176
    %v3221 = vmul.f32 %v3074, %v3176
    %v3222 = vmul.f32 %v3077, %v3176
    %v3223 = vmul.f32 %v3080, %v3176
    %v3224 = vmul.f32 %v3083, %v3176
    %v3225 = vmul.f32 %v3086, %v3176
    %v3226 = vmul.f32 %v3089, %v3176
    %v3227 = vmul.f32 %v3092, %v3176
    %v3228 = vmul.f32 %v3095, %v3176
    %v3229 = vmul.f32 %v3098, %v3176
    %v3230 = vmul.f32 %v3101, %v3176
    %v3231 = vmul.f32 %v3104, %v3176
    %v3232 = vmul.f32 %v3107, %v3176
    %v3233 = vmul.f32 %v3110, %v3176
    %v3234 = vmul.f32 %v3113, %v3176
    %v3235 = vmul.f32 %v3116, %v3176
    %v3236 = vmul.f32 %v3119, %v3176
    %v3237 = vmul.f32 %v3122, %v3176
    %v3238 = vmul.f32 %v3125, %v3176
    %v3239 = vmul.f32 %v3128, %v3176
    %v3240 = vmul.f32 %v3131, %v3176
    %v3241 = vmul.f32 %v3134, %v3176
    %v3242 = vmul.f32 %v3137, %v3176
    %v3243 = vperm.slane %v208, 0
    %v3244 = vlaneseq
    %v3245 = vshrl.u32 %v3244, 7
    %3247 = vset.pattern.permute.xlu0 %v3245
    %3248 = vperm.xlu0 %3247, %v3243
    %v3249 = vpop.permute.xlu0 %3248
    %v3250 = vlaneseq
    %v3251 = vshrl.u32 %v3250, 7
    %v3252 = vadd.s32 %v3251, 8
    %3253 = vset.pattern.permute.xlu0 %v3252
    %3254 = vperm.xlu0 %3253, %v3243
    %v3255 = vpop.permute.xlu0 %3254
    %v3256 = vperm.slane %v208, 1
    %v3257 = vlaneseq
    %v3258 = vshrl.u32 %v3257, 7
    %3260 = vset.pattern.permute.xlu0 %v3258
    %3261 = vperm.xlu0 %3260, %v3256
    %v3262 = vpop.permute.xlu0 %3261
    %v3263 = vlaneseq
    %v3264 = vshrl.u32 %v3263, 7
    %v3265 = vadd.s32 %v3264, 8
    %3266 = vset.pattern.permute.xlu0 %v3265
    %3267 = vperm.xlu0 %3266, %v3256
    %v3268 = vpop.permute.xlu0 %3267
    %v3269 = vperm.slane %v208, 2
    %v3270 = vlaneseq
    %v3271 = vshrl.u32 %v3270, 7
    %3273 = vset.pattern.permute.xlu0 %v3271
    %3274 = vperm.xlu0 %3273, %v3269
    %v3275 = vpop.permute.xlu0 %3274
    %v3276 = vlaneseq
    %v3277 = vshrl.u32 %v3276, 7
    %v3278 = vadd.s32 %v3277, 8
    %3279 = vset.pattern.permute.xlu0 %v3278
    %3280 = vperm.xlu0 %3279, %v3269
    %v3281 = vpop.permute.xlu0 %3280
    %v3282 = vperm.slane %v208, 3
    %v3283 = vlaneseq
    %v3284 = vshrl.u32 %v3283, 7
    %3286 = vset.pattern.permute.xlu0 %v3284
    %3287 = vperm.xlu0 %3286, %v3282
    %v3288 = vpop.permute.xlu0 %3287
    %v3289 = vlaneseq
    %v3290 = vshrl.u32 %v3289, 7
    %v3291 = vadd.s32 %v3290, 8
    %3292 = vset.pattern.permute.xlu0 %v3291
    %3293 = vperm.xlu0 %3292, %v3282
    %v3294 = vpop.permute.xlu0 %3293
    %v3295 = vperm.slane %v208, 4
    %v3296 = vlaneseq
    %v3297 = vshrl.u32 %v3296, 7
    %3299 = vset.pattern.permute.xlu0 %v3297
    %3300 = vperm.xlu0 %3299, %v3295
    %v3301 = vpop.permute.xlu0 %3300
    %v3302 = vlaneseq
    %v3303 = vshrl.u32 %v3302, 7
    %v3304 = vadd.s32 %v3303, 8
    %3305 = vset.pattern.permute.xlu0 %v3304
    %3306 = vperm.xlu0 %3305, %v3295
    %v3307 = vpop.permute.xlu0 %3306
    %v3308 = vperm.slane %v208, 5
    %v3309 = vlaneseq
    %v3310 = vshrl.u32 %v3309, 7
    %3312 = vset.pattern.permute.xlu0 %v3310
    %3313 = vperm.xlu0 %3312, %v3308
    %v3314 = vpop.permute.xlu0 %3313
    %v3315 = vlaneseq
    %v3316 = vshrl.u32 %v3315, 7
    %v3317 = vadd.s32 %v3316, 8
    %3318 = vset.pattern.permute.xlu0 %v3317
    %3319 = vperm.xlu0 %3318, %v3308
    %v3320 = vpop.permute.xlu0 %3319
    %v3321 = vperm.slane %v208, 6
    %v3322 = vlaneseq
    %v3323 = vshrl.u32 %v3322, 7
    %3325 = vset.pattern.permute.xlu0 %v3323
    %3326 = vperm.xlu0 %3325, %v3321
    %v3327 = vpop.permute.xlu0 %3326
    %v3328 = vlaneseq
    %v3329 = vshrl.u32 %v3328, 7
    %v3330 = vadd.s32 %v3329, 8
    %3331 = vset.pattern.permute.xlu0 %v3330
    %3332 = vperm.xlu0 %3331, %v3321
    %v3333 = vpop.permute.xlu0 %3332
    %v3334 = vperm.slane %v208, 7
    %v3335 = vlaneseq
    %v3336 = vshrl.u32 %v3335, 7
    %3338 = vset.pattern.permute.xlu0 %v3336
    %3339 = vperm.xlu0 %3338, %v3334
    %v3340 = vpop.permute.xlu0 %3339
    %v3341 = vlaneseq
    %v3342 = vshrl.u32 %v3341, 7
    %v3343 = vadd.s32 %v3342, 8
    %3344 = vset.pattern.permute.xlu0 %v3343
    %3345 = vperm.xlu0 %3344, %v3334
    %v3346 = vpop.permute.xlu0 %3345
    %v3347 = vperm.slane %v209, 0
    %v3348 = vlaneseq
    %v3349 = vshrl.u32 %v3348, 7
    %3351 = vset.pattern.permute.xlu0 %v3349
    %3352 = vperm.xlu0 %3351, %v3347
    %v3353 = vpop.permute.xlu0 %3352
    %v3354 = vlaneseq
    %v3355 = vshrl.u32 %v3354, 7
    %v3356 = vadd.s32 %v3355, 8
    %3357 = vset.pattern.permute.xlu0 %v3356
    %3358 = vperm.xlu0 %3357, %v3347
    %v3359 = vpop.permute.xlu0 %3358
    %v3360 = vperm.slane %v209, 1
    %v3361 = vlaneseq
    %v3362 = vshrl.u32 %v3361, 7
    %3364 = vset.pattern.permute.xlu0 %v3362
    %3365 = vperm.xlu0 %3364, %v3360
    %v3366 = vpop.permute.xlu0 %3365
    %v3367 = vlaneseq
    %v3368 = vshrl.u32 %v3367, 7
    %v3369 = vadd.s32 %v3368, 8
    %3370 = vset.pattern.permute.xlu0 %v3369
    %3371 = vperm.xlu0 %3370, %v3360
    %v3372 = vpop.permute.xlu0 %3371
    %v3373 = vperm.slane %v209, 2
    %v3374 = vlaneseq
    %v3375 = vshrl.u32 %v3374, 7
    %3377 = vset.pattern.permute.xlu0 %v3375
    %3378 = vperm.xlu0 %3377, %v3373
    %v3379 = vpop.permute.xlu0 %3378
    %v3380 = vlaneseq
    %v3381 = vshrl.u32 %v3380, 7
    %v3382 = vadd.s32 %v3381, 8
    %3383 = vset.pattern.permute.xlu0 %v3382
    %3384 = vperm.xlu0 %3383, %v3373
    %v3385 = vpop.permute.xlu0 %3384
    %v3386 = vperm.slane %v209, 3
    %v3387 = vlaneseq
    %v3388 = vshrl.u32 %v3387, 7
    %3390 = vset.pattern.permute.xlu0 %v3388
    %3391 = vperm.xlu0 %3390, %v3386
    %v3392 = vpop.permute.xlu0 %3391
    %v3393 = vlaneseq
    %v3394 = vshrl.u32 %v3393, 7
    %v3395 = vadd.s32 %v3394, 8
    %3396 = vset.pattern.permute.xlu0 %v3395
    %3397 = vperm.xlu0 %3396, %v3386
    %v3398 = vpop.permute.xlu0 %3397
    %v3399 = vperm.slane %v209, 4
    %v3400 = vlaneseq
    %v3401 = vshrl.u32 %v3400, 7
    %3403 = vset.pattern.permute.xlu0 %v3401
    %3404 = vperm.xlu0 %3403, %v3399
    %v3405 = vpop.permute.xlu0 %3404
    %v3406 = vlaneseq
    %v3407 = vshrl.u32 %v3406, 7
    %v3408 = vadd.s32 %v3407, 8
    %3409 = vset.pattern.permute.xlu0 %v3408
    %3410 = vperm.xlu0 %3409, %v3399
    %v3411 = vpop.permute.xlu0 %3410
    %v3412 = vperm.slane %v209, 5
    %v3413 = vlaneseq
    %v3414 = vshrl.u32 %v3413, 7
    %3416 = vset.pattern.permute.xlu0 %v3414
    %3417 = vperm.xlu0 %3416, %v3412
    %v3418 = vpop.permute.xlu0 %3417
    %v3419 = vlaneseq
    %v3420 = vshrl.u32 %v3419, 7
    %v3421 = vadd.s32 %v3420, 8
    %3422 = vset.pattern.permute.xlu0 %v3421
    %3423 = vperm.xlu0 %3422, %v3412
    %v3424 = vpop.permute.xlu0 %3423
    %v3425 = vperm.slane %v209, 6
    %v3426 = vlaneseq
    %v3427 = vshrl.u32 %v3426, 7
    %3429 = vset.pattern.permute.xlu0 %v3427
    %3430 = vperm.xlu0 %3429, %v3425
    %v3431 = vpop.permute.xlu0 %3430
    %v3432 = vlaneseq
    %v3433 = vshrl.u32 %v3432, 7
    %v3434 = vadd.s32 %v3433, 8
    %3435 = vset.pattern.permute.xlu0 %v3434
    %3436 = vperm.xlu0 %3435, %v3425
    %v3437 = vpop.permute.xlu0 %3436
    %v3438 = vperm.slane %v209, 7
    %v3439 = vlaneseq
    %v3440 = vshrl.u32 %v3439, 7
    %3442 = vset.pattern.permute.xlu0 %v3440
    %3443 = vperm.xlu0 %3442, %v3438
    %v3444 = vpop.permute.xlu0 %3443
    %v3445 = vlaneseq
    %v3446 = vshrl.u32 %v3445, 7
    %v3447 = vadd.s32 %v3446, 8
    %3448 = vset.pattern.permute.xlu0 %v3447
    %3449 = vperm.xlu0 %3448, %v3438
    %v3450 = vpop.permute.xlu0 %3449
    %v3451 = vadd.f32 %v3179, %v3249
    %v3452 = vadd.f32 %v3180, %v3255
    %v3453 = vadd.f32 %v3181, %v3262
    %v3454 = vadd.f32 %v3182, %v3268
    %v3455 = vadd.f32 %v3183, %v3275
    %v3456 = vadd.f32 %v3184, %v3281
    %v3457 = vadd.f32 %v3185, %v3288
    %v3458 = vadd.f32 %v3186, %v3294
    %v3459 = vadd.f32 %v3187, %v3301
    %v3460 = vadd.f32 %v3188, %v3307
    %v3461 = vadd.f32 %v3189, %v3314
    %v3462 = vadd.f32 %v3190, %v3320
    %v3463 = vadd.f32 %v3191, %v3327
    %v3464 = vadd.f32 %v3192, %v3333
    %v3465 = vadd.f32 %v3193, %v3340
    %v3466 = vadd.f32 %v3194, %v3346
    %v3467 = vadd.f32 %v3195, %v3353
    %v3468 = vadd.f32 %v3196, %v3359
    %v3469 = vadd.f32 %v3197, %v3366
    %v3470 = vadd.f32 %v3198, %v3372
    %v3471 = vadd.f32 %v3199, %v3379
    %v3472 = vadd.f32 %v3200, %v3385
    %v3473 = vadd.f32 %v3201, %v3392
    %v3474 = vadd.f32 %v3202, %v3398
    %v3475 = vadd.f32 %v3203, %v3405
    %v3476 = vadd.f32 %v3204, %v3411
    %v3477 = vadd.f32 %v3205, %v3418
    %v3478 = vadd.f32 %v3206, %v3424
    %v3479 = vadd.f32 %v3207, %v3431
    %v3480 = vadd.f32 %v3208, %v3437
    %v3481 = vadd.f32 %v3209, %v3444
    %v3482 = vadd.f32 %v3210, %v3450
    %v3483 = vadd.f32 %v3211, %v3249
    %v3484 = vadd.f32 %v3212, %v3255
    %v3485 = vadd.f32 %v3213, %v3262
    %v3486 = vadd.f32 %v3214, %v3268
    %v3487 = vadd.f32 %v3215, %v3275
    %v3488 = vadd.f32 %v3216, %v3281
    %v3489 = vadd.f32 %v3217, %v3288
    %v3490 = vadd.f32 %v3218, %v3294
    %v3491 = vadd.f32 %v3219, %v3301
    %v3492 = vadd.f32 %v3220, %v3307
    %v3493 = vadd.f32 %v3221, %v3314
    %v3494 = vadd.f32 %v3222, %v3320
    %v3495 = vadd.f32 %v3223, %v3327
    %v3496 = vadd.f32 %v3224, %v3333
    %v3497 = vadd.f32 %v3225, %v3340
    %v3498 = vadd.f32 %v3226, %v3346
    %v3499 = vadd.f32 %v3227, %v3353
    %v3500 = vadd.f32 %v3228, %v3359
    %v3501 = vadd.f32 %v3229, %v3366
    %v3502 = vadd.f32 %v3230, %v3372
    %v3503 = vadd.f32 %v3231, %v3379
    %v3504 = vadd.f32 %v3232, %v3385
    %v3505 = vadd.f32 %v3233, %v3392
    %v3506 = vadd.f32 %v3234, %v3398
    %v3507 = vadd.f32 %v3235, %v3405
    %v3508 = vadd.f32 %v3236, %v3411
    %v3509 = vadd.f32 %v3237, %v3418
    %v3510 = vadd.f32 %v3238, %v3424
    %v3511 = vadd.f32 %v3239, %v3431
    %v3512 = vadd.f32 %v3240, %v3437
    %v3513 = vadd.f32 %v3241, %v3444
    %v3514 = vadd.f32 %v3242, %v3450
    %v3516 = vperm.slane %v210, 0
    %v3518 = vadd.f32 %v3451, %v3516
    %v3519 = vadd.f32 %v3452, %v3516
    %v3520 = vadd.f32 %v3453, %v3516
    %v3521 = vadd.f32 %v3454, %v3516
    %v3522 = vadd.f32 %v3455, %v3516
    %v3523 = vadd.f32 %v3456, %v3516
    %v3524 = vadd.f32 %v3457, %v3516
    %v3525 = vadd.f32 %v3458, %v3516
    %v3526 = vadd.f32 %v3459, %v3516
    %v3527 = vadd.f32 %v3460, %v3516
    %v3528 = vadd.f32 %v3461, %v3516
    %v3529 = vadd.f32 %v3462, %v3516
    %v3530 = vadd.f32 %v3463, %v3516
    %v3531 = vadd.f32 %v3464, %v3516
    %v3532 = vadd.f32 %v3465, %v3516
    %v3533 = vadd.f32 %v3466, %v3516
    %v3534 = vadd.f32 %v3467, %v3516
    %v3535 = vadd.f32 %v3468, %v3516
    %v3536 = vadd.f32 %v3469, %v3516
    %v3537 = vadd.f32 %v3470, %v3516
    %v3538 = vadd.f32 %v3471, %v3516
    %v3539 = vadd.f32 %v3472, %v3516
    %v3540 = vadd.f32 %v3473, %v3516
    %v3541 = vadd.f32 %v3474, %v3516
    %v3542 = vadd.f32 %v3475, %v3516
    %v3543 = vadd.f32 %v3476, %v3516
    %v3544 = vadd.f32 %v3477, %v3516
    %v3545 = vadd.f32 %v3478, %v3516
    %v3546 = vadd.f32 %v3479, %v3516
    %v3547 = vadd.f32 %v3480, %v3516
    %v3548 = vadd.f32 %v3481, %v3516
    %v3549 = vadd.f32 %v3482, %v3516
    %v3550 = vadd.f32 %v3483, %v3516
    %v3551 = vadd.f32 %v3484, %v3516
    %v3552 = vadd.f32 %v3485, %v3516
    %v3553 = vadd.f32 %v3486, %v3516
    %v3554 = vadd.f32 %v3487, %v3516
    %v3555 = vadd.f32 %v3488, %v3516
    %v3556 = vadd.f32 %v3489, %v3516
    %v3557 = vadd.f32 %v3490, %v3516
    %v3558 = vadd.f32 %v3491, %v3516
    %v3559 = vadd.f32 %v3492, %v3516
    %v3560 = vadd.f32 %v3493, %v3516
    %v3561 = vadd.f32 %v3494, %v3516
    %v3562 = vadd.f32 %v3495, %v3516
    %v3563 = vadd.f32 %v3496, %v3516
    %v3564 = vadd.f32 %v3497, %v3516
    %v3565 = vadd.f32 %v3498, %v3516
    %v3566 = vadd.f32 %v3499, %v3516
    %v3567 = vadd.f32 %v3500, %v3516
    %v3568 = vadd.f32 %v3501, %v3516
    %v3569 = vadd.f32 %v3502, %v3516
    %v3570 = vadd.f32 %v3503, %v3516
    %v3571 = vadd.f32 %v3504, %v3516
    %v3572 = vadd.f32 %v3505, %v3516
    %v3573 = vadd.f32 %v3506, %v3516
    %v3574 = vadd.f32 %v3507, %v3516
    %v3575 = vadd.f32 %v3508, %v3516
    %v3576 = vadd.f32 %v3509, %v3516
    %v3577 = vadd.f32 %v3510, %v3516
    %v3578 = vadd.f32 %v3511, %v3516
    %v3579 = vadd.f32 %v3512, %v3516
    %v3580 = vadd.f32 %v3513, %v3516
    %v3581 = vadd.f32 %v3514, %v3516
    %vm3582 = vcmp.ge.f32.partialorder %v3518, 0.0
    %vm3583 = vcmp.ge.f32.partialorder %v3519, 0.0
    %vm3584 = vcmp.ge.f32.partialorder %v3520, 0.0
    %vm3585 = vcmp.ge.f32.partialorder %v3521, 0.0
    %vm3586 = vcmp.ge.f32.partialorder %v3522, 0.0
    %vm3587 = vcmp.ge.f32.partialorder %v3523, 0.0
    %vm3588 = vcmp.ge.f32.partialorder %v3524, 0.0
    %vm3589 = vcmp.ge.f32.partialorder %v3525, 0.0
    %vm3590 = vcmp.ge.f32.partialorder %v3526, 0.0
    %vm3591 = vcmp.ge.f32.partialorder %v3527, 0.0
    %vm3592 = vcmp.ge.f32.partialorder %v3528, 0.0
    %vm3593 = vcmp.ge.f32.partialorder %v3529, 0.0
    %vm3594 = vcmp.ge.f32.partialorder %v3530, 0.0
    %vm3595 = vcmp.ge.f32.partialorder %v3531, 0.0
    %vm3596 = vcmp.ge.f32.partialorder %v3532, 0.0
    %vm3597 = vcmp.ge.f32.partialorder %v3533, 0.0
    %vm3598 = vcmp.ge.f32.partialorder %v3534, 0.0
    %vm3599 = vcmp.ge.f32.partialorder %v3535, 0.0
    %vm3600 = vcmp.ge.f32.partialorder %v3536, 0.0
    %vm3601 = vcmp.ge.f32.partialorder %v3537, 0.0
    %vm3602 = vcmp.ge.f32.partialorder %v3538, 0.0
    %vm3603 = vcmp.ge.f32.partialorder %v3539, 0.0
    %vm3604 = vcmp.ge.f32.partialorder %v3540, 0.0
    %vm3605 = vcmp.ge.f32.partialorder %v3541, 0.0
    %vm3606 = vcmp.ge.f32.partialorder %v3542, 0.0
    %vm3607 = vcmp.ge.f32.partialorder %v3543, 0.0
    %vm3608 = vcmp.ge.f32.partialorder %v3544, 0.0
    %vm3609 = vcmp.ge.f32.partialorder %v3545, 0.0
    %vm3610 = vcmp.ge.f32.partialorder %v3546, 0.0
    %vm3611 = vcmp.ge.f32.partialorder %v3547, 0.0
    %vm3612 = vcmp.ge.f32.partialorder %v3548, 0.0
    %vm3613 = vcmp.ge.f32.partialorder %v3549, 0.0
    %vm3614 = vcmp.ge.f32.partialorder %v3550, 0.0
    %vm3615 = vcmp.ge.f32.partialorder %v3551, 0.0
    %vm3616 = vcmp.ge.f32.partialorder %v3552, 0.0
    %vm3617 = vcmp.ge.f32.partialorder %v3553, 0.0
    %vm3618 = vcmp.ge.f32.partialorder %v3554, 0.0
    %vm3619 = vcmp.ge.f32.partialorder %v3555, 0.0
    %vm3620 = vcmp.ge.f32.partialorder %v3556, 0.0
    %vm3621 = vcmp.ge.f32.partialorder %v3557, 0.0
    %vm3622 = vcmp.ge.f32.partialorder %v3558, 0.0
    %vm3623 = vcmp.ge.f32.partialorder %v3559, 0.0
    %vm3624 = vcmp.ge.f32.partialorder %v3560, 0.0
    %vm3625 = vcmp.ge.f32.partialorder %v3561, 0.0
    %vm3626 = vcmp.ge.f32.partialorder %v3562, 0.0
    %vm3627 = vcmp.ge.f32.partialorder %v3563, 0.0
    %vm3628 = vcmp.ge.f32.partialorder %v3564, 0.0
    %vm3629 = vcmp.ge.f32.partialorder %v3565, 0.0
    %vm3630 = vcmp.ge.f32.partialorder %v3566, 0.0
    %vm3631 = vcmp.ge.f32.partialorder %v3567, 0.0
    %vm3632 = vcmp.ge.f32.partialorder %v3568, 0.0
    %vm3633 = vcmp.ge.f32.partialorder %v3569, 0.0
    %vm3634 = vcmp.ge.f32.partialorder %v3570, 0.0
    %vm3635 = vcmp.ge.f32.partialorder %v3571, 0.0
    %vm3636 = vcmp.ge.f32.partialorder %v3572, 0.0
    %vm3637 = vcmp.ge.f32.partialorder %v3573, 0.0
    %vm3638 = vcmp.ge.f32.partialorder %v3574, 0.0
    %vm3639 = vcmp.ge.f32.partialorder %v3575, 0.0
    %vm3640 = vcmp.ge.f32.partialorder %v3576, 0.0
    %vm3641 = vcmp.ge.f32.partialorder %v3577, 0.0
    %vm3642 = vcmp.ge.f32.partialorder %v3578, 0.0
    %vm3643 = vcmp.ge.f32.partialorder %v3579, 0.0
    %vm3644 = vcmp.ge.f32.partialorder %v3580, 0.0
    %vm3645 = vcmp.ge.f32.partialorder %v3581, 0.0
    %v3646 = vmul.f32 %v3518, 0.2
    %v3647 = vmul.f32 %v3519, 0.2
    %v3648 = vmul.f32 %v3520, 0.2
    %v3649 = vmul.f32 %v3521, 0.2
    %v3650 = vmul.f32 %v3522, 0.2
    %v3651 = vmul.f32 %v3523, 0.2
    %v3652 = vmul.f32 %v3524, 0.2
    %v3653 = vmul.f32 %v3525, 0.2
    %v3654 = vmul.f32 %v3526, 0.2
    %v3655 = vmul.f32 %v3527, 0.2
    %v3656 = vmul.f32 %v3528, 0.2
    %v3657 = vmul.f32 %v3529, 0.2
    %v3658 = vmul.f32 %v3530, 0.2
    %v3659 = vmul.f32 %v3531, 0.2
    %v3660 = vmul.f32 %v3532, 0.2
    %v3661 = vmul.f32 %v3533, 0.2
    %v3662 = vmul.f32 %v3534, 0.2
    %v3663 = vmul.f32 %v3535, 0.2
    %v3664 = vmul.f32 %v3536, 0.2
    %v3665 = vmul.f32 %v3537, 0.2
    %v3666 = vmul.f32 %v3538, 0.2
    %v3667 = vmul.f32 %v3539, 0.2
    %v3668 = vmul.f32 %v3540, 0.2
    %v3669 = vmul.f32 %v3541, 0.2
    %v3670 = vmul.f32 %v3542, 0.2
    %v3671 = vmul.f32 %v3543, 0.2
    %v3672 = vmul.f32 %v3544, 0.2
    %v3673 = vmul.f32 %v3545, 0.2
    %v3674 = vmul.f32 %v3546, 0.2
    %v3675 = vmul.f32 %v3547, 0.2
    %v3676 = vmul.f32 %v3548, 0.2
    %v3677 = vmul.f32 %v3549, 0.2
    %v3678 = vmul.f32 %v3550, 0.2
    %v3679 = vmul.f32 %v3551, 0.2
    %v3680 = vmul.f32 %v3552, 0.2
    %v3681 = vmul.f32 %v3553, 0.2
    %v3682 = vmul.f32 %v3554, 0.2
    %v3683 = vmul.f32 %v3555, 0.2
    %v3684 = vmul.f32 %v3556, 0.2
    %v3685 = vmul.f32 %v3557, 0.2
    %v3686 = vmul.f32 %v3558, 0.2
    %v3687 = vmul.f32 %v3559, 0.2
    %v3688 = vmul.f32 %v3560, 0.2
    %v3689 = vmul.f32 %v3561, 0.2
    %v3690 = vmul.f32 %v3562, 0.2
    %v3691 = vmul.f32 %v3563, 0.2
    %v3692 = vmul.f32 %v3564, 0.2
    %v3693 = vmul.f32 %v3565, 0.2
    %v3694 = vmul.f32 %v3566, 0.2
    %v3695 = vmul.f32 %v3567, 0.2
    %v3696 = vmul.f32 %v3568, 0.2
    %v3697 = vmul.f32 %v3569, 0.2
    %v3698 = vmul.f32 %v3570, 0.2
    %v3699 = vmul.f32 %v3571, 0.2
    %v3700 = vmul.f32 %v3572, 0.2
    %v3701 = vmul.f32 %v3573, 0.2
    %v3702 = vmul.f32 %v3574, 0.2
    %v3703 = vmul.f32 %v3575, 0.2
    %v3704 = vmul.f32 %v3576, 0.2
    %v3705 = vmul.f32 %v3577, 0.2
    %v3706 = vmul.f32 %v3578, 0.2
    %v3707 = vmul.f32 %v3579, 0.2
    %v3708 = vmul.f32 %v3580, 0.2
    %v3709 = vmul.f32 %v3581, 0.2
    %v3710 = vsel %vm3582, %v3518, %v3646
    %v3711 = vsel %vm3583, %v3519, %v3647
    %v3712 = vsel %vm3584, %v3520, %v3648
    %v3713 = vsel %vm3585, %v3521, %v3649
    %v3714 = vsel %vm3586, %v3522, %v3650
    %v3715 = vsel %vm3587, %v3523, %v3651
    %v3716 = vsel %vm3588, %v3524, %v3652
    %v3717 = vsel %vm3589, %v3525, %v3653
    %v3718 = vsel %vm3590, %v3526, %v3654
    %v3719 = vsel %vm3591, %v3527, %v3655
    %v3720 = vsel %vm3592, %v3528, %v3656
    %v3721 = vsel %vm3593, %v3529, %v3657
    %v3722 = vsel %vm3594, %v3530, %v3658
    %v3723 = vsel %vm3595, %v3531, %v3659
    %v3724 = vsel %vm3596, %v3532, %v3660
    %v3725 = vsel %vm3597, %v3533, %v3661
    %v3726 = vsel %vm3598, %v3534, %v3662
    %v3727 = vsel %vm3599, %v3535, %v3663
    %v3728 = vsel %vm3600, %v3536, %v3664
    %v3729 = vsel %vm3601, %v3537, %v3665
    %v3730 = vsel %vm3602, %v3538, %v3666
    %v3731 = vsel %vm3603, %v3539, %v3667
    %v3732 = vsel %vm3604, %v3540, %v3668
    %v3733 = vsel %vm3605, %v3541, %v3669
    %v3734 = vsel %vm3606, %v3542, %v3670
    %v3735 = vsel %vm3607, %v3543, %v3671
    %v3736 = vsel %vm3608, %v3544, %v3672
    %v3737 = vsel %vm3609, %v3545, %v3673
    %v3738 = vsel %vm3610, %v3546, %v3674
    %v3739 = vsel %vm3611, %v3547, %v3675
    %v3740 = vsel %vm3612, %v3548, %v3676
    %v3741 = vsel %vm3613, %v3549, %v3677
    %v3742 = vsel %vm3614, %v3550, %v3678
    %v3743 = vsel %vm3615, %v3551, %v3679
    %v3744 = vsel %vm3616, %v3552, %v3680
    %v3745 = vsel %vm3617, %v3553, %v3681
    %v3746 = vsel %vm3618, %v3554, %v3682
    %v3747 = vsel %vm3619, %v3555, %v3683
    %v3748 = vsel %vm3620, %v3556, %v3684
    %v3749 = vsel %vm3621, %v3557, %v3685
    %v3750 = vsel %vm3622, %v3558, %v3686
    %v3751 = vsel %vm3623, %v3559, %v3687
    %v3752 = vsel %vm3624, %v3560, %v3688
    %v3753 = vsel %vm3625, %v3561, %v3689
    %v3754 = vsel %vm3626, %v3562, %v3690
    %v3755 = vsel %vm3627, %v3563, %v3691
    %v3756 = vsel %vm3628, %v3564, %v3692
    %v3757 = vsel %vm3629, %v3565, %v3693
    %v3758 = vsel %vm3630, %v3566, %v3694
    %v3759 = vsel %vm3631, %v3567, %v3695
    %v3760 = vsel %vm3632, %v3568, %v3696
    %v3761 = vsel %vm3633, %v3569, %v3697
    %v3762 = vsel %vm3634, %v3570, %v3698
    %v3763 = vsel %vm3635, %v3571, %v3699
    %v3764 = vsel %vm3636, %v3572, %v3700
    %v3765 = vsel %vm3637, %v3573, %v3701
    %v3766 = vsel %vm3638, %v3574, %v3702
    %v3767 = vsel %vm3639, %v3575, %v3703
    %v3768 = vsel %vm3640, %v3576, %v3704
    %v3769 = vsel %vm3641, %v3577, %v3705
    %v3770 = vsel %vm3642, %v3578, %v3706
    %v3771 = vsel %vm3643, %v3579, %v3707
    %v3772 = vsel %vm3644, %v3580, %v3708
    %v3773 = vsel %vm3645, %v3581, %v3709
    %v3774 = vmul.f32 %v3710, 1.4142135
    %v3775 = vmul.f32 %v3711, 1.4142135
    %v3776 = vmul.f32 %v3712, 1.4142135
    %v3777 = vmul.f32 %v3713, 1.4142135
    %v3778 = vmul.f32 %v3714, 1.4142135
    %v3779 = vmul.f32 %v3715, 1.4142135
    %v3780 = vmul.f32 %v3716, 1.4142135
    %v3781 = vmul.f32 %v3717, 1.4142135
    %v3782 = vmul.f32 %v3718, 1.4142135
    %v3783 = vmul.f32 %v3719, 1.4142135
    %v3784 = vmul.f32 %v3720, 1.4142135
    %v3785 = vmul.f32 %v3721, 1.4142135
    %v3786 = vmul.f32 %v3722, 1.4142135
    %v3787 = vmul.f32 %v3723, 1.4142135
    %v3788 = vmul.f32 %v3724, 1.4142135
    %v3789 = vmul.f32 %v3725, 1.4142135
    %v3790 = vmul.f32 %v3726, 1.4142135
    %v3791 = vmul.f32 %v3727, 1.4142135
    %v3792 = vmul.f32 %v3728, 1.4142135
    %v3793 = vmul.f32 %v3729, 1.4142135
    %v3794 = vmul.f32 %v3730, 1.4142135
    %v3795 = vmul.f32 %v3731, 1.4142135
    %v3796 = vmul.f32 %v3732, 1.4142135
    %v3797 = vmul.f32 %v3733, 1.4142135
    %v3798 = vmul.f32 %v3734, 1.4142135
    %v3799 = vmul.f32 %v3735, 1.4142135
    %v3800 = vmul.f32 %v3736, 1.4142135
    %v3801 = vmul.f32 %v3737, 1.4142135
    %v3802 = vmul.f32 %v3738, 1.4142135
    %v3803 = vmul.f32 %v3739, 1.4142135
    %v3804 = vmul.f32 %v3740, 1.4142135
    %v3805 = vmul.f32 %v3741, 1.4142135
    %v3806 = vmul.f32 %v3742, 1.4142135
    %v3807 = vmul.f32 %v3743, 1.4142135
    %v3808 = vmul.f32 %v3744, 1.4142135
    %v3809 = vmul.f32 %v3745, 1.4142135
    %v3810 = vmul.f32 %v3746, 1.4142135
    %v3811 = vmul.f32 %v3747, 1.4142135
    %v3812 = vmul.f32 %v3748, 1.4142135
    %v3813 = vmul.f32 %v3749, 1.4142135
    %v3814 = vmul.f32 %v3750, 1.4142135
    %v3815 = vmul.f32 %v3751, 1.4142135
    %v3816 = vmul.f32 %v3752, 1.4142135
    %v3817 = vmul.f32 %v3753, 1.4142135
    %v3818 = vmul.f32 %v3754, 1.4142135
    %v3819 = vmul.f32 %v3755, 1.4142135
    %v3820 = vmul.f32 %v3756, 1.4142135
    %v3821 = vmul.f32 %v3757, 1.4142135
    %v3822 = vmul.f32 %v3758, 1.4142135
    %v3823 = vmul.f32 %v3759, 1.4142135
    %v3824 = vmul.f32 %v3760, 1.4142135
    %v3825 = vmul.f32 %v3761, 1.4142135
    %v3826 = vmul.f32 %v3762, 1.4142135
    %v3827 = vmul.f32 %v3763, 1.4142135
    %v3828 = vmul.f32 %v3764, 1.4142135
    %v3829 = vmul.f32 %v3765, 1.4142135
    %v3830 = vmul.f32 %v3766, 1.4142135
    %v3831 = vmul.f32 %v3767, 1.4142135
    %v3832 = vmul.f32 %v3768, 1.4142135
    %v3833 = vmul.f32 %v3769, 1.4142135
    %v3834 = vmul.f32 %v3770, 1.4142135
    %v3835 = vmul.f32 %v3771, 1.4142135
    %v3836 = vmul.f32 %v3772, 1.4142135
    %v3837 = vmul.f32 %v3773, 1.4142135
    %3838 = vst.msk [vmem:[#allocation2] sm:$0xff] %vm2139, %v3774
    %3839 = vst.msk [vmem:[#allocation2 + $0x8] sm:$0xff] %vm2139, %v3775
    %3840 = vst.msk [vmem:[#allocation2 + $0x10] sm:$0xff] %vm2139, %v3776
    %3841 = vst.msk [vmem:[#allocation2 + $0x18] sm:$0xff] %vm2139, %v3777
    %3842 = vst.msk [vmem:[#allocation2 + $0x20] sm:$0xff] %vm2139, %v3778
    %3843 = vst.msk [vmem:[#allocation2 + $0x28] sm:$0xff] %vm2139, %v3779
    %3844 = vst.msk [vmem:[#allocation2 + $0x30] sm:$0xff] %vm2139, %v3780
    %3845 = vst.msk [vmem:[#allocation2 + $0x38] sm:$0xff] %vm2139, %v3781
    %3846 = vst.msk [vmem:[#allocation2 + $0x40] sm:$0xff] %vm2139, %v3782
    %3847 = vst.msk [vmem:[#allocation2 + $0x48] sm:$0xff] %vm2139, %v3783
    %3848 = vst.msk [vmem:[#allocation2 + $0x50] sm:$0xff] %vm2139, %v3784
    %3849 = vst.msk [vmem:[#allocation2 + $0x58] sm:$0xff] %vm2139, %v3785
    %3850 = vst.msk [vmem:[#allocation2 + $0x60] sm:$0xff] %vm2139, %v3786
    %3851 = vst.msk [vmem:[#allocation2 + $0x68] sm:$0xff] %vm2139, %v3787
    %3852 = vst.msk [vmem:[#allocation2 + $0x70] sm:$0xff] %vm2139, %v3788
    %3853 = vst.msk [vmem:[#allocation2 + $0x78] sm:$0xff] %vm2139, %v3789
    %3854 = vst.msk [vmem:[#allocation2 + $0x80] sm:$0xff] %vm2139, %v3790
    %3855 = vst.msk [vmem:[#allocation2 + $0x88] sm:$0xff] %vm2139, %v3791
    %3856 = vst.msk [vmem:[#allocation2 + $0x90] sm:$0xff] %vm2139, %v3792
    %3857 = vst.msk [vmem:[#allocation2 + $0x98] sm:$0xff] %vm2139, %v3793
    %3858 = vst.msk [vmem:[#allocation2 + $0xa0] sm:$0xff] %vm2139, %v3794
    %3859 = vst.msk [vmem:[#allocation2 + $0xa8] sm:$0xff] %vm2139, %v3795
    %3860 = vst.msk [vmem:[#allocation2 + $0xb0] sm:$0xff] %vm2139, %v3796
    %3861 = vst.msk [vmem:[#allocation2 + $0xb8] sm:$0xff] %vm2139, %v3797
    %3862 = vst.msk [vmem:[#allocation2 + $0xc0] sm:$0xff] %vm2139, %v3798
    %3863 = vst.msk [vmem:[#allocation2 + $0xc8] sm:$0xff] %vm2139, %v3799
    %3864 = vst.msk [vmem:[#allocation2 + $0xd0] sm:$0xff] %vm2139, %v3800
    %3865 = vst.msk [vmem:[#allocation2 + $0xd8] sm:$0xff] %vm2139, %v3801
    %3866 = vst.msk [vmem:[#allocation2 + $0xe0] sm:$0xff] %vm2139, %v3802
    %3867 = vst.msk [vmem:[#allocation2 + $0xe8] sm:$0xff] %vm2139, %v3803
    %3868 = vst.msk [vmem:[#allocation2 + $0xf0] sm:$0xff] %vm2139, %v3804
    %3869 = vst.msk [vmem:[#allocation2 + $0xf8] sm:$0xff] %vm2139, %v3805
    %3870 = vst.msk [vmem:[#allocation2 + $0x100] sm:$0xff] %vm2139, %v3806
    %3871 = vst.msk [vmem:[#allocation2 + $0x108] sm:$0xff] %vm2139, %v3807
    %3872 = vst.msk [vmem:[#allocation2 + $0x110] sm:$0xff] %vm2139, %v3808
    %3873 = vst.msk [vmem:[#allocation2 + $0x118] sm:$0xff] %vm2139, %v3809
    %3874 = vst.msk [vmem:[#allocation2 + $0x120] sm:$0xff] %vm2139, %v3810
    %3875 = vst.msk [vmem:[#allocation2 + $0x128] sm:$0xff] %vm2139, %v3811
    %3876 = vst.msk [vmem:[#allocation2 + $0x130] sm:$0xff] %vm2139, %v3812
    %3877 = vst.msk [vmem:[#allocation2 + $0x138] sm:$0xff] %vm2139, %v3813
    %3878 = vst.msk [vmem:[#allocation2 + $0x140] sm:$0xff] %vm2139, %v3814
    %3879 = vst.msk [vmem:[#allocation2 + $0x148] sm:$0xff] %vm2139, %v3815
    %3880 = vst.msk [vmem:[#allocation2 + $0x150] sm:$0xff] %vm2139, %v3816
    %3881 = vst.msk [vmem:[#allocation2 + $0x158] sm:$0xff] %vm2139, %v3817
    %3882 = vst.msk [vmem:[#allocation2 + $0x160] sm:$0xff] %vm2139, %v3818
    %3883 = vst.msk [vmem:[#allocation2 + $0x168] sm:$0xff] %vm2139, %v3819
    %3884 = vst.msk [vmem:[#allocation2 + $0x170] sm:$0xff] %vm2139, %v3820
    %3885 = vst.msk [vmem:[#allocation2 + $0x178] sm:$0xff] %vm2139, %v3821
    %3886 = vst.msk [vmem:[#allocation2 + $0x180] sm:$0xff] %vm2139, %v3822
    %3887 = vst.msk [vmem:[#allocation2 + $0x188] sm:$0xff] %vm2139, %v3823
    %3888 = vst.msk [vmem:[#allocation2 + $0x190] sm:$0xff] %vm2139, %v3824
    %3889 = vst.msk [vmem:[#allocation2 + $0x198] sm:$0xff] %vm2139, %v3825
    %3890 = vst.msk [vmem:[#allocation2 + $0x1a0] sm:$0xff] %vm2139, %v3826
    %3891 = vst.msk [vmem:[#allocation2 + $0x1a8] sm:$0xff] %vm2139, %v3827
    %3892 = vst.msk [vmem:[#allocation2 + $0x1b0] sm:$0xff] %vm2139, %v3828
    %3893 = vst.msk [vmem:[#allocation2 + $0x1b8] sm:$0xff] %vm2139, %v3829
    %3894 = vst.msk [vmem:[#allocation2 + $0x1c0] sm:$0xff] %vm2139, %v3830
    %3895 = vst.msk [vmem:[#allocation2 + $0x1c8] sm:$0xff] %vm2139, %v3831
    %3896 = vst.msk [vmem:[#allocation2 + $0x1d0] sm:$0xff] %vm2139, %v3832
    %3897 = vst.msk [vmem:[#allocation2 + $0x1d8] sm:$0xff] %vm2139, %v3833
    %3898 = vst.msk [vmem:[#allocation2 + $0x1e0] sm:$0xff] %vm2139, %v3834
    %3899 = vst.msk [vmem:[#allocation2 + $0x1e8] sm:$0xff] %vm2139, %v3835
    %3900 = vst.msk [vmem:[#allocation2 + $0x1f0] sm:$0xff] %vm2139, %v3836
    %3901 = vst.msk [vmem:[#allocation2 + $0x1f8] sm:$0xff] %vm2139, %v3837
    %v3902 = vld [vmem:[%s8] sm:$0x3]
    %v3903 = vld [vmem:[%s9] sm:$0xff]
    %v3904 = vld [vmem:[%s9 + $0x8] sm:$0xff]
    %v3905 = vld [vmem:[%s9 + $0x10] sm:$0xff]
    %v3906 = vld [vmem:[%s9 + $0x18] sm:$0xff]
    %v3907 = vld [vmem:[%s10] sm:$0x1]
    %v3909 = vperm.slane %v3907, 0
    %v3912 = vsel %vm56, %v3902, 0
    %3914 = vmatpush.msra.mxu0 0.0
    %3915 = vmatpush.msra.mxu0 0.0
    %3916 = vmatpush.msra.mxu0 0.0
    %3917 = vmatpush.msra.mxu0 0.0
    %3918 = vmatpush.msra.mxu0 0.0
    %3919 = vmatpush.msra.mxu0 0.0
    %3920 = vmatpush.msra.mxu0 0.0
    %3921 = vmatpush.msra.mxu0 0.0
    %3922 = vmatpush.msra.mxu0 0.0
    %3923 = vmatpush.msra.mxu0 0.0
    %3924 = vmatpush.msra.mxu0 0.0
    %3925 = vmatpush.msra.mxu0 0.0
    %3926 = vmatpush.msra.mxu0 %v3906
    %3927 = vmatpush.msra.mxu0 %v3905
    %3928 = vmatpush.msra.mxu0 %v3904
    %3929 = vmatpush.msra.mxu0 %v3903
    %3930 = vmatmul.f32.gmra.mxu0 %v3912
    %v3931 = vpop.f32.mrf.mxu0
    %v3932 = vadd.f32 %v3909, %v3931
    %3933 = vdwg.mxu0
    %v3934 = vld [vmem:[%s11] sm:$0xff]
    %v3935 = vld [vmem:[%s11 + $0x8] sm:$0xff]
    %v3936 = vld [vmem:[%s12] sm:$0x1]
    %v3938 = vrot.slane %v3932, 1
    %v3939 = vperm.slane %v3932, 0
    %v3940 = vperm.slane %v3938, 0
    %v3943 = vmul.f32 %v3774, %v3939
    %v3944 = vmul.f32 %v3775, %v3939
    %v3945 = vmul.f32 %v3776, %v3939
    %v3946 = vmul.f32 %v3777, %v3939
    %v3947 = vmul.f32 %v3778, %v3939
    %v3948 = vmul.f32 %v3779, %v3939
    %v3949 = vmul.f32 %v3780, %v3939
    %v3950 = vmul.f32 %v3781, %v3939
    %v3951 = vmul.f32 %v3782, %v3939
    %v3952 = vmul.f32 %v3783, %v3939
    %v3953 = vmul.f32 %v3784, %v3939
    %v3954 = vmul.f32 %v3785, %v3939
    %v3955 = vmul.f32 %v3786, %v3939
    %v3956 = vmul.f32 %v3787, %v3939
    %v3957 = vmul.f32 %v3788, %v3939
    %v3958 = vmul.f32 %v3789, %v3939
    %v3959 = vmul.f32 %v3790, %v3939
    %v3960 = vmul.f32 %v3791, %v3939
    %v3961 = vmul.f32 %v3792, %v3939
    %v3962 = vmul.f32 %v3793, %v3939
    %v3963 = vmul.f32 %v3794, %v3939
    %v3964 = vmul.f32 %v3795, %v3939
    %v3965 = vmul.f32 %v3796, %v3939
    %v3966 = vmul.f32 %v3797, %v3939
    %v3967 = vmul.f32 %v3798, %v3939
    %v3968 = vmul.f32 %v3799, %v3939
    %v3969 = vmul.f32 %v3800, %v3939
    %v3970 = vmul.f32 %v3801, %v3939
    %v3971 = vmul.f32 %v3802, %v3939
    %v3972 = vmul.f32 %v3803, %v3939
    %v3973 = vmul.f32 %v3804, %v3939
    %v3974 = vmul.f32 %v3805, %v3939
    %v3975 = vmul.f32 %v3806, %v3940
    %v3976 = vmul.f32 %v3807, %v3940
    %v3977 = vmul.f32 %v3808, %v3940
    %v3978 = vmul.f32 %v3809, %v3940
    %v3979 = vmul.f32 %v3810, %v3940
    %v3980 = vmul.f32 %v3811, %v3940
    %v3981 = vmul.f32 %v3812, %v3940
    %v3982 = vmul.f32 %v3813, %v3940
    %v3983 = vmul.f32 %v3814, %v3940
    %v3984 = vmul.f32 %v3815, %v3940
    %v3985 = vmul.f32 %v3816, %v3940
    %v3986 = vmul.f32 %v3817, %v3940
    %v3987 = vmul.f32 %v3818, %v3940
    %v3988 = vmul.f32 %v3819, %v3940
    %v3989 = vmul.f32 %v3820, %v3940
    %v3990 = vmul.f32 %v3821, %v3940
    %v3991 = vmul.f32 %v3822, %v3940
    %v3992 = vmul.f32 %v3823, %v3940
    %v3993 = vmul.f32 %v3824, %v3940
    %v3994 = vmul.f32 %v3825, %v3940
    %v3995 = vmul.f32 %v3826, %v3940
    %v3996 = vmul.f32 %v3827, %v3940
    %v3997 = vmul.f32 %v3828, %v3940
    %v3998 = vmul.f32 %v3829, %v3940
    %v3999 = vmul.f32 %v3830, %v3940
    %v4000 = vmul.f32 %v3831, %v3940
    %v4001 = vmul.f32 %v3832, %v3940
    %v4002 = vmul.f32 %v3833, %v3940
    %v4003 = vmul.f32 %v3834, %v3940
    %v4004 = vmul.f32 %v3835, %v3940
    %v4005 = vmul.f32 %v3836, %v3940
    %v4006 = vmul.f32 %v3837, %v3940
    %v4008 = vsel %vm2139, %v3943, 0
    %v4011 = vsel %vm2139, %v3944, 0
    %v4014 = vsel %vm2139, %v3945, 0
    %v4017 = vsel %vm2139, %v3946, 0
    %v4020 = vsel %vm2139, %v3947, 0
    %v4023 = vsel %vm2139, %v3948, 0
    %v4026 = vsel %vm2139, %v3949, 0
    %v4029 = vsel %vm2139, %v3950, 0
    %v4032 = vsel %vm2139, %v3951, 0
    %v4035 = vsel %vm2139, %v3952, 0
    %v4038 = vsel %vm2139, %v3953, 0
    %v4041 = vsel %vm2139, %v3954, 0
    %v4044 = vsel %vm2139, %v3955, 0
    %v4047 = vsel %vm2139, %v3956, 0
    %v4050 = vsel %vm2139, %v3957, 0
    %v4053 = vsel %vm2139, %v3958, 0
    %v4056 = vsel %vm2139, %v3959, 0
    %v4059 = vsel %vm2139, %v3960, 0
    %v4062 = vsel %vm2139, %v3961, 0
    %v4065 = vsel %vm2139, %v3962, 0
    %v4068 = vsel %vm2139, %v3963, 0
    %v4071 = vsel %vm2139, %v3964, 0
    %v4074 = vsel %vm2139, %v3965, 0
    %v4077 = vsel %vm2139, %v3966, 0
    %v4080 = vsel %vm2139, %v3967, 0
    %v4083 = vsel %vm2139, %v3968, 0
    %v4086 = vsel %vm2139, %v3969, 0
    %v4089 = vsel %vm2139, %v3970, 0
    %v4092 = vsel %vm2139, %v3971, 0
    %v4095 = vsel %vm2139, %v3972, 0
    %v4098 = vsel %vm2139, %v3973, 0
    %v4101 = vsel %vm2139, %v3974, 0
    %v4104 = vsel %vm2139, %v3975, 0
    %v4107 = vsel %vm2139, %v3976, 0
    %v4110 = vsel %vm2139, %v3977, 0
    %v4113 = vsel %vm2139, %v3978, 0
    %v4116 = vsel %vm2139, %v3979, 0
    %v4119 = vsel %vm2139, %v3980, 0
    %v4122 = vsel %vm2139, %v3981, 0
    %v4125 = vsel %vm2139, %v3982, 0
    %v4128 = vsel %vm2139, %v3983, 0
    %v4131 = vsel %vm2139, %v3984, 0
    %v4134 = vsel %vm2139, %v3985, 0
    %v4137 = vsel %vm2139, %v3986, 0
    %v4140 = vsel %vm2139, %v3987, 0
    %v4143 = vsel %vm2139, %v3988, 0
    %v4146 = vsel %vm2139, %v3989, 0
    %v4149 = vsel %vm2139, %v3990, 0
    %v4152 = vsel %vm2139, %v3991, 0
    %v4155 = vsel %vm2139, %v3992, 0
    %v4158 = vsel %vm2139, %v3993, 0
    %v4161 = vsel %vm2139, %v3994, 0
    %v4164 = vsel %vm2139, %v3995, 0
    %v4167 = vsel %vm2139, %v3996, 0
    %v4170 = vsel %vm2139, %v3997, 0
    %v4173 = vsel %vm2139, %v3998, 0
    %v4176 = vsel %vm2139, %v3999, 0
    %v4179 = vsel %vm2139, %v4000, 0
    %v4182 = vsel %vm2139, %v4001, 0
    %v4185 = vsel %vm2139, %v4002, 0
    %v4188 = vsel %vm2139, %v4003, 0
    %v4191 = vsel %vm2139, %v4004, 0
    %v4194 = vsel %vm2139, %v4005, 0
    %v4197 = vsel %vm2139, %v4006, 0
    %4199 = vmatpush.msra.mxu0 0.0
    %4200 = vmatpush.msra.mxu0 0.0
    %4201 = vmatpush.msra.mxu0 0.0
    %4202 = vmatpush.msra.mxu0 0.0
    %4203 = vmatpush.msra.mxu0 0.0
    %4204 = vmatpush.msra.mxu0 0.0
    %4205 = vmatpush.msra.mxu0 0.0
    %4206 = vmatpush.msra.mxu0 0.0
    %4207 = vmatpush.msra.mxu0 0.0
    %4208 = vmatpush.msra.mxu0 0.0
    %4209 = vmatpush.msra.mxu0 0.0
    %4210 = vmatpush.msra.mxu0 0.0
    %4211 = vmatpush.msra.mxu0 0.0
    %4212 = vmatpush.msra.mxu0 0.0
    %4213 = vmatpush.msra.mxu0 %v3935
    %4214 = vmatpush.msra.mxu0 %v3934
    %4215 = vmatmul.f32.gmra.mxu0 %v4008
    %v4216 = vpop.f32.mrf.mxu0
    %v4217 = vadd.f32 0.0, %v4216
    %4218 = vmatmul.f32.gmra.mxu0 %v4011
    %v4219 = vpop.f32.mrf.mxu0
    %v4220 = vadd.f32 0.0, %v4219
    %4221 = vmatmul.f32.gmra.mxu0 %v4014
    %v4222 = vpop.f32.mrf.mxu0
    %v4223 = vadd.f32 0.0, %v4222
    %4224 = vmatmul.f32.gmra.mxu0 %v4017
    %v4225 = vpop.f32.mrf.mxu0
    %v4226 = vadd.f32 0.0, %v4225
    %4227 = vmatmul.f32.gmra.mxu0 %v4020
    %v4228 = vpop.f32.mrf.mxu0
    %v4229 = vadd.f32 0.0, %v4228
    %4230 = vmatmul.f32.gmra.mxu0 %v4023
    %v4231 = vpop.f32.mrf.mxu0
    %v4232 = vadd.f32 0.0, %v4231
    %4233 = vmatmul.f32.gmra.mxu0 %v4026
    %v4234 = vpop.f32.mrf.mxu0
    %v4235 = vadd.f32 0.0, %v4234
    %4236 = vmatmul.f32.gmra.mxu0 %v4029
    %v4237 = vpop.f32.mrf.mxu0
    %v4238 = vadd.f32 0.0, %v4237
    %4239 = vmatmul.f32.gmra.mxu0 %v4032
    %v4240 = vpop.f32.mrf.mxu0
    %v4241 = vadd.f32 0.0, %v4240
    %4242 = vmatmul.f32.gmra.mxu0 %v4035
    %v4243 = vpop.f32.mrf.mxu0
    %v4244 = vadd.f32 0.0, %v4243
    %4245 = vmatmul.f32.gmra.mxu0 %v4038
    %v4246 = vpop.f32.mrf.mxu0
    %v4247 = vadd.f32 0.0, %v4246
    %4248 = vmatmul.f32.gmra.mxu0 %v4041
    %v4249 = vpop.f32.mrf.mxu0
    %v4250 = vadd.f32 0.0, %v4249
    %4251 = vmatmul.f32.gmra.mxu0 %v4044
    %v4252 = vpop.f32.mrf.mxu0
    %v4253 = vadd.f32 0.0, %v4252
    %4254 = vmatmul.f32.gmra.mxu0 %v4047
    %v4255 = vpop.f32.mrf.mxu0
    %v4256 = vadd.f32 0.0, %v4255
    %4257 = vmatmul.f32.gmra.mxu0 %v4050
    %v4258 = vpop.f32.mrf.mxu0
    %v4259 = vadd.f32 0.0, %v4258
    %4260 = vmatmul.f32.gmra.mxu0 %v4053
    %v4261 = vpop.f32.mrf.mxu0
    %v4262 = vadd.f32 0.0, %v4261
    %4263 = vmatmul.f32.gmra.mxu0 %v4056
    %v4264 = vpop.f32.mrf.mxu0
    %v4265 = vadd.f32 0.0, %v4264
    %4266 = vmatmul.f32.gmra.mxu0 %v4059
    %v4267 = vpop.f32.mrf.mxu0
    %v4268 = vadd.f32 0.0, %v4267
    %4269 = vmatmul.f32.gmra.mxu0 %v4062
    %v4270 = vpop.f32.mrf.mxu0
    %v4271 = vadd.f32 0.0, %v4270
    %4272 = vmatmul.f32.gmra.mxu0 %v4065
    %v4273 = vpop.f32.mrf.mxu0
    %v4274 = vadd.f32 0.0, %v4273
    %4275 = vmatmul.f32.gmra.mxu0 %v4068
    %v4276 = vpop.f32.mrf.mxu0
    %v4277 = vadd.f32 0.0, %v4276
    %4278 = vmatmul.f32.gmra.mxu0 %v4071
    %v4279 = vpop.f32.mrf.mxu0
    %v4280 = vadd.f32 0.0, %v4279
    %4281 = vmatmul.f32.gmra.mxu0 %v4074
    %v4282 = vpop.f32.mrf.mxu0
    %v4283 = vadd.f32 0.0, %v4282
    %4284 = vmatmul.f32.gmra.mxu0 %v4077
    %v4285 = vpop.f32.mrf.mxu0
    %v4286 = vadd.f32 0.0, %v4285
    %4287 = vmatmul.f32.gmra.mxu0 %v4080
    %v4288 = vpop.f32.mrf.mxu0
    %v4289 = vadd.f32 0.0, %v4288
    %4290 = vmatmul.f32.gmra.mxu0 %v4083
    %v4291 = vpop.f32.mrf.mxu0
    %v4292 = vadd.f32 0.0, %v4291
    %4293 = vmatmul.f32.gmra.mxu0 %v4086
    %v4294 = vpop.f32.mrf.mxu0
    %v4295 = vadd.f32 0.0, %v4294
    %4296 = vmatmul.f32.gmra.mxu0 %v4089
    %v4297 = vpop.f32.mrf.mxu0
    %v4298 = vadd.f32 0.0, %v4297
    %4299 = vmatmul.f32.gmra.mxu0 %v4092
    %v4300 = vpop.f32.mrf.mxu0
    %v4301 = vadd.f32 0.0, %v4300
    %4302 = vmatmul.f32.gmra.mxu0 %v4095
    %v4303 = vpop.f32.mrf.mxu0
    %v4304 = vadd.f32 0.0, %v4303
    %4305 = vmatmul.f32.gmra.mxu0 %v4098
    %v4306 = vpop.f32.mrf.mxu0
    %v4307 = vadd.f32 0.0, %v4306
    %4308 = vmatmul.f32.gmra.mxu0 %v4101
    %v4309 = vpop.f32.mrf.mxu0
    %v4310 = vadd.f32 0.0, %v4309
    %4311 = vmatmul.f32.gmra.mxu0 %v4104
    %v4312 = vpop.f32.mrf.mxu0
    %v4313 = vadd.f32 0.0, %v4312
    %4314 = vmatmul.f32.gmra.mxu0 %v4107
    %v4315 = vpop.f32.mrf.mxu0
    %v4316 = vadd.f32 0.0, %v4315
    %4317 = vmatmul.f32.gmra.mxu0 %v4110
    %v4318 = vpop.f32.mrf.mxu0
    %v4319 = vadd.f32 0.0, %v4318
    %4320 = vmatmul.f32.gmra.mxu0 %v4113
    %v4321 = vpop.f32.mrf.mxu0
    %v4322 = vadd.f32 0.0, %v4321
    %4323 = vmatmul.f32.gmra.mxu0 %v4116
    %v4324 = vpop.f32.mrf.mxu0
    %v4325 = vadd.f32 0.0, %v4324
    %4326 = vmatmul.f32.gmra.mxu0 %v4119
    %v4327 = vpop.f32.mrf.mxu0
    %v4328 = vadd.f32 0.0, %v4327
    %4329 = vmatmul.f32.gmra.mxu0 %v4122
    %v4330 = vpop.f32.mrf.mxu0
    %v4331 = vadd.f32 0.0, %v4330
    %4332 = vmatmul.f32.gmra.mxu0 %v4125
    %v4333 = vpop.f32.mrf.mxu0
    %v4334 = vadd.f32 0.0, %v4333
    %4335 = vmatmul.f32.gmra.mxu0 %v4128
    %v4336 = vpop.f32.mrf.mxu0
    %v4337 = vadd.f32 0.0, %v4336
    %4338 = vmatmul.f32.gmra.mxu0 %v4131
    %v4339 = vpop.f32.mrf.mxu0
    %v4340 = vadd.f32 0.0, %v4339
    %4341 = vmatmul.f32.gmra.mxu0 %v4134
    %v4342 = vpop.f32.mrf.mxu0
    %v4343 = vadd.f32 0.0, %v4342
    %4344 = vmatmul.f32.gmra.mxu0 %v4137
    %v4345 = vpop.f32.mrf.mxu0
    %v4346 = vadd.f32 0.0, %v4345
    %4347 = vmatmul.f32.gmra.mxu0 %v4140
    %v4348 = vpop.f32.mrf.mxu0
    %v4349 = vadd.f32 0.0, %v4348
    %4350 = vmatmul.f32.gmra.mxu0 %v4143
    %v4351 = vpop.f32.mrf.mxu0
    %v4352 = vadd.f32 0.0, %v4351
    %4353 = vmatmul.f32.gmra.mxu0 %v4146
    %v4354 = vpop.f32.mrf.mxu0
    %v4355 = vadd.f32 0.0, %v4354
    %4356 = vmatmul.f32.gmra.mxu0 %v4149
    %v4357 = vpop.f32.mrf.mxu0
    %v4358 = vadd.f32 0.0, %v4357
    %4359 = vmatmul.f32.gmra.mxu0 %v4152
    %v4360 = vpop.f32.mrf.mxu0
    %v4361 = vadd.f32 0.0, %v4360
    %4362 = vmatmul.f32.gmra.mxu0 %v4155
    %v4363 = vpop.f32.mrf.mxu0
    %v4364 = vadd.f32 0.0, %v4363
    %4365 = vmatmul.f32.gmra.mxu0 %v4158
    %v4366 = vpop.f32.mrf.mxu0
    %v4367 = vadd.f32 0.0, %v4366
    %4368 = vmatmul.f32.gmra.mxu0 %v4161
    %v4369 = vpop.f32.mrf.mxu0
    %v4370 = vadd.f32 0.0, %v4369
    %4371 = vmatmul.f32.gmra.mxu0 %v4164
    %v4372 = vpop.f32.mrf.mxu0
    %v4373 = vadd.f32 0.0, %v4372
    %4374 = vmatmul.f32.gmra.mxu0 %v4167
    %v4375 = vpop.f32.mrf.mxu0
    %v4376 = vadd.f32 0.0, %v4375
    %4377 = vmatmul.f32.gmra.mxu0 %v4170
    %v4378 = vpop.f32.mrf.mxu0
    %v4379 = vadd.f32 0.0, %v4378
    %4380 = vmatmul.f32.gmra.mxu0 %v4173
    %v4381 = vpop.f32.mrf.mxu0
    %v4382 = vadd.f32 0.0, %v4381
    %4383 = vmatmul.f32.gmra.mxu0 %v4176
    %v4384 = vpop.f32.mrf.mxu0
    %v4385 = vadd.f32 0.0, %v4384
    %4386 = vmatmul.f32.gmra.mxu0 %v4179
    %v4387 = vpop.f32.mrf.mxu0
    %v4388 = vadd.f32 0.0, %v4387
    %4389 = vmatmul.f32.gmra.mxu0 %v4182
    %v4390 = vpop.f32.mrf.mxu0
    %v4391 = vadd.f32 0.0, %v4390
    %4392 = vmatmul.f32.gmra.mxu0 %v4185
    %v4393 = vpop.f32.mrf.mxu0
    %v4394 = vadd.f32 0.0, %v4393
    %4395 = vmatmul.f32.gmra.mxu0 %v4188
    %v4396 = vpop.f32.mrf.mxu0
    %v4397 = vadd.f32 0.0, %v4396
    %4398 = vmatmul.f32.gmra.mxu0 %v4191
    %v4399 = vpop.f32.mrf.mxu0
    %v4400 = vadd.f32 0.0, %v4399
    %4401 = vmatmul.f32.gmra.mxu0 %v4194
    %v4402 = vpop.f32.mrf.mxu0
    %v4403 = vadd.f32 0.0, %v4402
    %4404 = vmatmul.f32.gmra.mxu0 %v4197
    %v4405 = vpop.f32.mrf.mxu0
    %v4406 = vadd.f32 0.0, %v4405
    %4407 = vdwg.mxu0
    %v4409 = vperm.slane %v3936, 0
    %v4411 = vadd.f32 %v4217, %v4409
    %v4412 = vadd.f32 %v4220, %v4409
    %v4413 = vadd.f32 %v4223, %v4409
    %v4414 = vadd.f32 %v4226, %v4409
    %v4415 = vadd.f32 %v4229, %v4409
    %v4416 = vadd.f32 %v4232, %v4409
    %v4417 = vadd.f32 %v4235, %v4409
    %v4418 = vadd.f32 %v4238, %v4409
    %v4419 = vadd.f32 %v4241, %v4409
    %v4420 = vadd.f32 %v4244, %v4409
    %v4421 = vadd.f32 %v4247, %v4409
    %v4422 = vadd.f32 %v4250, %v4409
    %v4423 = vadd.f32 %v4253, %v4409
    %v4424 = vadd.f32 %v4256, %v4409
    %v4425 = vadd.f32 %v4259, %v4409
    %v4426 = vadd.f32 %v4262, %v4409
    %v4427 = vadd.f32 %v4265, %v4409
    %v4428 = vadd.f32 %v4268, %v4409
    %v4429 = vadd.f32 %v4271, %v4409
    %v4430 = vadd.f32 %v4274, %v4409
    %v4431 = vadd.f32 %v4277, %v4409
    %v4432 = vadd.f32 %v4280, %v4409
    %v4433 = vadd.f32 %v4283, %v4409
    %v4434 = vadd.f32 %v4286, %v4409
    %v4435 = vadd.f32 %v4289, %v4409
    %v4436 = vadd.f32 %v4292, %v4409
    %v4437 = vadd.f32 %v4295, %v4409
    %v4438 = vadd.f32 %v4298, %v4409
    %v4439 = vadd.f32 %v4301, %v4409
    %v4440 = vadd.f32 %v4304, %v4409
    %v4441 = vadd.f32 %v4307, %v4409
    %v4442 = vadd.f32 %v4310, %v4409
    %v4443 = vadd.f32 %v4313, %v4409
    %v4444 = vadd.f32 %v4316, %v4409
    %v4445 = vadd.f32 %v4319, %v4409
    %v4446 = vadd.f32 %v4322, %v4409
    %v4447 = vadd.f32 %v4325, %v4409
    %v4448 = vadd.f32 %v4328, %v4409
    %v4449 = vadd.f32 %v4331, %v4409
    %v4450 = vadd.f32 %v4334, %v4409
    %v4451 = vadd.f32 %v4337, %v4409
    %v4452 = vadd.f32 %v4340, %v4409
    %v4453 = vadd.f32 %v4343, %v4409
    %v4454 = vadd.f32 %v4346, %v4409
    %v4455 = vadd.f32 %v4349, %v4409
    %v4456 = vadd.f32 %v4352, %v4409
    %v4457 = vadd.f32 %v4355, %v4409
    %v4458 = vadd.f32 %v4358, %v4409
    %v4459 = vadd.f32 %v4361, %v4409
    %v4460 = vadd.f32 %v4364, %v4409
    %v4461 = vadd.f32 %v4367, %v4409
    %v4462 = vadd.f32 %v4370, %v4409
    %v4463 = vadd.f32 %v4373, %v4409
    %v4464 = vadd.f32 %v4376, %v4409
    %v4465 = vadd.f32 %v4379, %v4409
    %v4466 = vadd.f32 %v4382, %v4409
    %v4467 = vadd.f32 %v4385, %v4409
    %v4468 = vadd.f32 %v4388, %v4409
    %v4469 = vadd.f32 %v4391, %v4409
    %v4470 = vadd.f32 %v4394, %v4409
    %v4471 = vadd.f32 %v4397, %v4409
    %v4472 = vadd.f32 %v4400, %v4409
    %v4473 = vadd.f32 %v4403, %v4409
    %v4474 = vadd.f32 %v4406, %v4409
    %vm4475 = vcmask 23552
    %4476 = vst.msk [vmem:[%s14] sm:$0xff] %vm4475, %v4411
    %4477 = vst.msk [vmem:[%s14 + $0x8] sm:$0xff] %vm4475, %v4412
    %4478 = vst.msk [vmem:[%s14 + $0x10] sm:$0xff] %vm4475, %v4413
    %4479 = vst.msk [vmem:[%s14 + $0x18] sm:$0xff] %vm4475, %v4414
    %4480 = vst.msk [vmem:[%s14 + $0x20] sm:$0xff] %vm4475, %v4415
    %4481 = vst.msk [vmem:[%s14 + $0x28] sm:$0xff] %vm4475, %v4416
    %4482 = vst.msk [vmem:[%s14 + $0x30] sm:$0xff] %vm4475, %v4417
    %4483 = vst.msk [vmem:[%s14 + $0x38] sm:$0xff] %vm4475, %v4418
    %4484 = vst.msk [vmem:[%s14 + $0x40] sm:$0xff] %vm4475, %v4419
    %4485 = vst.msk [vmem:[%s14 + $0x48] sm:$0xff] %vm4475, %v4420
    %4486 = vst.msk [vmem:[%s14 + $0x50] sm:$0xff] %vm4475, %v4421
    %4487 = vst.msk [vmem:[%s14 + $0x58] sm:$0xff] %vm4475, %v4422
    %4488 = vst.msk [vmem:[%s14 + $0x60] sm:$0xff] %vm4475, %v4423
    %4489 = vst.msk [vmem:[%s14 + $0x68] sm:$0xff] %vm4475, %v4424
    %4490 = vst.msk [vmem:[%s14 + $0x70] sm:$0xff] %vm4475, %v4425
    %4491 = vst.msk [vmem:[%s14 + $0x78] sm:$0xff] %vm4475, %v4426
    %4492 = vst.msk [vmem:[%s14 + $0x80] sm:$0xff] %vm4475, %v4427
    %4493 = vst.msk [vmem:[%s14 + $0x88] sm:$0xff] %vm4475, %v4428
    %4494 = vst.msk [vmem:[%s14 + $0x90] sm:$0xff] %vm4475, %v4429
    %4495 = vst.msk [vmem:[%s14 + $0x98] sm:$0xff] %vm4475, %v4430
    %4496 = vst.msk [vmem:[%s14 + $0xa0] sm:$0xff] %vm4475, %v4431
    %4497 = vst.msk [vmem:[%s14 + $0xa8] sm:$0xff] %vm4475, %v4432
    %4498 = vst.msk [vmem:[%s14 + $0xb0] sm:$0xff] %vm4475, %v4433
    %4499 = vst.msk [vmem:[%s14 + $0xb8] sm:$0xff] %vm4475, %v4434
    %4500 = vst.msk [vmem:[%s14 + $0xc0] sm:$0xff] %vm4475, %v4435
    %4501 = vst.msk [vmem:[%s14 + $0xc8] sm:$0xff] %vm4475, %v4436
    %4502 = vst.msk [vmem:[%s14 + $0xd0] sm:$0xff] %vm4475, %v4437
    %4503 = vst.msk [vmem:[%s14 + $0xd8] sm:$0xff] %vm4475, %v4438
    %4504 = vst.msk [vmem:[%s14 + $0xe0] sm:$0xff] %vm4475, %v4439
    %4505 = vst.msk [vmem:[%s14 + $0xe8] sm:$0xff] %vm4475, %v4440
    %4506 = vst.msk [vmem:[%s14 + $0xf0] sm:$0xff] %vm4475, %v4441
    %4507 = vst.msk [vmem:[%s14 + $0xf8] sm:$0xff] %vm4475, %v4442
    %4508 = vst.msk [vmem:[%s14 + $0x100] sm:$0xff] %vm4475, %v4443
    %4509 = vst.msk [vmem:[%s14 + $0x108] sm:$0xff] %vm4475, %v4444
    %4510 = vst.msk [vmem:[%s14 + $0x110] sm:$0xff] %vm4475, %v4445
    %4511 = vst.msk [vmem:[%s14 + $0x118] sm:$0xff] %vm4475, %v4446
    %4512 = vst.msk [vmem:[%s14 + $0x120] sm:$0xff] %vm4475, %v4447
    %4513 = vst.msk [vmem:[%s14 + $0x128] sm:$0xff] %vm4475, %v4448
    %4514 = vst.msk [vmem:[%s14 + $0x130] sm:$0xff] %vm4475, %v4449
    %4515 = vst.msk [vmem:[%s14 + $0x138] sm:$0xff] %vm4475, %v4450
    %4516 = vst.msk [vmem:[%s14 + $0x140] sm:$0xff] %vm4475, %v4451
    %4517 = vst.msk [vmem:[%s14 + $0x148] sm:$0xff] %vm4475, %v4452
    %4518 = vst.msk [vmem:[%s14 + $0x150] sm:$0xff] %vm4475, %v4453
    %4519 = vst.msk [vmem:[%s14 + $0x158] sm:$0xff] %vm4475, %v4454
    %4520 = vst.msk [vmem:[%s14 + $0x160] sm:$0xff] %vm4475, %v4455
    %4521 = vst.msk [vmem:[%s14 + $0x168] sm:$0xff] %vm4475, %v4456
    %4522 = vst.msk [vmem:[%s14 + $0x170] sm:$0xff] %vm4475, %v4457
    %4523 = vst.msk [vmem:[%s14 + $0x178] sm:$0xff] %vm4475, %v4458
    %4524 = vst.msk [vmem:[%s14 + $0x180] sm:$0xff] %vm4475, %v4459
    %4525 = vst.msk [vmem:[%s14 + $0x188] sm:$0xff] %vm4475, %v4460
    %4526 = vst.msk [vmem:[%s14 + $0x190] sm:$0xff] %vm4475, %v4461
    %4527 = vst.msk [vmem:[%s14 + $0x198] sm:$0xff] %vm4475, %v4462
    %4528 = vst.msk [vmem:[%s14 + $0x1a0] sm:$0xff] %vm4475, %v4463
    %4529 = vst.msk [vmem:[%s14 + $0x1a8] sm:$0xff] %vm4475, %v4464
    %4530 = vst.msk [vmem:[%s14 + $0x1b0] sm:$0xff] %vm4475, %v4465
    %4531 = vst.msk [vmem:[%s14 + $0x1b8] sm:$0xff] %vm4475, %v4466
    %4532 = vst.msk [vmem:[%s14 + $0x1c0] sm:$0xff] %vm4475, %v4467
    %4533 = vst.msk [vmem:[%s14 + $0x1c8] sm:$0xff] %vm4475, %v4468
    %4534 = vst.msk [vmem:[%s14 + $0x1d0] sm:$0xff] %vm4475, %v4469
    %4535 = vst.msk [vmem:[%s14 + $0x1d8] sm:$0xff] %vm4475, %v4470
    %4536 = vst.msk [vmem:[%s14 + $0x1e0] sm:$0xff] %vm4475, %v4471
    %4537 = vst.msk [vmem:[%s14 + $0x1e8] sm:$0xff] %vm4475, %v4472
    %4538 = vst.msk [vmem:[%s14 + $0x1f0] sm:$0xff] %vm4475, %v4473
    %4539 = vst.msk [vmem:[%s14 + $0x1f8] sm:$0xff] %vm4475, %v4474
    // Predicated region
    $region54: #{_forward.9} parent=1 // pred_check
      _
    $region55: #{_forward.9} parent=1 // pred_check_branch
      %4541 = sbr.rel (0) target = $region57
    $region56: #{_forward.9} parent=1 // pred_region
      %4543 = vsyncadd [#allocation3], 0
      %s4544 = sshll.u32 [#allocation2], 4
      %s4545 = int_to_ptr.vmem [resolvable:$true] %s4544
      %s4546 = sshll.u32 %s13, 4
      %s4547 = int_to_ptr.hbm [resolvable:$true] %s4546
      %4552 = dma.vmem_to_hbm [thread:$0]  %s4545, 8192, %s4547, [#allocation3], 128, 128, 8
    $region57: #{_forward.9} parent=1 // pred_fallthru
      _
    // Predicated region
    $region58: #{_forward.9} parent=1 // pred_check
      _
    $region59: #{_forward.9} parent=1 // pred_check_branch
      %4554 = sbr.rel (0) target = $region61
    $region60: #{_forward.9} parent=1 // pred_region
      _
    $region61: #{_forward.9} parent=1 // pred_fallthru
      _
    // Predicated region
    $region62: #{_forward.9} parent=1 // pred_check
      _
    $region63: #{_forward.9} parent=1 // pred_check_branch
      %4556 = sbr.rel (0) target = $region65
    $region64: #{_forward.9} parent=1 // pred_region
      %4558 = dma.done [#allocation3], 8192
    $region65: #{_forward.9} parent=1 // pred_fallthru
      _
    // Predicated region
    $region66: #{_forward.9} parent=1 // pred_check
      _
    $region67: #{_forward.9} parent=1 // pred_check_branch
      %4560 = sbr.rel (0) target = $region69
    $region68: #{_forward.9} parent=1 // pred_region
      _
    $region69: #{_forward.9} parent=1 // pred_fallthru
      _
    %4561 = vsyncpa [#allocation3], 1

// kernel: _forward.8
$region0: #{_forward.8}
  #allocation0 [shape = 'u32[]', space=smem, size = 0x4, offset = 0x4, fixed_abs, tag = 'smem constant byte address 0x4 - core index']
  #allocation1 [shape = 'u32[72,128]{1,0:T(1,128)}', space=vmem, size = 0x9000, scoped, tag = 'internal scratch']
  %s0 = inlined_call_operand.vmem [shape: f32[2,32], index: 0, kind: input, shape index: {}]
  %s1 = inlined_call_operand.vmem [shape: f32[32,16], index: 1, kind: input, shape index: {}]
  %s2 = inlined_call_operand.vmem [shape: f32[1,16], index: 2, kind: input, shape index: {}]
  %s3 = inlined_call_operand.vmem [shape: f32[2,18,18,16], index: 3, kind: input, shape index: {}]
  %s4 = inlined_call_operand.vmem [shape: f32[144,16], index: 4, kind: input, shape index: {}]
  %s5 = inlined_call_operand.vmem [shape: f32[16,16], index: 5, kind: input, shape index: {}]
  %s6 = inlined_call_operand.vmem [shape: f32[16,16], index: 6, kind: input, shape index: {}]
  %s7 = inlined_call_operand.vmem [shape: f32[1,16], index: 7, kind: input, shape index: {}]
  %s8 = inlined_call_operand.vmem [shape: f32[2,16,16,16], index: 8, kind: output, shape index: {}]
  %s9 = sld [smem:[#allocation0]]
  $region42: #{_forward.8} parent=0
    _
  %s11 = ssub.s32 1, %s9
  %s12 = scalar_select 0, %s11, %s9
  // Predicated region
  $region2: #{_forward.8} parent=0 // pred_check
    _
  $region3: #{_forward.8} parent=0 // pred_check_branch
    %14 = sbr.rel (0) target = $region5
  $region4: #{_forward.8} parent=0 // pred_region
    _
  $region5: #{_forward.8} parent=0 // pred_fallthru
    _
  // Predicated region
  $region6: #{_forward.8} parent=0 // pred_check
    _
  $region7: #{_forward.8} parent=0 // pred_check_branch
    %16 = sbr.rel (0) target = $region9
  $region8: #{_forward.8} parent=0 // pred_region
    _
  $region9: #{_forward.8} parent=0 // pred_fallthru
    _
  // Predicated region
  $region10: #{_forward.8} parent=0 // pred_check
    _
  $region11: #{_forward.8} parent=0 // pred_check_branch
    %18 = sbr.rel (0) target = $region13
  $region12: #{_forward.8} parent=0 // pred_region
    _
  $region13: #{_forward.8} parent=0 // pred_fallthru
    _
  // Predicated region
  $region14: #{_forward.8} parent=0 // pred_check
    _
  $region15: #{_forward.8} parent=0 // pred_check_branch
    %20 = sbr.rel (0) target = $region17
  $region16: #{_forward.8} parent=0 // pred_region
    _
  $region17: #{_forward.8} parent=0 // pred_fallthru
    _
  // Predicated region
  $region18: #{_forward.8} parent=0 // pred_check
    _
  $region19: #{_forward.8} parent=0 // pred_check_branch
    %22 = sbr.rel (0) target = $region21
  $region20: #{_forward.8} parent=0 // pred_region
    _
  $region21: #{_forward.8} parent=0 // pred_fallthru
    _
  // Predicated region
  $region22: #{_forward.8} parent=0 // pred_check
    _
  $region23: #{_forward.8} parent=0 // pred_check_branch
    %24 = sbr.rel (0) target = $region25
  $region24: #{_forward.8} parent=0 // pred_region
    _
  $region25: #{_forward.8} parent=0 // pred_fallthru
    _
  // Predicated region
  $region26: #{_forward.8} parent=0 // pred_check
    _
  $region27: #{_forward.8} parent=0 // pred_check_branch
    %26 = sbr.rel (0) target = $region29
  $region28: #{_forward.8} parent=0 // pred_region
    _
  $region29: #{_forward.8} parent=0 // pred_fallthru
    _
  // Predicated region
  $region30: #{_forward.8} parent=0 // pred_check
    _
  $region31: #{_forward.8} parent=0 // pred_check_branch
    %28 = sbr.rel (0) target = $region33
  $region32: #{_forward.8} parent=0 // pred_region
    _
  $region33: #{_forward.8} parent=0 // pred_fallthru
    _
  %v29 = vld [vmem:[%s0] sm:$0x3]
  %v30 = vld [vmem:[%s1] sm:$0xff]
  %v31 = vld [vmem:[%s1 + $0x8] sm:$0xff]
  %v32 = vld [vmem:[%s1 + $0x10] sm:$0xff]
  %v33 = vld [vmem:[%s1 + $0x18] sm:$0xff]
  %v34 = vld [vmem:[%s2] sm:$0x1]
  %v36 = vperm.slane %v34, 0
  %vm38 = vcmask 261120
  %v40 = vsel %vm38, %v29, 0
  %42 = vmatpush.msra.mxu0 0.0
  %43 = vmatpush.msra.mxu0 0.0
  %44 = vmatpush.msra.mxu0 0.0
  %45 = vmatpush.msra.mxu0 0.0
  %46 = vmatpush.msra.mxu0 0.0
  %47 = vmatpush.msra.mxu0 0.0
  %48 = vmatpush.msra.mxu0 0.0
  %49 = vmatpush.msra.mxu0 0.0
  %50 = vmatpush.msra.mxu0 0.0
  %51 = vmatpush.msra.mxu0 0.0
  %52 = vmatpush.msra.mxu0 0.0
  %53 = vmatpush.msra.mxu0 0.0
  %54 = vmatpush.msra.mxu0 %v33
  %55 = vmatpush.msra.mxu0 %v32
  %56 = vmatpush.msra.mxu0 %v31
  %57 = vmatpush.msra.mxu0 %v30
  %58 = vmatmul.f32.gmra.mxu0 %v40
  %v59 = vpop.f32.mrf.mxu0
  %v60 = vadd.f32 %v36, %v59
  %61 = vdwg.mxu0
  %v62 = vld [vmem:[%s3] sm:$0xff]
  %v63 = vld [vmem:[%s3 + $0x8] sm:$0xff]
  %v64 = vld [vmem:[%s3 + $0x10] sm:$0x3]
  %v65 = vld [vmem:[%s3 + $0x18] sm:$0xff]
  %v66 = vld [vmem:[%s3 + $0x20] sm:$0xff]
  %v67 = vld [vmem:[%s3 + $0x28] sm:$0x3]
  %v68 = vld [vmem:[%s3 + $0x30] sm:$0xff]
  %v69 = vld [vmem:[%s3 + $0x38] sm:$0xff]
  %v70 = vld [vmem:[%s3 + $0x40] sm:$0x3]
  %v71 = vld [vmem:[%s3 + $0x48] sm:$0xff]
  %v72 = vld [vmem:[%s3 + $0x50] sm:$0xff]
  %v73 = vld [vmem:[%s3 + $0x58] sm:$0x3]
  %v74 = vld [vmem:[%s3 + $0x60] sm:$0xff]
  %v75 = vld [vmem:[%s3 + $0x68] sm:$0xff]
  %v76 = vld [vmem:[%s3 + $0x70] sm:$0x3]
  %v77 = vld [vmem:[%s3 + $0x78] sm:$0xff]
  %v78 = vld [vmem:[%s3 + $0x80] sm:$0xff]
  %v79 = vld [vmem:[%s3 + $0x88] sm:$0x3]
  %v80 = vld [vmem:[%s3 + $0x90] sm:$0xff]
  %v81 = vld [vmem:[%s3 + $0x98] sm:$0xff]
  %v82 = vld [vmem:[%s3 + $0xa0] sm:$0x3]
  %v83 = vld [vmem:[%s3 + $0xa8] sm:$0xff]
  %v84 = vld [vmem:[%s3 + $0xb0] sm:$0xff]
  %v85 = vld [vmem:[%s3 + $0xb8] sm:$0x3]
  %v86 = vld [vmem:[%s3 + $0xc0] sm:$0xff]
  %v87 = vld [vmem:[%s3 + $0xc8] sm:$0xff]
  %v88 = vld [vmem:[%s3 + $0xd0] sm:$0x3]
  %v89 = vld [vmem:[%s3 + $0xd8] sm:$0xff]
  %v90 = vld [vmem:[%s3 + $0xe0] sm:$0xff]
  %v91 = vld [vmem:[%s3 + $0xe8] sm:$0x3]
  %v92 = vld [vmem:[%s3 + $0xf0] sm:$0xff]
  %v93 = vld [vmem:[%s3 + $0xf8] sm:$0xff]
  %v94 = vld [vmem:[%s3 + $0x100] sm:$0x3]
  %v95 = vld [vmem:[%s3 + $0x108] sm:$0xff]
  %v96 = vld [vmem:[%s3 + $0x110] sm:$0xff]
  %v97 = vld [vmem:[%s3 + $0x118] sm:$0x3]
  %v98 = vld [vmem:[%s3 + $0x120] sm:$0xff]
  %v99 = vld [vmem:[%s3 + $0x128] sm:$0xff]
  %v100 = vld [vmem:[%s3 + $0x130] sm:$0x3]
  %v101 = vld [vmem:[%s3 + $0x138] sm:$0xff]
  %v102 = vld [vmem:[%s3 + $0x140] sm:$0xff]
  %v103 = vld [vmem:[%s3 + $0x148] sm:$0x3]
  %v104 = vld [vmem:[%s3 + $0x150] sm:$0xff]
  %v105 = vld [vmem:[%s3 + $0x158] sm:$0xff]
  %v106 = vld [vmem:[%s3 + $0x160] sm:$0x3]
  %v107 = vld [vmem:[%s3 + $0x168] sm:$0xff]
  %v108 = vld [vmem:[%s3 + $0x170] sm:$0xff]
  %v109 = vld [vmem:[%s3 + $0x178] sm:$0x3]
  %v110 = vld [vmem:[%s3 + $0x180] sm:$0xff]
  %v111 = vld [vmem:[%s3 + $0x188] sm:$0xff]
  %v112 = vld [vmem:[%s3 + $0x190] sm:$0x3]
  %v113 = vld [vmem:[%s3 + $0x198] sm:$0xff]
  %v114 = vld [vmem:[%s3 + $0x1a0] sm:$0xff]
  %v115 = vld [vmem:[%s3 + $0x1a8] sm:$0x3]
  %v116 = vld [vmem:[%s3 + $0x1b0] sm:$0xff]
  %v117 = vld [vmem:[%s3 + $0x1b8] sm:$0xff]
  %v118 = vld [vmem:[%s3 + $0x1c0] sm:$0x3]
  %v119 = vld [vmem:[%s3 + $0x1c8] sm:$0xff]
  %v120 = vld [vmem:[%s3 + $0x1d0] sm:$0xff]
  %v121 = vld [vmem:[%s3 + $0x1d8] sm:$0x3]
  %v122 = vld [vmem:[%s3 + $0x1e0] sm:$0xff]
  %v123 = vld [vmem:[%s3 + $0x1e8] sm:$0xff]
  %v124 = vld [vmem:[%s3 + $0x1f0] sm:$0x3]
  %v125 = vld [vmem:[%s3 + $0x1f8] sm:$0xff]
  %v126 = vld [vmem:[%s3 + $0x200] sm:$0xff]
  %v127 = vld [vmem:[%s3 + $0x208] sm:$0x3]
  %v128 = vld [vmem:[%s3 + $0x210] sm:$0xff]
  %v129 = vld [vmem:[%s3 + $0x218] sm:$0xff]
  %v130 = vld [vmem:[%s3 + $0x220] sm:$0x3]
  %v131 = vld [vmem:[%s3 + $0x228] sm:$0xff]
  %v132 = vld [vmem:[%s3 + $0x230] sm:$0xff]
  %v133 = vld [vmem:[%s3 + $0x238] sm:$0x3]
  %v134 = vld [vmem:[%s3 + $0x240] sm:$0xff]
  %v135 = vld [vmem:[%s3 + $0x248] sm:$0xff]
  %v136 = vld [vmem:[%s3 + $0x250] sm:$0x3]
  %v137 = vld [vmem:[%s3 + $0x258] sm:$0xff]
  %v138 = vld [vmem:[%s3 + $0x260] sm:$0xff]
  %v139 = vld [vmem:[%s3 + $0x268] sm:$0x3]
  %v140 = vld [vmem:[%s3 + $0x270] sm:$0xff]
  %v141 = vld [vmem:[%s3 + $0x278] sm:$0xff]
  %v142 = vld [vmem:[%s3 + $0x280] sm:$0x3]
  %v143 = vld [vmem:[%s3 + $0x288] sm:$0xff]
  %v144 = vld [vmem:[%s3 + $0x290] sm:$0xff]
  %v145 = vld [vmem:[%s3 + $0x298] sm:$0x3]
  %v146 = vld [vmem:[%s3 + $0x2a0] sm:$0xff]
  %v147 = vld [vmem:[%s3 + $0x2a8] sm:$0xff]
  %v148 = vld [vmem:[%s3 + $0x2b0] sm:$0x3]
  %v149 = vld [vmem:[%s3 + $0x2b8] sm:$0xff]
  %v150 = vld [vmem:[%s3 + $0x2c0] sm:$0xff]
  %v151 = vld [vmem:[%s3 + $0x2c8] sm:$0x3]
  %v152 = vld [vmem:[%s3 + $0x2d0] sm:$0xff]
  %v153 = vld [vmem:[%s3 + $0x2d8] sm:$0xff]
  %v154 = vld [vmem:[%s3 + $0x2e0] sm:$0x3]
  %v155 = vld [vmem:[%s3 + $0x2e8] sm:$0xff]
  %v156 = vld [vmem:[%s3 + $0x2f0] sm:$0xff]
  %v157 = vld [vmem:[%s3 + $0x2f8] sm:$0x3]
  %v158 = vld [vmem:[%s3 + $0x300] sm:$0xff]
  %v159 = vld [vmem:[%s3 + $0x308] sm:$0xff]
  %v160 = vld [vmem:[%s3 + $0x310] sm:$0x3]
  %v161 = vld [vmem:[%s3 + $0x318] sm:$0xff]
  %v162 = vld [vmem:[%s3 + $0x320] sm:$0xff]
  %v163 = vld [vmem:[%s3 + $0x328] sm:$0x3]
  %v164 = vld [vmem:[%s3 + $0x330] sm:$0xff]
  %v165 = vld [vmem:[%s3 + $0x338] sm:$0xff]
  %v166 = vld [vmem:[%s3 + $0x340] sm:$0x3]
  %v167 = vld [vmem:[%s3 + $0x348] sm:$0xff]
  %v168 = vld [vmem:[%s3 + $0x350] sm:$0xff]
  %v169 = vld [vmem:[%s3 + $0x358] sm:$0x3]
  %v170 = vld [vmem:[%s4] sm:$0xff]
  %v171 = vld [vmem:[%s4 + $0x8] sm:$0xff]
  %v172 = vld [vmem:[%s4 + $0x10] sm:$0xff]
  %v173 = vld [vmem:[%s4 + $0x18] sm:$0xff]
  %v174 = vld [vmem:[%s4 + $0x20] sm:$0xff]
  %v175 = vld [vmem:[%s4 + $0x28] sm:$0xff]
  %v176 = vld [vmem:[%s4 + $0x30] sm:$0xff]
  %v177 = vld [vmem:[%s4 + $0x38] sm:$0xff]
  %v178 = vld [vmem:[%s4 + $0x40] sm:$0xff]
  %v179 = vld [vmem:[%s4 + $0x48] sm:$0xff]
  %v180 = vld [vmem:[%s4 + $0x50] sm:$0xff]
  %v181 = vld [vmem:[%s4 + $0x58] sm:$0xff]
  %v182 = vld [vmem:[%s4 + $0x60] sm:$0xff]
  %v183 = vld [vmem:[%s4 + $0x68] sm:$0xff]
  %v184 = vld [vmem:[%s4 + $0x70] sm:$0xff]
  %v185 = vld [vmem:[%s4 + $0x78] sm:$0xff]
  %v186 = vld [vmem:[%s4 + $0x80] sm:$0xff]
  %v187 = vld [vmem:[%s4 + $0x88] sm:$0xff]
  %v188 = vld [vmem:[%s5] sm:$0xff]
  %v189 = vld [vmem:[%s5 + $0x8] sm:$0xff]
  %v190 = vld [vmem:[%s6] sm:$0xff]
  %v191 = vld [vmem:[%s6 + $0x8] sm:$0xff]
  %v192 = vld [vmem:[%s7] sm:$0x1]
  %v194 = vrot.slane %v60, 1
  %v195 = vperm.slane %v60, 0
  %v196 = vperm.slane %v194, 0
  %v199 = vmul.f32 %v62, %v195
  %v200 = vmul.f32 %v63, %v195
  %v201 = vmul.f32 %v64, %v195
  %v202 = vmul.f32 %v65, %v195
  %v203 = vmul.f32 %v66, %v195
  %v204 = vmul.f32 %v67, %v195
  %v205 = vmul.f32 %v68, %v195
  %v206 = vmul.f32 %v69, %v195
  %v207 = vmul.f32 %v70, %v195
  %v208 = vmul.f32 %v71, %v195
  %v209 = vmul.f32 %v72, %v195
  %v210 = vmul.f32 %v73, %v195
  %v211 = vmul.f32 %v74, %v195
  %v212 = vmul.f32 %v75, %v195
  %v213 = vmul.f32 %v76, %v195
  %v214 = vmul.f32 %v77, %v195
  %v215 = vmul.f32 %v78, %v195
  %v216 = vmul.f32 %v79, %v195
  %v217 = vmul.f32 %v80, %v195
  %v218 = vmul.f32 %v81, %v195
  %v219 = vmul.f32 %v82, %v195
  %v220 = vmul.f32 %v83, %v195
  %v221 = vmul.f32 %v84, %v195
  %v222 = vmul.f32 %v85, %v195
  %v223 = vmul.f32 %v86, %v195
  %v224 = vmul.f32 %v87, %v195
  %v225 = vmul.f32 %v88, %v195
  %v226 = vmul.f32 %v89, %v195
  %v227 = vmul.f32 %v90, %v195
  %v228 = vmul.f32 %v91, %v195
  %v229 = vmul.f32 %v92, %v195
  %v230 = vmul.f32 %v93, %v195
  %v231 = vmul.f32 %v94, %v195
  %v232 = vmul.f32 %v95, %v195
  %v233 = vmul.f32 %v96, %v195
  %v234 = vmul.f32 %v97, %v195
  %v235 = vmul.f32 %v98, %v195
  %v236 = vmul.f32 %v99, %v195
  %v237 = vmul.f32 %v100, %v195
  %v238 = vmul.f32 %v101, %v195
  %v239 = vmul.f32 %v102, %v195
  %v240 = vmul.f32 %v103, %v195
  %v241 = vmul.f32 %v104, %v195
  %v242 = vmul.f32 %v105, %v195
  %v243 = vmul.f32 %v106, %v195
  %v244 = vmul.f32 %v107, %v195
  %v245 = vmul.f32 %v108, %v195
  %v246 = vmul.f32 %v109, %v195
  %v247 = vmul.f32 %v110, %v195
  %v248 = vmul.f32 %v111, %v195
  %v249 = vmul.f32 %v112, %v195
  %v250 = vmul.f32 %v113, %v195
  %v251 = vmul.f32 %v114, %v195
  %v252 = vmul.f32 %v115, %v195
  %v253 = vmul.f32 %v116, %v196
  %v254 = vmul.f32 %v117, %v196
  %v255 = vmul.f32 %v118, %v196
  %v256 = vmul.f32 %v119, %v196
  %v257 = vmul.f32 %v120, %v196
  %v258 = vmul.f32 %v121, %v196
  %v259 = vmul.f32 %v122, %v196
  %v260 = vmul.f32 %v123, %v196
  %v261 = vmul.f32 %v124, %v196
  %v262 = vmul.f32 %v125, %v196
  %v263 = vmul.f32 %v126, %v196
  %v264 = vmul.f32 %v127, %v196
  %v265 = vmul.f32 %v128, %v196
  %v266 = vmul.f32 %v129, %v196
  %v267 = vmul.f32 %v130, %v196
  %v268 = vmul.f32 %v131, %v196
  %v269 = vmul.f32 %v132, %v196
  %v270 = vmul.f32 %v133, %v196
  %v271 = vmul.f32 %v134, %v196
  %v272 = vmul.f32 %v135, %v196
  %v273 = vmul.f32 %v136, %v196
  %v274 = vmul.f32 %v137, %v196
  %v275 = vmul.f32 %v138, %v196
  %v276 = vmul.f32 %v139, %v196
  %v277 = vmul.f32 %v140, %v196
  %v278 = vmul.f32 %v141, %v196
  %v279 = vmul.f32 %v142, %v196
  %v280 = vmul.f32 %v143, %v196
  %v281 = vmul.f32 %v144, %v196
  %v282 = vmul.f32 %v145, %v196
  %v283 = vmul.f32 %v146, %v196
  %v284 = vmul.f32 %v147, %v196
  %v285 = vmul.f32 %v148, %v196
  %v286 = vmul.f32 %v149, %v196
  %v287 = vmul.f32 %v150, %v196
  %v288 = vmul.f32 %v151, %v196
  %v289 = vmul.f32 %v152, %v196
  %v290 = vmul.f32 %v153, %v196
  %v291 = vmul.f32 %v154, %v196
  %v292 = vmul.f32 %v155, %v196
  %v293 = vmul.f32 %v156, %v196
  %v294 = vmul.f32 %v157, %v196
  %v295 = vmul.f32 %v158, %v196
  %v296 = vmul.f32 %v159, %v196
  %v297 = vmul.f32 %v160, %v196
  %v298 = vmul.f32 %v161, %v196
  %v299 = vmul.f32 %v162, %v196
  %v300 = vmul.f32 %v163, %v196
  %v301 = vmul.f32 %v164, %v196
  %v302 = vmul.f32 %v165, %v196
  %v303 = vmul.f32 %v166, %v196
  %v304 = vmul.f32 %v167, %v196
  %v305 = vmul.f32 %v168, %v196
  %v306 = vmul.f32 %v169, %v196
  %vm403 = vcmask 1046528
  %v404 = vrot.slane %v199, 1
  %v405 = vrot.slane %v200, 1
  %v406 = vsel %vm403, %v404, %v405
  %v407 = vrot.slane %v201, 1
  %v408 = vsel %vm403, %v405, %v407
  %v409 = vrot.slane %v202, 1
  %v410 = vrot.slane %v203, 1
  %v411 = vsel %vm403, %v409, %v410
  %v412 = vrot.slane %v204, 1
  %v413 = vsel %vm403, %v410, %v412
  %v414 = vrot.slane %v205, 1
  %v415 = vrot.slane %v206, 1
  %v416 = vsel %vm403, %v414, %v415
  %v417 = vrot.slane %v207, 1
  %v418 = vsel %vm403, %v415, %v417
  %v419 = vrot.slane %v208, 1
  %v420 = vrot.slane %v209, 1
  %v421 = vsel %vm403, %v419, %v420
  %v422 = vrot.slane %v210, 1
  %v423 = vsel %vm403, %v420, %v422
  %v424 = vrot.slane %v211, 1
  %v425 = vrot.slane %v212, 1
  %v426 = vsel %vm403, %v424, %v425
  %v427 = vrot.slane %v213, 1
  %v428 = vsel %vm403, %v425, %v427
  %v429 = vrot.slane %v214, 1
  %v430 = vrot.slane %v215, 1
  %v431 = vsel %vm403, %v429, %v430
  %v432 = vrot.slane %v216, 1
  %v433 = vsel %vm403, %v430, %v432
  %v434 = vrot.slane %v217, 1
  %v435 = vrot.slane %v218, 1
  %v436 = vsel %vm403, %v434, %v435
  %v437 = vrot.slane %v219, 1
  %v438 = vsel %vm403, %v435, %v437
  %v439 = vrot.slane %v220, 1
  %v440 = vrot.slane %v221, 1
  %v441 = vsel %vm403, %v439, %v440
  %v442 = vrot.slane %v222, 1
  %v443 = vsel %vm403, %v440, %v442
  %v444 = vrot.slane %v223, 1
  %v445 = vrot.slane %v224, 1
  %v446 = vsel %vm403, %v444, %v445
  %v447 = vrot.slane %v225, 1
  %v448 = vsel %vm403, %v445, %v447
  %v449 = vrot.slane %v226, 1
  %v450 = vrot.slane %v227, 1
  %v451 = vsel %vm403, %v449, %v450
  %v452 = vrot.slane %v228, 1
  %v453 = vsel %vm403, %v450, %v452
  %v454 = vrot.slane %v229, 1
  %v455 = vrot.slane %v230, 1
  %v456 = vsel %vm403, %v454, %v455
  %v457 = vrot.slane %v231, 1
  %v458 = vsel %vm403, %v455, %v457
  %v459 = vrot.slane %v232, 1
  %v460 = vrot.slane %v233, 1
  %v461 = vsel %vm403, %v459, %v460
  %v462 = vrot.slane %v234, 1
  %v463 = vsel %vm403, %v460, %v462
  %v464 = vrot.slane %v235, 1
  %v465 = vrot.slane %v236, 1
  %v466 = vsel %vm403, %v464, %v465
  %v467 = vrot.slane %v237, 1
  %v468 = vsel %vm403, %v465, %v467
  %v469 = vrot.slane %v238, 1
  %v470 = vrot.slane %v239, 1
  %v471 = vsel %vm403, %v469, %v470
  %v472 = vrot.slane %v240, 1
  %v473 = vsel %vm403, %v470, %v472
  %v474 = vrot.slane %v241, 1
  %v475 = vrot.slane %v242, 1
  %v476 = vsel %vm403, %v474, %v475
  %v477 = vrot.slane %v243, 1
  %v478 = vsel %vm403, %v475, %v477
  %v479 = vrot.slane %v244, 1
  %v480 = vrot.slane %v245, 1
  %v481 = vsel %vm403, %v479, %v480
  %v482 = vrot.slane %v246, 1
  %v483 = vsel %vm403, %v480, %v482
  %v484 = vrot.slane %v253, 1
  %v485 = vrot.slane %v254, 1
  %v486 = vsel %vm403, %v484, %v485
  %v487 = vrot.slane %v255, 1
  %v488 = vsel %vm403, %v485, %v487
  %v489 = vrot.slane %v256, 1
  %v490 = vrot.slane %v257, 1
  %v491 = vsel %vm403, %v489, %v490
  %v492 = vrot.slane %v258, 1
  %v493 = vsel %vm403, %v490, %v492
  %v494 = vrot.slane %v259, 1
  %v495 = vrot.slane %v260, 1
  %v496 = vsel %vm403, %v494, %v495
  %v497 = vrot.slane %v261, 1
  %v498 = vsel %vm403, %v495, %v497
  %v499 = vrot.slane %v262, 1
  %v500 = vrot.slane %v263, 1
  %v501 = vsel %vm403, %v499, %v500
  %v502 = vrot.slane %v264, 1
  %v503 = vsel %vm403, %v500, %v502
  %v504 = vrot.slane %v265, 1
  %v505 = vrot.slane %v266, 1
  %v506 = vsel %vm403, %v504, %v505
  %v507 = vrot.slane %v267, 1
  %v508 = vsel %vm403, %v505, %v507
  %v509 = vrot.slane %v268, 1
  %v510 = vrot.slane %v269, 1
  %v511 = vsel %vm403, %v509, %v510
  %v512 = vrot.slane %v270, 1
  %v513 = vsel %vm403, %v510, %v512
  %v514 = vrot.slane %v271, 1
  %v515 = vrot.slane %v272, 1
  %v516 = vsel %vm403, %v514, %v515
  %v517 = vrot.slane %v273, 1
  %v518 = vsel %vm403, %v515, %v517
  %v519 = vrot.slane %v274, 1
  %v520 = vrot.slane %v275, 1
  %v521 = vsel %vm403, %v519, %v520
  %v522 = vrot.slane %v276, 1
  %v523 = vsel %vm403, %v520, %v522
  %v524 = vrot.slane %v277, 1
  %v525 = vrot.slane %v278, 1
  %v526 = vsel %vm403, %v524, %v525
  %v527 = vrot.slane %v279, 1
  %v528 = vsel %vm403, %v525, %v527
  %v529 = vrot.slane %v280, 1
  %v530 = vrot.slane %v281, 1
  %v531 = vsel %vm403, %v529, %v530
  %v532 = vrot.slane %v282, 1
  %v533 = vsel %vm403, %v530, %v532
  %v534 = vrot.slane %v283, 1
  %v535 = vrot.slane %v284, 1
  %v536 = vsel %vm403, %v534, %v535
  %v537 = vrot.slane %v285, 1
  %v538 = vsel %vm403, %v535, %v537
  %v539 = vrot.slane %v286, 1
  %v540 = vrot.slane %v287, 1
  %v541 = vsel %vm403, %v539, %v540
  %v542 = vrot.slane %v288, 1
  %v543 = vsel %vm403, %v540, %v542
  %v544 = vrot.slane %v289, 1
  %v545 = vrot.slane %v290, 1
  %v546 = vsel %vm403, %v544, %v545
  %v547 = vrot.slane %v291, 1
  %v548 = vsel %vm403, %v545, %v547
  %v549 = vrot.slane %v292, 1
  %v550 = vrot.slane %v293, 1
  %v551 = vsel %vm403, %v549, %v550
  %v552 = vrot.slane %v294, 1
  %v553 = vsel %vm403, %v550, %v552
  %v554 = vrot.slane %v295, 1
  %v555 = vrot.slane %v296, 1
  %v556 = vsel %vm403, %v554, %v555
  %v557 = vrot.slane %v297, 1
  %v558 = vsel %vm403, %v555, %v557
  %v559 = vrot.slane %v298, 1
  %v560 = vrot.slane %v299, 1
  %v561 = vsel %vm403, %v559, %v560
  %v562 = vrot.slane %v300, 1
  %v563 = vsel %vm403, %v560, %v562
  %564 = vrot.lane.b32.xlu0 %v406, 16
  %v565 = vpop.permute.xlu0 %564
  %566 = vrot.lane.b32.xlu0 %v408, 16
  %v567 = vpop.permute.xlu0 %566
  %568 = vrot.lane.b32.xlu0 %v411, 16
  %v569 = vpop.permute.xlu0 %568
  %570 = vrot.lane.b32.xlu0 %v413, 16
  %v571 = vpop.permute.xlu0 %570
  %572 = vrot.lane.b32.xlu0 %v416, 16
  %v573 = vpop.permute.xlu0 %572
  %574 = vrot.lane.b32.xlu0 %v418, 16
  %v575 = vpop.permute.xlu0 %574
  %576 = vrot.lane.b32.xlu0 %v421, 16
  %v577 = vpop.permute.xlu0 %576
  %578 = vrot.lane.b32.xlu0 %v423, 16
  %v579 = vpop.permute.xlu0 %578
  %580 = vrot.lane.b32.xlu0 %v426, 16
  %v581 = vpop.permute.xlu0 %580
  %582 = vrot.lane.b32.xlu0 %v428, 16
  %v583 = vpop.permute.xlu0 %582
  %584 = vrot.lane.b32.xlu0 %v431, 16
  %v585 = vpop.permute.xlu0 %584
  %586 = vrot.lane.b32.xlu0 %v433, 16
  %v587 = vpop.permute.xlu0 %586
  %588 = vrot.lane.b32.xlu0 %v436, 16
  %v589 = vpop.permute.xlu0 %588
  %590 = vrot.lane.b32.xlu0 %v438, 16
  %v591 = vpop.permute.xlu0 %590
  %592 = vrot.lane.b32.xlu0 %v441, 16
  %v593 = vpop.permute.xlu0 %592
  %594 = vrot.lane.b32.xlu0 %v443, 16
  %v595 = vpop.permute.xlu0 %594
  %596 = vrot.lane.b32.xlu0 %v446, 16
  %v597 = vpop.permute.xlu0 %596
  %598 = vrot.lane.b32.xlu0 %v448, 16
  %v599 = vpop.permute.xlu0 %598
  %600 = vrot.lane.b32.xlu0 %v451, 16
  %v601 = vpop.permute.xlu0 %600
  %602 = vrot.lane.b32.xlu0 %v453, 16
  %v603 = vpop.permute.xlu0 %602
  %604 = vrot.lane.b32.xlu0 %v456, 16
  %v605 = vpop.permute.xlu0 %604
  %606 = vrot.lane.b32.xlu0 %v458, 16
  %v607 = vpop.permute.xlu0 %606
  %608 = vrot.lane.b32.xlu0 %v461, 16
  %v609 = vpop.permute.xlu0 %608
  %610 = vrot.lane.b32.xlu0 %v463, 16
  %v611 = vpop.permute.xlu0 %610
  %612 = vrot.lane.b32.xlu0 %v466, 16
  %v613 = vpop.permute.xlu0 %612
  %614 = vrot.lane.b32.xlu0 %v468, 16
  %v615 = vpop.permute.xlu0 %614
  %616 = vrot.lane.b32.xlu0 %v471, 16
  %v617 = vpop.permute.xlu0 %616
  %618 = vrot.lane.b32.xlu0 %v473, 16
  %v619 = vpop.permute.xlu0 %618
  %620 = vrot.lane.b32.xlu0 %v476, 16
  %v621 = vpop.permute.xlu0 %620
  %622 = vrot.lane.b32.xlu0 %v478, 16
  %v623 = vpop.permute.xlu0 %622
  %624 = vrot.lane.b32.xlu0 %v481, 16
  %v625 = vpop.permute.xlu0 %624
  %626 = vrot.lane.b32.xlu0 %v483, 16
  %v627 = vpop.permute.xlu0 %626
  %628 = vrot.lane.b32.xlu0 %v486, 16
  %v629 = vpop.permute.xlu0 %628
  %630 = vrot.lane.b32.xlu0 %v488, 16
  %v631 = vpop.permute.xlu0 %630
  %632 = vrot.lane.b32.xlu0 %v491, 16
  %v633 = vpop.permute.xlu0 %632
  %634 = vrot.lane.b32.xlu0 %v493, 16
  %v635 = vpop.permute.xlu0 %634
  %636 = vrot.lane.b32.xlu0 %v496, 16
  %v637 = vpop.permute.xlu0 %636
  %638 = vrot.lane.b32.xlu0 %v498, 16
  %v639 = vpop.permute.xlu0 %638
  %640 = vrot.lane.b32.xlu0 %v501, 16
  %v641 = vpop.permute.xlu0 %640
  %642 = vrot.lane.b32.xlu0 %v503, 16
  %v643 = vpop.permute.xlu0 %642
  %644 = vrot.lane.b32.xlu0 %v506, 16
  %v645 = vpop.permute.xlu0 %644
  %646 = vrot.lane.b32.xlu0 %v508, 16
  %v647 = vpop.permute.xlu0 %646
  %648 = vrot.lane.b32.xlu0 %v511, 16
  %v649 = vpop.permute.xlu0 %648
  %650 = vrot.lane.b32.xlu0 %v513, 16
  %v651 = vpop.permute.xlu0 %650
  %652 = vrot.lane.b32.xlu0 %v516, 16
  %v653 = vpop.permute.xlu0 %652
  %654 = vrot.lane.b32.xlu0 %v518, 16
  %v655 = vpop.permute.xlu0 %654
  %656 = vrot.lane.b32.xlu0 %v521, 16
  %v657 = vpop.permute.xlu0 %656
  %658 = vrot.lane.b32.xlu0 %v523, 16
  %v659 = vpop.permute.xlu0 %658
  %660 = vrot.lane.b32.xlu0 %v526, 16
  %v661 = vpop.permute.xlu0 %660
  %662 = vrot.lane.b32.xlu0 %v528, 16
  %v663 = vpop.permute.xlu0 %662
  %664 = vrot.lane.b32.xlu0 %v531, 16
  %v665 = vpop.permute.xlu0 %664
  %666 = vrot.lane.b32.xlu0 %v533, 16
  %v667 = vpop.permute.xlu0 %666
  %668 = vrot.lane.b32.xlu0 %v536, 16
  %v669 = vpop.permute.xlu0 %668
  %670 = vrot.lane.b32.xlu0 %v538, 16
  %v671 = vpop.permute.xlu0 %670
  %672 = vrot.lane.b32.xlu0 %v541, 16
  %v673 = vpop.permute.xlu0 %672
  %674 = vrot.lane.b32.xlu0 %v543, 16
  %v675 = vpop.permute.xlu0 %674
  %676 = vrot.lane.b32.xlu0 %v546, 16
  %v677 = vpop.permute.xlu0 %676
  %678 = vrot.lane.b32.xlu0 %v548, 16
  %v679 = vpop.permute.xlu0 %678
  %680 = vrot.lane.b32.xlu0 %v551, 16
  %v681 = vpop.permute.xlu0 %680
  %682 = vrot.lane.b32.xlu0 %v553, 16
  %v683 = vpop.permute.xlu0 %682
  %684 = vrot.lane.b32.xlu0 %v556, 16
  %v685 = vpop.permute.xlu0 %684
  %686 = vrot.lane.b32.xlu0 %v558, 16
  %v687 = vpop.permute.xlu0 %686
  %688 = vrot.lane.b32.xlu0 %v561, 16
  %v689 = vpop.permute.xlu0 %688
  %690 = vrot.lane.b32.xlu0 %v563, 16
  %v691 = vpop.permute.xlu0 %690
  %vm756 = vcmask 1045504
  %v757 = vrot.slane %v199, 2
  %v758 = vrot.slane %v200, 2
  %v759 = vsel %vm756, %v757, %v758
  %v760 = vrot.slane %v201, 2
  %v761 = vsel %vm756, %v758, %v760
  %v762 = vrot.slane %v202, 2
  %v763 = vrot.slane %v203, 2
  %v764 = vsel %vm756, %v762, %v763
  %v765 = vrot.slane %v204, 2
  %v766 = vsel %vm756, %v763, %v765
  %v767 = vrot.slane %v205, 2
  %v768 = vrot.slane %v206, 2
  %v769 = vsel %vm756, %v767, %v768
  %v770 = vrot.slane %v207, 2
  %v771 = vsel %vm756, %v768, %v770
  %v772 = vrot.slane %v208, 2
  %v773 = vrot.slane %v209, 2
  %v774 = vsel %vm756, %v772, %v773
  %v775 = vrot.slane %v210, 2
  %v776 = vsel %vm756, %v773, %v775
  %v777 = vrot.slane %v211, 2
  %v778 = vrot.slane %v212, 2
  %v779 = vsel %vm756, %v777, %v778
  %v780 = vrot.slane %v213, 2
  %v781 = vsel %vm756, %v778, %v780
  %v782 = vrot.slane %v214, 2
  %v783 = vrot.slane %v215, 2
  %v784 = vsel %vm756, %v782, %v783
  %v785 = vrot.slane %v216, 2
  %v786 = vsel %vm756, %v783, %v785
  %v787 = vrot.slane %v217, 2
  %v788 = vrot.slane %v218, 2
  %v789 = vsel %vm756, %v787, %v788
  %v790 = vrot.slane %v219, 2
  %v791 = vsel %vm756, %v788, %v790
  %v792 = vrot.slane %v220, 2
  %v793 = vrot.slane %v221, 2
  %v794 = vsel %vm756, %v792, %v793
  %v795 = vrot.slane %v222, 2
  %v796 = vsel %vm756, %v793, %v795
  %v797 = vrot.slane %v223, 2
  %v798 = vrot.slane %v224, 2
  %v799 = vsel %vm756, %v797, %v798
  %v800 = vrot.slane %v225, 2
  %v801 = vsel %vm756, %v798, %v800
  %v802 = vrot.slane %v226, 2
  %v803 = vrot.slane %v227, 2
  %v804 = vsel %vm756, %v802, %v803
  %v805 = vrot.slane %v228, 2
  %v806 = vsel %vm756, %v803, %v805
  %v807 = vrot.slane %v229, 2
  %v808 = vrot.slane %v230, 2
  %v809 = vsel %vm756, %v807, %v808
  %v810 = vrot.slane %v231, 2
  %v811 = vsel %vm756, %v808, %v810
  %v812 = vrot.slane %v232, 2
  %v813 = vrot.slane %v233, 2
  %v814 = vsel %vm756, %v812, %v813
  %v815 = vrot.slane %v234, 2
  %v816 = vsel %vm756, %v813, %v815
  %v817 = vrot.slane %v235, 2
  %v818 = vrot.slane %v236, 2
  %v819 = vsel %vm756, %v817, %v818
  %v820 = vrot.slane %v237, 2
  %v821 = vsel %vm756, %v818, %v820
  %v822 = vrot.slane %v238, 2
  %v823 = vrot.slane %v239, 2
  %v824 = vsel %vm756, %v822, %v823
  %v825 = vrot.slane %v240, 2
  %v826 = vsel %vm756, %v823, %v825
  %v827 = vrot.slane %v241, 2
  %v828 = vrot.slane %v242, 2
  %v829 = vsel %vm756, %v827, %v828
  %v830 = vrot.slane %v243, 2
  %v831 = vsel %vm756, %v828, %v830
  %v832 = vrot.slane %v244, 2
  %v833 = vrot.slane %v245, 2
  %v834 = vsel %vm756, %v832, %v833
  %v835 = vrot.slane %v246, 2
  %v836 = vsel %vm756, %v833, %v835
  %v837 = vrot.slane %v253, 2
  %v838 = vrot.slane %v254, 2
  %v839 = vsel %vm756, %v837, %v838
  %v840 = vrot.slane %v255, 2
  %v841 = vsel %vm756, %v838, %v840
  %v842 = vrot.slane %v256, 2
  %v843 = vrot.slane %v257, 2
  %v844 = vsel %vm756, %v842, %v843
  %v845 = vrot.slane %v258, 2
  %v846 = vsel %vm756, %v843, %v845
  %v847 = vrot.slane %v259, 2
  %v848 = vrot.slane %v260, 2
  %v849 = vsel %vm756, %v847, %v848
  %v850 = vrot.slane %v261, 2
  %v851 = vsel %vm756, %v848, %v850
  %v852 = vrot.slane %v262, 2
  %v853 = vrot.slane %v263, 2
  %v854 = vsel %vm756, %v852, %v853
  %v855 = vrot.slane %v264, 2
  %v856 = vsel %vm756, %v853, %v855
  %v857 = vrot.slane %v265, 2
  %v858 = vrot.slane %v266, 2
  %v859 = vsel %vm756, %v857, %v858
  %v860 = vrot.slane %v267, 2
  %v861 = vsel %vm756, %v858, %v860
  %v862 = vrot.slane %v268, 2
  %v863 = vrot.slane %v269, 2
  %v864 = vsel %vm756, %v862, %v863
  %v865 = vrot.slane %v270, 2
  %v866 = vsel %vm756, %v863, %v865
  %v867 = vrot.slane %v271, 2
  %v868 = vrot.slane %v272, 2
  %v869 = vsel %vm756, %v867, %v868
  %v870 = vrot.slane %v273, 2
  %v871 = vsel %vm756, %v868, %v870
  %v872 = vrot.slane %v274, 2
  %v873 = vrot.slane %v275, 2
  %v874 = vsel %vm756, %v872, %v873
  %v875 = vrot.slane %v276, 2
  %v876 = vsel %vm756, %v873, %v875
  %v877 = vrot.slane %v277, 2
  %v878 = vrot.slane %v278, 2
  %v879 = vsel %vm756, %v877, %v878
  %v880 = vrot.slane %v279, 2
  %v881 = vsel %vm756, %v878, %v880
  %v882 = vrot.slane %v280, 2
  %v883 = vrot.slane %v281, 2
  %v884 = vsel %vm756, %v882, %v883
  %v885 = vrot.slane %v282, 2
  %v886 = vsel %vm756, %v883, %v885
  %v887 = vrot.slane %v283, 2
  %v888 = vrot.slane %v284, 2
  %v889 = vsel %vm756, %v887, %v888
  %v890 = vrot.slane %v285, 2
  %v891 = vsel %vm756, %v888, %v890
  %v892 = vrot.slane %v286, 2
  %v893 = vrot.slane %v287, 2
  %v894 = vsel %vm756, %v892, %v893
  %v895 = vrot.slane %v288, 2
  %v896 = vsel %vm756, %v893, %v895
  %v897 = vrot.slane %v289, 2
  %v898 = vrot.slane %v290, 2
  %v899 = vsel %vm756, %v897, %v898
  %v900 = vrot.slane %v291, 2
  %v901 = vsel %vm756, %v898, %v900
  %v902 = vrot.slane %v292, 2
  %v903 = vrot.slane %v293, 2
  %v904 = vsel %vm756, %v902, %v903
  %v905 = vrot.slane %v294, 2
  %v906 = vsel %vm756, %v903, %v905
  %v907 = vrot.slane %v295, 2
  %v908 = vrot.slane %v296, 2
  %v909 = vsel %vm756, %v907, %v908
  %v910 = vrot.slane %v297, 2
  %v911 = vsel %vm756, %v908, %v910
  %v912 = vrot.slane %v298, 2
  %v913 = vrot.slane %v299, 2
  %v914 = vsel %vm756, %v912, %v913
  %v915 = vrot.slane %v300, 2
  %v916 = vsel %vm756, %v913, %v915
  %917 = vrot.lane.b32.xlu0 %v759, 32
  %v918 = vpop.permute.xlu0 %917
  %919 = vrot.lane.b32.xlu0 %v761, 32
  %v920 = vpop.permute.xlu0 %919
  %921 = vrot.lane.b32.xlu0 %v764, 32
  %v922 = vpop.permute.xlu0 %921
  %923 = vrot.lane.b32.xlu0 %v766, 32
  %v924 = vpop.permute.xlu0 %923
  %925 = vrot.lane.b32.xlu0 %v769, 32
  %v926 = vpop.permute.xlu0 %925
  %927 = vrot.lane.b32.xlu0 %v771, 32
  %v928 = vpop.permute.xlu0 %927
  %929 = vrot.lane.b32.xlu0 %v774, 32
  %v930 = vpop.permute.xlu0 %929
  %931 = vrot.lane.b32.xlu0 %v776, 32
  %v932 = vpop.permute.xlu0 %931
  %933 = vrot.lane.b32.xlu0 %v779, 32
  %v934 = vpop.permute.xlu0 %933
  %935 = vrot.lane.b32.xlu0 %v781, 32
  %v936 = vpop.permute.xlu0 %935
  %937 = vrot.lane.b32.xlu0 %v784, 32
  %v938 = vpop.permute.xlu0 %937
  %939 = vrot.lane.b32.xlu0 %v786, 32
  %v940 = vpop.permute.xlu0 %939
  %941 = vrot.lane.b32.xlu0 %v789, 32
  %v942 = vpop.permute.xlu0 %941
  %943 = vrot.lane.b32.xlu0 %v791, 32
  %v944 = vpop.permute.xlu0 %943
  %945 = vrot.lane.b32.xlu0 %v794, 32
  %v946 = vpop.permute.xlu0 %945
  %947 = vrot.lane.b32.xlu0 %v796, 32
  %v948 = vpop.permute.xlu0 %947
  %949 = vrot.lane.b32.xlu0 %v799, 32
  %v950 = vpop.permute.xlu0 %949
  %951 = vrot.lane.b32.xlu0 %v801, 32
  %v952 = vpop.permute.xlu0 %951
  %953 = vrot.lane.b32.xlu0 %v804, 32
  %v954 = vpop.permute.xlu0 %953
  %955 = vrot.lane.b32.xlu0 %v806, 32
  %v956 = vpop.permute.xlu0 %955
  %957 = vrot.lane.b32.xlu0 %v809, 32
  %v958 = vpop.permute.xlu0 %957
  %959 = vrot.lane.b32.xlu0 %v811, 32
  %v960 = vpop.permute.xlu0 %959
  %961 = vrot.lane.b32.xlu0 %v814, 32
  %v962 = vpop.permute.xlu0 %961
  %963 = vrot.lane.b32.xlu0 %v816, 32
  %v964 = vpop.permute.xlu0 %963
  %965 = vrot.lane.b32.xlu0 %v819, 32
  %v966 = vpop.permute.xlu0 %965
  %967 = vrot.lane.b32.xlu0 %v821, 32
  %v968 = vpop.permute.xlu0 %967
  %969 = vrot.lane.b32.xlu0 %v824, 32
  %v970 = vpop.permute.xlu0 %969
  %971 = vrot.lane.b32.xlu0 %v826, 32
  %v972 = vpop.permute.xlu0 %971
  %973 = vrot.lane.b32.xlu0 %v829, 32
  %v974 = vpop.permute.xlu0 %973
  %975 = vrot.lane.b32.xlu0 %v831, 32
  %v976 = vpop.permute.xlu0 %975
  %977 = vrot.lane.b32.xlu0 %v834, 32
  %v978 = vpop.permute.xlu0 %977
  %979 = vrot.lane.b32.xlu0 %v836, 32
  %v980 = vpop.permute.xlu0 %979
  %981 = vrot.lane.b32.xlu0 %v839, 32
  %v982 = vpop.permute.xlu0 %981
  %983 = vrot.lane.b32.xlu0 %v841, 32
  %v984 = vpop.permute.xlu0 %983
  %985 = vrot.lane.b32.xlu0 %v844, 32
  %v986 = vpop.permute.xlu0 %985
  %987 = vrot.lane.b32.xlu0 %v846, 32
  %v988 = vpop.permute.xlu0 %987
  %989 = vrot.lane.b32.xlu0 %v849, 32
  %v990 = vpop.permute.xlu0 %989
  %991 = vrot.lane.b32.xlu0 %v851, 32
  %v992 = vpop.permute.xlu0 %991
  %993 = vrot.lane.b32.xlu0 %v854, 32
  %v994 = vpop.permute.xlu0 %993
  %995 = vrot.lane.b32.xlu0 %v856, 32
  %v996 = vpop.permute.xlu0 %995
  %997 = vrot.lane.b32.xlu0 %v859, 32
  %v998 = vpop.permute.xlu0 %997
  %999 = vrot.lane.b32.xlu0 %v861, 32
  %v1000 = vpop.permute.xlu0 %999
  %1001 = vrot.lane.b32.xlu0 %v864, 32
  %v1002 = vpop.permute.xlu0 %1001
  %1003 = vrot.lane.b32.xlu0 %v866, 32
  %v1004 = vpop.permute.xlu0 %1003
  %1005 = vrot.lane.b32.xlu0 %v869, 32
  %v1006 = vpop.permute.xlu0 %1005
  %1007 = vrot.lane.b32.xlu0 %v871, 32
  %v1008 = vpop.permute.xlu0 %1007
  %1009 = vrot.lane.b32.xlu0 %v874, 32
  %v1010 = vpop.permute.xlu0 %1009
  %1011 = vrot.lane.b32.xlu0 %v876, 32
  %v1012 = vpop.permute.xlu0 %1011
  %1013 = vrot.lane.b32.xlu0 %v879, 32
  %v1014 = vpop.permute.xlu0 %1013
  %1015 = vrot.lane.b32.xlu0 %v881, 32
  %v1016 = vpop.permute.xlu0 %1015
  %1017 = vrot.lane.b32.xlu0 %v884, 32
  %v1018 = vpop.permute.xlu0 %1017
  %1019 = vrot.lane.b32.xlu0 %v886, 32
  %v1020 = vpop.permute.xlu0 %1019
  %1021 = vrot.lane.b32.xlu0 %v889, 32
  %v1022 = vpop.permute.xlu0 %1021
  %1023 = vrot.lane.b32.xlu0 %v891, 32
  %v1024 = vpop.permute.xlu0 %1023
  %1025 = vrot.lane.b32.xlu0 %v894, 32
  %v1026 = vpop.permute.xlu0 %1025
  %1027 = vrot.lane.b32.xlu0 %v896, 32
  %v1028 = vpop.permute.xlu0 %1027
  %1029 = vrot.lane.b32.xlu0 %v899, 32
  %v1030 = vpop.permute.xlu0 %1029
  %1031 = vrot.lane.b32.xlu0 %v901, 32
  %v1032 = vpop.permute.xlu0 %1031
  %1033 = vrot.lane.b32.xlu0 %v904, 32
  %v1034 = vpop.permute.xlu0 %1033
  %1035 = vrot.lane.b32.xlu0 %v906, 32
  %v1036 = vpop.permute.xlu0 %1035
  %1037 = vrot.lane.b32.xlu0 %v909, 32
  %v1038 = vpop.permute.xlu0 %1037
  %1039 = vrot.lane.b32.xlu0 %v911, 32
  %v1040 = vpop.permute.xlu0 %1039
  %1041 = vrot.lane.b32.xlu0 %v914, 32
  %v1042 = vpop.permute.xlu0 %1041
  %1043 = vrot.lane.b32.xlu0 %v916, 32
  %v1044 = vpop.permute.xlu0 %1043
  %1113 = vrot.lane.b32.xlu0 %v202, 48
  %v1114 = vpop.permute.xlu0 %1113
  %1115 = vrot.lane.b32.xlu0 %v203, 48
  %v1116 = vpop.permute.xlu0 %1115
  %1117 = vrot.lane.b32.xlu0 %v205, 48
  %v1118 = vpop.permute.xlu0 %1117
  %1119 = vrot.lane.b32.xlu0 %v206, 48
  %v1120 = vpop.permute.xlu0 %1119
  %1121 = vrot.lane.b32.xlu0 %v208, 48
  %v1122 = vpop.permute.xlu0 %1121
  %1123 = vrot.lane.b32.xlu0 %v209, 48
  %v1124 = vpop.permute.xlu0 %1123
  %1125 = vrot.lane.b32.xlu0 %v211, 48
  %v1126 = vpop.permute.xlu0 %1125
  %1127 = vrot.lane.b32.xlu0 %v212, 48
  %v1128 = vpop.permute.xlu0 %1127
  %1129 = vrot.lane.b32.xlu0 %v214, 48
  %v1130 = vpop.permute.xlu0 %1129
  %1131 = vrot.lane.b32.xlu0 %v215, 48
  %v1132 = vpop.permute.xlu0 %1131
  %1133 = vrot.lane.b32.xlu0 %v217, 48
  %v1134 = vpop.permute.xlu0 %1133
  %1135 = vrot.lane.b32.xlu0 %v218, 48
  %v1136 = vpop.permute.xlu0 %1135
  %1137 = vrot.lane.b32.xlu0 %v220, 48
  %v1138 = vpop.permute.xlu0 %1137
  %1139 = vrot.lane.b32.xlu0 %v221, 48
  %v1140 = vpop.permute.xlu0 %1139
  %1141 = vrot.lane.b32.xlu0 %v223, 48
  %v1142 = vpop.permute.xlu0 %1141
  %1143 = vrot.lane.b32.xlu0 %v224, 48
  %v1144 = vpop.permute.xlu0 %1143
  %1145 = vrot.lane.b32.xlu0 %v226, 48
  %v1146 = vpop.permute.xlu0 %1145
  %1147 = vrot.lane.b32.xlu0 %v227, 48
  %v1148 = vpop.permute.xlu0 %1147
  %1149 = vrot.lane.b32.xlu0 %v229, 48
  %v1150 = vpop.permute.xlu0 %1149
  %1151 = vrot.lane.b32.xlu0 %v230, 48
  %v1152 = vpop.permute.xlu0 %1151
  %1153 = vrot.lane.b32.xlu0 %v232, 48
  %v1154 = vpop.permute.xlu0 %1153
  %1155 = vrot.lane.b32.xlu0 %v233, 48
  %v1156 = vpop.permute.xlu0 %1155
  %1157 = vrot.lane.b32.xlu0 %v235, 48
  %v1158 = vpop.permute.xlu0 %1157
  %1159 = vrot.lane.b32.xlu0 %v236, 48
  %v1160 = vpop.permute.xlu0 %1159
  %1161 = vrot.lane.b32.xlu0 %v238, 48
  %v1162 = vpop.permute.xlu0 %1161
  %1163 = vrot.lane.b32.xlu0 %v239, 48
  %v1164 = vpop.permute.xlu0 %1163
  %1165 = vrot.lane.b32.xlu0 %v241, 48
  %v1166 = vpop.permute.xlu0 %1165
  %1167 = vrot.lane.b32.xlu0 %v242, 48
  %v1168 = vpop.permute.xlu0 %1167
  %1169 = vrot.lane.b32.xlu0 %v244, 48
  %v1170 = vpop.permute.xlu0 %1169
  %1171 = vrot.lane.b32.xlu0 %v245, 48
  %v1172 = vpop.permute.xlu0 %1171
  %1173 = vrot.lane.b32.xlu0 %v247, 48
  %v1174 = vpop.permute.xlu0 %1173
  %1175 = vrot.lane.b32.xlu0 %v248, 48
  %v1176 = vpop.permute.xlu0 %1175
  %1177 = vrot.lane.b32.xlu0 %v256, 48
  %v1178 = vpop.permute.xlu0 %1177
  %1179 = vrot.lane.b32.xlu0 %v257, 48
  %v1180 = vpop.permute.xlu0 %1179
  %1181 = vrot.lane.b32.xlu0 %v259, 48
  %v1182 = vpop.permute.xlu0 %1181
  %1183 = vrot.lane.b32.xlu0 %v260, 48
  %v1184 = vpop.permute.xlu0 %1183
  %1185 = vrot.lane.b32.xlu0 %v262, 48
  %v1186 = vpop.permute.xlu0 %1185
  %1187 = vrot.lane.b32.xlu0 %v263, 48
  %v1188 = vpop.permute.xlu0 %1187
  %1189 = vrot.lane.b32.xlu0 %v265, 48
  %v1190 = vpop.permute.xlu0 %1189
  %1191 = vrot.lane.b32.xlu0 %v266, 48
  %v1192 = vpop.permute.xlu0 %1191
  %1193 = vrot.lane.b32.xlu0 %v268, 48
  %v1194 = vpop.permute.xlu0 %1193
  %1195 = vrot.lane.b32.xlu0 %v269, 48
  %v1196 = vpop.permute.xlu0 %1195
  %1197 = vrot.lane.b32.xlu0 %v271, 48
  %v1198 = vpop.permute.xlu0 %1197
  %1199 = vrot.lane.b32.xlu0 %v272, 48
  %v1200 = vpop.permute.xlu0 %1199
  %1201 = vrot.lane.b32.xlu0 %v274, 48
  %v1202 = vpop.permute.xlu0 %1201
  %1203 = vrot.lane.b32.xlu0 %v275, 48
  %v1204 = vpop.permute.xlu0 %1203
  %1205 = vrot.lane.b32.xlu0 %v277, 48
  %v1206 = vpop.permute.xlu0 %1205
  %1207 = vrot.lane.b32.xlu0 %v278, 48
  %v1208 = vpop.permute.xlu0 %1207
  %1209 = vrot.lane.b32.xlu0 %v280, 48
  %v1210 = vpop.permute.xlu0 %1209
  %1211 = vrot.lane.b32.xlu0 %v281, 48
  %v1212 = vpop.permute.xlu0 %1211
  %1213 = vrot.lane.b32.xlu0 %v283, 48
  %v1214 = vpop.permute.xlu0 %1213
  %1215 = vrot.lane.b32.xlu0 %v284, 48
  %v1216 = vpop.permute.xlu0 %1215
  %1217 = vrot.lane.b32.xlu0 %v286, 48
  %v1218 = vpop.permute.xlu0 %1217
  %1219 = vrot.lane.b32.xlu0 %v287, 48
  %v1220 = vpop.permute.xlu0 %1219
  %1221 = vrot.lane.b32.xlu0 %v289, 48
  %v1222 = vpop.permute.xlu0 %1221
  %1223 = vrot.lane.b32.xlu0 %v290, 48
  %v1224 = vpop.permute.xlu0 %1223
  %1225 = vrot.lane.b32.xlu0 %v292, 48
  %v1226 = vpop.permute.xlu0 %1225
  %1227 = vrot.lane.b32.xlu0 %v293, 48
  %v1228 = vpop.permute.xlu0 %1227
  %1229 = vrot.lane.b32.xlu0 %v295, 48
  %v1230 = vpop.permute.xlu0 %1229
  %1231 = vrot.lane.b32.xlu0 %v296, 48
  %v1232 = vpop.permute.xlu0 %1231
  %1233 = vrot.lane.b32.xlu0 %v298, 48
  %v1234 = vpop.permute.xlu0 %1233
  %1235 = vrot.lane.b32.xlu0 %v299, 48
  %v1236 = vpop.permute.xlu0 %1235
  %1237 = vrot.lane.b32.xlu0 %v301, 48
  %v1238 = vpop.permute.xlu0 %1237
  %1239 = vrot.lane.b32.xlu0 %v302, 48
  %v1240 = vpop.permute.xlu0 %1239
  %v1307 = vrot.slane %v247, 1
  %v1308 = vrot.slane %v248, 1
  %v1309 = vsel %vm403, %v1307, %v1308
  %v1310 = vrot.slane %v249, 1
  %v1311 = vsel %vm403, %v1308, %v1310
  %v1312 = vrot.slane %v301, 1
  %v1313 = vrot.slane %v302, 1
  %v1314 = vsel %vm403, %v1312, %v1313
  %v1315 = vrot.slane %v303, 1
  %v1316 = vsel %vm403, %v1313, %v1315
  %1317 = vrot.lane.b32.xlu0 %v411, 64
  %v1318 = vpop.permute.xlu0 %1317
  %1319 = vrot.lane.b32.xlu0 %v413, 64
  %v1320 = vpop.permute.xlu0 %1319
  %1321 = vrot.lane.b32.xlu0 %v416, 64
  %v1322 = vpop.permute.xlu0 %1321
  %1323 = vrot.lane.b32.xlu0 %v418, 64
  %v1324 = vpop.permute.xlu0 %1323
  %1325 = vrot.lane.b32.xlu0 %v421, 64
  %v1326 = vpop.permute.xlu0 %1325
  %1327 = vrot.lane.b32.xlu0 %v423, 64
  %v1328 = vpop.permute.xlu0 %1327
  %1329 = vrot.lane.b32.xlu0 %v426, 64
  %v1330 = vpop.permute.xlu0 %1329
  %1331 = vrot.lane.b32.xlu0 %v428, 64
  %v1332 = vpop.permute.xlu0 %1331
  %1333 = vrot.lane.b32.xlu0 %v431, 64
  %v1334 = vpop.permute.xlu0 %1333
  %1335 = vrot.lane.b32.xlu0 %v433, 64
  %v1336 = vpop.permute.xlu0 %1335
  %1337 = vrot.lane.b32.xlu0 %v436, 64
  %v1338 = vpop.permute.xlu0 %1337
  %1339 = vrot.lane.b32.xlu0 %v438, 64
  %v1340 = vpop.permute.xlu0 %1339
  %1341 = vrot.lane.b32.xlu0 %v441, 64
  %v1342 = vpop.permute.xlu0 %1341
  %1343 = vrot.lane.b32.xlu0 %v443, 64
  %v1344 = vpop.permute.xlu0 %1343
  %1345 = vrot.lane.b32.xlu0 %v446, 64
  %v1346 = vpop.permute.xlu0 %1345
  %1347 = vrot.lane.b32.xlu0 %v448, 64
  %v1348 = vpop.permute.xlu0 %1347
  %1349 = vrot.lane.b32.xlu0 %v451, 64
  %v1350 = vpop.permute.xlu0 %1349
  %1351 = vrot.lane.b32.xlu0 %v453, 64
  %v1352 = vpop.permute.xlu0 %1351
  %1353 = vrot.lane.b32.xlu0 %v456, 64
  %v1354 = vpop.permute.xlu0 %1353
  %1355 = vrot.lane.b32.xlu0 %v458, 64
  %v1356 = vpop.permute.xlu0 %1355
  %1357 = vrot.lane.b32.xlu0 %v461, 64
  %v1358 = vpop.permute.xlu0 %1357
  %1359 = vrot.lane.b32.xlu0 %v463, 64
  %v1360 = vpop.permute.xlu0 %1359
  %1361 = vrot.lane.b32.xlu0 %v466, 64
  %v1362 = vpop.permute.xlu0 %1361
  %1363 = vrot.lane.b32.xlu0 %v468, 64
  %v1364 = vpop.permute.xlu0 %1363
  %1365 = vrot.lane.b32.xlu0 %v471, 64
  %v1366 = vpop.permute.xlu0 %1365
  %1367 = vrot.lane.b32.xlu0 %v473, 64
  %v1368 = vpop.permute.xlu0 %1367
  %1369 = vrot.lane.b32.xlu0 %v476, 64
  %v1370 = vpop.permute.xlu0 %1369
  %1371 = vrot.lane.b32.xlu0 %v478, 64
  %v1372 = vpop.permute.xlu0 %1371
  %1373 = vrot.lane.b32.xlu0 %v481, 64
  %v1374 = vpop.permute.xlu0 %1373
  %1375 = vrot.lane.b32.xlu0 %v483, 64
  %v1376 = vpop.permute.xlu0 %1375
  %1377 = vrot.lane.b32.xlu0 %v1309, 64
  %v1378 = vpop.permute.xlu0 %1377
  %1379 = vrot.lane.b32.xlu0 %v1311, 64
  %v1380 = vpop.permute.xlu0 %1379
  %1381 = vrot.lane.b32.xlu0 %v491, 64
  %v1382 = vpop.permute.xlu0 %1381
  %1383 = vrot.lane.b32.xlu0 %v493, 64
  %v1384 = vpop.permute.xlu0 %1383
  %1385 = vrot.lane.b32.xlu0 %v496, 64
  %v1386 = vpop.permute.xlu0 %1385
  %1387 = vrot.lane.b32.xlu0 %v498, 64
  %v1388 = vpop.permute.xlu0 %1387
  %1389 = vrot.lane.b32.xlu0 %v501, 64
  %v1390 = vpop.permute.xlu0 %1389
  %1391 = vrot.lane.b32.xlu0 %v503, 64
  %v1392 = vpop.permute.xlu0 %1391
  %1393 = vrot.lane.b32.xlu0 %v506, 64
  %v1394 = vpop.permute.xlu0 %1393
  %1395 = vrot.lane.b32.xlu0 %v508, 64
  %v1396 = vpop.permute.xlu0 %1395
  %1397 = vrot.lane.b32.xlu0 %v511, 64
  %v1398 = vpop.permute.xlu0 %1397
  %1399 = vrot.lane.b32.xlu0 %v513, 64
  %v1400 = vpop.permute.xlu0 %1399
  %1401 = vrot.lane.b32.xlu0 %v516, 64
  %v1402 = vpop.permute.xlu0 %1401
  %1403 = vrot.lane.b32.xlu0 %v518, 64
  %v1404 = vpop.permute.xlu0 %1403
  %1405 = vrot.lane.b32.xlu0 %v521, 64
  %v1406 = vpop.permute.xlu0 %1405
  %1407 = vrot.lane.b32.xlu0 %v523, 64
  %v1408 = vpop.permute.xlu0 %1407
  %1409 = vrot.lane.b32.xlu0 %v526, 64
  %v1410 = vpop.permute.xlu0 %1409
  %1411 = vrot.lane.b32.xlu0 %v528, 64
  %v1412 = vpop.permute.xlu0 %1411
  %1413 = vrot.lane.b32.xlu0 %v531, 64
  %v1414 = vpop.permute.xlu0 %1413
  %1415 = vrot.lane.b32.xlu0 %v533, 64
  %v1416 = vpop.permute.xlu0 %1415
  %1417 = vrot.lane.b32.xlu0 %v536, 64
  %v1418 = vpop.permute.xlu0 %1417
  %1419 = vrot.lane.b32.xlu0 %v538, 64
  %v1420 = vpop.permute.xlu0 %1419
  %1421 = vrot.lane.b32.xlu0 %v541, 64
  %v1422 = vpop.permute.xlu0 %1421
  %1423 = vrot.lane.b32.xlu0 %v543, 64
  %v1424 = vpop.permute.xlu0 %1423
  %1425 = vrot.lane.b32.xlu0 %v546, 64
  %v1426 = vpop.permute.xlu0 %1425
  %1427 = vrot.lane.b32.xlu0 %v548, 64
  %v1428 = vpop.permute.xlu0 %1427
  %1429 = vrot.lane.b32.xlu0 %v551, 64
  %v1430 = vpop.permute.xlu0 %1429
  %1431 = vrot.lane.b32.xlu0 %v553, 64
  %v1432 = vpop.permute.xlu0 %1431
  %1433 = vrot.lane.b32.xlu0 %v556, 64
  %v1434 = vpop.permute.xlu0 %1433
  %1435 = vrot.lane.b32.xlu0 %v558, 64
  %v1436 = vpop.permute.xlu0 %1435
  %1437 = vrot.lane.b32.xlu0 %v561, 64
  %v1438 = vpop.permute.xlu0 %1437
  %1439 = vrot.lane.b32.xlu0 %v563, 64
  %v1440 = vpop.permute.xlu0 %1439
  %1441 = vrot.lane.b32.xlu0 %v1314, 64
  %v1442 = vpop.permute.xlu0 %1441
  %1443 = vrot.lane.b32.xlu0 %v1316, 64
  %v1444 = vpop.permute.xlu0 %1443
  %v1509 = vrot.slane %v247, 2
  %v1510 = vrot.slane %v248, 2
  %v1511 = vsel %vm756, %v1509, %v1510
  %v1512 = vrot.slane %v249, 2
  %v1513 = vsel %vm756, %v1510, %v1512
  %v1514 = vrot.slane %v301, 2
  %v1515 = vrot.slane %v302, 2
  %v1516 = vsel %vm756, %v1514, %v1515
  %v1517 = vrot.slane %v303, 2
  %v1518 = vsel %vm756, %v1515, %v1517
  %1519 = vrot.lane.b32.xlu0 %v764, 80
  %v1520 = vpop.permute.xlu0 %1519
  %1521 = vrot.lane.b32.xlu0 %v766, 80
  %v1522 = vpop.permute.xlu0 %1521
  %1523 = vrot.lane.b32.xlu0 %v769, 80
  %v1524 = vpop.permute.xlu0 %1523
  %1525 = vrot.lane.b32.xlu0 %v771, 80
  %v1526 = vpop.permute.xlu0 %1525
  %1527 = vrot.lane.b32.xlu0 %v774, 80
  %v1528 = vpop.permute.xlu0 %1527
  %1529 = vrot.lane.b32.xlu0 %v776, 80
  %v1530 = vpop.permute.xlu0 %1529
  %1531 = vrot.lane.b32.xlu0 %v779, 80
  %v1532 = vpop.permute.xlu0 %1531
  %1533 = vrot.lane.b32.xlu0 %v781, 80
  %v1534 = vpop.permute.xlu0 %1533
  %1535 = vrot.lane.b32.xlu0 %v784, 80
  %v1536 = vpop.permute.xlu0 %1535
  %1537 = vrot.lane.b32.xlu0 %v786, 80
  %v1538 = vpop.permute.xlu0 %1537
  %1539 = vrot.lane.b32.xlu0 %v789, 80
  %v1540 = vpop.permute.xlu0 %1539
  %1541 = vrot.lane.b32.xlu0 %v791, 80
  %v1542 = vpop.permute.xlu0 %1541
  %1543 = vrot.lane.b32.xlu0 %v794, 80
  %v1544 = vpop.permute.xlu0 %1543
  %1545 = vrot.lane.b32.xlu0 %v796, 80
  %v1546 = vpop.permute.xlu0 %1545
  %1547 = vrot.lane.b32.xlu0 %v799, 80
  %v1548 = vpop.permute.xlu0 %1547
  %1549 = vrot.lane.b32.xlu0 %v801, 80
  %v1550 = vpop.permute.xlu0 %1549
  %1551 = vrot.lane.b32.xlu0 %v804, 80
  %v1552 = vpop.permute.xlu0 %1551
  %1553 = vrot.lane.b32.xlu0 %v806, 80
  %v1554 = vpop.permute.xlu0 %1553
  %1555 = vrot.lane.b32.xlu0 %v809, 80
  %v1556 = vpop.permute.xlu0 %1555
  %1557 = vrot.lane.b32.xlu0 %v811, 80
  %v1558 = vpop.permute.xlu0 %1557
  %1559 = vrot.lane.b32.xlu0 %v814, 80
  %v1560 = vpop.permute.xlu0 %1559
  %1561 = vrot.lane.b32.xlu0 %v816, 80
  %v1562 = vpop.permute.xlu0 %1561
  %1563 = vrot.lane.b32.xlu0 %v819, 80
  %v1564 = vpop.permute.xlu0 %1563
  %1565 = vrot.lane.b32.xlu0 %v821, 80
  %v1566 = vpop.permute.xlu0 %1565
  %1567 = vrot.lane.b32.xlu0 %v824, 80
  %v1568 = vpop.permute.xlu0 %1567
  %1569 = vrot.lane.b32.xlu0 %v826, 80
  %v1570 = vpop.permute.xlu0 %1569
  %1571 = vrot.lane.b32.xlu0 %v829, 80
  %v1572 = vpop.permute.xlu0 %1571
  %1573 = vrot.lane.b32.xlu0 %v831, 80
  %v1574 = vpop.permute.xlu0 %1573
  %1575 = vrot.lane.b32.xlu0 %v834, 80
  %v1576 = vpop.permute.xlu0 %1575
  %1577 = vrot.lane.b32.xlu0 %v836, 80
  %v1578 = vpop.permute.xlu0 %1577
  %1579 = vrot.lane.b32.xlu0 %v1511, 80
  %v1580 = vpop.permute.xlu0 %1579
  %1581 = vrot.lane.b32.xlu0 %v1513, 80
  %v1582 = vpop.permute.xlu0 %1581
  %1583 = vrot.lane.b32.xlu0 %v844, 80
  %v1584 = vpop.permute.xlu0 %1583
  %1585 = vrot.lane.b32.xlu0 %v846, 80
  %v1586 = vpop.permute.xlu0 %1585
  %1587 = vrot.lane.b32.xlu0 %v849, 80
  %v1588 = vpop.permute.xlu0 %1587
  %1589 = vrot.lane.b32.xlu0 %v851, 80
  %v1590 = vpop.permute.xlu0 %1589
  %1591 = vrot.lane.b32.xlu0 %v854, 80
  %v1592 = vpop.permute.xlu0 %1591
  %1593 = vrot.lane.b32.xlu0 %v856, 80
  %v1594 = vpop.permute.xlu0 %1593
  %1595 = vrot.lane.b32.xlu0 %v859, 80
  %v1596 = vpop.permute.xlu0 %1595
  %1597 = vrot.lane.b32.xlu0 %v861, 80
  %v1598 = vpop.permute.xlu0 %1597
  %1599 = vrot.lane.b32.xlu0 %v864, 80
  %v1600 = vpop.permute.xlu0 %1599
  %1601 = vrot.lane.b32.xlu0 %v866, 80
  %v1602 = vpop.permute.xlu0 %1601
  %1603 = vrot.lane.b32.xlu0 %v869, 80
  %v1604 = vpop.permute.xlu0 %1603
  %1605 = vrot.lane.b32.xlu0 %v871, 80
  %v1606 = vpop.permute.xlu0 %1605
  %1607 = vrot.lane.b32.xlu0 %v874, 80
  %v1608 = vpop.permute.xlu0 %1607
  %1609 = vrot.lane.b32.xlu0 %v876, 80
  %v1610 = vpop.permute.xlu0 %1609
  %1611 = vrot.lane.b32.xlu0 %v879, 80
  %v1612 = vpop.permute.xlu0 %1611
  %1613 = vrot.lane.b32.xlu0 %v881, 80
  %v1614 = vpop.permute.xlu0 %1613
  %1615 = vrot.lane.b32.xlu0 %v884, 80
  %v1616 = vpop.permute.xlu0 %1615
  %1617 = vrot.lane.b32.xlu0 %v886, 80
  %v1618 = vpop.permute.xlu0 %1617
  %1619 = vrot.lane.b32.xlu0 %v889, 80
  %v1620 = vpop.permute.xlu0 %1619
  %1621 = vrot.lane.b32.xlu0 %v891, 80
  %v1622 = vpop.permute.xlu0 %1621
  %1623 = vrot.lane.b32.xlu0 %v894, 80
  %v1624 = vpop.permute.xlu0 %1623
  %1625 = vrot.lane.b32.xlu0 %v896, 80
  %v1626 = vpop.permute.xlu0 %1625
  %1627 = vrot.lane.b32.xlu0 %v899, 80
  %v1628 = vpop.permute.xlu0 %1627
  %1629 = vrot.lane.b32.xlu0 %v901, 80
  %v1630 = vpop.permute.xlu0 %1629
  %1631 = vrot.lane.b32.xlu0 %v904, 80
  %v1632 = vpop.permute.xlu0 %1631
  %1633 = vrot.lane.b32.xlu0 %v906, 80
  %v1634 = vpop.permute.xlu0 %1633
  %1635 = vrot.lane.b32.xlu0 %v909, 80
  %v1636 = vpop.permute.xlu0 %1635
  %1637 = vrot.lane.b32.xlu0 %v911, 80
  %v1638 = vpop.permute.xlu0 %1637
  %1639 = vrot.lane.b32.xlu0 %v914, 80
  %v1640 = vpop.permute.xlu0 %1639
  %1641 = vrot.lane.b32.xlu0 %v916, 80
  %v1642 = vpop.permute.xlu0 %1641
  %1643 = vrot.lane.b32.xlu0 %v1516, 80
  %v1644 = vpop.permute.xlu0 %1643
  %1645 = vrot.lane.b32.xlu0 %v1518, 80
  %v1646 = vpop.permute.xlu0 %1645
  %1715 = vrot.lane.b32.xlu0 %v205, 96
  %v1716 = vpop.permute.xlu0 %1715
  %1717 = vrot.lane.b32.xlu0 %v206, 96
  %v1718 = vpop.permute.xlu0 %1717
  %1719 = vrot.lane.b32.xlu0 %v208, 96
  %v1720 = vpop.permute.xlu0 %1719
  %1721 = vrot.lane.b32.xlu0 %v209, 96
  %v1722 = vpop.permute.xlu0 %1721
  %1723 = vrot.lane.b32.xlu0 %v211, 96
  %v1724 = vpop.permute.xlu0 %1723
  %1725 = vrot.lane.b32.xlu0 %v212, 96
  %v1726 = vpop.permute.xlu0 %1725
  %1727 = vrot.lane.b32.xlu0 %v214, 96
  %v1728 = vpop.permute.xlu0 %1727
  %1729 = vrot.lane.b32.xlu0 %v215, 96
  %v1730 = vpop.permute.xlu0 %1729
  %1731 = vrot.lane.b32.xlu0 %v217, 96
  %v1732 = vpop.permute.xlu0 %1731
  %1733 = vrot.lane.b32.xlu0 %v218, 96
  %v1734 = vpop.permute.xlu0 %1733
  %1735 = vrot.lane.b32.xlu0 %v220, 96
  %v1736 = vpop.permute.xlu0 %1735
  %1737 = vrot.lane.b32.xlu0 %v221, 96
  %v1738 = vpop.permute.xlu0 %1737
  %1739 = vrot.lane.b32.xlu0 %v223, 96
  %v1740 = vpop.permute.xlu0 %1739
  %1741 = vrot.lane.b32.xlu0 %v224, 96
  %v1742 = vpop.permute.xlu0 %1741
  %1743 = vrot.lane.b32.xlu0 %v226, 96
  %v1744 = vpop.permute.xlu0 %1743
  %1745 = vrot.lane.b32.xlu0 %v227, 96
  %v1746 = vpop.permute.xlu0 %1745
  %1747 = vrot.lane.b32.xlu0 %v229, 96
  %v1748 = vpop.permute.xlu0 %1747
  %1749 = vrot.lane.b32.xlu0 %v230, 96
  %v1750 = vpop.permute.xlu0 %1749
  %1751 = vrot.lane.b32.xlu0 %v232, 96
  %v1752 = vpop.permute.xlu0 %1751
  %1753 = vrot.lane.b32.xlu0 %v233, 96
  %v1754 = vpop.permute.xlu0 %1753
  %1755 = vrot.lane.b32.xlu0 %v235, 96
  %v1756 = vpop.permute.xlu0 %1755
  %1757 = vrot.lane.b32.xlu0 %v236, 96
  %v1758 = vpop.permute.xlu0 %1757
  %1759 = vrot.lane.b32.xlu0 %v238, 96
  %v1760 = vpop.permute.xlu0 %1759
  %1761 = vrot.lane.b32.xlu0 %v239, 96
  %v1762 = vpop.permute.xlu0 %1761
  %1763 = vrot.lane.b32.xlu0 %v241, 96
  %v1764 = vpop.permute.xlu0 %1763
  %1765 = vrot.lane.b32.xlu0 %v242, 96
  %v1766 = vpop.permute.xlu0 %1765
  %1767 = vrot.lane.b32.xlu0 %v244, 96
  %v1768 = vpop.permute.xlu0 %1767
  %1769 = vrot.lane.b32.xlu0 %v245, 96
  %v1770 = vpop.permute.xlu0 %1769
  %1771 = vrot.lane.b32.xlu0 %v247, 96
  %v1772 = vpop.permute.xlu0 %1771
  %1773 = vrot.lane.b32.xlu0 %v248, 96
  %v1774 = vpop.permute.xlu0 %1773
  %1775 = vrot.lane.b32.xlu0 %v250, 96
  %v1776 = vpop.permute.xlu0 %1775
  %1777 = vrot.lane.b32.xlu0 %v251, 96
  %v1778 = vpop.permute.xlu0 %1777
  %1779 = vrot.lane.b32.xlu0 %v259, 96
  %v1780 = vpop.permute.xlu0 %1779
  %1781 = vrot.lane.b32.xlu0 %v260, 96
  %v1782 = vpop.permute.xlu0 %1781
  %1783 = vrot.lane.b32.xlu0 %v262, 96
  %v1784 = vpop.permute.xlu0 %1783
  %1785 = vrot.lane.b32.xlu0 %v263, 96
  %v1786 = vpop.permute.xlu0 %1785
  %1787 = vrot.lane.b32.xlu0 %v265, 96
  %v1788 = vpop.permute.xlu0 %1787
  %1789 = vrot.lane.b32.xlu0 %v266, 96
  %v1790 = vpop.permute.xlu0 %1789
  %1791 = vrot.lane.b32.xlu0 %v268, 96
  %v1792 = vpop.permute.xlu0 %1791
  %1793 = vrot.lane.b32.xlu0 %v269, 96
  %v1794 = vpop.permute.xlu0 %1793
  %1795 = vrot.lane.b32.xlu0 %v271, 96
  %v1796 = vpop.permute.xlu0 %1795
  %1797 = vrot.lane.b32.xlu0 %v272, 96
  %v1798 = vpop.permute.xlu0 %1797
  %1799 = vrot.lane.b32.xlu0 %v274, 96
  %v1800 = vpop.permute.xlu0 %1799
  %1801 = vrot.lane.b32.xlu0 %v275, 96
  %v1802 = vpop.permute.xlu0 %1801
  %1803 = vrot.lane.b32.xlu0 %v277, 96
  %v1804 = vpop.permute.xlu0 %1803
  %1805 = vrot.lane.b32.xlu0 %v278, 96
  %v1806 = vpop.permute.xlu0 %1805
  %1807 = vrot.lane.b32.xlu0 %v280, 96
  %v1808 = vpop.permute.xlu0 %1807
  %1809 = vrot.lane.b32.xlu0 %v281, 96
  %v1810 = vpop.permute.xlu0 %1809
  %1811 = vrot.lane.b32.xlu0 %v283, 96
  %v1812 = vpop.permute.xlu0 %1811
  %1813 = vrot.lane.b32.xlu0 %v284, 96
  %v1814 = vpop.permute.xlu0 %1813
  %1815 = vrot.lane.b32.xlu0 %v286, 96
  %v1816 = vpop.permute.xlu0 %1815
  %1817 = vrot.lane.b32.xlu0 %v287, 96
  %v1818 = vpop.permute.xlu0 %1817
  %1819 = vrot.lane.b32.xlu0 %v289, 96
  %v1820 = vpop.permute.xlu0 %1819
  %1821 = vrot.lane.b32.xlu0 %v290, 96
  %v1822 = vpop.permute.xlu0 %1821
  %1823 = vrot.lane.b32.xlu0 %v292, 96
  %v1824 = vpop.permute.xlu0 %1823
  %1825 = vrot.lane.b32.xlu0 %v293, 96
  %v1826 = vpop.permute.xlu0 %1825
  %1827 = vrot.lane.b32.xlu0 %v295, 96
  %v1828 = vpop.permute.xlu0 %1827
  %1829 = vrot.lane.b32.xlu0 %v296, 96
  %v1830 = vpop.permute.xlu0 %1829
  %1831 = vrot.lane.b32.xlu0 %v298, 96
  %v1832 = vpop.permute.xlu0 %1831
  %1833 = vrot.lane.b32.xlu0 %v299, 96
  %v1834 = vpop.permute.xlu0 %1833
  %1835 = vrot.lane.b32.xlu0 %v301, 96
  %v1836 = vpop.permute.xlu0 %1835
  %1837 = vrot.lane.b32.xlu0 %v302, 96
  %v1838 = vpop.permute.xlu0 %1837
  %1839 = vrot.lane.b32.xlu0 %v304, 96
  %v1840 = vpop.permute.xlu0 %1839
  %1841 = vrot.lane.b32.xlu0 %v305, 96
  %v1842 = vpop.permute.xlu0 %1841
  %v1909 = vrot.slane %v250, 1
  %v1910 = vrot.slane %v251, 1
  %v1911 = vsel %vm403, %v1909, %v1910
  %v1912 = vrot.slane %v252, 1
  %v1913 = vsel %vm403, %v1910, %v1912
  %v1914 = vrot.slane %v304, 1
  %v1915 = vrot.slane %v305, 1
  %v1916 = vsel %vm403, %v1914, %v1915
  %v1917 = vrot.slane %v306, 1
  %v1918 = vsel %vm403, %v1915, %v1917
  %1919 = vrot.lane.b32.xlu0 %v416, 112
  %v1920 = vpop.permute.xlu0 %1919
  %1921 = vrot.lane.b32.xlu0 %v418, 112
  %v1922 = vpop.permute.xlu0 %1921
  %1923 = vrot.lane.b32.xlu0 %v421, 112
  %v1924 = vpop.permute.xlu0 %1923
  %1925 = vrot.lane.b32.xlu0 %v423, 112
  %v1926 = vpop.permute.xlu0 %1925
  %1927 = vrot.lane.b32.xlu0 %v426, 112
  %v1928 = vpop.permute.xlu0 %1927
  %1929 = vrot.lane.b32.xlu0 %v428, 112
  %v1930 = vpop.permute.xlu0 %1929
  %1931 = vrot.lane.b32.xlu0 %v431, 112
  %v1932 = vpop.permute.xlu0 %1931
  %1933 = vrot.lane.b32.xlu0 %v433, 112
  %v1934 = vpop.permute.xlu0 %1933
  %1935 = vrot.lane.b32.xlu0 %v436, 112
  %v1936 = vpop.permute.xlu0 %1935
  %1937 = vrot.lane.b32.xlu0 %v438, 112
  %v1938 = vpop.permute.xlu0 %1937
  %1939 = vrot.lane.b32.xlu0 %v441, 112
  %v1940 = vpop.permute.xlu0 %1939
  %1941 = vrot.lane.b32.xlu0 %v443, 112
  %v1942 = vpop.permute.xlu0 %1941
  %1943 = vrot.lane.b32.xlu0 %v446, 112
  %v1944 = vpop.permute.xlu0 %1943
  %1945 = vrot.lane.b32.xlu0 %v448, 112
  %v1946 = vpop.permute.xlu0 %1945
  %1947 = vrot.lane.b32.xlu0 %v451, 112
  %v1948 = vpop.permute.xlu0 %1947
  %1949 = vrot.lane.b32.xlu0 %v453, 112
  %v1950 = vpop.permute.xlu0 %1949
  %1951 = vrot.lane.b32.xlu0 %v456, 112
  %v1952 = vpop.permute.xlu0 %1951
  %1953 = vrot.lane.b32.xlu0 %v458, 112
  %v1954 = vpop.permute.xlu0 %1953
  %1955 = vrot.lane.b32.xlu0 %v461, 112
  %v1956 = vpop.permute.xlu0 %1955
  %1957 = vrot.lane.b32.xlu0 %v463, 112
  %v1958 = vpop.permute.xlu0 %1957
  %1959 = vrot.lane.b32.xlu0 %v466, 112
  %v1960 = vpop.permute.xlu0 %1959
  %1961 = vrot.lane.b32.xlu0 %v468, 112
  %v1962 = vpop.permute.xlu0 %1961
  %1963 = vrot.lane.b32.xlu0 %v471, 112
  %v1964 = vpop.permute.xlu0 %1963
  %1965 = vrot.lane.b32.xlu0 %v473, 112
  %v1966 = vpop.permute.xlu0 %1965
  %1967 = vrot.lane.b32.xlu0 %v476, 112
  %v1968 = vpop.permute.xlu0 %1967
  %1969 = vrot.lane.b32.xlu0 %v478, 112
  %v1970 = vpop.permute.xlu0 %1969
  %1971 = vrot.lane.b32.xlu0 %v481, 112
  %v1972 = vpop.permute.xlu0 %1971
  %1973 = vrot.lane.b32.xlu0 %v483, 112
  %v1974 = vpop.permute.xlu0 %1973
  %1975 = vrot.lane.b32.xlu0 %v1309, 112
  %v1976 = vpop.permute.xlu0 %1975
  %1977 = vrot.lane.b32.xlu0 %v1311, 112
  %v1978 = vpop.permute.xlu0 %1977
  %1979 = vrot.lane.b32.xlu0 %v1911, 112
  %v1980 = vpop.permute.xlu0 %1979
  %1981 = vrot.lane.b32.xlu0 %v1913, 112
  %v1982 = vpop.permute.xlu0 %1981
  %1983 = vrot.lane.b32.xlu0 %v496, 112
  %v1984 = vpop.permute.xlu0 %1983
  %1985 = vrot.lane.b32.xlu0 %v498, 112
  %v1986 = vpop.permute.xlu0 %1985
  %1987 = vrot.lane.b32.xlu0 %v501, 112
  %v1988 = vpop.permute.xlu0 %1987
  %1989 = vrot.lane.b32.xlu0 %v503, 112
  %v1990 = vpop.permute.xlu0 %1989
  %1991 = vrot.lane.b32.xlu0 %v506, 112
  %v1992 = vpop.permute.xlu0 %1991
  %1993 = vrot.lane.b32.xlu0 %v508, 112
  %v1994 = vpop.permute.xlu0 %1993
  %1995 = vrot.lane.b32.xlu0 %v511, 112
  %v1996 = vpop.permute.xlu0 %1995
  %1997 = vrot.lane.b32.xlu0 %v513, 112
  %v1998 = vpop.permute.xlu0 %1997
  %1999 = vrot.lane.b32.xlu0 %v516, 112
  %v2000 = vpop.permute.xlu0 %1999
  %2001 = vrot.lane.b32.xlu0 %v518, 112
  %v2002 = vpop.permute.xlu0 %2001
  %2003 = vrot.lane.b32.xlu0 %v521, 112
  %v2004 = vpop.permute.xlu0 %2003
  %2005 = vrot.lane.b32.xlu0 %v523, 112
  %v2006 = vpop.permute.xlu0 %2005
  %2007 = vrot.lane.b32.xlu0 %v526, 112
  %v2008 = vpop.permute.xlu0 %2007
  %2009 = vrot.lane.b32.xlu0 %v528, 112
  %v2010 = vpop.permute.xlu0 %2009
  %2011 = vrot.lane.b32.xlu0 %v531, 112
  %v2012 = vpop.permute.xlu0 %2011
  %2013 = vrot.lane.b32.xlu0 %v533, 112
  %v2014 = vpop.permute.xlu0 %2013
  %2015 = vrot.lane.b32.xlu0 %v536, 112
  %v2016 = vpop.permute.xlu0 %2015
  %2017 = vrot.lane.b32.xlu0 %v538, 112
  %v2018 = vpop.permute.xlu0 %2017
  %2019 = vrot.lane.b32.xlu0 %v541, 112
  %v2020 = vpop.permute.xlu0 %2019
  %2021 = vrot.lane.b32.xlu0 %v543, 112
  %v2022 = vpop.permute.xlu0 %2021
  %2023 = vrot.lane.b32.xlu0 %v546, 112
  %v2024 = vpop.permute.xlu0 %2023
  %2025 = vrot.lane.b32.xlu0 %v548, 112
  %v2026 = vpop.permute.xlu0 %2025
  %2027 = vrot.lane.b32.xlu0 %v551, 112
  %v2028 = vpop.permute.xlu0 %2027
  %2029 = vrot.lane.b32.xlu0 %v553, 112
  %v2030 = vpop.permute.xlu0 %2029
  %2031 = vrot.lane.b32.xlu0 %v556, 112
  %v2032 = vpop.permute.xlu0 %2031
  %2033 = vrot.lane.b32.xlu0 %v558, 112
  %v2034 = vpop.permute.xlu0 %2033
  %2035 = vrot.lane.b32.xlu0 %v561, 112
  %v2036 = vpop.permute.xlu0 %2035
  %2037 = vrot.lane.b32.xlu0 %v563, 112
  %v2038 = vpop.permute.xlu0 %2037
  %2039 = vrot.lane.b32.xlu0 %v1314, 112
  %v2040 = vpop.permute.xlu0 %2039
  %2041 = vrot.lane.b32.xlu0 %v1316, 112
  %v2042 = vpop.permute.xlu0 %2041
  %2043 = vrot.lane.b32.xlu0 %v1916, 112
  %v2044 = vpop.permute.xlu0 %2043
  %2045 = vrot.lane.b32.xlu0 %v1918, 112
  %v2046 = vpop.permute.xlu0 %2045
  %v2111 = vrot.slane %v250, 2
  %v2112 = vrot.slane %v251, 2
  %v2113 = vsel %vm756, %v2111, %v2112
  %v2114 = vrot.slane %v252, 2
  %v2115 = vsel %vm756, %v2112, %v2114
  %v2116 = vrot.slane %v304, 2
  %v2117 = vrot.slane %v305, 2
  %v2118 = vsel %vm756, %v2116, %v2117
  %v2119 = vrot.slane %v306, 2
  %v2120 = vsel %vm756, %v2117, %v2119
  %vm2121 = vcmask 130048
  %v2122 = vsel %vm2121, %v199, %v565
  %v2123 = vsel %vm2121, %v200, %v567
  %v2124 = vsel %vm2121, %v202, %v569
  %v2125 = vsel %vm2121, %v203, %v571
  %v2126 = vsel %vm2121, %v205, %v573
  %v2127 = vsel %vm2121, %v206, %v575
  %v2128 = vsel %vm2121, %v208, %v577
  %v2129 = vsel %vm2121, %v209, %v579
  %v2130 = vsel %vm2121, %v211, %v581
  %v2131 = vsel %vm2121, %v212, %v583
  %v2132 = vsel %vm2121, %v214, %v585
  %v2133 = vsel %vm2121, %v215, %v587
  %v2134 = vsel %vm2121, %v217, %v589
  %v2135 = vsel %vm2121, %v218, %v591
  %v2136 = vsel %vm2121, %v220, %v593
  %v2137 = vsel %vm2121, %v221, %v595
  %v2138 = vsel %vm2121, %v223, %v597
  %v2139 = vsel %vm2121, %v224, %v599
  %v2140 = vsel %vm2121, %v226, %v601
  %v2141 = vsel %vm2121, %v227, %v603
  %v2142 = vsel %vm2121, %v229, %v605
  %v2143 = vsel %vm2121, %v230, %v607
  %v2144 = vsel %vm2121, %v232, %v609
  %v2145 = vsel %vm2121, %v233, %v611
  %v2146 = vsel %vm2121, %v235, %v613
  %v2147 = vsel %vm2121, %v236, %v615
  %v2148 = vsel %vm2121, %v238, %v617
  %v2149 = vsel %vm2121, %v239, %v619
  %v2150 = vsel %vm2121, %v241, %v621
  %v2151 = vsel %vm2121, %v242, %v623
  %v2152 = vsel %vm2121, %v244, %v625
  %v2153 = vsel %vm2121, %v245, %v627
  %v2154 = vsel %vm2121, %v253, %v629
  %v2155 = vsel %vm2121, %v254, %v631
  %v2156 = vsel %vm2121, %v256, %v633
  %v2157 = vsel %vm2121, %v257, %v635
  %v2158 = vsel %vm2121, %v259, %v637
  %v2159 = vsel %vm2121, %v260, %v639
  %v2160 = vsel %vm2121, %v262, %v641
  %v2161 = vsel %vm2121, %v263, %v643
  %v2162 = vsel %vm2121, %v265, %v645
  %v2163 = vsel %vm2121, %v266, %v647
  %v2164 = vsel %vm2121, %v268, %v649
  %v2165 = vsel %vm2121, %v269, %v651
  %v2166 = vsel %vm2121, %v271, %v653
  %v2167 = vsel %vm2121, %v272, %v655
  %v2168 = vsel %vm2121, %v274, %v657
  %v2169 = vsel %vm2121, %v275, %v659
  %v2170 = vsel %vm2121, %v277, %v661
  %v2171 = vsel %vm2121, %v278, %v663
  %v2172 = vsel %vm2121, %v280, %v665
  %v2173 = vsel %vm2121, %v281, %v667
  %v2174 = vsel %vm2121, %v283, %v669
  %v2175 = vsel %vm2121, %v284, %v671
  %v2176 = vsel %vm2121, %v286, %v673
  %v2177 = vsel %vm2121, %v287, %v675
  %v2178 = vsel %vm2121, %v289, %v677
  %v2179 = vsel %vm2121, %v290, %v679
  %v2180 = vsel %vm2121, %v292, %v681
  %v2181 = vsel %vm2121, %v293, %v683
  %v2182 = vsel %vm2121, %v295, %v685
  %v2183 = vsel %vm2121, %v296, %v687
  %v2184 = vsel %vm2121, %v298, %v689
  %v2185 = vsel %vm2121, %v299, %v691
  %v2186 = vsel %vm38, %v2122, %v918
  %v2187 = vsel %vm38, %v2123, %v920
  %v2188 = vsel %vm38, %v2124, %v922
  %v2189 = vsel %vm38, %v2125, %v924
  %v2190 = vsel %vm38, %v2126, %v926
  %v2191 = vsel %vm38, %v2127, %v928
  %v2192 = vsel %vm38, %v2128, %v930
  %v2193 = vsel %vm38, %v2129, %v932
  %v2194 = vsel %vm38, %v2130, %v934
  %v2195 = vsel %vm38, %v2131, %v936
  %v2196 = vsel %vm38, %v2132, %v938
  %v2197 = vsel %vm38, %v2133, %v940
  %v2198 = vsel %vm38, %v2134, %v942
  %v2199 = vsel %vm38, %v2135, %v944
  %v2200 = vsel %vm38, %v2136, %v946
  %v2201 = vsel %vm38, %v2137, %v948
  %v2202 = vsel %vm38, %v2138, %v950
  %v2203 = vsel %vm38, %v2139, %v952
  %v2204 = vsel %vm38, %v2140, %v954
  %v2205 = vsel %vm38, %v2141, %v956
  %v2206 = vsel %vm38, %v2142, %v958
  %v2207 = vsel %vm38, %v2143, %v960
  %v2208 = vsel %vm38, %v2144, %v962
  %v2209 = vsel %vm38, %v2145, %v964
  %v2210 = vsel %vm38, %v2146, %v966
  %v2211 = vsel %vm38, %v2147, %v968
  %v2212 = vsel %vm38, %v2148, %v970
  %v2213 = vsel %vm38, %v2149, %v972
  %v2214 = vsel %vm38, %v2150, %v974
  %v2215 = vsel %vm38, %v2151, %v976
  %v2216 = vsel %vm38, %v2152, %v978
  %v2217 = vsel %vm38, %v2153, %v980
  %v2218 = vsel %vm38, %v2154, %v982
  %v2219 = vsel %vm38, %v2155, %v984
  %v2220 = vsel %vm38, %v2156, %v986
  %v2221 = vsel %vm38, %v2157, %v988
  %v2222 = vsel %vm38, %v2158, %v990
  %v2223 = vsel %vm38, %v2159, %v992
  %v2224 = vsel %vm38, %v2160, %v994
  %v2225 = vsel %vm38, %v2161, %v996
  %v2226 = vsel %vm38, %v2162, %v998
  %v2227 = vsel %vm38, %v2163, %v1000
  %v2228 = vsel %vm38, %v2164, %v1002
  %v2229 = vsel %vm38, %v2165, %v1004
  %v2230 = vsel %vm38, %v2166, %v1006
  %v2231 = vsel %vm38, %v2167, %v1008
  %v2232 = vsel %vm38, %v2168, %v1010
  %v2233 = vsel %vm38, %v2169, %v1012
  %v2234 = vsel %vm38, %v2170, %v1014
  %v2235 = vsel %vm38, %v2171, %v1016
  %v2236 = vsel %vm38, %v2172, %v1018
  %v2237 = vsel %vm38, %v2173, %v1020
  %v2238 = vsel %vm38, %v2174, %v1022
  %v2239 = vsel %vm38, %v2175, %v1024
  %v2240 = vsel %vm38, %v2176, %v1026
  %v2241 = vsel %vm38, %v2177, %v1028
  %v2242 = vsel %vm38, %v2178, %v1030
  %v2243 = vsel %vm38, %v2179, %v1032
  %v2244 = vsel %vm38, %v2180, %v1034
  %v2245 = vsel %vm38, %v2181, %v1036
  %v2246 = vsel %vm38, %v2182, %v1038
  %v2247 = vsel %vm38, %v2183, %v1040
  %v2248 = vsel %vm38, %v2184, %v1042
  %v2249 = vsel %vm38, %v2185, %v1044
  %vm2250 = vcmask 392192
  %v2251 = vsel %vm2250, %v2186, %v1114
  %v2252 = vsel %vm2250, %v2187, %v1116
  %v2253 = vsel %vm2250, %v2188, %v1118
  %v2254 = vsel %vm2250, %v2189, %v1120
  %v2255 = vsel %vm2250, %v2190, %v1122
  %v2256 = vsel %vm2250, %v2191, %v1124
  %v2257 = vsel %vm2250, %v2192, %v1126
  %v2258 = vsel %vm2250, %v2193, %v1128
  %v2259 = vsel %vm2250, %v2194, %v1130
  %v2260 = vsel %vm2250, %v2195, %v1132
  %v2261 = vsel %vm2250, %v2196, %v1134
  %v2262 = vsel %vm2250, %v2197, %v1136
  %v2263 = vsel %vm2250, %v2198, %v1138
  %v2264 = vsel %vm2250, %v2199, %v1140
  %v2265 = vsel %vm2250, %v2200, %v1142
  %v2266 = vsel %vm2250, %v2201, %v1144
  %v2267 = vsel %vm2250, %v2202, %v1146
  %v2268 = vsel %vm2250, %v2203, %v1148
  %v2269 = vsel %vm2250, %v2204, %v1150
  %v2270 = vsel %vm2250, %v2205, %v1152
  %v2271 = vsel %vm2250, %v2206, %v1154
  %v2272 = vsel %vm2250, %v2207, %v1156
  %v2273 = vsel %vm2250, %v2208, %v1158
  %v2274 = vsel %vm2250, %v2209, %v1160
  %v2275 = vsel %vm2250, %v2210, %v1162
  %v2276 = vsel %vm2250, %v2211, %v1164
  %v2277 = vsel %vm2250, %v2212, %v1166
  %v2278 = vsel %vm2250, %v2213, %v1168
  %v2279 = vsel %vm2250, %v2214, %v1170
  %v2280 = vsel %vm2250, %v2215, %v1172
  %v2281 = vsel %vm2250, %v2216, %v1174
  %v2282 = vsel %vm2250, %v2217, %v1176
  %v2283 = vsel %vm2250, %v2218, %v1178
  %v2284 = vsel %vm2250, %v2219, %v1180
  %v2285 = vsel %vm2250, %v2220, %v1182
  %v2286 = vsel %vm2250, %v2221, %v1184
  %v2287 = vsel %vm2250, %v2222, %v1186
  %v2288 = vsel %vm2250, %v2223, %v1188
  %v2289 = vsel %vm2250, %v2224, %v1190
  %v2290 = vsel %vm2250, %v2225, %v1192
  %v2291 = vsel %vm2250, %v2226, %v1194
  %v2292 = vsel %vm2250, %v2227, %v1196
  %v2293 = vsel %vm2250, %v2228, %v1198
  %v2294 = vsel %vm2250, %v2229, %v1200
  %v2295 = vsel %vm2250, %v2230, %v1202
  %v2296 = vsel %vm2250, %v2231, %v1204
  %v2297 = vsel %vm2250, %v2232, %v1206
  %v2298 = vsel %vm2250, %v2233, %v1208
  %v2299 = vsel %vm2250, %v2234, %v1210
  %v2300 = vsel %vm2250, %v2235, %v1212
  %v2301 = vsel %vm2250, %v2236, %v1214
  %v2302 = vsel %vm2250, %v2237, %v1216
  %v2303 = vsel %vm2250, %v2238, %v1218
  %v2304 = vsel %vm2250, %v2239, %v1220
  %v2305 = vsel %vm2250, %v2240, %v1222
  %v2306 = vsel %vm2250, %v2241, %v1224
  %v2307 = vsel %vm2250, %v2242, %v1226
  %v2308 = vsel %vm2250, %v2243, %v1228
  %v2309 = vsel %vm2250, %v2244, %v1230
  %v2310 = vsel %vm2250, %v2245, %v1232
  %v2311 = vsel %vm2250, %v2246, %v1234
  %v2312 = vsel %vm2250, %v2247, %v1236
  %v2313 = vsel %vm2250, %v2248, %v1238
  %v2314 = vsel %vm2250, %v2249, %v1240
  %vm2315 = vcmask 523264
  %v2316 = vsel %vm2315, %v2251, %v1318
  %v2317 = vsel %vm2315, %v2252, %v1320
  %v2318 = vsel %vm2315, %v2253, %v1322
  %v2319 = vsel %vm2315, %v2254, %v1324
  %v2320 = vsel %vm2315, %v2255, %v1326
  %v2321 = vsel %vm2315, %v2256, %v1328
  %v2322 = vsel %vm2315, %v2257, %v1330
  %v2323 = vsel %vm2315, %v2258, %v1332
  %v2324 = vsel %vm2315, %v2259, %v1334
  %v2325 = vsel %vm2315, %v2260, %v1336
  %v2326 = vsel %vm2315, %v2261, %v1338
  %v2327 = vsel %vm2315, %v2262, %v1340
  %v2328 = vsel %vm2315, %v2263, %v1342
  %v2329 = vsel %vm2315, %v2264, %v1344
  %v2330 = vsel %vm2315, %v2265, %v1346
  %v2331 = vsel %vm2315, %v2266, %v1348
  %v2332 = vsel %vm2315, %v2267, %v1350
  %v2333 = vsel %vm2315, %v2268, %v1352
  %v2334 = vsel %vm2315, %v2269, %v1354
  %v2335 = vsel %vm2315, %v2270, %v1356
  %v2336 = vsel %vm2315, %v2271, %v1358
  %v2337 = vsel %vm2315, %v2272, %v1360
  %v2338 = vsel %vm2315, %v2273, %v1362
  %v2339 = vsel %vm2315, %v2274, %v1364
  %v2340 = vsel %vm2315, %v2275, %v1366
  %v2341 = vsel %vm2315, %v2276, %v1368
  %v2342 = vsel %vm2315, %v2277, %v1370
  %v2343 = vsel %vm2315, %v2278, %v1372
  %v2344 = vsel %vm2315, %v2279, %v1374
  %v2345 = vsel %vm2315, %v2280, %v1376
  %v2346 = vsel %vm2315, %v2281, %v1378
  %v2347 = vsel %vm2315, %v2282, %v1380
  %v2348 = vsel %vm2315, %v2283, %v1382
  %v2349 = vsel %vm2315, %v2284, %v1384
  %v2350 = vsel %vm2315, %v2285, %v1386
  %v2351 = vsel %vm2315, %v2286, %v1388
  %v2352 = vsel %vm2315, %v2287, %v1390
  %v2353 = vsel %vm2315, %v2288, %v1392
  %v2354 = vsel %vm2315, %v2289, %v1394
  %v2355 = vsel %vm2315, %v2290, %v1396
  %v2356 = vsel %vm2315, %v2291, %v1398
  %v2357 = vsel %vm2315, %v2292, %v1400
  %v2358 = vsel %vm2315, %v2293, %v1402
  %v2359 = vsel %vm2315, %v2294, %v1404
  %v2360 = vsel %vm2315, %v2295, %v1406
  %v2361 = vsel %vm2315, %v2296, %v1408
  %v2362 = vsel %vm2315, %v2297, %v1410
  %v2363 = vsel %vm2315, %v2298, %v1412
  %v2364 = vsel %vm2315, %v2299, %v1414
  %v2365 = vsel %vm2315, %v2300, %v1416
  %v2366 = vsel %vm2315, %v2301, %v1418
  %v2367 = vsel %vm2315, %v2302, %v1420
  %v2368 = vsel %vm2315, %v2303, %v1422
  %v2369 = vsel %vm2315, %v2304, %v1424
  %v2370 = vsel %vm2315, %v2305, %v1426
  %v2371 = vsel %vm2315, %v2306, %v1428
  %v2372 = vsel %vm2315, %v2307, %v1430
  %v2373 = vsel %vm2315, %v2308, %v1432
  %v2374 = vsel %vm2315, %v2309, %v1434
  %v2375 = vsel %vm2315, %v2310, %v1436
  %v2376 = vsel %vm2315, %v2311, %v1438
  %v2377 = vsel %vm2315, %v2312, %v1440
  %v2378 = vsel %vm2315, %v2313, %v1442
  %v2379 = vsel %vm2315, %v2314, %v1444
  %vm2380 = vcmask 654336
  %v2381 = vsel %vm2380, %v2316, %v1520
  %v2382 = vsel %vm2380, %v2317, %v1522
  %v2383 = vsel %vm2380, %v2318, %v1524
  %v2384 = vsel %vm2380, %v2319, %v1526
  %v2385 = vsel %vm2380, %v2320, %v1528
  %v2386 = vsel %vm2380, %v2321, %v1530
  %v2387 = vsel %vm2380, %v2322, %v1532
  %v2388 = vsel %vm2380, %v2323, %v1534
  %v2389 = vsel %vm2380, %v2324, %v1536
  %v2390 = vsel %vm2380, %v2325, %v1538
  %v2391 = vsel %vm2380, %v2326, %v1540
  %v2392 = vsel %vm2380, %v2327, %v1542
  %v2393 = vsel %vm2380, %v2328, %v1544
  %v2394 = vsel %vm2380, %v2329, %v1546
  %v2395 = vsel %vm2380, %v2330, %v1548
  %v2396 = vsel %vm2380, %v2331, %v1550
  %v2397 = vsel %vm2380, %v2332, %v1552
  %v2398 = vsel %vm2380, %v2333, %v1554
  %v2399 = vsel %vm2380, %v2334, %v1556
  %v2400 = vsel %vm2380, %v2335, %v1558
  %v2401 = vsel %vm2380, %v2336, %v1560
  %v2402 = vsel %vm2380, %v2337, %v1562
  %v2403 = vsel %vm2380, %v2338, %v1564
  %v2404 = vsel %vm2380, %v2339, %v1566
  %v2405 = vsel %vm2380, %v2340, %v1568
  %v2406 = vsel %vm2380, %v2341, %v1570
  %v2407 = vsel %vm2380, %v2342, %v1572
  %v2408 = vsel %vm2380, %v2343, %v1574
  %v2409 = vsel %vm2380, %v2344, %v1576
  %v2410 = vsel %vm2380, %v2345, %v1578
  %v2411 = vsel %vm2380, %v2346, %v1580
  %v2412 = vsel %vm2380, %v2347, %v1582
  %v2413 = vsel %vm2380, %v2348, %v1584
  %v2414 = vsel %vm2380, %v2349, %v1586
  %v2415 = vsel %vm2380, %v2350, %v1588
  %v2416 = vsel %vm2380, %v2351, %v1590
  %v2417 = vsel %vm2380, %v2352, %v1592
  %v2418 = vsel %vm2380, %v2353, %v1594
  %v2419 = vsel %vm2380, %v2354, %v1596
  %v2420 = vsel %vm2380, %v2355, %v1598
  %v2421 = vsel %vm2380, %v2356, %v1600
  %v2422 = vsel %vm2380, %v2357, %v1602
  %v2423 = vsel %vm2380, %v2358, %v1604
  %v2424 = vsel %vm2380, %v2359, %v1606
  %v2425 = vsel %vm2380, %v2360, %v1608
  %v2426 = vsel %vm2380, %v2361, %v1610
  %v2427 = vsel %vm2380, %v2362, %v1612
  %v2428 = vsel %vm2380, %v2363, %v1614
  %v2429 = vsel %vm2380, %v2364, %v1616
  %v2430 = vsel %vm2380, %v2365, %v1618
  %v2431 = vsel %vm2380, %v2366, %v1620
  %v2432 = vsel %vm2380, %v2367, %v1622
  %v2433 = vsel %vm2380, %v2368, %v1624
  %v2434 = vsel %vm2380, %v2369, %v1626
  %v2435 = vsel %vm2380, %v2370, %v1628
  %v2436 = vsel %vm2380, %v2371, %v1630
  %v2437 = vsel %vm2380, %v2372, %v1632
  %v2438 = vsel %vm2380, %v2373, %v1634
  %v2439 = vsel %vm2380, %v2374, %v1636
  %v2440 = vsel %vm2380, %v2375, %v1638
  %v2441 = vsel %vm2380, %v2376, %v1640
  %v2442 = vsel %vm2380, %v2377, %v1642
  %v2443 = vsel %vm2380, %v2378, %v1644
  %v2444 = vsel %vm2380, %v2379, %v1646
  %vm2445 = vcmask 785408
  %v2446 = vsel %vm2445, %v2381, %v1716
  %v2447 = vsel %vm2445, %v2382, %v1718
  %v2448 = vsel %vm2445, %v2383, %v1720
  %v2449 = vsel %vm2445, %v2384, %v1722
  %v2450 = vsel %vm2445, %v2385, %v1724
  %v2451 = vsel %vm2445, %v2386, %v1726
  %v2452 = vsel %vm2445, %v2387, %v1728
  %v2453 = vsel %vm2445, %v2388, %v1730
  %v2454 = vsel %vm2445, %v2389, %v1732
  %v2455 = vsel %vm2445, %v2390, %v1734
  %v2456 = vsel %vm2445, %v2391, %v1736
  %v2457 = vsel %vm2445, %v2392, %v1738
  %v2458 = vsel %vm2445, %v2393, %v1740
  %v2459 = vsel %vm2445, %v2394, %v1742
  %v2460 = vsel %vm2445, %v2395, %v1744
  %v2461 = vsel %vm2445, %v2396, %v1746
  %v2462 = vsel %vm2445, %v2397, %v1748
  %v2463 = vsel %vm2445, %v2398, %v1750
  %v2464 = vsel %vm2445, %v2399, %v1752
  %v2465 = vsel %vm2445, %v2400, %v1754
  %v2466 = vsel %vm2445, %v2401, %v1756
  %v2467 = vsel %vm2445, %v2402, %v1758
  %v2468 = vsel %vm2445, %v2403, %v1760
  %v2469 = vsel %vm2445, %v2404, %v1762
  %v2470 = vsel %vm2445, %v2405, %v1764
  %v2471 = vsel %vm2445, %v2406, %v1766
  %v2472 = vsel %vm2445, %v2407, %v1768
  %v2473 = vsel %vm2445, %v2408, %v1770
  %v2474 = vsel %vm2445, %v2409, %v1772
  %v2475 = vsel %vm2445, %v2410, %v1774
  %v2476 = vsel %vm2445, %v2411, %v1776
  %v2477 = vsel %vm2445, %v2412, %v1778
  %v2478 = vsel %vm2445, %v2413, %v1780
  %v2479 = vsel %vm2445, %v2414, %v1782
  %v2480 = vsel %vm2445, %v2415, %v1784
  %v2481 = vsel %vm2445, %v2416, %v1786
  %v2482 = vsel %vm2445, %v2417, %v1788
  %v2483 = vsel %vm2445, %v2418, %v1790
  %v2484 = vsel %vm2445, %v2419, %v1792
  %v2485 = vsel %vm2445, %v2420, %v1794
  %v2486 = vsel %vm2445, %v2421, %v1796
  %v2487 = vsel %vm2445, %v2422, %v1798
  %v2488 = vsel %vm2445, %v2423, %v1800
  %v2489 = vsel %vm2445, %v2424, %v1802
  %v2490 = vsel %vm2445, %v2425, %v1804
  %v2491 = vsel %vm2445, %v2426, %v1806
  %v2492 = vsel %vm2445, %v2427, %v1808
  %v2493 = vsel %vm2445, %v2428, %v1810
  %v2494 = vsel %vm2445, %v2429, %v1812
  %v2495 = vsel %vm2445, %v2430, %v1814
  %v2496 = vsel %vm2445, %v2431, %v1816
  %v2497 = vsel %vm2445, %v2432, %v1818
  %v2498 = vsel %vm2445, %v2433, %v1820
  %v2499 = vsel %vm2445, %v2434, %v1822
  %v2500 = vsel %vm2445, %v2435, %v1824
  %v2501 = vsel %vm2445, %v2436, %v1826
  %v2502 = vsel %vm2445, %v2437, %v1828
  %v2503 = vsel %vm2445, %v2438, %v1830
  %v2504 = vsel %vm2445, %v2439, %v1832
  %v2505 = vsel %vm2445, %v2440, %v1834
  %v2506 = vsel %vm2445, %v2441, %v1836
  %v2507 = vsel %vm2445, %v2442, %v1838
  %v2508 = vsel %vm2445, %v2443, %v1840
  %v2509 = vsel %vm2445, %v2444, %v1842
  %vm2510 = vcmask 916480
  %v2511 = vsel %vm2510, %v2446, %v1920
  %v2512 = vsel %vm2510, %v2447, %v1922
  %v2513 = vsel %vm2510, %v2448, %v1924
  %v2514 = vsel %vm2510, %v2449, %v1926
  %v2515 = vsel %vm2510, %v2450, %v1928
  %v2516 = vsel %vm2510, %v2451, %v1930
  %v2517 = vsel %vm2510, %v2452, %v1932
  %v2518 = vsel %vm2510, %v2453, %v1934
  %v2519 = vsel %vm2510, %v2454, %v1936
  %v2520 = vsel %vm2510, %v2455, %v1938
  %v2521 = vsel %vm2510, %v2456, %v1940
  %v2522 = vsel %vm2510, %v2457, %v1942
  %v2523 = vsel %vm2510, %v2458, %v1944
  %v2524 = vsel %vm2510, %v2459, %v1946
  %v2525 = vsel %vm2510, %v2460, %v1948
  %v2526 = vsel %vm2510, %v2461, %v1950
  %v2527 = vsel %vm2510, %v2462, %v1952
  %v2528 = vsel %vm2510, %v2463, %v1954
  %v2529 = vsel %vm2510, %v2464, %v1956
  %v2530 = vsel %vm2510, %v2465, %v1958
  %v2531 = vsel %vm2510, %v2466, %v1960
  %v2532 = vsel %vm2510, %v2467, %v1962
  %v2533 = vsel %vm2510, %v2468, %v1964
  %v2534 = vsel %vm2510, %v2469, %v1966
  %v2535 = vsel %vm2510, %v2470, %v1968
  %v2536 = vsel %vm2510, %v2471, %v1970
  %v2537 = vsel %vm2510, %v2472, %v1972
  %v2538 = vsel %vm2510, %v2473, %v1974
  %v2539 = vsel %vm2510, %v2474, %v1976
  %v2540 = vsel %vm2510, %v2475, %v1978
  %v2541 = vsel %vm2510, %v2476, %v1980
  %v2542 = vsel %vm2510, %v2477, %v1982
  %v2543 = vsel %vm2510, %v2478, %v1984
  %v2544 = vsel %vm2510, %v2479, %v1986
  %v2545 = vsel %vm2510, %v2480, %v1988
  %v2546 = vsel %vm2510, %v2481, %v1990
  %v2547 = vsel %vm2510, %v2482, %v1992
  %v2548 = vsel %vm2510, %v2483, %v1994
  %v2549 = vsel %vm2510, %v2484, %v1996
  %v2550 = vsel %vm2510, %v2485, %v1998
  %v2551 = vsel %vm2510, %v2486, %v2000
  %v2552 = vsel %vm2510, %v2487, %v2002
  %v2553 = vsel %vm2510, %v2488, %v2004
  %v2554 = vsel %vm2510, %v2489, %v2006
  %v2555 = vsel %vm2510, %v2490, %v2008
  %v2556 = vsel %vm2510, %v2491, %v2010
  %v2557 = vsel %vm2510, %v2492, %v2012
  %v2558 = vsel %vm2510, %v2493, %v2014
  %v2559 = vsel %vm2510, %v2494, %v2016
  %v2560 = vsel %vm2510, %v2495, %v2018
  %v2561 = vsel %vm2510, %v2496, %v2020
  %v2562 = vsel %vm2510, %v2497, %v2022
  %v2563 = vsel %vm2510, %v2498, %v2024
  %v2564 = vsel %vm2510, %v2499, %v2026
  %v2565 = vsel %vm2510, %v2500, %v2028
  %v2566 = vsel %vm2510, %v2501, %v2030
  %v2567 = vsel %vm2510, %v2502, %v2032
  %v2568 = vsel %vm2510, %v2503, %v2034
  %v2569 = vsel %vm2510, %v2504, %v2036
  %v2570 = vsel %vm2510, %v2505, %v2038
  %v2571 = vsel %vm2510, %v2506, %v2040
  %v2572 = vsel %vm2510, %v2507, %v2042
  %v2573 = vsel %vm2510, %v2508, %v2044
  %v2574 = vsel %vm2510, %v2509, %v2046
  %v2575 = vsel %vm2121, %v769, 0
  %v2577 = vsel %vm2121, %v771, 0
  %v2579 = vsel %vm2121, %v774, 0
  %v2581 = vsel %vm2121, %v776, 0
  %v2583 = vsel %vm2121, %v779, 0
  %v2585 = vsel %vm2121, %v781, 0
  %v2587 = vsel %vm2121, %v784, 0
  %v2589 = vsel %vm2121, %v786, 0
  %v2591 = vsel %vm2121, %v789, 0
  %v2593 = vsel %vm2121, %v791, 0
  %v2595 = vsel %vm2121, %v794, 0
  %v2597 = vsel %vm2121, %v796, 0
  %v2599 = vsel %vm2121, %v799, 0
  %v2601 = vsel %vm2121, %v801, 0
  %v2603 = vsel %vm2121, %v804, 0
  %v2605 = vsel %vm2121, %v806, 0
  %v2607 = vsel %vm2121, %v809, 0
  %v2609 = vsel %vm2121, %v811, 0
  %v2611 = vsel %vm2121, %v814, 0
  %v2613 = vsel %vm2121, %v816, 0
  %v2615 = vsel %vm2121, %v819, 0
  %v2617 = vsel %vm2121, %v821, 0
  %v2619 = vsel %vm2121, %v824, 0
  %v2621 = vsel %vm2121, %v826, 0
  %v2623 = vsel %vm2121, %v829, 0
  %v2625 = vsel %vm2121, %v831, 0
  %v2627 = vsel %vm2121, %v834, 0
  %v2629 = vsel %vm2121, %v836, 0
  %v2631 = vsel %vm2121, %v1511, 0
  %v2633 = vsel %vm2121, %v1513, 0
  %v2635 = vsel %vm2121, %v2113, 0
  %v2637 = vsel %vm2121, %v2115, 0
  %v2639 = vsel %vm2121, %v849, 0
  %v2641 = vsel %vm2121, %v851, 0
  %v2643 = vsel %vm2121, %v854, 0
  %v2645 = vsel %vm2121, %v856, 0
  %v2647 = vsel %vm2121, %v859, 0
  %v2649 = vsel %vm2121, %v861, 0
  %v2651 = vsel %vm2121, %v864, 0
  %v2653 = vsel %vm2121, %v866, 0
  %v2655 = vsel %vm2121, %v869, 0
  %v2657 = vsel %vm2121, %v871, 0
  %v2659 = vsel %vm2121, %v874, 0
  %v2661 = vsel %vm2121, %v876, 0
  %v2663 = vsel %vm2121, %v879, 0
  %v2665 = vsel %vm2121, %v881, 0
  %v2667 = vsel %vm2121, %v884, 0
  %v2669 = vsel %vm2121, %v886, 0
  %v2671 = vsel %vm2121, %v889, 0
  %v2673 = vsel %vm2121, %v891, 0
  %v2675 = vsel %vm2121, %v894, 0
  %v2677 = vsel %vm2121, %v896, 0
  %v2679 = vsel %vm2121, %v899, 0
  %v2681 = vsel %vm2121, %v901, 0
  %v2683 = vsel %vm2121, %v904, 0
  %v2685 = vsel %vm2121, %v906, 0
  %v2687 = vsel %vm2121, %v909, 0
  %v2689 = vsel %vm2121, %v911, 0
  %v2691 = vsel %vm2121, %v914, 0
  %v2693 = vsel %vm2121, %v916, 0
  %v2695 = vsel %vm2121, %v1516, 0
  %v2697 = vsel %vm2121, %v1518, 0
  %v2699 = vsel %vm2121, %v2118, 0
  %v2701 = vsel %vm2121, %v2120, 0
  %2703 = vmatpush.msra.mxu0 %v185
  %2704 = vmatpush.msra.mxu0 %v184
  %2705 = vmatpush.msra.mxu0 %v183
  %2706 = vmatpush.msra.mxu0 %v182
  %2707 = vmatpush.msra.mxu0 %v181
  %2708 = vmatpush.msra.mxu0 %v180
  %2709 = vmatpush.msra.mxu0 %v179
  %2710 = vmatpush.msra.mxu0 %v178
  %2711 = vmatpush.msra.mxu0 %v177
  %2712 = vmatpush.msra.mxu0 %v176
  %2713 = vmatpush.msra.mxu0 %v175
  %2714 = vmatpush.msra.mxu0 %v174
  %2715 = vmatpush.msra.mxu0 %v173
  %2716 = vmatpush.msra.mxu0 %v172
  %2717 = vmatpush.msra.mxu0 %v171
  %2718 = vmatpush.msra.mxu0 %v170
  %2719 = vmatmul.f32.gmra.mxu0 %v2511
  %v2720 = vpop.f32.mrf.mxu0
  %v2721 = vadd.f32 0.0, %v2720
  %2722 = vmatmul.f32.gmra.mxu0 %v2512
  %v2723 = vpop.f32.mrf.mxu0
  %v2724 = vadd.f32 0.0, %v2723
  %2725 = vmatmul.f32.gmra.mxu0 %v2513
  %v2726 = vpop.f32.mrf.mxu0
  %v2727 = vadd.f32 0.0, %v2726
  %2728 = vmatmul.f32.gmra.mxu0 %v2514
  %v2729 = vpop.f32.mrf.mxu0
  %v2730 = vadd.f32 0.0, %v2729
  %2731 = vmatmul.f32.gmra.mxu0 %v2515
  %v2732 = vpop.f32.mrf.mxu0
  %v2733 = vadd.f32 0.0, %v2732
  %2734 = vmatmul.f32.gmra.mxu0 %v2516
  %v2735 = vpop.f32.mrf.mxu0
  %v2736 = vadd.f32 0.0, %v2735
  %2737 = vmatmul.f32.gmra.mxu0 %v2517
  %v2738 = vpop.f32.mrf.mxu0
  %v2739 = vadd.f32 0.0, %v2738
  %2740 = vmatmul.f32.gmra.mxu0 %v2518
  %v2741 = vpop.f32.mrf.mxu0
  %v2742 = vadd.f32 0.0, %v2741
  %2743 = vmatmul.f32.gmra.mxu0 %v2519
  %v2744 = vpop.f32.mrf.mxu0
  %v2745 = vadd.f32 0.0, %v2744
  %2746 = vmatmul.f32.gmra.mxu0 %v2520
  %v2747 = vpop.f32.mrf.mxu0
  %v2748 = vadd.f32 0.0, %v2747
  %2749 = vmatmul.f32.gmra.mxu0 %v2521
  %v2750 = vpop.f32.mrf.mxu0
  %v2751 = vadd.f32 0.0, %v2750
  %2752 = vmatmul.f32.gmra.mxu0 %v2522
  %v2753 = vpop.f32.mrf.mxu0
  %v2754 = vadd.f32 0.0, %v2753
  %2755 = vmatmul.f32.gmra.mxu0 %v2523
  %v2756 = vpop.f32.mrf.mxu0
  %v2757 = vadd.f32 0.0, %v2756
  %2758 = vmatmul.f32.gmra.mxu0 %v2524
  %v2759 = vpop.f32.mrf.mxu0
  %v2760 = vadd.f32 0.0, %v2759
  %2761 = vmatmul.f32.gmra.mxu0 %v2525
  %v2762 = vpop.f32.mrf.mxu0
  %v2763 = vadd.f32 0.0, %v2762
  %2764 = vmatmul.f32.gmra.mxu0 %v2526
  %v2765 = vpop.f32.mrf.mxu0
  %v2766 = vadd.f32 0.0, %v2765
  %2767 = vmatmul.f32.gmra.mxu0 %v2527
  %v2768 = vpop.f32.mrf.mxu0
  %v2769 = vadd.f32 0.0, %v2768
  %2770 = vmatmul.f32.gmra.mxu0 %v2528
  %v2771 = vpop.f32.mrf.mxu0
  %v2772 = vadd.f32 0.0, %v2771
  %2773 = vmatmul.f32.gmra.mxu0 %v2529
  %v2774 = vpop.f32.mrf.mxu0
  %v2775 = vadd.f32 0.0, %v2774
  %2776 = vmatmul.f32.gmra.mxu0 %v2530
  %v2777 = vpop.f32.mrf.mxu0
  %v2778 = vadd.f32 0.0, %v2777
  %2779 = vmatmul.f32.gmra.mxu0 %v2531
  %v2780 = vpop.f32.mrf.mxu0
  %v2781 = vadd.f32 0.0, %v2780
  %2782 = vmatmul.f32.gmra.mxu0 %v2532
  %v2783 = vpop.f32.mrf.mxu0
  %v2784 = vadd.f32 0.0, %v2783
  %2785 = vmatmul.f32.gmra.mxu0 %v2533
  %v2786 = vpop.f32.mrf.mxu0
  %v2787 = vadd.f32 0.0, %v2786
  %2788 = vmatmul.f32.gmra.mxu0 %v2534
  %v2789 = vpop.f32.mrf.mxu0
  %v2790 = vadd.f32 0.0, %v2789
  %2791 = vmatmul.f32.gmra.mxu0 %v2535
  %v2792 = vpop.f32.mrf.mxu0
  %v2793 = vadd.f32 0.0, %v2792
  %2794 = vmatmul.f32.gmra.mxu0 %v2536
  %v2795 = vpop.f32.mrf.mxu0
  %v2796 = vadd.f32 0.0, %v2795
  %2797 = vmatmul.f32.gmra.mxu0 %v2537
  %v2798 = vpop.f32.mrf.mxu0
  %v2799 = vadd.f32 0.0, %v2798
  %2800 = vmatmul.f32.gmra.mxu0 %v2538
  %v2801 = vpop.f32.mrf.mxu0
  %v2802 = vadd.f32 0.0, %v2801
  %2803 = vmatmul.f32.gmra.mxu0 %v2539
  %v2804 = vpop.f32.mrf.mxu0
  %v2805 = vadd.f32 0.0, %v2804
  %2806 = vmatmul.f32.gmra.mxu0 %v2540
  %v2807 = vpop.f32.mrf.mxu0
  %v2808 = vadd.f32 0.0, %v2807
  %2809 = vmatmul.f32.gmra.mxu0 %v2541
  %v2810 = vpop.f32.mrf.mxu0
  %v2811 = vadd.f32 0.0, %v2810
  %2812 = vmatmul.f32.gmra.mxu0 %v2542
  %v2813 = vpop.f32.mrf.mxu0
  %v2814 = vadd.f32 0.0, %v2813
  %2815 = vmatmul.f32.gmra.mxu0 %v2543
  %v2816 = vpop.f32.mrf.mxu0
  %v2817 = vadd.f32 0.0, %v2816
  %2818 = vmatmul.f32.gmra.mxu0 %v2544
  %v2819 = vpop.f32.mrf.mxu0
  %v2820 = vadd.f32 0.0, %v2819
  %2821 = vmatmul.f32.gmra.mxu0 %v2545
  %v2822 = vpop.f32.mrf.mxu0
  %v2823 = vadd.f32 0.0, %v2822
  %2824 = vmatmul.f32.gmra.mxu0 %v2546
  %v2825 = vpop.f32.mrf.mxu0
  %v2826 = vadd.f32 0.0, %v2825
  %2827 = vmatmul.f32.gmra.mxu0 %v2547
  %v2828 = vpop.f32.mrf.mxu0
  %v2829 = vadd.f32 0.0, %v2828
  %2830 = vmatmul.f32.gmra.mxu0 %v2548
  %v2831 = vpop.f32.mrf.mxu0
  %v2832 = vadd.f32 0.0, %v2831
  %2833 = vmatmul.f32.gmra.mxu0 %v2549
  %v2834 = vpop.f32.mrf.mxu0
  %v2835 = vadd.f32 0.0, %v2834
  %2836 = vmatmul.f32.gmra.mxu0 %v2550
  %v2837 = vpop.f32.mrf.mxu0
  %v2838 = vadd.f32 0.0, %v2837
  %2839 = vmatmul.f32.gmra.mxu0 %v2551
  %v2840 = vpop.f32.mrf.mxu0
  %v2841 = vadd.f32 0.0, %v2840
  %2842 = vmatmul.f32.gmra.mxu0 %v2552
  %v2843 = vpop.f32.mrf.mxu0
  %v2844 = vadd.f32 0.0, %v2843
  %2845 = vmatmul.f32.gmra.mxu0 %v2553
  %v2846 = vpop.f32.mrf.mxu0
  %v2847 = vadd.f32 0.0, %v2846
  %2848 = vmatmul.f32.gmra.mxu0 %v2554
  %v2849 = vpop.f32.mrf.mxu0
  %v2850 = vadd.f32 0.0, %v2849
  %2851 = vmatmul.f32.gmra.mxu0 %v2555
  %v2852 = vpop.f32.mrf.mxu0
  %v2853 = vadd.f32 0.0, %v2852
  %2854 = vmatmul.f32.gmra.mxu0 %v2556
  %v2855 = vpop.f32.mrf.mxu0
  %v2856 = vadd.f32 0.0, %v2855
  %2857 = vmatmul.f32.gmra.mxu0 %v2557
  %v2858 = vpop.f32.mrf.mxu0
  %v2859 = vadd.f32 0.0, %v2858
  %2860 = vmatmul.f32.gmra.mxu0 %v2558
  %v2861 = vpop.f32.mrf.mxu0
  %v2862 = vadd.f32 0.0, %v2861
  %2863 = vmatmul.f32.gmra.mxu0 %v2559
  %v2864 = vpop.f32.mrf.mxu0
  %v2865 = vadd.f32 0.0, %v2864
  %2866 = vmatmul.f32.gmra.mxu0 %v2560
  %v2867 = vpop.f32.mrf.mxu0
  %v2868 = vadd.f32 0.0, %v2867
  %2869 = vmatmul.f32.gmra.mxu0 %v2561
  %v2870 = vpop.f32.mrf.mxu0
  %v2871 = vadd.f32 0.0, %v2870
  %2872 = vmatmul.f32.gmra.mxu0 %v2562
  %v2873 = vpop.f32.mrf.mxu0
  %v2874 = vadd.f32 0.0, %v2873
  %2875 = vmatmul.f32.gmra.mxu0 %v2563
  %v2876 = vpop.f32.mrf.mxu0
  %v2877 = vadd.f32 0.0, %v2876
  %2878 = vmatmul.f32.gmra.mxu0 %v2564
  %v2879 = vpop.f32.mrf.mxu0
  %v2880 = vadd.f32 0.0, %v2879
  %2881 = vmatmul.f32.gmra.mxu0 %v2565
  %v2882 = vpop.f32.mrf.mxu0
  %v2883 = vadd.f32 0.0, %v2882
  %2884 = vmatmul.f32.gmra.mxu0 %v2566
  %v2885 = vpop.f32.mrf.mxu0
  %v2886 = vadd.f32 0.0, %v2885
  %2887 = vmatmul.f32.gmra.mxu0 %v2567
  %v2888 = vpop.f32.mrf.mxu0
  %v2889 = vadd.f32 0.0, %v2888
  %2890 = vmatmul.f32.gmra.mxu0 %v2568
  %v2891 = vpop.f32.mrf.mxu0
  %v2892 = vadd.f32 0.0, %v2891
  %2893 = vmatmul.f32.gmra.mxu0 %v2569
  %v2894 = vpop.f32.mrf.mxu0
  %v2895 = vadd.f32 0.0, %v2894
  %2896 = vmatmul.f32.gmra.mxu0 %v2570
  %v2897 = vpop.f32.mrf.mxu0
  %v2898 = vadd.f32 0.0, %v2897
  %2899 = vmatmul.f32.gmra.mxu0 %v2571
  %v2900 = vpop.f32.mrf.mxu0
  %v2901 = vadd.f32 0.0, %v2900
  %2902 = vmatmul.f32.gmra.mxu0 %v2572
  %v2903 = vpop.f32.mrf.mxu0
  %v2904 = vadd.f32 0.0, %v2903
  %2905 = vmatmul.f32.gmra.mxu0 %v2573
  %v2906 = vpop.f32.mrf.mxu0
  %v2907 = vadd.f32 0.0, %v2906
  %2908 = vmatmul.f32.gmra.mxu0 %v2574
  %v2909 = vpop.f32.mrf.mxu0
  %v2910 = vadd.f32 0.0, %v2909
  %2911 = vdwg.mxu0
  %2912 = vmatpush.msra.mxu0 0.0
  %2913 = vmatpush.msra.mxu0 0.0
  %2914 = vmatpush.msra.mxu0 0.0
  %2915 = vmatpush.msra.mxu0 0.0
  %2916 = vmatpush.msra.mxu0 0.0
  %2917 = vmatpush.msra.mxu0 0.0
  %2918 = vmatpush.msra.mxu0 0.0
  %2919 = vmatpush.msra.mxu0 0.0
  %2920 = vmatpush.msra.mxu0 0.0
  %2921 = vmatpush.msra.mxu0 0.0
  %2922 = vmatpush.msra.mxu0 0.0
  %2923 = vmatpush.msra.mxu0 0.0
  %2924 = vmatpush.msra.mxu0 0.0
  %2925 = vmatpush.msra.mxu0 0.0
  %2926 = vmatpush.msra.mxu0 %v187
  %2927 = vmatpush.msra.mxu0 %v186
  %2928 = vmatmul.f32.gmra.mxu0 %v2575
  %v2929 = vpop.f32.mrf.mxu0
  %v2930 = vadd.f32 %v2721, %v2929
  %2931 = vmatmul.f32.gmra.mxu0 %v2577
  %v2932 = vpop.f32.mrf.mxu0
  %v2933 = vadd.f32 %v2724, %v2932
  %2934 = vmatmul.f32.gmra.mxu0 %v2579
  %v2935 = vpop.f32.mrf.mxu0
  %v2936 = vadd.f32 %v2727, %v2935
  %2937 = vmatmul.f32.gmra.mxu0 %v2581
  %v2938 = vpop.f32.mrf.mxu0
  %v2939 = vadd.f32 %v2730, %v2938
  %2940 = vmatmul.f32.gmra.mxu0 %v2583
  %v2941 = vpop.f32.mrf.mxu0
  %v2942 = vadd.f32 %v2733, %v2941
  %2943 = vmatmul.f32.gmra.mxu0 %v2585
  %v2944 = vpop.f32.mrf.mxu0
  %v2945 = vadd.f32 %v2736, %v2944
  %2946 = vmatmul.f32.gmra.mxu0 %v2587
  %v2947 = vpop.f32.mrf.mxu0
  %v2948 = vadd.f32 %v2739, %v2947
  %2949 = vmatmul.f32.gmra.mxu0 %v2589
  %v2950 = vpop.f32.mrf.mxu0
  %v2951 = vadd.f32 %v2742, %v2950
  %2952 = vmatmul.f32.gmra.mxu0 %v2591
  %v2953 = vpop.f32.mrf.mxu0
  %v2954 = vadd.f32 %v2745, %v2953
  %2955 = vmatmul.f32.gmra.mxu0 %v2593
  %v2956 = vpop.f32.mrf.mxu0
  %v2957 = vadd.f32 %v2748, %v2956
  %2958 = vmatmul.f32.gmra.mxu0 %v2595
  %v2959 = vpop.f32.mrf.mxu0
  %v2960 = vadd.f32 %v2751, %v2959
  %2961 = vmatmul.f32.gmra.mxu0 %v2597
  %v2962 = vpop.f32.mrf.mxu0
  %v2963 = vadd.f32 %v2754, %v2962
  %2964 = vmatmul.f32.gmra.mxu0 %v2599
  %v2965 = vpop.f32.mrf.mxu0
  %v2966 = vadd.f32 %v2757, %v2965
  %2967 = vmatmul.f32.gmra.mxu0 %v2601
  %v2968 = vpop.f32.mrf.mxu0
  %v2969 = vadd.f32 %v2760, %v2968
  %2970 = vmatmul.f32.gmra.mxu0 %v2603
  %v2971 = vpop.f32.mrf.mxu0
  %v2972 = vadd.f32 %v2763, %v2971
  %2973 = vmatmul.f32.gmra.mxu0 %v2605
  %v2974 = vpop.f32.mrf.mxu0
  %v2975 = vadd.f32 %v2766, %v2974
  %2976 = vmatmul.f32.gmra.mxu0 %v2607
  %v2977 = vpop.f32.mrf.mxu0
  %v2978 = vadd.f32 %v2769, %v2977
  %2979 = vmatmul.f32.gmra.mxu0 %v2609
  %v2980 = vpop.f32.mrf.mxu0
  %v2981 = vadd.f32 %v2772, %v2980
  %2982 = vmatmul.f32.gmra.mxu0 %v2611
  %v2983 = vpop.f32.mrf.mxu0
  %v2984 = vadd.f32 %v2775, %v2983
  %2985 = vmatmul.f32.gmra.mxu0 %v2613
  %v2986 = vpop.f32.mrf.mxu0
  %v2987 = vadd.f32 %v2778, %v2986
  %2988 = vmatmul.f32.gmra.mxu0 %v2615
  %v2989 = vpop.f32.mrf.mxu0
  %v2990 = vadd.f32 %v2781, %v2989
  %2991 = vmatmul.f32.gmra.mxu0 %v2617
  %v2992 = vpop.f32.mrf.mxu0
  %v2993 = vadd.f32 %v2784, %v2992
  %2994 = vmatmul.f32.gmra.mxu0 %v2619
  %v2995 = vpop.f32.mrf.mxu0
  %v2996 = vadd.f32 %v2787, %v2995
  %2997 = vmatmul.f32.gmra.mxu0 %v2621
  %v2998 = vpop.f32.mrf.mxu0
  %v2999 = vadd.f32 %v2790, %v2998
  %3000 = vmatmul.f32.gmra.mxu0 %v2623
  %v3001 = vpop.f32.mrf.mxu0
  %v3002 = vadd.f32 %v2793, %v3001
  %3003 = vmatmul.f32.gmra.mxu0 %v2625
  %v3004 = vpop.f32.mrf.mxu0
  %v3005 = vadd.f32 %v2796, %v3004
  %3006 = vmatmul.f32.gmra.mxu0 %v2627
  %v3007 = vpop.f32.mrf.mxu0
  %v3008 = vadd.f32 %v2799, %v3007
  %3009 = vmatmul.f32.gmra.mxu0 %v2629
  %v3010 = vpop.f32.mrf.mxu0
  %v3011 = vadd.f32 %v2802, %v3010
  %3012 = vmatmul.f32.gmra.mxu0 %v2631
  %v3013 = vpop.f32.mrf.mxu0
  %v3014 = vadd.f32 %v2805, %v3013
  %3015 = vmatmul.f32.gmra.mxu0 %v2633
  %v3016 = vpop.f32.mrf.mxu0
  %v3017 = vadd.f32 %v2808, %v3016
  %3018 = vmatmul.f32.gmra.mxu0 %v2635
  %v3019 = vpop.f32.mrf.mxu0
  %v3020 = vadd.f32 %v2811, %v3019
  %3021 = vmatmul.f32.gmra.mxu0 %v2637
  %v3022 = vpop.f32.mrf.mxu0
  %v3023 = vadd.f32 %v2814, %v3022
  %3024 = vmatmul.f32.gmra.mxu0 %v2639
  %v3025 = vpop.f32.mrf.mxu0
  %v3026 = vadd.f32 %v2817, %v3025
  %3027 = vmatmul.f32.gmra.mxu0 %v2641
  %v3028 = vpop.f32.mrf.mxu0
  %v3029 = vadd.f32 %v2820, %v3028
  %3030 = vmatmul.f32.gmra.mxu0 %v2643
  %v3031 = vpop.f32.mrf.mxu0
  %v3032 = vadd.f32 %v2823, %v3031
  %3033 = vmatmul.f32.gmra.mxu0 %v2645
  %v3034 = vpop.f32.mrf.mxu0
  %v3035 = vadd.f32 %v2826, %v3034
  %3036 = vmatmul.f32.gmra.mxu0 %v2647
  %v3037 = vpop.f32.mrf.mxu0
  %v3038 = vadd.f32 %v2829, %v3037
  %3039 = vmatmul.f32.gmra.mxu0 %v2649
  %v3040 = vpop.f32.mrf.mxu0
  %v3041 = vadd.f32 %v2832, %v3040
  %3042 = vmatmul.f32.gmra.mxu0 %v2651
  %v3043 = vpop.f32.mrf.mxu0
  %v3044 = vadd.f32 %v2835, %v3043
  %3045 = vmatmul.f32.gmra.mxu0 %v2653
  %v3046 = vpop.f32.mrf.mxu0
  %v3047 = vadd.f32 %v2838, %v3046
  %3048 = vmatmul.f32.gmra.mxu0 %v2655
  %v3049 = vpop.f32.mrf.mxu0
  %v3050 = vadd.f32 %v2841, %v3049
  %3051 = vmatmul.f32.gmra.mxu0 %v2657
  %v3052 = vpop.f32.mrf.mxu0
  %v3053 = vadd.f32 %v2844, %v3052
  %3054 = vmatmul.f32.gmra.mxu0 %v2659
  %v3055 = vpop.f32.mrf.mxu0
  %v3056 = vadd.f32 %v2847, %v3055
  %3057 = vmatmul.f32.gmra.mxu0 %v2661
  %v3058 = vpop.f32.mrf.mxu0
  %v3059 = vadd.f32 %v2850, %v3058
  %3060 = vmatmul.f32.gmra.mxu0 %v2663
  %v3061 = vpop.f32.mrf.mxu0
  %v3062 = vadd.f32 %v2853, %v3061
  %3063 = vmatmul.f32.gmra.mxu0 %v2665
  %v3064 = vpop.f32.mrf.mxu0
  %v3065 = vadd.f32 %v2856, %v3064
  %3066 = vmatmul.f32.gmra.mxu0 %v2667
  %v3067 = vpop.f32.mrf.mxu0
  %v3068 = vadd.f32 %v2859, %v3067
  %3069 = vmatmul.f32.gmra.mxu0 %v2669
  %v3070 = vpop.f32.mrf.mxu0
  %v3071 = vadd.f32 %v2862, %v3070
  %3072 = vmatmul.f32.gmra.mxu0 %v2671
  %v3073 = vpop.f32.mrf.mxu0
  %v3074 = vadd.f32 %v2865, %v3073
  %3075 = vmatmul.f32.gmra.mxu0 %v2673
  %v3076 = vpop.f32.mrf.mxu0
  %v3077 = vadd.f32 %v2868, %v3076
  %3078 = vmatmul.f32.gmra.mxu0 %v2675
  %v3079 = vpop.f32.mrf.mxu0
  %v3080 = vadd.f32 %v2871, %v3079
  %3081 = vmatmul.f32.gmra.mxu0 %v2677
  %v3082 = vpop.f32.mrf.mxu0
  %v3083 = vadd.f32 %v2874, %v3082
  %3084 = vmatmul.f32.gmra.mxu0 %v2679
  %v3085 = vpop.f32.mrf.mxu0
  %v3086 = vadd.f32 %v2877, %v3085
  %3087 = vmatmul.f32.gmra.mxu0 %v2681
  %v3088 = vpop.f32.mrf.mxu0
  %v3089 = vadd.f32 %v2880, %v3088
  %3090 = vmatmul.f32.gmra.mxu0 %v2683
  %v3091 = vpop.f32.mrf.mxu0
  %v3092 = vadd.f32 %v2883, %v3091
  %3093 = vmatmul.f32.gmra.mxu0 %v2685
  %v3094 = vpop.f32.mrf.mxu0
  %v3095 = vadd.f32 %v2886, %v3094
  %3096 = vmatmul.f32.gmra.mxu0 %v2687
  %v3097 = vpop.f32.mrf.mxu0
  %v3098 = vadd.f32 %v2889, %v3097
  %3099 = vmatmul.f32.gmra.mxu0 %v2689
  %v3100 = vpop.f32.mrf.mxu0
  %v3101 = vadd.f32 %v2892, %v3100
  %3102 = vmatmul.f32.gmra.mxu0 %v2691
  %v3103 = vpop.f32.mrf.mxu0
  %v3104 = vadd.f32 %v2895, %v3103
  %3105 = vmatmul.f32.gmra.mxu0 %v2693
  %v3106 = vpop.f32.mrf.mxu0
  %v3107 = vadd.f32 %v2898, %v3106
  %3108 = vmatmul.f32.gmra.mxu0 %v2695
  %v3109 = vpop.f32.mrf.mxu0
  %v3110 = vadd.f32 %v2901, %v3109
  %3111 = vmatmul.f32.gmra.mxu0 %v2697
  %v3112 = vpop.f32.mrf.mxu0
  %v3113 = vadd.f32 %v2904, %v3112
  %3114 = vmatmul.f32.gmra.mxu0 %v2699
  %v3115 = vpop.f32.mrf.mxu0
  %v3116 = vadd.f32 %v2907, %v3115
  %3117 = vmatmul.f32.gmra.mxu0 %v2701
  %v3118 = vpop.f32.mrf.mxu0
  %v3119 = vadd.f32 %v2910, %v3118
  %3120 = vdwg.mxu0
  %v3121 = vmul.f32 %v60, %v60
  %v3123 = vsel %vm2121, %v3121, 0
  %3125 = vmatpush.msra.mxu0 0.0
  %3126 = vmatpush.msra.mxu0 0.0
  %3127 = vmatpush.msra.mxu0 0.0
  %3128 = vmatpush.msra.mxu0 0.0
  %3129 = vmatpush.msra.mxu0 0.0
  %3130 = vmatpush.msra.mxu0 0.0
  %3131 = vmatpush.msra.mxu0 0.0
  %3132 = vmatpush.msra.mxu0 0.0
  %3133 = vmatpush.msra.mxu0 0.0
  %3134 = vmatpush.msra.mxu0 0.0
  %3135 = vmatpush.msra.mxu0 0.0
  %3136 = vmatpush.msra.mxu0 0.0
  %3137 = vmatpush.msra.mxu0 0.0
  %3138 = vmatpush.msra.mxu0 0.0
  %3139 = vmatpush.msra.mxu0 %v189
  %3140 = vmatpush.msra.mxu0 %v188
  %3141 = vmatmul.f32.gmra.mxu0 %v3123
  %v3142 = vpop.f32.mrf.mxu0
  %v3143 = vadd.f32 1e-08, %v3142
  %3144 = vdwg.mxu0
  %v3145 = vrsqrt.pop %v3143
  %v3146 = vmul.f32 %v3145, %v3143
  %v3147 = vmul.f32 %v3146, %v3145
  %v3148 = vmul.f32 0.5, %v3147
  %v3149 = vsub.f32 1.5, %v3148
  %v3150 = vmul.f32 %v3145, %v3149
  %vm3151 = vweird.f32 %v3143
  %vm3152 = vweird.f32 %v3145
  %vm3153 = vmor %vm3151, %vm3152
  %v3154 = vsel %vm3153, %v3145, %v3150
  %v3156 = vrot.slane %v3154, 1
  %v3157 = vperm.slane %v3154, 0
  %v3158 = vperm.slane %v3156, 0
  %v3161 = vmul.f32 %v2930, %v3157
  %v3162 = vmul.f32 %v2933, %v3157
  %v3163 = vmul.f32 %v2936, %v3157
  %v3164 = vmul.f32 %v2939, %v3157
  %v3165 = vmul.f32 %v2942, %v3157
  %v3166 = vmul.f32 %v2945, %v3157
  %v3167 = vmul.f32 %v2948, %v3157
  %v3168 = vmul.f32 %v2951, %v3157
  %v3169 = vmul.f32 %v2954, %v3157
  %v3170 = vmul.f32 %v2957, %v3157
  %v3171 = vmul.f32 %v2960, %v3157
  %v3172 = vmul.f32 %v2963, %v3157
  %v3173 = vmul.f32 %v2966, %v3157
  %v3174 = vmul.f32 %v2969, %v3157
  %v3175 = vmul.f32 %v2972, %v3157
  %v3176 = vmul.f32 %v2975, %v3157
  %v3177 = vmul.f32 %v2978, %v3157
  %v3178 = vmul.f32 %v2981, %v3157
  %v3179 = vmul.f32 %v2984, %v3157
  %v3180 = vmul.f32 %v2987, %v3157
  %v3181 = vmul.f32 %v2990, %v3157
  %v3182 = vmul.f32 %v2993, %v3157
  %v3183 = vmul.f32 %v2996, %v3157
  %v3184 = vmul.f32 %v2999, %v3157
  %v3185 = vmul.f32 %v3002, %v3157
  %v3186 = vmul.f32 %v3005, %v3157
  %v3187 = vmul.f32 %v3008, %v3157
  %v3188 = vmul.f32 %v3011, %v3157
  %v3189 = vmul.f32 %v3014, %v3157
  %v3190 = vmul.f32 %v3017, %v3157
  %v3191 = vmul.f32 %v3020, %v3157
  %v3192 = vmul.f32 %v3023, %v3157
  %v3193 = vmul.f32 %v3026, %v3158
  %v3194 = vmul.f32 %v3029, %v3158
  %v3195 = vmul.f32 %v3032, %v3158
  %v3196 = vmul.f32 %v3035, %v3158
  %v3197 = vmul.f32 %v3038, %v3158
  %v3198 = vmul.f32 %v3041, %v3158
  %v3199 = vmul.f32 %v3044, %v3158
  %v3200 = vmul.f32 %v3047, %v3158
  %v3201 = vmul.f32 %v3050, %v3158
  %v3202 = vmul.f32 %v3053, %v3158
  %v3203 = vmul.f32 %v3056, %v3158
  %v3204 = vmul.f32 %v3059, %v3158
  %v3205 = vmul.f32 %v3062, %v3158
  %v3206 = vmul.f32 %v3065, %v3158
  %v3207 = vmul.f32 %v3068, %v3158
  %v3208 = vmul.f32 %v3071, %v3158
  %v3209 = vmul.f32 %v3074, %v3158
  %v3210 = vmul.f32 %v3077, %v3158
  %v3211 = vmul.f32 %v3080, %v3158
  %v3212 = vmul.f32 %v3083, %v3158
  %v3213 = vmul.f32 %v3086, %v3158
  %v3214 = vmul.f32 %v3089, %v3158
  %v3215 = vmul.f32 %v3092, %v3158
  %v3216 = vmul.f32 %v3095, %v3158
  %v3217 = vmul.f32 %v3098, %v3158
  %v3218 = vmul.f32 %v3101, %v3158
  %v3219 = vmul.f32 %v3104, %v3158
  %v3220 = vmul.f32 %v3107, %v3158
  %v3221 = vmul.f32 %v3110, %v3158
  %v3222 = vmul.f32 %v3113, %v3158
  %v3223 = vmul.f32 %v3116, %v3158
  %v3224 = vmul.f32 %v3119, %v3158
  %v3225 = vperm.slane %v190, 0
  %v3226 = vlaneseq
  %v3227 = vshrl.u32 %v3226, 7
  %3229 = vset.pattern.permute.xlu0 %v3227
  %3230 = vperm.xlu0 %3229, %v3225
  %v3231 = vpop.permute.xlu0 %3230
  %v3232 = vlaneseq
  %v3233 = vshrl.u32 %v3232, 7
  %v3234 = vadd.s32 %v3233, 8
  %3235 = vset.pattern.permute.xlu0 %v3234
  %3236 = vperm.xlu0 %3235, %v3225
  %v3237 = vpop.permute.xlu0 %3236
  %v3238 = vperm.slane %v190, 1
  %v3239 = vlaneseq
  %v3240 = vshrl.u32 %v3239, 7
  %3242 = vset.pattern.permute.xlu0 %v3240
  %3243 = vperm.xlu0 %3242, %v3238
  %v3244 = vpop.permute.xlu0 %3243
  %v3245 = vlaneseq
  %v3246 = vshrl.u32 %v3245, 7
  %v3247 = vadd.s32 %v3246, 8
  %3248 = vset.pattern.permute.xlu0 %v3247
  %3249 = vperm.xlu0 %3248, %v3238
  %v3250 = vpop.permute.xlu0 %3249
  %v3251 = vperm.slane %v190, 2
  %v3252 = vlaneseq
  %v3253 = vshrl.u32 %v3252, 7
  %3255 = vset.pattern.permute.xlu0 %v3253
  %3256 = vperm.xlu0 %3255, %v3251
  %v3257 = vpop.permute.xlu0 %3256
  %v3258 = vlaneseq
  %v3259 = vshrl.u32 %v3258, 7
  %v3260 = vadd.s32 %v3259, 8
  %3261 = vset.pattern.permute.xlu0 %v3260
  %3262 = vperm.xlu0 %3261, %v3251
  %v3263 = vpop.permute.xlu0 %3262
  %v3264 = vperm.slane %v190, 3
  %v3265 = vlaneseq
  %v3266 = vshrl.u32 %v3265, 7
  %3268 = vset.pattern.permute.xlu0 %v3266
  %3269 = vperm.xlu0 %3268, %v3264
  %v3270 = vpop.permute.xlu0 %3269
  %v3271 = vlaneseq
  %v3272 = vshrl.u32 %v3271, 7
  %v3273 = vadd.s32 %v3272, 8
  %3274 = vset.pattern.permute.xlu0 %v3273
  %3275 = vperm.xlu0 %3274, %v3264
  %v3276 = vpop.permute.xlu0 %3275
  %v3277 = vperm.slane %v190, 4
  %v3278 = vlaneseq
  %v3279 = vshrl.u32 %v3278, 7
  %3281 = vset.pattern.permute.xlu0 %v3279
  %3282 = vperm.xlu0 %3281, %v3277
  %v3283 = vpop.permute.xlu0 %3282
  %v3284 = vlaneseq
  %v3285 = vshrl.u32 %v3284, 7
  %v3286 = vadd.s32 %v3285, 8
  %3287 = vset.pattern.permute.xlu0 %v3286
  %3288 = vperm.xlu0 %3287, %v3277
  %v3289 = vpop.permute.xlu0 %3288
  %v3290 = vperm.slane %v190, 5
  %v3291 = vlaneseq
  %v3292 = vshrl.u32 %v3291, 7
  %3294 = vset.pattern.permute.xlu0 %v3292
  %3295 = vperm.xlu0 %3294, %v3290
  %v3296 = vpop.permute.xlu0 %3295
  %v3297 = vlaneseq
  %v3298 = vshrl.u32 %v3297, 7
  %v3299 = vadd.s32 %v3298, 8
  %3300 = vset.pattern.permute.xlu0 %v3299
  %3301 = vperm.xlu0 %3300, %v3290
  %v3302 = vpop.permute.xlu0 %3301
  %v3303 = vperm.slane %v190, 6
  %v3304 = vlaneseq
  %v3305 = vshrl.u32 %v3304, 7
  %3307 = vset.pattern.permute.xlu0 %v3305
  %3308 = vperm.xlu0 %3307, %v3303
  %v3309 = vpop.permute.xlu0 %3308
  %v3310 = vlaneseq
  %v3311 = vshrl.u32 %v3310, 7
  %v3312 = vadd.s32 %v3311, 8
  %3313 = vset.pattern.permute.xlu0 %v3312
  %3314 = vperm.xlu0 %3313, %v3303
  %v3315 = vpop.permute.xlu0 %3314
  %v3316 = vperm.slane %v190, 7
  %v3317 = vlaneseq
  %v3318 = vshrl.u32 %v3317, 7
  %3320 = vset.pattern.permute.xlu0 %v3318
  %3321 = vperm.xlu0 %3320, %v3316
  %v3322 = vpop.permute.xlu0 %3321
  %v3323 = vlaneseq
  %v3324 = vshrl.u32 %v3323, 7
  %v3325 = vadd.s32 %v3324, 8
  %3326 = vset.pattern.permute.xlu0 %v3325
  %3327 = vperm.xlu0 %3326, %v3316
  %v3328 = vpop.permute.xlu0 %3327
  %v3329 = vperm.slane %v191, 0
  %v3330 = vlaneseq
  %v3331 = vshrl.u32 %v3330, 7
  %3333 = vset.pattern.permute.xlu0 %v3331
  %3334 = vperm.xlu0 %3333, %v3329
  %v3335 = vpop.permute.xlu0 %3334
  %v3336 = vlaneseq
  %v3337 = vshrl.u32 %v3336, 7
  %v3338 = vadd.s32 %v3337, 8
  %3339 = vset.pattern.permute.xlu0 %v3338
  %3340 = vperm.xlu0 %3339, %v3329
  %v3341 = vpop.permute.xlu0 %3340
  %v3342 = vperm.slane %v191, 1
  %v3343 = vlaneseq
  %v3344 = vshrl.u32 %v3343, 7
  %3346 = vset.pattern.permute.xlu0 %v3344
  %3347 = vperm.xlu0 %3346, %v3342
  %v3348 = vpop.permute.xlu0 %3347
  %v3349 = vlaneseq
  %v3350 = vshrl.u32 %v3349, 7
  %v3351 = vadd.s32 %v3350, 8
  %3352 = vset.pattern.permute.xlu0 %v3351
  %3353 = vperm.xlu0 %3352, %v3342
  %v3354 = vpop.permute.xlu0 %3353
  %v3355 = vperm.slane %v191, 2
  %v3356 = vlaneseq
  %v3357 = vshrl.u32 %v3356, 7
  %3359 = vset.pattern.permute.xlu0 %v3357
  %3360 = vperm.xlu0 %3359, %v3355
  %v3361 = vpop.permute.xlu0 %3360
  %v3362 = vlaneseq
  %v3363 = vshrl.u32 %v3362, 7
  %v3364 = vadd.s32 %v3363, 8
  %3365 = vset.pattern.permute.xlu0 %v3364
  %3366 = vperm.xlu0 %3365, %v3355
  %v3367 = vpop.permute.xlu0 %3366
  %v3368 = vperm.slane %v191, 3
  %v3369 = vlaneseq
  %v3370 = vshrl.u32 %v3369, 7
  %3372 = vset.pattern.permute.xlu0 %v3370
  %3373 = vperm.xlu0 %3372, %v3368
  %v3374 = vpop.permute.xlu0 %3373
  %v3375 = vlaneseq
  %v3376 = vshrl.u32 %v3375, 7
  %v3377 = vadd.s32 %v3376, 8
  %3378 = vset.pattern.permute.xlu0 %v3377
  %3379 = vperm.xlu0 %3378, %v3368
  %v3380 = vpop.permute.xlu0 %3379
  %v3381 = vperm.slane %v191, 4
  %v3382 = vlaneseq
  %v3383 = vshrl.u32 %v3382, 7
  %3385 = vset.pattern.permute.xlu0 %v3383
  %3386 = vperm.xlu0 %3385, %v3381
  %v3387 = vpop.permute.xlu0 %3386
  %v3388 = vlaneseq
  %v3389 = vshrl.u32 %v3388, 7
  %v3390 = vadd.s32 %v3389, 8
  %3391 = vset.pattern.permute.xlu0 %v3390
  %3392 = vperm.xlu0 %3391, %v3381
  %v3393 = vpop.permute.xlu0 %3392
  %v3394 = vperm.slane %v191, 5
  %v3395 = vlaneseq
  %v3396 = vshrl.u32 %v3395, 7
  %3398 = vset.pattern.permute.xlu0 %v3396
  %3399 = vperm.xlu0 %3398, %v3394
  %v3400 = vpop.permute.xlu0 %3399
  %v3401 = vlaneseq
  %v3402 = vshrl.u32 %v3401, 7
  %v3403 = vadd.s32 %v3402, 8
  %3404 = vset.pattern.permute.xlu0 %v3403
  %3405 = vperm.xlu0 %3404, %v3394
  %v3406 = vpop.permute.xlu0 %3405
  %v3407 = vperm.slane %v191, 6
  %v3408 = vlaneseq
  %v3409 = vshrl.u32 %v3408, 7
  %3411 = vset.pattern.permute.xlu0 %v3409
  %3412 = vperm.xlu0 %3411, %v3407
  %v3413 = vpop.permute.xlu0 %3412
  %v3414 = vlaneseq
  %v3415 = vshrl.u32 %v3414, 7
  %v3416 = vadd.s32 %v3415, 8
  %3417 = vset.pattern.permute.xlu0 %v3416
  %3418 = vperm.xlu0 %3417, %v3407
  %v3419 = vpop.permute.xlu0 %3418
  %v3420 = vperm.slane %v191, 7
  %v3421 = vlaneseq
  %v3422 = vshrl.u32 %v3421, 7
  %3424 = vset.pattern.permute.xlu0 %v3422
  %3425 = vperm.xlu0 %3424, %v3420
  %v3426 = vpop.permute.xlu0 %3425
  %v3427 = vlaneseq
  %v3428 = vshrl.u32 %v3427, 7
  %v3429 = vadd.s32 %v3428, 8
  %3430 = vset.pattern.permute.xlu0 %v3429
  %3431 = vperm.xlu0 %3430, %v3420
  %v3432 = vpop.permute.xlu0 %3431
  %v3433 = vadd.f32 %v3161, %v3231
  %v3434 = vadd.f32 %v3162, %v3237
  %v3435 = vadd.f32 %v3163, %v3244
  %v3436 = vadd.f32 %v3164, %v3250
  %v3437 = vadd.f32 %v3165, %v3257
  %v3438 = vadd.f32 %v3166, %v3263
  %v3439 = vadd.f32 %v3167, %v3270
  %v3440 = vadd.f32 %v3168, %v3276
  %v3441 = vadd.f32 %v3169, %v3283
  %v3442 = vadd.f32 %v3170, %v3289
  %v3443 = vadd.f32 %v3171, %v3296
  %v3444 = vadd.f32 %v3172, %v3302
  %v3445 = vadd.f32 %v3173, %v3309
  %v3446 = vadd.f32 %v3174, %v3315
  %v3447 = vadd.f32 %v3175, %v3322
  %v3448 = vadd.f32 %v3176, %v3328
  %v3449 = vadd.f32 %v3177, %v3335
  %v3450 = vadd.f32 %v3178, %v3341
  %v3451 = vadd.f32 %v3179, %v3348
  %v3452 = vadd.f32 %v3180, %v3354
  %v3453 = vadd.f32 %v3181, %v3361
  %v3454 = vadd.f32 %v3182, %v3367
  %v3455 = vadd.f32 %v3183, %v3374
  %v3456 = vadd.f32 %v3184, %v3380
  %v3457 = vadd.f32 %v3185, %v3387
  %v3458 = vadd.f32 %v3186, %v3393
  %v3459 = vadd.f32 %v3187, %v3400
  %v3460 = vadd.f32 %v3188, %v3406
  %v3461 = vadd.f32 %v3189, %v3413
  %v3462 = vadd.f32 %v3190, %v3419
  %v3463 = vadd.f32 %v3191, %v3426
  %v3464 = vadd.f32 %v3192, %v3432
  %v3465 = vadd.f32 %v3193, %v3231
  %v3466 = vadd.f32 %v3194, %v3237
  %v3467 = vadd.f32 %v3195, %v3244
  %v3468 = vadd.f32 %v3196, %v3250
  %v3469 = vadd.f32 %v3197, %v3257
  %v3470 = vadd.f32 %v3198, %v3263
  %v3471 = vadd.f32 %v3199, %v3270
  %v3472 = vadd.f32 %v3200, %v3276
  %v3473 = vadd.f32 %v3201, %v3283
  %v3474 = vadd.f32 %v3202, %v3289
  %v3475 = vadd.f32 %v3203, %v3296
  %v3476 = vadd.f32 %v3204, %v3302
  %v3477 = vadd.f32 %v3205, %v3309
  %v3478 = vadd.f32 %v3206, %v3315
  %v3479 = vadd.f32 %v3207, %v3322
  %v3480 = vadd.f32 %v3208, %v3328
  %v3481 = vadd.f32 %v3209, %v3335
  %v3482 = vadd.f32 %v3210, %v3341
  %v3483 = vadd.f32 %v3211, %v3348
  %v3484 = vadd.f32 %v3212, %v3354
  %v3485 = vadd.f32 %v3213, %v3361
  %v3486 = vadd.f32 %v3214, %v3367
  %v3487 = vadd.f32 %v3215, %v3374
  %v3488 = vadd.f32 %v3216, %v3380
  %v3489 = vadd.f32 %v3217, %v3387
  %v3490 = vadd.f32 %v3218, %v3393
  %v3491 = vadd.f32 %v3219, %v3400
  %v3492 = vadd.f32 %v3220, %v3406
  %v3493 = vadd.f32 %v3221, %v3413
  %v3494 = vadd.f32 %v3222, %v3419
  %v3495 = vadd.f32 %v3223, %v3426
  %v3496 = vadd.f32 %v3224, %v3432
  %v3498 = vperm.slane %v192, 0
  %v3500 = vadd.f32 %v3433, %v3498
  %v3501 = vadd.f32 %v3434, %v3498
  %v3502 = vadd.f32 %v3435, %v3498
  %v3503 = vadd.f32 %v3436, %v3498
  %v3504 = vadd.f32 %v3437, %v3498
  %v3505 = vadd.f32 %v3438, %v3498
  %v3506 = vadd.f32 %v3439, %v3498
  %v3507 = vadd.f32 %v3440, %v3498
  %v3508 = vadd.f32 %v3441, %v3498
  %v3509 = vadd.f32 %v3442, %v3498
  %v3510 = vadd.f32 %v3443, %v3498
  %v3511 = vadd.f32 %v3444, %v3498
  %v3512 = vadd.f32 %v3445, %v3498
  %v3513 = vadd.f32 %v3446, %v3498
  %v3514 = vadd.f32 %v3447, %v3498
  %v3515 = vadd.f32 %v3448, %v3498
  %v3516 = vadd.f32 %v3449, %v3498
  %v3517 = vadd.f32 %v3450, %v3498
  %v3518 = vadd.f32 %v3451, %v3498
  %v3519 = vadd.f32 %v3452, %v3498
  %v3520 = vadd.f32 %v3453, %v3498
  %v3521 = vadd.f32 %v3454, %v3498
  %v3522 = vadd.f32 %v3455, %v3498
  %v3523 = vadd.f32 %v3456, %v3498
  %v3524 = vadd.f32 %v3457, %v3498
  %v3525 = vadd.f32 %v3458, %v3498
  %v3526 = vadd.f32 %v3459, %v3498
  %v3527 = vadd.f32 %v3460, %v3498
  %v3528 = vadd.f32 %v3461, %v3498
  %v3529 = vadd.f32 %v3462, %v3498
  %v3530 = vadd.f32 %v3463, %v3498
  %v3531 = vadd.f32 %v3464, %v3498
  %v3532 = vadd.f32 %v3465, %v3498
  %v3533 = vadd.f32 %v3466, %v3498
  %v3534 = vadd.f32 %v3467, %v3498
  %v3535 = vadd.f32 %v3468, %v3498
  %v3536 = vadd.f32 %v3469, %v3498
  %v3537 = vadd.f32 %v3470, %v3498
  %v3538 = vadd.f32 %v3471, %v3498
  %v3539 = vadd.f32 %v3472, %v3498
  %v3540 = vadd.f32 %v3473, %v3498
  %v3541 = vadd.f32 %v3474, %v3498
  %v3542 = vadd.f32 %v3475, %v3498
  %v3543 = vadd.f32 %v3476, %v3498
  %v3544 = vadd.f32 %v3477, %v3498
  %v3545 = vadd.f32 %v3478, %v3498
  %v3546 = vadd.f32 %v3479, %v3498
  %v3547 = vadd.f32 %v3480, %v3498
  %v3548 = vadd.f32 %v3481, %v3498
  %v3549 = vadd.f32 %v3482, %v3498
  %v3550 = vadd.f32 %v3483, %v3498
  %v3551 = vadd.f32 %v3484, %v3498
  %v3552 = vadd.f32 %v3485, %v3498
  %v3553 = vadd.f32 %v3486, %v3498
  %v3554 = vadd.f32 %v3487, %v3498
  %v3555 = vadd.f32 %v3488, %v3498
  %v3556 = vadd.f32 %v3489, %v3498
  %v3557 = vadd.f32 %v3490, %v3498
  %v3558 = vadd.f32 %v3491, %v3498
  %v3559 = vadd.f32 %v3492, %v3498
  %v3560 = vadd.f32 %v3493, %v3498
  %v3561 = vadd.f32 %v3494, %v3498
  %v3562 = vadd.f32 %v3495, %v3498
  %v3563 = vadd.f32 %v3496, %v3498
  %vm3564 = vcmp.ge.f32.partialorder %v3500, 0.0
  %vm3565 = vcmp.ge.f32.partialorder %v3501, 0.0
  %vm3566 = vcmp.ge.f32.partialorder %v3502, 0.0
  %vm3567 = vcmp.ge.f32.partialorder %v3503, 0.0
  %vm3568 = vcmp.ge.f32.partialorder %v3504, 0.0
  %vm3569 = vcmp.ge.f32.partialorder %v3505, 0.0
  %vm3570 = vcmp.ge.f32.partialorder %v3506, 0.0
  %vm3571 = vcmp.ge.f32.partialorder %v3507, 0.0
  %vm3572 = vcmp.ge.f32.partialorder %v3508, 0.0
  %vm3573 = vcmp.ge.f32.partialorder %v3509, 0.0
  %vm3574 = vcmp.ge.f32.partialorder %v3510, 0.0
  %vm3575 = vcmp.ge.f32.partialorder %v3511, 0.0
  %vm3576 = vcmp.ge.f32.partialorder %v3512, 0.0
  %vm3577 = vcmp.ge.f32.partialorder %v3513, 0.0
  %vm3578 = vcmp.ge.f32.partialorder %v3514, 0.0
  %vm3579 = vcmp.ge.f32.partialorder %v3515, 0.0
  %vm3580 = vcmp.ge.f32.partialorder %v3516, 0.0
  %vm3581 = vcmp.ge.f32.partialorder %v3517, 0.0
  %vm3582 = vcmp.ge.f32.partialorder %v3518, 0.0
  %vm3583 = vcmp.ge.f32.partialorder %v3519, 0.0
  %vm3584 = vcmp.ge.f32.partialorder %v3520, 0.0
  %vm3585 = vcmp.ge.f32.partialorder %v3521, 0.0
  %vm3586 = vcmp.ge.f32.partialorder %v3522, 0.0
  %vm3587 = vcmp.ge.f32.partialorder %v3523, 0.0
  %vm3588 = vcmp.ge.f32.partialorder %v3524, 0.0
  %vm3589 = vcmp.ge.f32.partialorder %v3525, 0.0
  %vm3590 = vcmp.ge.f32.partialorder %v3526, 0.0
  %vm3591 = vcmp.ge.f32.partialorder %v3527, 0.0
  %vm3592 = vcmp.ge.f32.partialorder %v3528, 0.0
  %vm3593 = vcmp.ge.f32.partialorder %v3529, 0.0
  %vm3594 = vcmp.ge.f32.partialorder %v3530, 0.0
  %vm3595 = vcmp.ge.f32.partialorder %v3531, 0.0
  %vm3596 = vcmp.ge.f32.partialorder %v3532, 0.0
  %vm3597 = vcmp.ge.f32.partialorder %v3533, 0.0
  %vm3598 = vcmp.ge.f32.partialorder %v3534, 0.0
  %vm3599 = vcmp.ge.f32.partialorder %v3535, 0.0
  %vm3600 = vcmp.ge.f32.partialorder %v3536, 0.0
  %vm3601 = vcmp.ge.f32.partialorder %v3537, 0.0
  %vm3602 = vcmp.ge.f32.partialorder %v3538, 0.0
  %vm3603 = vcmp.ge.f32.partialorder %v3539, 0.0
  %vm3604 = vcmp.ge.f32.partialorder %v3540, 0.0
  %vm3605 = vcmp.ge.f32.partialorder %v3541, 0.0
  %vm3606 = vcmp.ge.f32.partialorder %v3542, 0.0
  %vm3607 = vcmp.ge.f32.partialorder %v3543, 0.0
  %vm3608 = vcmp.ge.f32.partialorder %v3544, 0.0
  %vm3609 = vcmp.ge.f32.partialorder %v3545, 0.0
  %vm3610 = vcmp.ge.f32.partialorder %v3546, 0.0
  %vm3611 = vcmp.ge.f32.partialorder %v3547, 0.0
  %vm3612 = vcmp.ge.f32.partialorder %v3548, 0.0
  %vm3613 = vcmp.ge.f32.partialorder %v3549, 0.0
  %vm3614 = vcmp.ge.f32.partialorder %v3550, 0.0
  %vm3615 = vcmp.ge.f32.partialorder %v3551, 0.0
  %vm3616 = vcmp.ge.f32.partialorder %v3552, 0.0
  %vm3617 = vcmp.ge.f32.partialorder %v3553, 0.0
  %vm3618 = vcmp.ge.f32.partialorder %v3554, 0.0
  %vm3619 = vcmp.ge.f32.partialorder %v3555, 0.0
  %vm3620 = vcmp.ge.f32.partialorder %v3556, 0.0
  %vm3621 = vcmp.ge.f32.partialorder %v3557, 0.0
  %vm3622 = vcmp.ge.f32.partialorder %v3558, 0.0
  %vm3623 = vcmp.ge.f32.partialorder %v3559, 0.0
  %vm3624 = vcmp.ge.f32.partialorder %v3560, 0.0
  %vm3625 = vcmp.ge.f32.partialorder %v3561, 0.0
  %vm3626 = vcmp.ge.f32.partialorder %v3562, 0.0
  %vm3627 = vcmp.ge.f32.partialorder %v3563, 0.0
  %v3628 = vmul.f32 %v3500, 0.2
  %v3629 = vmul.f32 %v3501, 0.2
  %v3630 = vmul.f32 %v3502, 0.2
  %v3631 = vmul.f32 %v3503, 0.2
  %v3632 = vmul.f32 %v3504, 0.2
  %v3633 = vmul.f32 %v3505, 0.2
  %v3634 = vmul.f32 %v3506, 0.2
  %v3635 = vmul.f32 %v3507, 0.2
  %v3636 = vmul.f32 %v3508, 0.2
  %v3637 = vmul.f32 %v3509, 0.2
  %v3638 = vmul.f32 %v3510, 0.2
  %v3639 = vmul.f32 %v3511, 0.2
  %v3640 = vmul.f32 %v3512, 0.2
  %v3641 = vmul.f32 %v3513, 0.2
  %v3642 = vmul.f32 %v3514, 0.2
  %v3643 = vmul.f32 %v3515, 0.2
  %v3644 = vmul.f32 %v3516, 0.2
  %v3645 = vmul.f32 %v3517, 0.2
  %v3646 = vmul.f32 %v3518, 0.2
  %v3647 = vmul.f32 %v3519, 0.2
  %v3648 = vmul.f32 %v3520, 0.2
  %v3649 = vmul.f32 %v3521, 0.2
  %v3650 = vmul.f32 %v3522, 0.2
  %v3651 = vmul.f32 %v3523, 0.2
  %v3652 = vmul.f32 %v3524, 0.2
  %v3653 = vmul.f32 %v3525, 0.2
  %v3654 = vmul.f32 %v3526, 0.2
  %v3655 = vmul.f32 %v3527, 0.2
  %v3656 = vmul.f32 %v3528, 0.2
  %v3657 = vmul.f32 %v3529, 0.2
  %v3658 = vmul.f32 %v3530, 0.2
  %v3659 = vmul.f32 %v3531, 0.2
  %v3660 = vmul.f32 %v3532, 0.2
  %v3661 = vmul.f32 %v3533, 0.2
  %v3662 = vmul.f32 %v3534, 0.2
  %v3663 = vmul.f32 %v3535, 0.2
  %v3664 = vmul.f32 %v3536, 0.2
  %v3665 = vmul.f32 %v3537, 0.2
  %v3666 = vmul.f32 %v3538, 0.2
  %v3667 = vmul.f32 %v3539, 0.2
  %v3668 = vmul.f32 %v3540, 0.2
  %v3669 = vmul.f32 %v3541, 0.2
  %v3670 = vmul.f32 %v3542, 0.2
  %v3671 = vmul.f32 %v3543, 0.2
  %v3672 = vmul.f32 %v3544, 0.2
  %v3673 = vmul.f32 %v3545, 0.2
  %v3674 = vmul.f32 %v3546, 0.2
  %v3675 = vmul.f32 %v3547, 0.2
  %v3676 = vmul.f32 %v3548, 0.2
  %v3677 = vmul.f32 %v3549, 0.2
  %v3678 = vmul.f32 %v3550, 0.2
  %v3679 = vmul.f32 %v3551, 0.2
  %v3680 = vmul.f32 %v3552, 0.2
  %v3681 = vmul.f32 %v3553, 0.2
  %v3682 = vmul.f32 %v3554, 0.2
  %v3683 = vmul.f32 %v3555, 0.2
  %v3684 = vmul.f32 %v3556, 0.2
  %v3685 = vmul.f32 %v3557, 0.2
  %v3686 = vmul.f32 %v3558, 0.2
  %v3687 = vmul.f32 %v3559, 0.2
  %v3688 = vmul.f32 %v3560, 0.2
  %v3689 = vmul.f32 %v3561, 0.2
  %v3690 = vmul.f32 %v3562, 0.2
  %v3691 = vmul.f32 %v3563, 0.2
  %v3692 = vsel %vm3564, %v3500, %v3628
  %v3693 = vsel %vm3565, %v3501, %v3629
  %v3694 = vsel %vm3566, %v3502, %v3630
  %v3695 = vsel %vm3567, %v3503, %v3631
  %v3696 = vsel %vm3568, %v3504, %v3632
  %v3697 = vsel %vm3569, %v3505, %v3633
  %v3698 = vsel %vm3570, %v3506, %v3634
  %v3699 = vsel %vm3571, %v3507, %v3635
  %v3700 = vsel %vm3572, %v3508, %v3636
  %v3701 = vsel %vm3573, %v3509, %v3637
  %v3702 = vsel %vm3574, %v3510, %v3638
  %v3703 = vsel %vm3575, %v3511, %v3639
  %v3704 = vsel %vm3576, %v3512, %v3640
  %v3705 = vsel %vm3577, %v3513, %v3641
  %v3706 = vsel %vm3578, %v3514, %v3642
  %v3707 = vsel %vm3579, %v3515, %v3643
  %v3708 = vsel %vm3580, %v3516, %v3644
  %v3709 = vsel %vm3581, %v3517, %v3645
  %v3710 = vsel %vm3582, %v3518, %v3646
  %v3711 = vsel %vm3583, %v3519, %v3647
  %v3712 = vsel %vm3584, %v3520, %v3648
  %v3713 = vsel %vm3585, %v3521, %v3649
  %v3714 = vsel %vm3586, %v3522, %v3650
  %v3715 = vsel %vm3587, %v3523, %v3651
  %v3716 = vsel %vm3588, %v3524, %v3652
  %v3717 = vsel %vm3589, %v3525, %v3653
  %v3718 = vsel %vm3590, %v3526, %v3654
  %v3719 = vsel %vm3591, %v3527, %v3655
  %v3720 = vsel %vm3592, %v3528, %v3656
  %v3721 = vsel %vm3593, %v3529, %v3657
  %v3722 = vsel %vm3594, %v3530, %v3658
  %v3723 = vsel %vm3595, %v3531, %v3659
  %v3724 = vsel %vm3596, %v3532, %v3660
  %v3725 = vsel %vm3597, %v3533, %v3661
  %v3726 = vsel %vm3598, %v3534, %v3662
  %v3727 = vsel %vm3599, %v3535, %v3663
  %v3728 = vsel %vm3600, %v3536, %v3664
  %v3729 = vsel %vm3601, %v3537, %v3665
  %v3730 = vsel %vm3602, %v3538, %v3666
  %v3731 = vsel %vm3603, %v3539, %v3667
  %v3732 = vsel %vm3604, %v3540, %v3668
  %v3733 = vsel %vm3605, %v3541, %v3669
  %v3734 = vsel %vm3606, %v3542, %v3670
  %v3735 = vsel %vm3607, %v3543, %v3671
  %v3736 = vsel %vm3608, %v3544, %v3672
  %v3737 = vsel %vm3609, %v3545, %v3673
  %v3738 = vsel %vm3610, %v3546, %v3674
  %v3739 = vsel %vm3611, %v3547, %v3675
  %v3740 = vsel %vm3612, %v3548, %v3676
  %v3741 = vsel %vm3613, %v3549, %v3677
  %v3742 = vsel %vm3614, %v3550, %v3678
  %v3743 = vsel %vm3615, %v3551, %v3679
  %v3744 = vsel %vm3616, %v3552, %v3680
  %v3745 = vsel %vm3617, %v3553, %v3681
  %v3746 = vsel %vm3618, %v3554, %v3682
  %v3747 = vsel %vm3619, %v3555, %v3683
  %v3748 = vsel %vm3620, %v3556, %v3684
  %v3749 = vsel %vm3621, %v3557, %v3685
  %v3750 = vsel %vm3622, %v3558, %v3686
  %v3751 = vsel %vm3623, %v3559, %v3687
  %v3752 = vsel %vm3624, %v3560, %v3688
  %v3753 = vsel %vm3625, %v3561, %v3689
  %v3754 = vsel %vm3626, %v3562, %v3690
  %v3755 = vsel %vm3627, %v3563, %v3691
  %v3756 = vmul.f32 %v3692, 1.4142135
  %v3757 = vmul.f32 %v3693, 1.4142135
  %v3758 = vmul.f32 %v3694, 1.4142135
  %v3759 = vmul.f32 %v3695, 1.4142135
  %v3760 = vmul.f32 %v3696, 1.4142135
  %v3761 = vmul.f32 %v3697, 1.4142135
  %v3762 = vmul.f32 %v3698, 1.4142135
  %v3763 = vmul.f32 %v3699, 1.4142135
  %v3764 = vmul.f32 %v3700, 1.4142135
  %v3765 = vmul.f32 %v3701, 1.4142135
  %v3766 = vmul.f32 %v3702, 1.4142135
  %v3767 = vmul.f32 %v3703, 1.4142135
  %v3768 = vmul.f32 %v3704, 1.4142135
  %v3769 = vmul.f32 %v3705, 1.4142135
  %v3770 = vmul.f32 %v3706, 1.4142135
  %v3771 = vmul.f32 %v3707, 1.4142135
  %v3772 = vmul.f32 %v3708, 1.4142135
  %v3773 = vmul.f32 %v3709, 1.4142135
  %v3774 = vmul.f32 %v3710, 1.4142135
  %v3775 = vmul.f32 %v3711, 1.4142135
  %v3776 = vmul.f32 %v3712, 1.4142135
  %v3777 = vmul.f32 %v3713, 1.4142135
  %v3778 = vmul.f32 %v3714, 1.4142135
  %v3779 = vmul.f32 %v3715, 1.4142135
  %v3780 = vmul.f32 %v3716, 1.4142135
  %v3781 = vmul.f32 %v3717, 1.4142135
  %v3782 = vmul.f32 %v3718, 1.4142135
  %v3783 = vmul.f32 %v3719, 1.4142135
  %v3784 = vmul.f32 %v3720, 1.4142135
  %v3785 = vmul.f32 %v3721, 1.4142135
  %v3786 = vmul.f32 %v3722, 1.4142135
  %v3787 = vmul.f32 %v3723, 1.4142135
  %v3788 = vmul.f32 %v3724, 1.4142135
  %v3789 = vmul.f32 %v3725, 1.4142135
  %v3790 = vmul.f32 %v3726, 1.4142135
  %v3791 = vmul.f32 %v3727, 1.4142135
  %v3792 = vmul.f32 %v3728, 1.4142135
  %v3793 = vmul.f32 %v3729, 1.4142135
  %v3794 = vmul.f32 %v3730, 1.4142135
  %v3795 = vmul.f32 %v3731, 1.4142135
  %v3796 = vmul.f32 %v3732, 1.4142135
  %v3797 = vmul.f32 %v3733, 1.4142135
  %v3798 = vmul.f32 %v3734, 1.4142135
  %v3799 = vmul.f32 %v3735, 1.4142135
  %v3800 = vmul.f32 %v3736, 1.4142135
  %v3801 = vmul.f32 %v3737, 1.4142135
  %v3802 = vmul.f32 %v3738, 1.4142135
  %v3803 = vmul.f32 %v3739, 1.4142135
  %v3804 = vmul.f32 %v3740, 1.4142135
  %v3805 = vmul.f32 %v3741, 1.4142135
  %v3806 = vmul.f32 %v3742, 1.4142135
  %v3807 = vmul.f32 %v3743, 1.4142135
  %v3808 = vmul.f32 %v3744, 1.4142135
  %v3809 = vmul.f32 %v3745, 1.4142135
  %v3810 = vmul.f32 %v3746, 1.4142135
  %v3811 = vmul.f32 %v3747, 1.4142135
  %v3812 = vmul.f32 %v3748, 1.4142135
  %v3813 = vmul.f32 %v3749, 1.4142135
  %v3814 = vmul.f32 %v3750, 1.4142135
  %v3815 = vmul.f32 %v3751, 1.4142135
  %v3816 = vmul.f32 %v3752, 1.4142135
  %v3817 = vmul.f32 %v3753, 1.4142135
  %v3818 = vmul.f32 %v3754, 1.4142135
  %v3819 = vmul.f32 %v3755, 1.4142135
  %3820 = vst.msk [vmem:[%s8] sm:$0xff] %vm2121, %v3756
  %3821 = vst.msk [vmem:[%s8 + $0x8] sm:$0xff] %vm2121, %v3757
  %3822 = vst.msk [vmem:[%s8 + $0x10] sm:$0xff] %vm2121, %v3758
  %3823 = vst.msk [vmem:[%s8 + $0x18] sm:$0xff] %vm2121, %v3759
  %3824 = vst.msk [vmem:[%s8 + $0x20] sm:$0xff] %vm2121, %v3760
  %3825 = vst.msk [vmem:[%s8 + $0x28] sm:$0xff] %vm2121, %v3761
  %3826 = vst.msk [vmem:[%s8 + $0x30] sm:$0xff] %vm2121, %v3762
  %3827 = vst.msk [vmem:[%s8 + $0x38] sm:$0xff] %vm2121, %v3763
  %3828 = vst.msk [vmem:[%s8 + $0x40] sm:$0xff] %vm2121, %v3764
  %3829 = vst.msk [vmem:[%s8 + $0x48] sm:$0xff] %vm2121, %v3765
  %3830 = vst.msk [vmem:[%s8 + $0x50] sm:$0xff] %vm2121, %v3766
  %3831 = vst.msk [vmem:[%s8 + $0x58] sm:$0xff] %vm2121, %v3767
  %3832 = vst.msk [vmem:[%s8 + $0x60] sm:$0xff] %vm2121, %v3768
  %3833 = vst.msk [vmem:[%s8 + $0x68] sm:$0xff] %vm2121, %v3769
  %3834 = vst.msk [vmem:[%s8 + $0x70] sm:$0xff] %vm2121, %v3770
  %3835 = vst.msk [vmem:[%s8 + $0x78] sm:$0xff] %vm2121, %v3771
  %3836 = vst.msk [vmem:[%s8 + $0x80] sm:$0xff] %vm2121, %v3772
  %3837 = vst.msk [vmem:[%s8 + $0x88] sm:$0xff] %vm2121, %v3773
  %3838 = vst.msk [vmem:[%s8 + $0x90] sm:$0xff] %vm2121, %v3774
  %3839 = vst.msk [vmem:[%s8 + $0x98] sm:$0xff] %vm2121, %v3775
  %3840 = vst.msk [vmem:[%s8 + $0xa0] sm:$0xff] %vm2121, %v3776
  %3841 = vst.msk [vmem:[%s8 + $0xa8] sm:$0xff] %vm2121, %v3777
  %3842 = vst.msk [vmem:[%s8 + $0xb0] sm:$0xff] %vm2121, %v3778
  %3843 = vst.msk [vmem:[%s8 + $0xb8] sm:$0xff] %vm2121, %v3779
  %3844 = vst.msk [vmem:[%s8 + $0xc0] sm:$0xff] %vm2121, %v3780
  %3845 = vst.msk [vmem:[%s8 + $0xc8] sm:$0xff] %vm2121, %v3781
  %3846 = vst.msk [vmem:[%s8 + $0xd0] sm:$0xff] %vm2121, %v3782
  %3847 = vst.msk [vmem:[%s8 + $0xd8] sm:$0xff] %vm2121, %v3783
  %3848 = vst.msk [vmem:[%s8 + $0xe0] sm:$0xff] %vm2121, %v3784
  %3849 = vst.msk [vmem:[%s8 + $0xe8] sm:$0xff] %vm2121, %v3785
  %3850 = vst.msk [vmem:[%s8 + $0xf0] sm:$0xff] %vm2121, %v3786
  %3851 = vst.msk [vmem:[%s8 + $0xf8] sm:$0xff] %vm2121, %v3787
  %3852 = vst.msk [vmem:[%s8 + $0x100] sm:$0xff] %vm2121, %v3788
  %3853 = vst.msk [vmem:[%s8 + $0x108] sm:$0xff] %vm2121, %v3789
  %3854 = vst.msk [vmem:[%s8 + $0x110] sm:$0xff] %vm2121, %v3790
  %3855 = vst.msk [vmem:[%s8 + $0x118] sm:$0xff] %vm2121, %v3791
  %3856 = vst.msk [vmem:[%s8 + $0x120] sm:$0xff] %vm2121, %v3792
  %3857 = vst.msk [vmem:[%s8 + $0x128] sm:$0xff] %vm2121, %v3793
  %3858 = vst.msk [vmem:[%s8 + $0x130] sm:$0xff] %vm2121, %v3794
  %3859 = vst.msk [vmem:[%s8 + $0x138] sm:$0xff] %vm2121, %v3795
  %3860 = vst.msk [vmem:[%s8 + $0x140] sm:$0xff] %vm2121, %v3796
  %3861 = vst.msk [vmem:[%s8 + $0x148] sm:$0xff] %vm2121, %v3797
  %3862 = vst.msk [vmem:[%s8 + $0x150] sm:$0xff] %vm2121, %v3798
  %3863 = vst.msk [vmem:[%s8 + $0x158] sm:$0xff] %vm2121, %v3799
  %3864 = vst.msk [vmem:[%s8 + $0x160] sm:$0xff] %vm2121, %v3800
  %3865 = vst.msk [vmem:[%s8 + $0x168] sm:$0xff] %vm2121, %v3801
  %3866 = vst.msk [vmem:[%s8 + $0x170] sm:$0xff] %vm2121, %v3802
  %3867 = vst.msk [vmem:[%s8 + $0x178] sm:$0xff] %vm2121, %v3803
  %3868 = vst.msk [vmem:[%s8 + $0x180] sm:$0xff] %vm2121, %v3804
  %3869 = vst.msk [vmem:[%s8 + $0x188] sm:$0xff] %vm2121, %v3805
  %3870 = vst.msk [vmem:[%s8 + $0x190] sm:$0xff] %vm2121, %v3806
  %3871 = vst.msk [vmem:[%s8 + $0x198] sm:$0xff] %vm2121, %v3807
  %3872 = vst.msk [vmem:[%s8 + $0x1a0] sm:$0xff] %vm2121, %v3808
  %3873 = vst.msk [vmem:[%s8 + $0x1a8] sm:$0xff] %vm2121, %v3809
  %3874 = vst.msk [vmem:[%s8 + $0x1b0] sm:$0xff] %vm2121, %v3810
  %3875 = vst.msk [vmem:[%s8 + $0x1b8] sm:$0xff] %vm2121, %v3811
  %3876 = vst.msk [vmem:[%s8 + $0x1c0] sm:$0xff] %vm2121, %v3812
  %3877 = vst.msk [vmem:[%s8 + $0x1c8] sm:$0xff] %vm2121, %v3813
  %3878 = vst.msk [vmem:[%s8 + $0x1d0] sm:$0xff] %vm2121, %v3814
  %3879 = vst.msk [vmem:[%s8 + $0x1d8] sm:$0xff] %vm2121, %v3815
  %3880 = vst.msk [vmem:[%s8 + $0x1e0] sm:$0xff] %vm2121, %v3816
  %3881 = vst.msk [vmem:[%s8 + $0x1e8] sm:$0xff] %vm2121, %v3817
  %3882 = vst.msk [vmem:[%s8 + $0x1f0] sm:$0xff] %vm2121, %v3818
  %3883 = vst.msk [vmem:[%s8 + $0x1f8] sm:$0xff] %vm2121, %v3819
  // Predicated region
  $region34: #{_forward.8} parent=0 // pred_check
    _
  $region35: #{_forward.8} parent=0 // pred_check_branch
    %3885 = sbr.rel (0) target = $region37
  $region36: #{_forward.8} parent=0 // pred_region
    _
  $region37: #{_forward.8} parent=0 // pred_fallthru
    _
  // Predicated region
  $region38: #{_forward.8} parent=0 // pred_check
    _
  $region39: #{_forward.8} parent=0 // pred_check_branch
    %3887 = sbr.rel (0) target = $region41
  $region40: #{_forward.8} parent=0 // pred_region
    _
  $region41: #{_forward.8} parent=0 // pred_fallthru
    _

</llo_original>
